<compile_context>
chip_gen: v5e
topology: v5e:2x2
jax: 0.10.0
libtpu: 0.0.40
codegen_flags: <defaults>
</compile_context>

<pallas_src>
import functools

import jax
import jax.numpy as jnp
from jax.experimental import pallas as pl
from jax.experimental.pallas import tpu as pltpu


# -----------------------------------------------------------------------------
# Fused per-batch-tile kernel:
#   projection -> attention -> softmax -> aggregate -> head concat
#   -> ELU -> sigmoid gate -> residual mix
# -----------------------------------------------------------------------------
def _gat_fused_kernel(x_ref, adj_ref, wcat_ref, wsrc_bd_ref, wdst_bd_ref, bcat_ref,
                      hwT_ref, hb_ref, out_ref, *, bt, n, att_head, out_dim, leaky_alpha):
    ho = att_head * out_dim

    x3 = x_ref[...]                       # (BT, N, D)
    x2 = x3.reshape(bt * n, ho)           # (BT*N, D)   free: N is a multiple of 8 (sublanes)

    # All heads / all batch elements projected in one MXU matmul:
    #   columns [h*O : (h+1)*O] of h2 == x @ W[h]
    h2 = jnp.dot(x2, wcat_ref[...], preferred_element_type=jnp.float32)          # (BT*N, H*O)
    th2 = jnp.tanh(h2)

    # Per-node attention logits for all heads via block-diagonal selectors (MXU),
    # replacing per-head lane slices + cross-lane reductions.
    a_src = jnp.dot(th2, wsrc_bd_ref[...], preferred_element_type=jnp.float32)   # (BT*N, H)
    a_dst = jnp.dot(th2, wdst_bd_ref[...], preferred_element_type=jnp.float32)   # (BT*N, H)
    a_src3 = a_src.reshape(bt, n, att_head)                          # (BT, N, H)  column form
    a_dst_t = jnp.swapaxes(a_dst.reshape(bt, n, att_head), 1, 2)     # (BT, H, N)  row form

    h3 = h2.reshape(bt, n, ho)                                       # (BT, N, H*O)

    # adj arrives as int8; a single upcast + compare yields the mask used by every head.
    edge = adj_ref[...].astype(jnp.float32) > 0.5                    # (BT, N, N) bool

    head_feats = []
    for hd in range(att_head):            # static unroll over a small head count
        lo = hd * out_dim
        # attn[b, i, j] = a_src[b, i, hd] + a_dst[b, j, hd]
        attn = a_src3[:, :, hd:hd + 1] + a_dst_t[:, hd:hd + 1, :]    # (BT, N, N)
        # leaky relu
        attn = jnp.where(attn > 0, attn, leaky_alpha * attn)
        # masked_fill where adj == 0 with -999 (matches the PyTorch module)
        attn = jnp.where(edge, attn, -999.0)

        # row softmax; reciprocal on the EUP slot
        m = jnp.max(attn, axis=-1, keepdims=True)
        e = jnp.exp(attn - m)
        p = e * pl.reciprocal(jnp.sum(e, axis=-1, keepdims=True), approx=True)

        # weighted aggregation with this head's projected (un-tanh'ed) features
        head_feats.append(
            jnp.einsum('bij,bjo->bio', p, h3[:, :, lo:lo + out_dim],
                       preferred_element_type=jnp.float32))

    # Head concat (== transpose(1,2).view in torch) + per-head bias broadcast.
    feat = jnp.concatenate(head_feats, axis=-1) + bcat_ref[...]      # (BT, N, H*O)
    feat2 = feat.reshape(bt * n, ho)

    # ELU (alpha=1); exp only on the non-positive branch so no inf is generated.
    fe = jnp.where(feat2 > 0, feat2, jnp.exp(jnp.minimum(feat2, 0.0)) - 1.0)

    # Sigmoid gate from the original features, residual mix.
    logits = jnp.dot(x2, hwT_ref[...], preferred_element_type=jnp.float32) + hb_ref[...]
    gate = jax.nn.sigmoid(logits)
    out2 = gate * fe + (1.0 - gate) * x2                              # (BT*N, D)
    out_ref[...] = out2.reshape(bt, n, ho)


# -----------------------------------------------------------------------------
# Wrapper: padding, batch tiling, parameter re-layout (tiny, one-time) + pallas_call
# -----------------------------------------------------------------------------
def graph_attention_layer(feat_in, adj, params, leaky_alpha=0.2, b_tile=None):
    batch, N, in_dim = feat_in.shape
    att_head, _, out_dim = params["W"].shape
    HO = att_head * out_dim
    assert in_dim == HO

    # --- pad N up to a sublane multiple (8) so the (N,N)/(N,H*O) tiles are aligned ---
    n_pad = ((N + 7) // 8) * 8
    feat_p, adj_p = feat_in, adj
    if n_pad != N:
        feat_p = jnp.pad(feat_p, ((0, 0), (0, n_pad - N), (0, 0)))
        adj_p = jnp.pad(adj_p, ((0, 0), (0, n_pad - N), (0, n_pad - N)))

    # --- batch tiling: target M = b_tile * N around 256 (multiple of 128) ---
    if b_tile is None:
        b_tile = max(1, min(batch, max(1, 256 // n_pad)))
        if batch > 1 and pl.cdiv(batch, b_tile) == 1:
            b_tile = pl.cdiv(batch, 2)        # keep both v7x TensorCores busy
    num_steps = pl.cdiv(batch, b_tile)
    batch_pad = num_steps * b_tile
    if batch_pad != batch:
        pad = batch_pad - batch
        feat_p = jnp.pad(feat_p, ((0, pad), (0, 0), (0, 0)))
        adj_p = jnp.pad(adj_p, ((0, pad), (0, 0), (0, 0)))

    # Adjacency streamed as int8: 4x less HBM / VMEM traffic than f32.
    adj_i8 = (adj_p > 0.5).astype(jnp.int8)

    # Head-concatenated projection weight + block-diagonal w_src/w_dst selectors so the
    # per-head attention logits come out of single MXU matmuls.
    W_cat = jnp.transpose(params["W"], (1, 0, 2)).reshape(in_dim, HO)       # (D, H*O)
    eye_h = jnp.eye(att_head, dtype=jnp.float32)
    wsrc_flat = params["w_src"].reshape(att_head, out_dim)                  # (H, O)
    wdst_flat = params["w_dst"].reshape(att_head, out_dim)
    Wsrc_bd = (wsrc_flat[:, :, None] * eye_h[:, None, :]).reshape(HO, att_head)
    Wdst_bd = (wdst_flat[:, :, None] * eye_h[:, None, :]).reshape(HO, att_head)
    b_cat = jnp.tile(params["b"], (1, att_head))                            # (1, H*O)

    kernel = functools.partial(_gat_fused_kernel, bt=b_tile, n=n_pad,
                               att_head=att_head, out_dim=out_dim,
                               leaky_alpha=leaky_alpha)

    out = pl.pallas_call(
        kernel,
        out_shape=jax.ShapeDtypeStruct((batch_pad, n_pad, in_dim), jnp.float32),
        grid_spec=pltpu.PrefetchScalarGridSpec(
            num_scalar_prefetch=0,
            grid=(num_steps,),
            in_specs=[
                pl.BlockSpec((b_tile, n_pad, in_dim), lambda b: (b, 0, 0)),   # feat_in
                pl.BlockSpec((b_tile, n_pad, n_pad), lambda b: (b, 0, 0)),    # adj (int8)
                pl.BlockSpec((in_dim, HO), lambda b: (0, 0)),                 # W_cat
                pl.BlockSpec((HO, att_head), lambda b: (0, 0)),               # Wsrc block-diag
                pl.BlockSpec((HO, att_head), lambda b: (0, 0)),               # Wdst block-diag
                pl.BlockSpec((1, HO), lambda b: (0, 0)),                      # bias cat
                pl.BlockSpec((in_dim, in_dim), lambda b: (0, 0)),             # H.weight^T
                pl.BlockSpec((1, in_dim), lambda b: (0, 0)),                  # H.bias
            ],
            out_specs=pl.BlockSpec((b_tile, n_pad, in_dim), lambda b: (b, 0, 0)),
        ),
        compiler_params=pltpu.CompilerParams(
            dimension_semantics=("parallel",),
            vmem_limit_bytes=32 * 1024 * 1024),
    )(feat_p, adj_i8, W_cat, Wsrc_bd, Wdst_bd, b_cat, params["H_W_T"], params["H_b"])

    return out[:batch, :N, :]


# -----------------------------------------------------------------------------
# Pure-JAX reference for sanity checking
# -----------------------------------------------------------------------------
def reference_forward(feat_in, adj, params, leaky_alpha=0.2):
    batch, N, in_dim = feat_in.shape
    att_head, _, out_dim = params["W"].shape
    h = jnp.einsum("bni,hio->bhno", feat_in, params["W"])
    th = jnp.tanh(h)
    a_src = jnp.sum(th * params["w_src"][None], axis=-1, keepdims=True)  # (b,h,N,1)
    a_dst = jnp.sum(th * params["w_dst"][None], axis=-1, keepdims=True)  # (b,h,N,1)
    attn = a_src + jnp.swapaxes(a_dst, -1, -2)
    attn = jnp.where(attn > 0, attn, leaky_alpha * attn)
    attn = jnp.where(adj[:, None] > 0.5, attn, -999.0)
    attn = jax.nn.softmax(attn, axis=-1)
    feat_out = jnp.einsum("bhnm,bhmo->bhno", attn, h) + params["b"][0]
    feat_out = jnp.transpose(feat_out, (0, 2, 1, 3)).reshape(batch, N, in_dim)
    feat_out = jnp.where(feat_out > 0, feat_out, jnp.exp(jnp.minimum(feat_out, 0.0)) - 1.0)
    gate = jax.nn.sigmoid(feat_in @ params["H_W_T"] + params["H_b"][0])
    return gate * feat_out + (1.0 - gate) * feat_in


# -----------------------------------------------------------------------------
# Deterministic parameter init (xavier-style, synthetic)
# -----------------------------------------------------------------------------
def init_params(key, att_head, in_dim, out_dim):
    k = jax.random.split(key, 5)

    def xavier_uniform(key, shape, fan_in, fan_out):
        bound = (6.0 / (fan_in + fan_out)) ** 0.5
        return jax.random.uniform(key, shape, jnp.float32, -bound, bound)

    W = xavier_uniform(k[0], (att_head, in_dim, out_dim), in_dim * out_dim, att_head)
    w_src = xavier_uniform(k[1], (att_head, 1, out_dim), out_dim, att_head)
    w_dst = xavier_uniform(k[2], (att_head, 1, out_dim), out_dim, att_head)
    b = jnp.zeros((1, out_dim), jnp.float32)
    std = (2.0 / (in_dim + in_dim)) ** 0.5
    H_W = std * jax.random.normal(k[3], (in_dim, in_dim), jnp.float32)  # xavier_normal_
    H_b = (1.0 / in_dim ** 0.5) * jax.random.uniform(k[4], (1, in_dim), jnp.float32, -1.0, 1.0)
    return {"W": W, "w_src": w_src, "w_dst": w_dst, "b": b,
            "H_W_T": H_W.T, "H_b": H_b}


if __name__ == "__main__":
    att_head, out_dim = 4, 8
    in_dim = att_head * out_dim          # assert in_dim == out_dim * att_head
    batch, N = 64, 8                     # b_tile=32 -> grid=(2,), M = 256 per matmul

    key = jax.random.PRNGKey(0)
    k_feat, k_adj, k_params = jax.random.split(key, 3)

    feat_in = jax.random.normal(k_feat, (batch, N, in_dim), jnp.float32)
    adj = (jax.random.uniform(k_adj, (batch, N, N)) > 0.5).astype(jnp.float32)
    # ensure self-loops so every softmax row has at least one unmasked entry
    adj = jnp.maximum(adj, jnp.eye(N, dtype=jnp.float32)[None])

    params = init_params(k_params, att_head, in_dim, out_dim)

    out = graph_attention_layer(feat_in, adj, params, leaky_alpha=0.2)
    out = jax.block_until_ready(out)

    ref = reference_forward(feat_in, adj, params, leaky_alpha=0.2)
    assert out.shape == (batch, N, in_dim)
    # Tolerance accounts for pl.reciprocal(approx=True) in the softmax denominator
    # (shared multiplicative error per row, bounded well below 1e-3 on the output).
    assert jnp.allclose(out, ref, atol=2e-3, rtol=2e-3)

    print("KERNEL_OK")
</pallas_src>

<mosaic_0001>
module attributes {stable_mosaic.version = 11 : i64} {
  func.func @_gat_fused_kernel(%arg0: i32, %arg1: memref<32x8x32xf32, #tpu.memory_space<vmem>>, %arg2: memref<32x8x8xi8, #tpu.memory_space<vmem>>, %arg3: memref<32x32xf32, #tpu.memory_space<vmem>>, %arg4: memref<32x4xf32, #tpu.memory_space<vmem>>, %arg5: memref<32x4xf32, #tpu.memory_space<vmem>>, %arg6: memref<1x32xf32, #tpu.memory_space<vmem>>, %arg7: memref<32x32xf32, #tpu.memory_space<vmem>>, %arg8: memref<1x32xf32, #tpu.memory_space<vmem>>, %arg9: memref<32x8x32xf32, #tpu.memory_space<vmem>>) attributes {dimension_semantics = [#tpu.dimension_semantics<parallel>], iteration_bounds = array<i64: 2>, scalar_prefetch = 0 : i64, scratch_operands = 0 : i64, tpu.core_type = #tpu.core_type<tc>, window_params = [{transform_indices = @transform_0, window_bounds = array<i64: 32, 8, 32>}, {transform_indices = @transform_1, window_bounds = array<i64: 32, 8, 8>}, {pipeline_mode = #tpu.pipeline_mode<synchronous>, transform_indices = @transform_2, window_bounds = array<i64: 32, 32>}, {pipeline_mode = #tpu.pipeline_mode<synchronous>, transform_indices = @transform_3, window_bounds = array<i64: 32, 4>}, {pipeline_mode = #tpu.pipeline_mode<synchronous>, transform_indices = @transform_4, window_bounds = array<i64: 32, 4>}, {pipeline_mode = #tpu.pipeline_mode<synchronous>, transform_indices = @transform_5, window_bounds = array<i64: 1, 32>}, {pipeline_mode = #tpu.pipeline_mode<synchronous>, transform_indices = @transform_6, window_bounds = array<i64: 32, 32>}, {pipeline_mode = #tpu.pipeline_mode<synchronous>, transform_indices = @transform_7, window_bounds = array<i64: 1, 32>}, {transform_indices = @transform_8, window_bounds = array<i64: 32, 8, 32>}]} {
    %c0 = arith.constant 0 : index
    %c0_0 = arith.constant 0 : index
    %c0_1 = arith.constant 0 : index
    %0 = vector.load %arg1[%c0, %c0_0, %c0_1] : memref<32x8x32xf32, #tpu.memory_space<vmem>>, vector<32x8x32xf32>
    %1 = vector.shape_cast %0 : vector<32x8x32xf32> to vector<256x32xf32>
    %c0_2 = arith.constant 0 : index
    %c0_3 = arith.constant 0 : index
    %2 = vector.load %arg3[%c0_2, %c0_3] : memref<32x32xf32, #tpu.memory_space<vmem>>, vector<32x32xf32>
    %cst = arith.constant dense<0.000000e+00> : vector<256x32xf32>
    %3 = tpu.matmul %1, %2, %cst {dimension_numbers = #tpu.dot_dimension_numbers<[1], [0], [0], [1], [0, 0, 1, 1], [], []>} : vector<256x32xf32>, vector<32x32xf32>, vector<256x32xf32> -> vector<256x32xf32>
    %4 = math.tanh %3 : vector<256x32xf32>
    %c0_4 = arith.constant 0 : index
    %c0_5 = arith.constant 0 : index
    %5 = vector.load %arg4[%c0_4, %c0_5] : memref<32x4xf32, #tpu.memory_space<vmem>>, vector<32x4xf32>
    %cst_6 = arith.constant dense<0.000000e+00> : vector<256x4xf32>
    %6 = tpu.matmul %4, %5, %cst_6 {dimension_numbers = #tpu.dot_dimension_numbers<[1], [0], [0], [1], [0, 0, 1, 1], [], []>} : vector<256x32xf32>, vector<32x4xf32>, vector<256x4xf32> -> vector<256x4xf32>
    %c0_7 = arith.constant 0 : index
    %c0_8 = arith.constant 0 : index
    %7 = vector.load %arg5[%c0_7, %c0_8] : memref<32x4xf32, #tpu.memory_space<vmem>>, vector<32x4xf32>
    %cst_9 = arith.constant dense<0.000000e+00> : vector<256x4xf32>
    %8 = tpu.matmul %4, %7, %cst_9 {dimension_numbers = #tpu.dot_dimension_numbers<[1], [0], [0], [1], [0, 0, 1, 1], [], []>} : vector<256x32xf32>, vector<32x4xf32>, vector<256x4xf32> -> vector<256x4xf32>
    %9 = vector.shape_cast %6 : vector<256x4xf32> to vector<32x8x4xf32>
    %10 = vector.shape_cast %8 : vector<256x4xf32> to vector<32x8x4xf32>
    %11 = tpu.transpose %10, [0, 2, 1] : vector<32x8x4xf32> -> vector<32x4x8xf32>
    %12 = vector.shape_cast %3 : vector<256x32xf32> to vector<32x8x32xf32>
    %c0_10 = arith.constant 0 : index
    %c0_11 = arith.constant 0 : index
    %c0_12 = arith.constant 0 : index
    %13 = vector.load %arg2[%c0_10, %c0_11, %c0_12] : memref<32x8x8xi8, #tpu.memory_space<vmem>>, vector<32x8x8xi8>
    %14 = arith.sitofp %13 : vector<32x8x8xi8> to vector<32x8x8xf32>
    %cst_13 = arith.constant 5.000000e-01 : f32
    %15 = vector.broadcast %cst_13 : f32 to vector<32x8x8xf32>
    %16 = arith.cmpf ogt, %14, %15 : vector<32x8x8xf32>
    %17 = vector.extract_strided_slice %9 {offsets = [0, 0, 0], sizes = [32, 8, 1], strides = [1, 1, 1]} : vector<32x8x4xf32> to vector<32x8x1xf32>
    %18 = vector.extract_strided_slice %11 {offsets = [0, 0, 0], sizes = [32, 1, 8], strides = [1, 1, 1]} : vector<32x4x8xf32> to vector<32x1x8xf32>
    %19 = vector.broadcast %17 : vector<32x8x1xf32> to vector<32x8x8xf32>
    %20 = vector.broadcast %18 : vector<32x1x8xf32> to vector<32x8x8xf32>
    %21 = arith.addf %19, %20 : vector<32x8x8xf32>
    %cst_14 = arith.constant 0.000000e+00 : f32
    %22 = vector.broadcast %cst_14 : f32 to vector<32x8x8xf32>
    %23 = arith.cmpf ogt, %21, %22 : vector<32x8x8xf32>
    %cst_15 = arith.constant 2.000000e-01 : f32
    %24 = vector.broadcast %cst_15 : f32 to vector<32x8x8xf32>
    %25 = arith.mulf %24, %21 : vector<32x8x8xf32>
    %26 = arith.select %23, %21, %25 : vector<32x8x8xi1>, vector<32x8x8xf32>
    %cst_16 = arith.constant -9.990000e+02 : f32
    %27 = vector.broadcast %cst_16 : f32 to vector<32x8x8xf32>
    %28 = arith.select %16, %26, %27 : vector<32x8x8xi1>, vector<32x8x8xf32>
    %cst_17 = arith.constant dense<0xFF800000> : vector<32x8xf32>
    %29 = vector.multi_reduction <maximumf>, %28, %cst_17 [2] : vector<32x8x8xf32> to vector<32x8xf32>
    %30 = vector.shape_cast %29 : vector<32x8xf32> to vector<32x8x1xf32>
    %31 = vector.broadcast %30 : vector<32x8x1xf32> to vector<32x8x8xf32>
    %32 = arith.subf %28, %31 : vector<32x8x8xf32>
    %33 = math.exp %32 : vector<32x8x8xf32>
    %cst_18 = arith.constant dense<0.000000e+00> : vector<32x8xf32>
    %34 = vector.multi_reduction <add>, %33, %cst_18 [2] : vector<32x8x8xf32> to vector<32x8xf32>
    %35 = vector.shape_cast %34 : vector<32x8xf32> to vector<32x8x1xf32>
    %36 = tpu.reciprocal %35 {approx = true} : vector<32x8x1xf32> -> vector<32x8x1xf32>
    %37 = vector.broadcast %36 : vector<32x8x1xf32> to vector<32x8x8xf32>
    %38 = arith.mulf %33, %37 : vector<32x8x8xf32>
    %39 = vector.extract_strided_slice %12 {offsets = [0, 0, 0], sizes = [32, 8, 8], strides = [1, 1, 1]} : vector<32x8x32xf32> to vector<32x8x8xf32>
    "tpu.trace_start"() <{level = 10 : i32, message = "bij,bjo->bio"}> : () -> ()
    %cst_19 = arith.constant dense<0.000000e+00> : vector<32x8x8xf32>
    %40 = tpu.matmul %38, %39, %cst_19 {dimension_numbers = #tpu.dot_dimension_numbers<[2], [1], [1], [2], [0, 0, 0, 1, 1, 2], [0], [0]>} : vector<32x8x8xf32>, vector<32x8x8xf32>, vector<32x8x8xf32> -> vector<32x8x8xf32>
    "tpu.trace_stop"() : () -> ()
    %41 = vector.extract_strided_slice %9 {offsets = [0, 0, 1], sizes = [32, 8, 1], strides = [1, 1, 1]} : vector<32x8x4xf32> to vector<32x8x1xf32>
    %42 = vector.extract_strided_slice %11 {offsets = [0, 1, 0], sizes = [32, 1, 8], strides = [1, 1, 1]} : vector<32x4x8xf32> to vector<32x1x8xf32>
    %43 = vector.broadcast %41 : vector<32x8x1xf32> to vector<32x8x8xf32>
    %44 = vector.broadcast %42 : vector<32x1x8xf32> to vector<32x8x8xf32>
    %45 = arith.addf %43, %44 : vector<32x8x8xf32>
    %cst_20 = arith.constant 0.000000e+00 : f32
    %46 = vector.broadcast %cst_20 : f32 to vector<32x8x8xf32>
    %47 = arith.cmpf ogt, %45, %46 : vector<32x8x8xf32>
    %cst_21 = arith.constant 2.000000e-01 : f32
    %48 = vector.broadcast %cst_21 : f32 to vector<32x8x8xf32>
    %49 = arith.mulf %48, %45 : vector<32x8x8xf32>
    %50 = arith.select %47, %45, %49 : vector<32x8x8xi1>, vector<32x8x8xf32>
    %cst_22 = arith.constant -9.990000e+02 : f32
    %51 = vector.broadcast %cst_22 : f32 to vector<32x8x8xf32>
    %52 = arith.select %16, %50, %51 : vector<32x8x8xi1>, vector<32x8x8xf32>
    %cst_23 = arith.constant dense<0xFF800000> : vector<32x8xf32>
    %53 = vector.multi_reduction <maximumf>, %52, %cst_23 [2] : vector<32x8x8xf32> to vector<32x8xf32>
    %54 = vector.shape_cast %53 : vector<32x8xf32> to vector<32x8x1xf32>
    %55 = vector.broadcast %54 : vector<32x8x1xf32> to vector<32x8x8xf32>
    %56 = arith.subf %52, %55 : vector<32x8x8xf32>
    %57 = math.exp %56 : vector<32x8x8xf32>
    %cst_24 = arith.constant dense<0.000000e+00> : vector<32x8xf32>
    %58 = vector.multi_reduction <add>, %57, %cst_24 [2] : vector<32x8x8xf32> to vector<32x8xf32>
    %59 = vector.shape_cast %58 : vector<32x8xf32> to vector<32x8x1xf32>
    %60 = tpu.reciprocal %59 {approx = true} : vector<32x8x1xf32> -> vector<32x8x1xf32>
    %61 = vector.broadcast %60 : vector<32x8x1xf32> to vector<32x8x8xf32>
    %62 = arith.mulf %57, %61 : vector<32x8x8xf32>
    %63 = vector.extract_strided_slice %12 {offsets = [0, 0, 8], sizes = [32, 8, 8], strides = [1, 1, 1]} : vector<32x8x32xf32> to vector<32x8x8xf32>
    "tpu.trace_start"() <{level = 10 : i32, message = "bij,bjo->bio"}> : () -> ()
    %cst_25 = arith.constant dense<0.000000e+00> : vector<32x8x8xf32>
    %64 = tpu.matmul %62, %63, %cst_25 {dimension_numbers = #tpu.dot_dimension_numbers<[2], [1], [1], [2], [0, 0, 0, 1, 1, 2], [0], [0]>} : vector<32x8x8xf32>, vector<32x8x8xf32>, vector<32x8x8xf32> -> vector<32x8x8xf32>
    "tpu.trace_stop"() : () -> ()
    %65 = vector.extract_strided_slice %9 {offsets = [0, 0, 2], sizes = [32, 8, 1], strides = [1, 1, 1]} : vector<32x8x4xf32> to vector<32x8x1xf32>
    %66 = vector.extract_strided_slice %11 {offsets = [0, 2, 0], sizes = [32, 1, 8], strides = [1, 1, 1]} : vector<32x4x8xf32> to vector<32x1x8xf32>
    %67 = vector.broadcast %65 : vector<32x8x1xf32> to vector<32x8x8xf32>
    %68 = vector.broadcast %66 : vector<32x1x8xf32> to vector<32x8x8xf32>
    %69 = arith.addf %67, %68 : vector<32x8x8xf32>
    %cst_26 = arith.constant 0.000000e+00 : f32
    %70 = vector.broadcast %cst_26 : f32 to vector<32x8x8xf32>
    %71 = arith.cmpf ogt, %69, %70 : vector<32x8x8xf32>
    %cst_27 = arith.constant 2.000000e-01 : f32
    %72 = vector.broadcast %cst_27 : f32 to vector<32x8x8xf32>
    %73 = arith.mulf %72, %69 : vector<32x8x8xf32>
    %74 = arith.select %71, %69, %73 : vector<32x8x8xi1>, vector<32x8x8xf32>
    %cst_28 = arith.constant -9.990000e+02 : f32
    %75 = vector.broadcast %cst_28 : f32 to vector<32x8x8xf32>
    %76 = arith.select %16, %74, %75 : vector<32x8x8xi1>, vector<32x8x8xf32>
    %cst_29 = arith.constant dense<0xFF800000> : vector<32x8xf32>
    %77 = vector.multi_reduction <maximumf>, %76, %cst_29 [2] : vector<32x8x8xf32> to vector<32x8xf32>
    %78 = vector.shape_cast %77 : vector<32x8xf32> to vector<32x8x1xf32>
    %79 = vector.broadcast %78 : vector<32x8x1xf32> to vector<32x8x8xf32>
    %80 = arith.subf %76, %79 : vector<32x8x8xf32>
    %81 = math.exp %80 : vector<32x8x8xf32>
    %cst_30 = arith.constant dense<0.000000e+00> : vector<32x8xf32>
    %82 = vector.multi_reduction <add>, %81, %cst_30 [2] : vector<32x8x8xf32> to vector<32x8xf32>
    %83 = vector.shape_cast %82 : vector<32x8xf32> to vector<32x8x1xf32>
    %84 = tpu.reciprocal %83 {approx = true} : vector<32x8x1xf32> -> vector<32x8x1xf32>
    %85 = vector.broadcast %84 : vector<32x8x1xf32> to vector<32x8x8xf32>
    %86 = arith.mulf %81, %85 : vector<32x8x8xf32>
    %87 = vector.extract_strided_slice %12 {offsets = [0, 0, 16], sizes = [32, 8, 8], strides = [1, 1, 1]} : vector<32x8x32xf32> to vector<32x8x8xf32>
    "tpu.trace_start"() <{level = 10 : i32, message = "bij,bjo->bio"}> : () -> ()
    %cst_31 = arith.constant dense<0.000000e+00> : vector<32x8x8xf32>
    %88 = tpu.matmul %86, %87, %cst_31 {dimension_numbers = #tpu.dot_dimension_numbers<[2], [1], [1], [2], [0, 0, 0, 1, 1, 2], [0], [0]>} : vector<32x8x8xf32>, vector<32x8x8xf32>, vector<32x8x8xf32> -> vector<32x8x8xf32>
    "tpu.trace_stop"() : () -> ()
    %89 = vector.extract_strided_slice %9 {offsets = [0, 0, 3], sizes = [32, 8, 1], strides = [1, 1, 1]} : vector<32x8x4xf32> to vector<32x8x1xf32>
    %90 = vector.extract_strided_slice %11 {offsets = [0, 3, 0], sizes = [32, 1, 8], strides = [1, 1, 1]} : vector<32x4x8xf32> to vector<32x1x8xf32>
    %91 = vector.broadcast %89 : vector<32x8x1xf32> to vector<32x8x8xf32>
    %92 = vector.broadcast %90 : vector<32x1x8xf32> to vector<32x8x8xf32>
    %93 = arith.addf %91, %92 : vector<32x8x8xf32>
    %cst_32 = arith.constant 0.000000e+00 : f32
    %94 = vector.broadcast %cst_32 : f32 to vector<32x8x8xf32>
    %95 = arith.cmpf ogt, %93, %94 : vector<32x8x8xf32>
    %cst_33 = arith.constant 2.000000e-01 : f32
    %96 = vector.broadcast %cst_33 : f32 to vector<32x8x8xf32>
    %97 = arith.mulf %96, %93 : vector<32x8x8xf32>
    %98 = arith.select %95, %93, %97 : vector<32x8x8xi1>, vector<32x8x8xf32>
    %cst_34 = arith.constant -9.990000e+02 : f32
    %99 = vector.broadcast %cst_34 : f32 to vector<32x8x8xf32>
    %100 = arith.select %16, %98, %99 : vector<32x8x8xi1>, vector<32x8x8xf32>
    %cst_35 = arith.constant dense<0xFF800000> : vector<32x8xf32>
    %101 = vector.multi_reduction <maximumf>, %100, %cst_35 [2] : vector<32x8x8xf32> to vector<32x8xf32>
    %102 = vector.shape_cast %101 : vector<32x8xf32> to vector<32x8x1xf32>
    %103 = vector.broadcast %102 : vector<32x8x1xf32> to vector<32x8x8xf32>
    %104 = arith.subf %100, %103 : vector<32x8x8xf32>
    %105 = math.exp %104 : vector<32x8x8xf32>
    %cst_36 = arith.constant dense<0.000000e+00> : vector<32x8xf32>
    %106 = vector.multi_reduction <add>, %105, %cst_36 [2] : vector<32x8x8xf32> to vector<32x8xf32>
    %107 = vector.shape_cast %106 : vector<32x8xf32> to vector<32x8x1xf32>
    %108 = tpu.reciprocal %107 {approx = true} : vector<32x8x1xf32> -> vector<32x8x1xf32>
    %109 = vector.broadcast %108 : vector<32x8x1xf32> to vector<32x8x8xf32>
    %110 = arith.mulf %105, %109 : vector<32x8x8xf32>
    %111 = vector.extract_strided_slice %12 {offsets = [0, 0, 24], sizes = [32, 8, 8], strides = [1, 1, 1]} : vector<32x8x32xf32> to vector<32x8x8xf32>
    "tpu.trace_start"() <{level = 10 : i32, message = "bij,bjo->bio"}> : () -> ()
    %cst_37 = arith.constant dense<0.000000e+00> : vector<32x8x8xf32>
    %112 = tpu.matmul %110, %111, %cst_37 {dimension_numbers = #tpu.dot_dimension_numbers<[2], [1], [1], [2], [0, 0, 0, 1, 1, 2], [0], [0]>} : vector<32x8x8xf32>, vector<32x8x8xf32>, vector<32x8x8xf32> -> vector<32x8x8xf32>
    "tpu.trace_stop"() : () -> ()
    %113 = tpu.concatenate %40, %64, %88, %112 in 2 : vector<32x8x8xf32>, vector<32x8x8xf32>, vector<32x8x8xf32>, vector<32x8x8xf32> -> vector<32x8x32xf32>
    %c0_38 = arith.constant 0 : index
    %c0_39 = arith.constant 0 : index
    %114 = vector.load %arg6[%c0_38, %c0_39] : memref<1x32xf32, #tpu.memory_space<vmem>>, vector<1x32xf32>
    %115 = vector.shape_cast %114 : vector<1x32xf32> to vector<1x1x32xf32>
    %116 = vector.broadcast %115 : vector<1x1x32xf32> to vector<32x8x32xf32>
    %117 = arith.addf %113, %116 : vector<32x8x32xf32>
    %118 = vector.shape_cast %117 : vector<32x8x32xf32> to vector<256x32xf32>
    %cst_40 = arith.constant 0.000000e+00 : f32
    %119 = vector.broadcast %cst_40 : f32 to vector<256x32xf32>
    %120 = arith.cmpf ogt, %118, %119 : vector<256x32xf32>
    %cst_41 = arith.constant 0.000000e+00 : f32
    %121 = vector.broadcast %cst_41 : f32 to vector<256x32xf32>
    %122 = arith.minimumf %118, %121 : vector<256x32xf32>
    %123 = math.exp %122 : vector<256x32xf32>
    %cst_42 = arith.constant 1.000000e+00 : f32
    %124 = vector.broadcast %cst_42 : f32 to vector<256x32xf32>
    %125 = arith.subf %123, %124 : vector<256x32xf32>
    %126 = arith.select %120, %118, %125 : vector<256x32xi1>, vector<256x32xf32>
    %c0_43 = arith.constant 0 : index
    %c0_44 = arith.constant 0 : index
    %127 = vector.load %arg7[%c0_43, %c0_44] : memref<32x32xf32, #tpu.memory_space<vmem>>, vector<32x32xf32>
    %cst_45 = arith.constant dense<0.000000e+00> : vector<256x32xf32>
    %128 = tpu.matmul %1, %127, %cst_45 {dimension_numbers = #tpu.dot_dimension_numbers<[1], [0], [0], [1], [0, 0, 1, 1], [], []>} : vector<256x32xf32>, vector<32x32xf32>, vector<256x32xf32> -> vector<256x32xf32>
    %c0_46 = arith.constant 0 : index
    %c0_47 = arith.constant 0 : index
    %129 = vector.load %arg8[%c0_46, %c0_47] : memref<1x32xf32, #tpu.memory_space<vmem>>, vector<1x32xf32>
    %130 = vector.broadcast %129 : vector<1x32xf32> to vector<256x32xf32>
    %131 = arith.addf %128, %130 : vector<256x32xf32>
    %132 = arith.negf %131 : vector<256x32xf32>
    %133 = math.exp %132 : vector<256x32xf32>
    %cst_48 = arith.constant 1.000000e+00 : f32
    %134 = vector.broadcast %cst_48 : f32 to vector<256x32xf32>
    %135 = arith.addf %134, %133 : vector<256x32xf32>
    %136 = arith.divf %134, %135 : vector<256x32xf32>
    %137 = arith.mulf %136, %126 : vector<256x32xf32>
    %cst_49 = arith.constant 1.000000e+00 : f32
    %138 = vector.broadcast %cst_49 : f32 to vector<256x32xf32>
    %139 = arith.subf %138, %136 : vector<256x32xf32>
    %140 = arith.mulf %139, %1 : vector<256x32xf32>
    %141 = arith.addf %137, %140 : vector<256x32xf32>
    %142 = vector.shape_cast %141 : vector<256x32xf32> to vector<32x8x32xf32>
    %c0_50 = arith.constant 0 : index
    %c0_51 = arith.constant 0 : index
    %c0_52 = arith.constant 0 : index
    %143 = vector.load %arg9[%c0_50, %c0_51, %c0_52] : memref<32x8x32xf32, #tpu.memory_space<vmem>>, vector<32x8x32xf32>
    tpu.vector_store %arg9[%c0_50, %c0_51, %c0_52], %142 {strides = array<i32>} : memref<32x8x32xf32, #tpu.memory_space<vmem>>, vector<32x8x32xf32>,
    return
  }
  func.func @transform_0(%arg0: i32) -> (i32, i32, i32) {
    %c0_i32 = arith.constant 0 : i32
    %c0_i32_0 = arith.constant 0 : i32
    %c0_i32_1 = arith.constant 0 : i32
    return %arg0, %c0_i32, %c0_i32_0 : i32, i32, i32
  }
  func.func @transform_1(%arg0: i32) -> (i32, i32, i32) {
    %c0_i32 = arith.constant 0 : i32
    %c0_i32_0 = arith.constant 0 : i32
    %c0_i32_1 = arith.constant 0 : i32
    return %arg0, %c0_i32, %c0_i32_0 : i32, i32, i32
  }
  func.func @transform_2(%arg0: i32) -> (i32, i32) {
    %c0_i32 = arith.constant 0 : i32
    %c0_i32_0 = arith.constant 0 : i32
    %c0_i32_1 = arith.constant 0 : i32
    return %c0_i32, %c0_i32_0 : i32, i32
  }
  func.func @transform_3(%arg0: i32) -> (i32, i32) {
    %c0_i32 = arith.constant 0 : i32
    %c0_i32_0 = arith.constant 0 : i32
    %c0_i32_1 = arith.constant 0 : i32
    return %c0_i32, %c0_i32_0 : i32, i32
  }
  func.func @transform_4(%arg0: i32) -> (i32, i32) {
    %c0_i32 = arith.constant 0 : i32
    %c0_i32_0 = arith.constant 0 : i32
    %c0_i32_1 = arith.constant 0 : i32
    return %c0_i32, %c0_i32_0 : i32, i32
  }
  func.func @transform_5(%arg0: i32) -> (i32, i32) {
    %c0_i32 = arith.constant 0 : i32
    %c0_i32_0 = arith.constant 0 : i32
    %c0_i32_1 = arith.constant 0 : i32
    return %c0_i32, %c0_i32_0 : i32, i32
  }
  func.func @transform_6(%arg0: i32) -> (i32, i32) {
    %c0_i32 = arith.constant 0 : i32
    %c0_i32_0 = arith.constant 0 : i32
    %c0_i32_1 = arith.constant 0 : i32
    return %c0_i32, %c0_i32_0 : i32, i32
  }
  func.func @transform_7(%arg0: i32) -> (i32, i32) {
    %c0_i32 = arith.constant 0 : i32
    %c0_i32_0 = arith.constant 0 : i32
    %c0_i32_1 = arith.constant 0 : i32
    return %c0_i32, %c0_i32_0 : i32, i32
  }
  func.func @transform_8(%arg0: i32) -> (i32, i32, i32) {
    %c0_i32 = arith.constant 0 : i32
    %c0_i32_0 = arith.constant 0 : i32
    %c0_i32_1 = arith.constant 0 : i32
    return %arg0, %c0_i32, %c0_i32_0 : i32, i32, i32
  }
}

</mosaic_0001>

<llo_original>
// kernel: tpu_custom_call.1
$region0: #{tpu_custom_call.1}
  #allocation0 [shape = 'u32[]', space=smem, size = 0x4, offset = 0x4, fixed_abs, tag = 'smem constant byte address 0x4 - core index']
  #allocation1 [shape = 'u32[72,128]{1,0:T(1,128)}', space=vmem, size = 0x9000, scoped, tag = 'internal scratch']
  %s0 = inlined_call_operand.vmem [shape: f32[64,8,32], index: 0, kind: input, shape index: {}]
  %s1 = inlined_call_operand.vmem [shape: s8[64,8,8], index: 1, kind: input, shape index: {}]
  %s2 = inlined_call_operand.vmem [shape: f32[32,32], index: 2, kind: input, shape index: {}]
  %s3 = inlined_call_operand.vmem [shape: f32[32,4], index: 3, kind: input, shape index: {}]
  %s4 = inlined_call_operand.vmem [shape: f32[32,4], index: 4, kind: input, shape index: {}]
  %s5 = inlined_call_operand.vmem [shape: f32[1,32], index: 5, kind: input, shape index: {}]
  %s6 = inlined_call_operand.vmem [shape: f32[32,32], index: 6, kind: input, shape index: {}]
  %s7 = inlined_call_operand.vmem [shape: f32[1,32], index: 7, kind: input, shape index: {}]
  %s8 = inlined_call_operand.vmem [shape: f32[64,8,32], index: 8, kind: output, shape index: {}]
  %s9 = sld [smem:[#allocation0]]
  $region65: #{tpu_custom_call.1} parent=0
    _
  %s11 = ssub.s32 1, %s9
  %s12 = scalar_select 0, %s11, %s9
  loop: start=0, step=1, limit=4
  $region2: #{tpu_custom_call.1} parent=0 // loop_pre_header
    _
  $region3: #{tpu_custom_call.1} parent=0 // loop_header
    %s14 = sphi 0, %s18
    %p15 = scmp.ge.s32.totalorder %s14, 4
    %s24 = sphi 0, %s26
    %s27 = sphi 0, %s24
    %s28 = sphi 0, %s27
    %s44 = sphi 0, %s28
    %s50 = sphi 0, %s52
    %s53 = sphi 0, %s50
    %s54 = sphi 0, %s53
    %s70 = sphi 0, %s54
    %s74 = sphi 0, %s74
    %s76 = sphi 0, %s74
    %s77 = sphi 0, %s76
    %s91 = sphi 0, %s77
    %s95 = sphi 0, %s95
    %s97 = sphi 0, %s95
    %s98 = sphi 0, %s97
    %s112 = sphi 0, %s98
    %s116 = sphi 0, %s116
    %s118 = sphi 0, %s116
    %s119 = sphi 0, %s118
    %s133 = sphi 0, %s119
    %s137 = sphi 0, %s137
    %s139 = sphi 0, %s137
    %s140 = sphi 0, %s139
    %s154 = sphi 0, %s140
    %s158 = sphi 0, %s158
    %s160 = sphi 0, %s158
    %s161 = sphi 0, %s160
    %s175 = sphi 0, %s161
    %s179 = sphi 0, %s179
    %s181 = sphi 0, %s179
    %s182 = sphi 0, %s181
    %s196 = sphi 0, %s182
    %s202 = sphi 0, %s204
    %s205 = sphi 0, %s202
    %s206 = sphi 0, %s205
    %s222 = sphi 0, %s206
  $region4: #{tpu_custom_call.1} parent=0 // loop_header_branch
    %17 = sbr.rel (%p15) target = $region8
  $region5: #{tpu_custom_call.1} parent=0 // loop_body
    %s19 = ssub.s32 %s14, 1
    %s20 = ssub.s32 %s14, 2
    %s21 = sadd.s32 %s14, 1
    %s22 = ssub.s32 %s14, %s21
    %p23 = scmp.eq.s32.totalorder %s22, 0
    %s25 = sadd.s32 %s24, 1
    %s26 = scalar_select %p23, %s24, %s25
    %p29 = pneg %p23
    %p30 = scmp.eq.s32.totalorder %s14, 1
    %p31 = por %p29, %p30
    %p32 = scmp.ne.s32.totalorder %s24, %s27
    %p33 = scmp.eq.s32.totalorder %s14, 0
    %p34 = por %p32, %p33
    %p35 = scmp.ne.s32.totalorder %s24, %s27
    %p36 = scmp.eq.s32.totalorder %s19, 1
    %p37 = por %p35, %p36
    %p38 = scmp.ne.s32.totalorder %s27, %s28
    %p39 = scmp.eq.s32.totalorder %s19, 0
    %p40 = por %p38, %p39
    %p41 = scmp.ne.s32.totalorder %s27, %s28
    %p42 = scmp.eq.s32.totalorder %s20, 1
    %p43 = por %p41, %p42
    %p45 = scmp.ne.s32.totalorder %s28, %s44
    %p46 = scmp.eq.s32.totalorder %s20, 0
    %p47 = por %p45, %p46
    %s48 = ssub.s32 %s14, %s21
    %p49 = scmp.eq.s32.totalorder %s48, 0
    %s51 = sadd.s32 %s50, 1
    %s52 = scalar_select %p49, %s50, %s51
    %p55 = pneg %p49
    %p56 = scmp.eq.s32.totalorder %s14, 1
    %p57 = por %p55, %p56
    %p58 = scmp.ne.s32.totalorder %s50, %s53
    %p59 = scmp.eq.s32.totalorder %s14, 0
    %p60 = por %p58, %p59
    %p61 = scmp.ne.s32.totalorder %s50, %s53
    %p62 = scmp.eq.s32.totalorder %s19, 1
    %p63 = por %p61, %p62
    %p64 = scmp.ne.s32.totalorder %s53, %s54
    %p65 = scmp.eq.s32.totalorder %s19, 0
    %p66 = por %p64, %p65
    %p67 = scmp.ne.s32.totalorder %s53, %s54
    %p68 = scmp.eq.s32.totalorder %s20, 1
    %p69 = por %p67, %p68
    %p71 = scmp.ne.s32.totalorder %s54, %s70
    %p72 = scmp.eq.s32.totalorder %s20, 0
    %p73 = por %p71, %p72
    %s75 = sadd.s32 %s74, 1
    %p78 = scmp.eq.s32.totalorder %s14, 1
    %p79 = scmp.ne.s32.totalorder %s74, %s76
    %p80 = scmp.eq.s32.totalorder %s14, 0
    %p81 = por %p79, %p80
    %p82 = scmp.ne.s32.totalorder %s74, %s76
    %p83 = scmp.eq.s32.totalorder %s19, 1
    %p84 = por %p82, %p83
    %p85 = scmp.ne.s32.totalorder %s76, %s77
    %p86 = scmp.eq.s32.totalorder %s19, 0
    %p87 = por %p85, %p86
    %p88 = scmp.ne.s32.totalorder %s76, %s77
    %p89 = scmp.eq.s32.totalorder %s20, 1
    %p90 = por %p88, %p89
    %p92 = scmp.ne.s32.totalorder %s77, %s91
    %p93 = scmp.eq.s32.totalorder %s20, 0
    %p94 = por %p92, %p93
    %s96 = sadd.s32 %s95, 1
    %p99 = scmp.eq.s32.totalorder %s14, 1
    %p100 = scmp.ne.s32.totalorder %s95, %s97
    %p101 = scmp.eq.s32.totalorder %s14, 0
    %p102 = por %p100, %p101
    %p103 = scmp.ne.s32.totalorder %s95, %s97
    %p104 = scmp.eq.s32.totalorder %s19, 1
    %p105 = por %p103, %p104
    %p106 = scmp.ne.s32.totalorder %s97, %s98
    %p107 = scmp.eq.s32.totalorder %s19, 0
    %p108 = por %p106, %p107
    %p109 = scmp.ne.s32.totalorder %s97, %s98
    %p110 = scmp.eq.s32.totalorder %s20, 1
    %p111 = por %p109, %p110
    %p113 = scmp.ne.s32.totalorder %s98, %s112
    %p114 = scmp.eq.s32.totalorder %s20, 0
    %p115 = por %p113, %p114
    %s117 = sadd.s32 %s116, 1
    %p120 = scmp.eq.s32.totalorder %s14, 1
    %p121 = scmp.ne.s32.totalorder %s116, %s118
    %p122 = scmp.eq.s32.totalorder %s14, 0
    %p123 = por %p121, %p122
    %p124 = scmp.ne.s32.totalorder %s116, %s118
    %p125 = scmp.eq.s32.totalorder %s19, 1
    %p126 = por %p124, %p125
    %p127 = scmp.ne.s32.totalorder %s118, %s119
    %p128 = scmp.eq.s32.totalorder %s19, 0
    %p129 = por %p127, %p128
    %p130 = scmp.ne.s32.totalorder %s118, %s119
    %p131 = scmp.eq.s32.totalorder %s20, 1
    %p132 = por %p130, %p131
    %p134 = scmp.ne.s32.totalorder %s119, %s133
    %p135 = scmp.eq.s32.totalorder %s20, 0
    %p136 = por %p134, %p135
    %s138 = sadd.s32 %s137, 1
    %p141 = scmp.eq.s32.totalorder %s14, 1
    %p142 = scmp.ne.s32.totalorder %s137, %s139
    %p143 = scmp.eq.s32.totalorder %s14, 0
    %p144 = por %p142, %p143
    %p145 = scmp.ne.s32.totalorder %s137, %s139
    %p146 = scmp.eq.s32.totalorder %s19, 1
    %p147 = por %p145, %p146
    %p148 = scmp.ne.s32.totalorder %s139, %s140
    %p149 = scmp.eq.s32.totalorder %s19, 0
    %p150 = por %p148, %p149
    %p151 = scmp.ne.s32.totalorder %s139, %s140
    %p152 = scmp.eq.s32.totalorder %s20, 1
    %p153 = por %p151, %p152
    %p155 = scmp.ne.s32.totalorder %s140, %s154
    %p156 = scmp.eq.s32.totalorder %s20, 0
    %p157 = por %p155, %p156
    %s159 = sadd.s32 %s158, 1
    %p162 = scmp.eq.s32.totalorder %s14, 1
    %p163 = scmp.ne.s32.totalorder %s158, %s160
    %p164 = scmp.eq.s32.totalorder %s14, 0
    %p165 = por %p163, %p164
    %p166 = scmp.ne.s32.totalorder %s158, %s160
    %p167 = scmp.eq.s32.totalorder %s19, 1
    %p168 = por %p166, %p167
    %p169 = scmp.ne.s32.totalorder %s160, %s161
    %p170 = scmp.eq.s32.totalorder %s19, 0
    %p171 = por %p169, %p170
    %p172 = scmp.ne.s32.totalorder %s160, %s161
    %p173 = scmp.eq.s32.totalorder %s20, 1
    %p174 = por %p172, %p173
    %p176 = scmp.ne.s32.totalorder %s161, %s175
    %p177 = scmp.eq.s32.totalorder %s20, 0
    %p178 = por %p176, %p177
    %s180 = sadd.s32 %s179, 1
    %p183 = scmp.eq.s32.totalorder %s14, 1
    %p184 = scmp.ne.s32.totalorder %s179, %s181
    %p185 = scmp.eq.s32.totalorder %s14, 0
    %p186 = por %p184, %p185
    %p187 = scmp.ne.s32.totalorder %s179, %s181
    %p188 = scmp.eq.s32.totalorder %s19, 1
    %p189 = por %p187, %p188
    %p190 = scmp.ne.s32.totalorder %s181, %s182
    %p191 = scmp.eq.s32.totalorder %s19, 0
    %p192 = por %p190, %p191
    %p193 = scmp.ne.s32.totalorder %s181, %s182
    %p194 = scmp.eq.s32.totalorder %s20, 1
    %p195 = por %p193, %p194
    %p197 = scmp.ne.s32.totalorder %s182, %s196
    %p198 = scmp.eq.s32.totalorder %s20, 0
    %p199 = por %p197, %p198
    %s200 = ssub.s32 %s14, %s21
    %p201 = scmp.eq.s32.totalorder %s200, 0
    %s203 = sadd.s32 %s202, 1
    %s204 = scalar_select %p201, %s202, %s203
    %p207 = pneg %p201
    %p208 = scmp.eq.s32.totalorder %s14, 1
    %p209 = por %p207, %p208
    %p210 = scmp.ne.s32.totalorder %s202, %s205
    %p211 = scmp.eq.s32.totalorder %s14, 0
    %p212 = por %p210, %p211
    %p213 = scmp.ne.s32.totalorder %s202, %s205
    %p214 = scmp.eq.s32.totalorder %s19, 1
    %p215 = por %p213, %p214
    %p216 = scmp.ne.s32.totalorder %s205, %s206
    %p217 = scmp.eq.s32.totalorder %s19, 0
    %p218 = por %p216, %p217
    %p219 = scmp.ne.s32.totalorder %s205, %s206
    %p220 = scmp.eq.s32.totalorder %s20, 1
    %p221 = por %p219, %p220
    %p223 = scmp.ne.s32.totalorder %s206, %s222
    %p224 = scmp.eq.s32.totalorder %s20, 0
    %p225 = por %p223, %p224
    %p226 = scmp.le.s32.totalorder 1, %s14
    %p227 = scmp.lt.s32.totalorder %s14, 3
    %p228 = pnand %p226, %p227
    %p229 = pneg %p228
    // Predicated region
    $region9: #{tpu_custom_call.1} parent=5 // pred_check
      _
    $region10: #{tpu_custom_call.1} parent=5 // pred_check_branch
      %231 = sbr.rel (%p228) target = $region12
    $region11: #{tpu_custom_call.1} parent=5 // pred_region
      %s232 = ssub.s32 %s14, 1
      // Predicated region
      $region13: #{tpu_custom_call.1} parent=11 // pred_check
        %p233 = pneg %p87
      $region14: #{tpu_custom_call.1} parent=11 // pred_check_branch
        %235 = sbr.rel (%p233) target = $region16
      $region15: #{tpu_custom_call.1} parent=11 // pred_region
        _
      $region16: #{tpu_custom_call.1} parent=11 // pred_fallthru
        _
      // Predicated region
      $region17: #{tpu_custom_call.1} parent=11 // pred_check
        %p236 = pneg %p108
      $region18: #{tpu_custom_call.1} parent=11 // pred_check_branch
        %238 = sbr.rel (%p236) target = $region20
      $region19: #{tpu_custom_call.1} parent=11 // pred_region
        _
      $region20: #{tpu_custom_call.1} parent=11 // pred_fallthru
        _
      // Predicated region
      $region21: #{tpu_custom_call.1} parent=11 // pred_check
        %p239 = pneg %p129
      $region22: #{tpu_custom_call.1} parent=11 // pred_check_branch
        %241 = sbr.rel (%p239) target = $region24
      $region23: #{tpu_custom_call.1} parent=11 // pred_region
        _
      $region24: #{tpu_custom_call.1} parent=11 // pred_fallthru
        _
      // Predicated region
      $region25: #{tpu_custom_call.1} parent=11 // pred_check
        %p242 = pneg %p150
      $region26: #{tpu_custom_call.1} parent=11 // pred_check_branch
        %244 = sbr.rel (%p242) target = $region28
      $region27: #{tpu_custom_call.1} parent=11 // pred_region
        _
      $region28: #{tpu_custom_call.1} parent=11 // pred_fallthru
        _
      // Predicated region
      $region29: #{tpu_custom_call.1} parent=11 // pred_check
        %p245 = pneg %p171
      $region30: #{tpu_custom_call.1} parent=11 // pred_check_branch
        %247 = sbr.rel (%p245) target = $region32
      $region31: #{tpu_custom_call.1} parent=11 // pred_region
        _
      $region32: #{tpu_custom_call.1} parent=11 // pred_fallthru
        _
      // Predicated region
      $region33: #{tpu_custom_call.1} parent=11 // pred_check
        %p248 = pneg %p192
      $region34: #{tpu_custom_call.1} parent=11 // pred_check_branch
        %250 = sbr.rel (%p248) target = $region36
      $region35: #{tpu_custom_call.1} parent=11 // pred_region
        _
      $region36: #{tpu_custom_call.1} parent=11 // pred_fallthru
        _
    $region12: #{tpu_custom_call.1} parent=5 // pred_fallthru
      _
    %p251 = scmp.lt.s32.totalorder %s14, 2
    // Predicated region
    $region37: #{tpu_custom_call.1} parent=5 // pred_check
      %p252 = pneg %p251
    $region38: #{tpu_custom_call.1} parent=5 // pred_check_branch
      %254 = sbr.rel (%p252) target = $region40
    $region39: #{tpu_custom_call.1} parent=5 // pred_region
      // Predicated region
      $region41: #{tpu_custom_call.1} parent=39 // pred_check
        %p255 = pneg %p34
      $region42: #{tpu_custom_call.1} parent=39 // pred_check_branch
        %257 = sbr.rel (%p255) target = $region44
      $region43: #{tpu_custom_call.1} parent=39 // pred_region
        %s258 = smul.u32 32, %s14
        %p259 = scmp.lt.s32.totalorder %s258, 63
        %s260 = scalar_select %p259, %s258, 63
        %s261 = smul.addr %s260, 8
        %s262 = scalar_lea.vmem %s0, %s261
        %s263 = smul.u32 32, %s14
      $region44: #{tpu_custom_call.1} parent=39 // pred_fallthru
        _
      // Predicated region
      $region45: #{tpu_custom_call.1} parent=39 // pred_check
        %p264 = pneg %p60
      $region46: #{tpu_custom_call.1} parent=39 // pred_check_branch
        %266 = sbr.rel (%p264) target = $region48
      $region47: #{tpu_custom_call.1} parent=39 // pred_region
        %s267 = smul.u32 32, %s14
        %p268 = scmp.lt.s32.totalorder %s267, 63
        %s269 = scalar_select %p268, %s267, 63
        %s270 = smul.addr %s269, 2
        %s271 = scalar_lea.vmem %s1, %s270
        %s272 = smul.u32 32, %s14
      $region48: #{tpu_custom_call.1} parent=39 // pred_fallthru
        _
    $region40: #{tpu_custom_call.1} parent=5 // pred_fallthru
      _
    %p273 = scmp.le.s32.totalorder 1, %s14
    %p274 = scmp.lt.s32.totalorder %s14, 3
    %p275 = pnand %p273, %p274
    %p276 = pneg %p275
    // Predicated region
    $region49: #{tpu_custom_call.1} parent=5 // pred_check
      _
    $region50: #{tpu_custom_call.1} parent=5 // pred_check_branch
      %278 = sbr.rel (%p275) target = $region52
    $region51: #{tpu_custom_call.1} parent=5 // pred_region
      %s279 = ssub.s32 %s14, 1
      %s280 = smul.u32 32, %s19
      %p281 = scmp.lt.s32.totalorder %s280, 63
      %s282 = scalar_select %p281, %s280, 63
      %s283 = smul.addr %s282, 8
      %s284 = scalar_lea.vmem %s0, %s283
      %p285 = pneg %p40
      %p286 = pneg %p37
      %s287 = smul.u32 32, %s19
      %p288 = scmp.lt.s32.totalorder %s287, 63
      %s289 = scalar_select %p288, %s287, 63
      %s290 = smul.addr %s289, 2
      %s291 = scalar_lea.vmem %s1, %s290
      %p292 = pneg %p66
      %p293 = pneg %p63
      %p294 = pneg %p87
      %p295 = pneg %p84
      %p296 = pneg %p108
      %p297 = pneg %p105
      %p298 = pneg %p129
      %p299 = pneg %p126
      %p300 = pneg %p150
      %p301 = pneg %p147
      %p302 = pneg %p171
      %p303 = pneg %p168
      %p304 = pneg %p192
      %p305 = pneg %p189
      %p306 = pneg %p218
      %p307 = pneg %p215
      %s308 = smul.u32 32, %s19
      %p309 = scmp.lt.s32.totalorder %s308, 63
      %s310 = scalar_select %p309, %s308, 63
      %s311 = smul.addr %s310, 8
      %s312 = scalar_lea.vmem %s8, %s311
      %s313 = smul.u32 32, %s19
      %p314 = scmp.lt.s32.totalorder %s313, 63
      %s315 = scalar_select %p314, %s313, 63
      %s316 = smul.addr %s315, 8
      %s317 = scalar_lea.vmem %s0, %s316
      %s318 = smul.u32 32, %s19
      %s319 = smul.u32 32, %s19
      %p320 = scmp.lt.s32.totalorder %s319, 63
      %s321 = scalar_select %p320, %s319, 63
      %s322 = smul.addr %s321, 2
      %s323 = scalar_lea.vmem %s1, %s322
      %s324 = smul.u32 32, %s19
      %s325 = smul.u32 32, %s19
      %p326 = scmp.lt.s32.totalorder %s325, 63
      %s327 = scalar_select %p326, %s325, 63
      %s328 = smul.addr %s327, 8
      %s329 = scalar_lea.vmem %s8, %s328
      %s330 = smul.u32 32, %s19
      %v331 = vld [vmem:[%s317] sm:$0xff]
      %v332 = vld [vmem:[%s317 + $0x8] sm:$0xff]
      %v333 = vld [vmem:[%s317 + $0x10] sm:$0xff]
      %v334 = vld [vmem:[%s317 + $0x18] sm:$0xff]
      %v335 = vld [vmem:[%s317 + $0x20] sm:$0xff]
      %v336 = vld [vmem:[%s317 + $0x28] sm:$0xff]
      %v337 = vld [vmem:[%s317 + $0x30] sm:$0xff]
      %v338 = vld [vmem:[%s317 + $0x38] sm:$0xff]
      %v339 = vld [vmem:[%s317 + $0x40] sm:$0xff]
      %v340 = vld [vmem:[%s317 + $0x48] sm:$0xff]
      %v341 = vld [vmem:[%s317 + $0x50] sm:$0xff]
      %v342 = vld [vmem:[%s317 + $0x58] sm:$0xff]
      %v343 = vld [vmem:[%s317 + $0x60] sm:$0xff]
      %v344 = vld [vmem:[%s317 + $0x68] sm:$0xff]
      %v345 = vld [vmem:[%s317 + $0x70] sm:$0xff]
      %v346 = vld [vmem:[%s317 + $0x78] sm:$0xff]
      %v347 = vld [vmem:[%s317 + $0x80] sm:$0xff]
      %v348 = vld [vmem:[%s317 + $0x88] sm:$0xff]
      %v349 = vld [vmem:[%s317 + $0x90] sm:$0xff]
      %v350 = vld [vmem:[%s317 + $0x98] sm:$0xff]
      %v351 = vld [vmem:[%s317 + $0xa0] sm:$0xff]
      %v352 = vld [vmem:[%s317 + $0xa8] sm:$0xff]
      %v353 = vld [vmem:[%s317 + $0xb0] sm:$0xff]
      %v354 = vld [vmem:[%s317 + $0xb8] sm:$0xff]
      %v355 = vld [vmem:[%s317 + $0xc0] sm:$0xff]
      %v356 = vld [vmem:[%s317 + $0xc8] sm:$0xff]
      %v357 = vld [vmem:[%s317 + $0xd0] sm:$0xff]
      %v358 = vld [vmem:[%s317 + $0xd8] sm:$0xff]
      %v359 = vld [vmem:[%s317 + $0xe0] sm:$0xff]
      %v360 = vld [vmem:[%s317 + $0xe8] sm:$0xff]
      %v361 = vld [vmem:[%s317 + $0xf0] sm:$0xff]
      %v362 = vld [vmem:[%s317 + $0xf8] sm:$0xff]
      %v363 = vld [vmem:[%s2] sm:$0xff]
      %v364 = vld [vmem:[%s2 + $0x8] sm:$0xff]
      %v365 = vld [vmem:[%s2 + $0x10] sm:$0xff]
      %v366 = vld [vmem:[%s2 + $0x18] sm:$0xff]
      %vm367 = vcmask 261120
      %v369 = vsel %vm367, %v331, 0
      %v372 = vsel %vm367, %v332, 0
      %v375 = vsel %vm367, %v333, 0
      %v378 = vsel %vm367, %v334, 0
      %v381 = vsel %vm367, %v335, 0
      %v384 = vsel %vm367, %v336, 0
      %v387 = vsel %vm367, %v337, 0
      %v390 = vsel %vm367, %v338, 0
      %v393 = vsel %vm367, %v339, 0
      %v396 = vsel %vm367, %v340, 0
      %v399 = vsel %vm367, %v341, 0
      %v402 = vsel %vm367, %v342, 0
      %v405 = vsel %vm367, %v343, 0
      %v408 = vsel %vm367, %v344, 0
      %v411 = vsel %vm367, %v345, 0
      %v414 = vsel %vm367, %v346, 0
      %v417 = vsel %vm367, %v347, 0
      %v420 = vsel %vm367, %v348, 0
      %v423 = vsel %vm367, %v349, 0
      %v426 = vsel %vm367, %v350, 0
      %v429 = vsel %vm367, %v351, 0
      %v432 = vsel %vm367, %v352, 0
      %v435 = vsel %vm367, %v353, 0
      %v438 = vsel %vm367, %v354, 0
      %v441 = vsel %vm367, %v355, 0
      %v444 = vsel %vm367, %v356, 0
      %v447 = vsel %vm367, %v357, 0
      %v450 = vsel %vm367, %v358, 0
      %v453 = vsel %vm367, %v359, 0
      %v456 = vsel %vm367, %v360, 0
      %v459 = vsel %vm367, %v361, 0
      %v462 = vsel %vm367, %v362, 0
      %464 = vmatpush.msra.mxu0 0.0
      %465 = vmatpush.msra.mxu0 0.0
      %466 = vmatpush.msra.mxu0 0.0
      %467 = vmatpush.msra.mxu0 0.0
      %468 = vmatpush.msra.mxu0 0.0
      %469 = vmatpush.msra.mxu0 0.0
      %470 = vmatpush.msra.mxu0 0.0
      %471 = vmatpush.msra.mxu0 0.0
      %472 = vmatpush.msra.mxu0 0.0
      %473 = vmatpush.msra.mxu0 0.0
      %474 = vmatpush.msra.mxu0 0.0
      %475 = vmatpush.msra.mxu0 0.0
      %476 = vmatpush.msra.mxu0 %v366
      %477 = vmatpush.msra.mxu0 %v365
      %478 = vmatpush.msra.mxu0 %v364
      %479 = vmatpush.msra.mxu0 %v363
      %480 = vmatmul.f32.gmra.mxu0 %v369
      %v481 = vpop.f32.mrf.mxu0
      %v482 = vadd.f32 0.0, %v481
      %483 = vmatmul.f32.gmra.mxu0 %v372
      %v484 = vpop.f32.mrf.mxu0
      %v485 = vadd.f32 0.0, %v484
      %486 = vmatmul.f32.gmra.mxu0 %v375
      %v487 = vpop.f32.mrf.mxu0
      %v488 = vadd.f32 0.0, %v487
      %489 = vmatmul.f32.gmra.mxu0 %v378
      %v490 = vpop.f32.mrf.mxu0
      %v491 = vadd.f32 0.0, %v490
      %492 = vmatmul.f32.gmra.mxu0 %v381
      %v493 = vpop.f32.mrf.mxu0
      %v494 = vadd.f32 0.0, %v493
      %495 = vmatmul.f32.gmra.mxu0 %v384
      %v496 = vpop.f32.mrf.mxu0
      %v497 = vadd.f32 0.0, %v496
      %498 = vmatmul.f32.gmra.mxu0 %v387
      %v499 = vpop.f32.mrf.mxu0
      %v500 = vadd.f32 0.0, %v499
      %501 = vmatmul.f32.gmra.mxu0 %v390
      %v502 = vpop.f32.mrf.mxu0
      %v503 = vadd.f32 0.0, %v502
      %504 = vmatmul.f32.gmra.mxu0 %v393
      %v505 = vpop.f32.mrf.mxu0
      %v506 = vadd.f32 0.0, %v505
      %507 = vmatmul.f32.gmra.mxu0 %v396
      %v508 = vpop.f32.mrf.mxu0
      %v509 = vadd.f32 0.0, %v508
      %510 = vmatmul.f32.gmra.mxu0 %v399
      %v511 = vpop.f32.mrf.mxu0
      %v512 = vadd.f32 0.0, %v511
      %513 = vmatmul.f32.gmra.mxu0 %v402
      %v514 = vpop.f32.mrf.mxu0
      %v515 = vadd.f32 0.0, %v514
      %516 = vmatmul.f32.gmra.mxu0 %v405
      %v517 = vpop.f32.mrf.mxu0
      %v518 = vadd.f32 0.0, %v517
      %519 = vmatmul.f32.gmra.mxu0 %v408
      %v520 = vpop.f32.mrf.mxu0
      %v521 = vadd.f32 0.0, %v520
      %522 = vmatmul.f32.gmra.mxu0 %v411
      %v523 = vpop.f32.mrf.mxu0
      %v524 = vadd.f32 0.0, %v523
      %525 = vmatmul.f32.gmra.mxu0 %v414
      %v526 = vpop.f32.mrf.mxu0
      %v527 = vadd.f32 0.0, %v526
      %528 = vmatmul.f32.gmra.mxu0 %v417
      %v529 = vpop.f32.mrf.mxu0
      %v530 = vadd.f32 0.0, %v529
      %531 = vmatmul.f32.gmra.mxu0 %v420
      %v532 = vpop.f32.mrf.mxu0
      %v533 = vadd.f32 0.0, %v532
      %534 = vmatmul.f32.gmra.mxu0 %v423
      %v535 = vpop.f32.mrf.mxu0
      %v536 = vadd.f32 0.0, %v535
      %537 = vmatmul.f32.gmra.mxu0 %v426
      %v538 = vpop.f32.mrf.mxu0
      %v539 = vadd.f32 0.0, %v538
      %540 = vmatmul.f32.gmra.mxu0 %v429
      %v541 = vpop.f32.mrf.mxu0
      %v542 = vadd.f32 0.0, %v541
      %543 = vmatmul.f32.gmra.mxu0 %v432
      %v544 = vpop.f32.mrf.mxu0
      %v545 = vadd.f32 0.0, %v544
      %546 = vmatmul.f32.gmra.mxu0 %v435
      %v547 = vpop.f32.mrf.mxu0
      %v548 = vadd.f32 0.0, %v547
      %549 = vmatmul.f32.gmra.mxu0 %v438
      %v550 = vpop.f32.mrf.mxu0
      %v551 = vadd.f32 0.0, %v550
      %552 = vmatmul.f32.gmra.mxu0 %v441
      %v553 = vpop.f32.mrf.mxu0
      %v554 = vadd.f32 0.0, %v553
      %555 = vmatmul.f32.gmra.mxu0 %v444
      %v556 = vpop.f32.mrf.mxu0
      %v557 = vadd.f32 0.0, %v556
      %558 = vmatmul.f32.gmra.mxu0 %v447
      %v559 = vpop.f32.mrf.mxu0
      %v560 = vadd.f32 0.0, %v559
      %561 = vmatmul.f32.gmra.mxu0 %v450
      %v562 = vpop.f32.mrf.mxu0
      %v563 = vadd.f32 0.0, %v562
      %564 = vmatmul.f32.gmra.mxu0 %v453
      %v565 = vpop.f32.mrf.mxu0
      %v566 = vadd.f32 0.0, %v565
      %567 = vmatmul.f32.gmra.mxu0 %v456
      %v568 = vpop.f32.mrf.mxu0
      %v569 = vadd.f32 0.0, %v568
      %570 = vmatmul.f32.gmra.mxu0 %v459
      %v571 = vpop.f32.mrf.mxu0
      %v572 = vadd.f32 0.0, %v571
      %573 = vmatmul.f32.gmra.mxu0 %v462
      %v574 = vpop.f32.mrf.mxu0
      %v575 = vadd.f32 0.0, %v574
      %576 = vdwg.mxu0
      %v577 = vtanh.pop %v482
      %v578 = vtanh.pop %v485
      %v579 = vtanh.pop %v488
      %v580 = vtanh.pop %v491
      %v581 = vtanh.pop %v494
      %v582 = vtanh.pop %v497
      %v583 = vtanh.pop %v500
      %v584 = vtanh.pop %v503
      %v585 = vtanh.pop %v506
      %v586 = vtanh.pop %v509
      %v587 = vtanh.pop %v512
      %v588 = vtanh.pop %v515
      %v589 = vtanh.pop %v518
      %v590 = vtanh.pop %v521
      %v591 = vtanh.pop %v524
      %v592 = vtanh.pop %v527
      %v593 = vtanh.pop %v530
      %v594 = vtanh.pop %v533
      %v595 = vtanh.pop %v536
      %v596 = vtanh.pop %v539
      %v597 = vtanh.pop %v542
      %v598 = vtanh.pop %v545
      %v599 = vtanh.pop %v548
      %v600 = vtanh.pop %v551
      %v601 = vtanh.pop %v554
      %v602 = vtanh.pop %v557
      %v603 = vtanh.pop %v560
      %v604 = vtanh.pop %v563
      %v605 = vtanh.pop %v566
      %v606 = vtanh.pop %v569
      %v607 = vtanh.pop %v572
      %v608 = vtanh.pop %v575
      %v609 = vld [vmem:[%s3] sm:$0xff]
      %v610 = vld [vmem:[%s3 + $0x8] sm:$0xff]
      %v611 = vld [vmem:[%s3 + $0x10] sm:$0xff]
      %v612 = vld [vmem:[%s3 + $0x18] sm:$0xff]
      %v614 = vsel %vm367, %v577, 0
      %v617 = vsel %vm367, %v578, 0
      %v620 = vsel %vm367, %v579, 0
      %v623 = vsel %vm367, %v580, 0
      %v626 = vsel %vm367, %v581, 0
      %v629 = vsel %vm367, %v582, 0
      %v632 = vsel %vm367, %v583, 0
      %v635 = vsel %vm367, %v584, 0
      %v638 = vsel %vm367, %v585, 0
      %v641 = vsel %vm367, %v586, 0
      %v644 = vsel %vm367, %v587, 0
      %v647 = vsel %vm367, %v588, 0
      %v650 = vsel %vm367, %v589, 0
      %v653 = vsel %vm367, %v590, 0
      %v656 = vsel %vm367, %v591, 0
      %v659 = vsel %vm367, %v592, 0
      %v662 = vsel %vm367, %v593, 0
      %v665 = vsel %vm367, %v594, 0
      %v668 = vsel %vm367, %v595, 0
      %v671 = vsel %vm367, %v596, 0
      %v674 = vsel %vm367, %v597, 0
      %v677 = vsel %vm367, %v598, 0
      %v680 = vsel %vm367, %v599, 0
      %v683 = vsel %vm367, %v600, 0
      %v686 = vsel %vm367, %v601, 0
      %v689 = vsel %vm367, %v602, 0
      %v692 = vsel %vm367, %v603, 0
      %v695 = vsel %vm367, %v604, 0
      %v698 = vsel %vm367, %v605, 0
      %v701 = vsel %vm367, %v606, 0
      %v704 = vsel %vm367, %v607, 0
      %v707 = vsel %vm367, %v608, 0
      %709 = vmatpush.msra.mxu0 0.0
      %710 = vmatpush.msra.mxu0 0.0
      %711 = vmatpush.msra.mxu0 0.0
      %712 = vmatpush.msra.mxu0 0.0
      %713 = vmatpush.msra.mxu0 0.0
      %714 = vmatpush.msra.mxu0 0.0
      %715 = vmatpush.msra.mxu0 0.0
      %716 = vmatpush.msra.mxu0 0.0
      %717 = vmatpush.msra.mxu0 0.0
      %718 = vmatpush.msra.mxu0 0.0
      %719 = vmatpush.msra.mxu0 0.0
      %720 = vmatpush.msra.mxu0 0.0
      %721 = vmatpush.msra.mxu0 %v612
      %722 = vmatpush.msra.mxu0 %v611
      %723 = vmatpush.msra.mxu0 %v610
      %724 = vmatpush.msra.mxu0 %v609
      %725 = vmatmul.f32.gmra.mxu0 %v614
      %v726 = vpop.f32.mrf.mxu0
      %v727 = vadd.f32 0.0, %v726
      %728 = vmatmul.f32.gmra.mxu0 %v617
      %v729 = vpop.f32.mrf.mxu0
      %v730 = vadd.f32 0.0, %v729
      %731 = vmatmul.f32.gmra.mxu0 %v620
      %v732 = vpop.f32.mrf.mxu0
      %v733 = vadd.f32 0.0, %v732
      %734 = vmatmul.f32.gmra.mxu0 %v623
      %v735 = vpop.f32.mrf.mxu0
      %v736 = vadd.f32 0.0, %v735
      %737 = vmatmul.f32.gmra.mxu0 %v626
      %v738 = vpop.f32.mrf.mxu0
      %v739 = vadd.f32 0.0, %v738
      %740 = vmatmul.f32.gmra.mxu0 %v629
      %v741 = vpop.f32.mrf.mxu0
      %v742 = vadd.f32 0.0, %v741
      %743 = vmatmul.f32.gmra.mxu0 %v632
      %v744 = vpop.f32.mrf.mxu0
      %v745 = vadd.f32 0.0, %v744
      %746 = vmatmul.f32.gmra.mxu0 %v635
      %v747 = vpop.f32.mrf.mxu0
      %v748 = vadd.f32 0.0, %v747
      %749 = vmatmul.f32.gmra.mxu0 %v638
      %v750 = vpop.f32.mrf.mxu0
      %v751 = vadd.f32 0.0, %v750
      %752 = vmatmul.f32.gmra.mxu0 %v641
      %v753 = vpop.f32.mrf.mxu0
      %v754 = vadd.f32 0.0, %v753
      %755 = vmatmul.f32.gmra.mxu0 %v644
      %v756 = vpop.f32.mrf.mxu0
      %v757 = vadd.f32 0.0, %v756
      %758 = vmatmul.f32.gmra.mxu0 %v647
      %v759 = vpop.f32.mrf.mxu0
      %v760 = vadd.f32 0.0, %v759
      %761 = vmatmul.f32.gmra.mxu0 %v650
      %v762 = vpop.f32.mrf.mxu0
      %v763 = vadd.f32 0.0, %v762
      %764 = vmatmul.f32.gmra.mxu0 %v653
      %v765 = vpop.f32.mrf.mxu0
      %v766 = vadd.f32 0.0, %v765
      %767 = vmatmul.f32.gmra.mxu0 %v656
      %v768 = vpop.f32.mrf.mxu0
      %v769 = vadd.f32 0.0, %v768
      %770 = vmatmul.f32.gmra.mxu0 %v659
      %v771 = vpop.f32.mrf.mxu0
      %v772 = vadd.f32 0.0, %v771
      %773 = vmatmul.f32.gmra.mxu0 %v662
      %v774 = vpop.f32.mrf.mxu0
      %v775 = vadd.f32 0.0, %v774
      %776 = vmatmul.f32.gmra.mxu0 %v665
      %v777 = vpop.f32.mrf.mxu0
      %v778 = vadd.f32 0.0, %v777
      %779 = vmatmul.f32.gmra.mxu0 %v668
      %v780 = vpop.f32.mrf.mxu0
      %v781 = vadd.f32 0.0, %v780
      %782 = vmatmul.f32.gmra.mxu0 %v671
      %v783 = vpop.f32.mrf.mxu0
      %v784 = vadd.f32 0.0, %v783
      %785 = vmatmul.f32.gmra.mxu0 %v674
      %v786 = vpop.f32.mrf.mxu0
      %v787 = vadd.f32 0.0, %v786
      %788 = vmatmul.f32.gmra.mxu0 %v677
      %v789 = vpop.f32.mrf.mxu0
      %v790 = vadd.f32 0.0, %v789
      %791 = vmatmul.f32.gmra.mxu0 %v680
      %v792 = vpop.f32.mrf.mxu0
      %v793 = vadd.f32 0.0, %v792
      %794 = vmatmul.f32.gmra.mxu0 %v683
      %v795 = vpop.f32.mrf.mxu0
      %v796 = vadd.f32 0.0, %v795
      %797 = vmatmul.f32.gmra.mxu0 %v686
      %v798 = vpop.f32.mrf.mxu0
      %v799 = vadd.f32 0.0, %v798
      %800 = vmatmul.f32.gmra.mxu0 %v689
      %v801 = vpop.f32.mrf.mxu0
      %v802 = vadd.f32 0.0, %v801
      %803 = vmatmul.f32.gmra.mxu0 %v692
      %v804 = vpop.f32.mrf.mxu0
      %v805 = vadd.f32 0.0, %v804
      %806 = vmatmul.f32.gmra.mxu0 %v695
      %v807 = vpop.f32.mrf.mxu0
      %v808 = vadd.f32 0.0, %v807
      %809 = vmatmul.f32.gmra.mxu0 %v698
      %v810 = vpop.f32.mrf.mxu0
      %v811 = vadd.f32 0.0, %v810
      %812 = vmatmul.f32.gmra.mxu0 %v701
      %v813 = vpop.f32.mrf.mxu0
      %v814 = vadd.f32 0.0, %v813
      %815 = vmatmul.f32.gmra.mxu0 %v704
      %v816 = vpop.f32.mrf.mxu0
      %v817 = vadd.f32 0.0, %v816
      %818 = vmatmul.f32.gmra.mxu0 %v707
      %v819 = vpop.f32.mrf.mxu0
      %v820 = vadd.f32 0.0, %v819
      %821 = vdwg.mxu0
      %v822 = vld [vmem:[%s4] sm:$0xff]
      %v823 = vld [vmem:[%s4 + $0x8] sm:$0xff]
      %v824 = vld [vmem:[%s4 + $0x10] sm:$0xff]
      %v825 = vld [vmem:[%s4 + $0x18] sm:$0xff]
      %826 = vmatpush.msra.mxu0 0.0
      %827 = vmatpush.msra.mxu0 0.0
      %828 = vmatpush.msra.mxu0 0.0
      %829 = vmatpush.msra.mxu0 0.0
      %830 = vmatpush.msra.mxu0 0.0
      %831 = vmatpush.msra.mxu0 0.0
      %832 = vmatpush.msra.mxu0 0.0
      %833 = vmatpush.msra.mxu0 0.0
      %834 = vmatpush.msra.mxu0 0.0
      %835 = vmatpush.msra.mxu0 0.0
      %836 = vmatpush.msra.mxu0 0.0
      %837 = vmatpush.msra.mxu0 0.0
      %838 = vmatpush.msra.mxu0 %v825
      %839 = vmatpush.msra.mxu0 %v824
      %840 = vmatpush.msra.mxu0 %v823
      %841 = vmatpush.msra.mxu0 %v822
      %842 = vmatmul.f32.gmra.mxu0 %v614
      %v843 = vpop.f32.mrf.mxu0
      %v844 = vadd.f32 0.0, %v843
      %845 = vmatmul.f32.gmra.mxu0 %v617
      %v846 = vpop.f32.mrf.mxu0
      %v847 = vadd.f32 0.0, %v846
      %848 = vmatmul.f32.gmra.mxu0 %v620
      %v849 = vpop.f32.mrf.mxu0
      %v850 = vadd.f32 0.0, %v849
      %851 = vmatmul.f32.gmra.mxu0 %v623
      %v852 = vpop.f32.mrf.mxu0
      %v853 = vadd.f32 0.0, %v852
      %854 = vmatmul.f32.gmra.mxu0 %v626
      %v855 = vpop.f32.mrf.mxu0
      %v856 = vadd.f32 0.0, %v855
      %857 = vmatmul.f32.gmra.mxu0 %v629
      %v858 = vpop.f32.mrf.mxu0
      %v859 = vadd.f32 0.0, %v858
      %860 = vmatmul.f32.gmra.mxu0 %v632
      %v861 = vpop.f32.mrf.mxu0
      %v862 = vadd.f32 0.0, %v861
      %863 = vmatmul.f32.gmra.mxu0 %v635
      %v864 = vpop.f32.mrf.mxu0
      %v865 = vadd.f32 0.0, %v864
      %866 = vmatmul.f32.gmra.mxu0 %v638
      %v867 = vpop.f32.mrf.mxu0
      %v868 = vadd.f32 0.0, %v867
      %869 = vmatmul.f32.gmra.mxu0 %v641
      %v870 = vpop.f32.mrf.mxu0
      %v871 = vadd.f32 0.0, %v870
      %872 = vmatmul.f32.gmra.mxu0 %v644
      %v873 = vpop.f32.mrf.mxu0
      %v874 = vadd.f32 0.0, %v873
      %875 = vmatmul.f32.gmra.mxu0 %v647
      %v876 = vpop.f32.mrf.mxu0
      %v877 = vadd.f32 0.0, %v876
      %878 = vmatmul.f32.gmra.mxu0 %v650
      %v879 = vpop.f32.mrf.mxu0
      %v880 = vadd.f32 0.0, %v879
      %881 = vmatmul.f32.gmra.mxu0 %v653
      %v882 = vpop.f32.mrf.mxu0
      %v883 = vadd.f32 0.0, %v882
      %884 = vmatmul.f32.gmra.mxu0 %v656
      %v885 = vpop.f32.mrf.mxu0
      %v886 = vadd.f32 0.0, %v885
      %887 = vmatmul.f32.gmra.mxu0 %v659
      %v888 = vpop.f32.mrf.mxu0
      %v889 = vadd.f32 0.0, %v888
      %890 = vmatmul.f32.gmra.mxu0 %v662
      %v891 = vpop.f32.mrf.mxu0
      %v892 = vadd.f32 0.0, %v891
      %893 = vmatmul.f32.gmra.mxu0 %v665
      %v894 = vpop.f32.mrf.mxu0
      %v895 = vadd.f32 0.0, %v894
      %896 = vmatmul.f32.gmra.mxu0 %v668
      %v897 = vpop.f32.mrf.mxu0
      %v898 = vadd.f32 0.0, %v897
      %899 = vmatmul.f32.gmra.mxu0 %v671
      %v900 = vpop.f32.mrf.mxu0
      %v901 = vadd.f32 0.0, %v900
      %902 = vmatmul.f32.gmra.mxu0 %v674
      %v903 = vpop.f32.mrf.mxu0
      %v904 = vadd.f32 0.0, %v903
      %905 = vmatmul.f32.gmra.mxu0 %v677
      %v906 = vpop.f32.mrf.mxu0
      %v907 = vadd.f32 0.0, %v906
      %908 = vmatmul.f32.gmra.mxu0 %v680
      %v909 = vpop.f32.mrf.mxu0
      %v910 = vadd.f32 0.0, %v909
      %911 = vmatmul.f32.gmra.mxu0 %v683
      %v912 = vpop.f32.mrf.mxu0
      %v913 = vadd.f32 0.0, %v912
      %914 = vmatmul.f32.gmra.mxu0 %v686
      %v915 = vpop.f32.mrf.mxu0
      %v916 = vadd.f32 0.0, %v915
      %917 = vmatmul.f32.gmra.mxu0 %v689
      %v918 = vpop.f32.mrf.mxu0
      %v919 = vadd.f32 0.0, %v918
      %920 = vmatmul.f32.gmra.mxu0 %v692
      %v921 = vpop.f32.mrf.mxu0
      %v922 = vadd.f32 0.0, %v921
      %923 = vmatmul.f32.gmra.mxu0 %v695
      %v924 = vpop.f32.mrf.mxu0
      %v925 = vadd.f32 0.0, %v924
      %926 = vmatmul.f32.gmra.mxu0 %v698
      %v927 = vpop.f32.mrf.mxu0
      %v928 = vadd.f32 0.0, %v927
      %929 = vmatmul.f32.gmra.mxu0 %v701
      %v930 = vpop.f32.mrf.mxu0
      %v931 = vadd.f32 0.0, %v930
      %932 = vmatmul.f32.gmra.mxu0 %v704
      %v933 = vpop.f32.mrf.mxu0
      %v934 = vadd.f32 0.0, %v933
      %935 = vmatmul.f32.gmra.mxu0 %v707
      %v936 = vpop.f32.mrf.mxu0
      %v937 = vadd.f32 0.0, %v936
      %938 = vdwg.mxu0
      %939 = vxpose.xlu0.b32.start [1/16] %v844, 128
      %940 = vxpose.xlu0.b32.cont [2/16] 0.0, 128
      %941 = vxpose.xlu0.b32.cont [3/16] 0.0, 128
      %942 = vxpose.xlu0.b32.cont [4/16] 0.0, 128
      %943 = vxpose.xlu0.b32.cont [5/16] 0.0, 128
      %944 = vxpose.xlu0.b32.cont [6/16] 0.0, 128
      %945 = vxpose.xlu0.b32.cont [7/16] 0.0, 128
      %946 = vxpose.xlu0.b32.cont [8/16] 0.0, 128
      %947 = vxpose.xlu0.b32.cont [9/16] 0.0, 128
      %948 = vxpose.xlu0.b32.cont [10/16] 0.0, 128
      %949 = vxpose.xlu0.b32.cont [11/16] 0.0, 128
      %950 = vxpose.xlu0.b32.cont [12/16] 0.0, 128
      %951 = vxpose.xlu0.b32.cont [13/16] 0.0, 128
      %952 = vxpose.xlu0.b32.cont [14/16] 0.0, 128
      %953 = vxpose.xlu0.b32.cont [15/16] 0.0, 128
      %954 = vxpose.xlu0.b32.end [16/16] 0.0, 128
      %v955 = vpop.trf.xlu0
      %v956 = vpop.trf.xlu0
      %v957 = vpop.trf.xlu0
      %v958 = vpop.trf.xlu0
      %v959 = vpop.trf.xlu0
      %v960 = vpop.trf.xlu0
      %v961 = vpop.trf.xlu0
      %v962 = vpop.trf.xlu0
      %v963 = vpop.trf.xlu0
      %v964 = vpop.trf.xlu0
      %v965 = vpop.trf.xlu0
      %v966 = vpop.trf.xlu0
      %v967 = vpop.trf.xlu0
      %v968 = vpop.trf.xlu0
      %v969 = vpop.trf.xlu0
      %v970 = vpop.trf.xlu0
      %971 = vxpose.xlu0.b32.start [1/16] %v847, 128
      %972 = vxpose.xlu0.b32.cont [2/16] 0.0, 128
      %973 = vxpose.xlu0.b32.cont [3/16] 0.0, 128
      %974 = vxpose.xlu0.b32.cont [4/16] 0.0, 128
      %975 = vxpose.xlu0.b32.cont [5/16] 0.0, 128
      %976 = vxpose.xlu0.b32.cont [6/16] 0.0, 128
      %977 = vxpose.xlu0.b32.cont [7/16] 0.0, 128
      %978 = vxpose.xlu0.b32.cont [8/16] 0.0, 128
      %979 = vxpose.xlu0.b32.cont [9/16] 0.0, 128
      %980 = vxpose.xlu0.b32.cont [10/16] 0.0, 128
      %981 = vxpose.xlu0.b32.cont [11/16] 0.0, 128
      %982 = vxpose.xlu0.b32.cont [12/16] 0.0, 128
      %983 = vxpose.xlu0.b32.cont [13/16] 0.0, 128
      %984 = vxpose.xlu0.b32.cont [14/16] 0.0, 128
      %985 = vxpose.xlu0.b32.cont [15/16] 0.0, 128
      %986 = vxpose.xlu0.b32.end [16/16] 0.0, 128
      %v987 = vpop.trf.xlu0
      %v988 = vpop.trf.xlu0
      %v989 = vpop.trf.xlu0
      %v990 = vpop.trf.xlu0
      %v991 = vpop.trf.xlu0
      %v992 = vpop.trf.xlu0
      %v993 = vpop.trf.xlu0
      %v994 = vpop.trf.xlu0
      %v995 = vpop.trf.xlu0
      %v996 = vpop.trf.xlu0
      %v997 = vpop.trf.xlu0
      %v998 = vpop.trf.xlu0
      %v999 = vpop.trf.xlu0
      %v1000 = vpop.trf.xlu0
      %v1001 = vpop.trf.xlu0
      %v1002 = vpop.trf.xlu0
      %1003 = vxpose.xlu0.b32.start [1/16] %v850, 128
      %1004 = vxpose.xlu0.b32.cont [2/16] 0.0, 128
      %1005 = vxpose.xlu0.b32.cont [3/16] 0.0, 128
      %1006 = vxpose.xlu0.b32.cont [4/16] 0.0, 128
      %1007 = vxpose.xlu0.b32.cont [5/16] 0.0, 128
      %1008 = vxpose.xlu0.b32.cont [6/16] 0.0, 128
      %1009 = vxpose.xlu0.b32.cont [7/16] 0.0, 128
      %1010 = vxpose.xlu0.b32.cont [8/16] 0.0, 128
      %1011 = vxpose.xlu0.b32.cont [9/16] 0.0, 128
      %1012 = vxpose.xlu0.b32.cont [10/16] 0.0, 128
      %1013 = vxpose.xlu0.b32.cont [11/16] 0.0, 128
      %1014 = vxpose.xlu0.b32.cont [12/16] 0.0, 128
      %1015 = vxpose.xlu0.b32.cont [13/16] 0.0, 128
      %1016 = vxpose.xlu0.b32.cont [14/16] 0.0, 128
      %1017 = vxpose.xlu0.b32.cont [15/16] 0.0, 128
      %1018 = vxpose.xlu0.b32.end [16/16] 0.0, 128
      %v1019 = vpop.trf.xlu0
      %v1020 = vpop.trf.xlu0
      %v1021 = vpop.trf.xlu0
      %v1022 = vpop.trf.xlu0
      %v1023 = vpop.trf.xlu0
      %v1024 = vpop.trf.xlu0
      %v1025 = vpop.trf.xlu0
      %v1026 = vpop.trf.xlu0
      %v1027 = vpop.trf.xlu0
      %v1028 = vpop.trf.xlu0
      %v1029 = vpop.trf.xlu0
      %v1030 = vpop.trf.xlu0
      %v1031 = vpop.trf.xlu0
      %v1032 = vpop.trf.xlu0
      %v1033 = vpop.trf.xlu0
      %v1034 = vpop.trf.xlu0
      %1035 = vxpose.xlu0.b32.start [1/16] %v853, 128
      %1036 = vxpose.xlu0.b32.cont [2/16] 0.0, 128
      %1037 = vxpose.xlu0.b32.cont [3/16] 0.0, 128
      %1038 = vxpose.xlu0.b32.cont [4/16] 0.0, 128
      %1039 = vxpose.xlu0.b32.cont [5/16] 0.0, 128
      %1040 = vxpose.xlu0.b32.cont [6/16] 0.0, 128
      %1041 = vxpose.xlu0.b32.cont [7/16] 0.0, 128
      %1042 = vxpose.xlu0.b32.cont [8/16] 0.0, 128
      %1043 = vxpose.xlu0.b32.cont [9/16] 0.0, 128
      %1044 = vxpose.xlu0.b32.cont [10/16] 0.0, 128
      %1045 = vxpose.xlu0.b32.cont [11/16] 0.0, 128
      %1046 = vxpose.xlu0.b32.cont [12/16] 0.0, 128
      %1047 = vxpose.xlu0.b32.cont [13/16] 0.0, 128
      %1048 = vxpose.xlu0.b32.cont [14/16] 0.0, 128
      %1049 = vxpose.xlu0.b32.cont [15/16] 0.0, 128
      %1050 = vxpose.xlu0.b32.end [16/16] 0.0, 128
      %v1051 = vpop.trf.xlu0
      %v1052 = vpop.trf.xlu0
      %v1053 = vpop.trf.xlu0
      %v1054 = vpop.trf.xlu0
      %v1055 = vpop.trf.xlu0
      %v1056 = vpop.trf.xlu0
      %v1057 = vpop.trf.xlu0
      %v1058 = vpop.trf.xlu0
      %v1059 = vpop.trf.xlu0
      %v1060 = vpop.trf.xlu0
      %v1061 = vpop.trf.xlu0
      %v1062 = vpop.trf.xlu0
      %v1063 = vpop.trf.xlu0
      %v1064 = vpop.trf.xlu0
      %v1065 = vpop.trf.xlu0
      %v1066 = vpop.trf.xlu0
      %1067 = vxpose.xlu0.b32.start [1/16] %v856, 128
      %1068 = vxpose.xlu0.b32.cont [2/16] 0.0, 128
      %1069 = vxpose.xlu0.b32.cont [3/16] 0.0, 128
      %1070 = vxpose.xlu0.b32.cont [4/16] 0.0, 128
      %1071 = vxpose.xlu0.b32.cont [5/16] 0.0, 128
      %1072 = vxpose.xlu0.b32.cont [6/16] 0.0, 128
      %1073 = vxpose.xlu0.b32.cont [7/16] 0.0, 128
      %1074 = vxpose.xlu0.b32.cont [8/16] 0.0, 128
      %1075 = vxpose.xlu0.b32.cont [9/16] 0.0, 128
      %1076 = vxpose.xlu0.b32.cont [10/16] 0.0, 128
      %1077 = vxpose.xlu0.b32.cont [11/16] 0.0, 128
      %1078 = vxpose.xlu0.b32.cont [12/16] 0.0, 128
      %1079 = vxpose.xlu0.b32.cont [13/16] 0.0, 128
      %1080 = vxpose.xlu0.b32.cont [14/16] 0.0, 128
      %1081 = vxpose.xlu0.b32.cont [15/16] 0.0, 128
      %1082 = vxpose.xlu0.b32.end [16/16] 0.0, 128
      %v1083 = vpop.trf.xlu0
      %v1084 = vpop.trf.xlu0
      %v1085 = vpop.trf.xlu0
      %v1086 = vpop.trf.xlu0
      %v1087 = vpop.trf.xlu0
      %v1088 = vpop.trf.xlu0
      %v1089 = vpop.trf.xlu0
      %v1090 = vpop.trf.xlu0
      %v1091 = vpop.trf.xlu0
      %v1092 = vpop.trf.xlu0
      %v1093 = vpop.trf.xlu0
      %v1094 = vpop.trf.xlu0
      %v1095 = vpop.trf.xlu0
      %v1096 = vpop.trf.xlu0
      %v1097 = vpop.trf.xlu0
      %v1098 = vpop.trf.xlu0
      %1099 = vxpose.xlu0.b32.start [1/16] %v859, 128
      %1100 = vxpose.xlu0.b32.cont [2/16] 0.0, 128
      %1101 = vxpose.xlu0.b32.cont [3/16] 0.0, 128
      %1102 = vxpose.xlu0.b32.cont [4/16] 0.0, 128
      %1103 = vxpose.xlu0.b32.cont [5/16] 0.0, 128
      %1104 = vxpose.xlu0.b32.cont [6/16] 0.0, 128
      %1105 = vxpose.xlu0.b32.cont [7/16] 0.0, 128
      %1106 = vxpose.xlu0.b32.cont [8/16] 0.0, 128
      %1107 = vxpose.xlu0.b32.cont [9/16] 0.0, 128
      %1108 = vxpose.xlu0.b32.cont [10/16] 0.0, 128
      %1109 = vxpose.xlu0.b32.cont [11/16] 0.0, 128
      %1110 = vxpose.xlu0.b32.cont [12/16] 0.0, 128
      %1111 = vxpose.xlu0.b32.cont [13/16] 0.0, 128
      %1112 = vxpose.xlu0.b32.cont [14/16] 0.0, 128
      %1113 = vxpose.xlu0.b32.cont [15/16] 0.0, 128
      %1114 = vxpose.xlu0.b32.end [16/16] 0.0, 128
      %v1115 = vpop.trf.xlu0
      %v1116 = vpop.trf.xlu0
      %v1117 = vpop.trf.xlu0
      %v1118 = vpop.trf.xlu0
      %v1119 = vpop.trf.xlu0
      %v1120 = vpop.trf.xlu0
      %v1121 = vpop.trf.xlu0
      %v1122 = vpop.trf.xlu0
      %v1123 = vpop.trf.xlu0
      %v1124 = vpop.trf.xlu0
      %v1125 = vpop.trf.xlu0
      %v1126 = vpop.trf.xlu0
      %v1127 = vpop.trf.xlu0
      %v1128 = vpop.trf.xlu0
      %v1129 = vpop.trf.xlu0
      %v1130 = vpop.trf.xlu0
      %1131 = vxpose.xlu0.b32.start [1/16] %v862, 128
      %1132 = vxpose.xlu0.b32.cont [2/16] 0.0, 128
      %1133 = vxpose.xlu0.b32.cont [3/16] 0.0, 128
      %1134 = vxpose.xlu0.b32.cont [4/16] 0.0, 128
      %1135 = vxpose.xlu0.b32.cont [5/16] 0.0, 128
      %1136 = vxpose.xlu0.b32.cont [6/16] 0.0, 128
      %1137 = vxpose.xlu0.b32.cont [7/16] 0.0, 128
      %1138 = vxpose.xlu0.b32.cont [8/16] 0.0, 128
      %1139 = vxpose.xlu0.b32.cont [9/16] 0.0, 128
      %1140 = vxpose.xlu0.b32.cont [10/16] 0.0, 128
      %1141 = vxpose.xlu0.b32.cont [11/16] 0.0, 128
      %1142 = vxpose.xlu0.b32.cont [12/16] 0.0, 128
      %1143 = vxpose.xlu0.b32.cont [13/16] 0.0, 128
      %1144 = vxpose.xlu0.b32.cont [14/16] 0.0, 128
      %1145 = vxpose.xlu0.b32.cont [15/16] 0.0, 128
      %1146 = vxpose.xlu0.b32.end [16/16] 0.0, 128
      %v1147 = vpop.trf.xlu0
      %v1148 = vpop.trf.xlu0
      %v1149 = vpop.trf.xlu0
      %v1150 = vpop.trf.xlu0
      %v1151 = vpop.trf.xlu0
      %v1152 = vpop.trf.xlu0
      %v1153 = vpop.trf.xlu0
      %v1154 = vpop.trf.xlu0
      %v1155 = vpop.trf.xlu0
      %v1156 = vpop.trf.xlu0
      %v1157 = vpop.trf.xlu0
      %v1158 = vpop.trf.xlu0
      %v1159 = vpop.trf.xlu0
      %v1160 = vpop.trf.xlu0
      %v1161 = vpop.trf.xlu0
      %v1162 = vpop.trf.xlu0
      %1163 = vxpose.xlu0.b32.start [1/16] %v865, 128
      %1164 = vxpose.xlu0.b32.cont [2/16] 0.0, 128
      %1165 = vxpose.xlu0.b32.cont [3/16] 0.0, 128
      %1166 = vxpose.xlu0.b32.cont [4/16] 0.0, 128
      %1167 = vxpose.xlu0.b32.cont [5/16] 0.0, 128
      %1168 = vxpose.xlu0.b32.cont [6/16] 0.0, 128
      %1169 = vxpose.xlu0.b32.cont [7/16] 0.0, 128
      %1170 = vxpose.xlu0.b32.cont [8/16] 0.0, 128
      %1171 = vxpose.xlu0.b32.cont [9/16] 0.0, 128
      %1172 = vxpose.xlu0.b32.cont [10/16] 0.0, 128
      %1173 = vxpose.xlu0.b32.cont [11/16] 0.0, 128
      %1174 = vxpose.xlu0.b32.cont [12/16] 0.0, 128
      %1175 = vxpose.xlu0.b32.cont [13/16] 0.0, 128
      %1176 = vxpose.xlu0.b32.cont [14/16] 0.0, 128
      %1177 = vxpose.xlu0.b32.cont [15/16] 0.0, 128
      %1178 = vxpose.xlu0.b32.end [16/16] 0.0, 128
      %v1179 = vpop.trf.xlu0
      %v1180 = vpop.trf.xlu0
      %v1181 = vpop.trf.xlu0
      %v1182 = vpop.trf.xlu0
      %v1183 = vpop.trf.xlu0
      %v1184 = vpop.trf.xlu0
      %v1185 = vpop.trf.xlu0
      %v1186 = vpop.trf.xlu0
      %v1187 = vpop.trf.xlu0
      %v1188 = vpop.trf.xlu0
      %v1189 = vpop.trf.xlu0
      %v1190 = vpop.trf.xlu0
      %v1191 = vpop.trf.xlu0
      %v1192 = vpop.trf.xlu0
      %v1193 = vpop.trf.xlu0
      %v1194 = vpop.trf.xlu0
      %1195 = vxpose.xlu0.b32.start [1/16] %v868, 128
      %1196 = vxpose.xlu0.b32.cont [2/16] 0.0, 128
      %1197 = vxpose.xlu0.b32.cont [3/16] 0.0, 128
      %1198 = vxpose.xlu0.b32.cont [4/16] 0.0, 128
      %1199 = vxpose.xlu0.b32.cont [5/16] 0.0, 128
      %1200 = vxpose.xlu0.b32.cont [6/16] 0.0, 128
      %1201 = vxpose.xlu0.b32.cont [7/16] 0.0, 128
      %1202 = vxpose.xlu0.b32.cont [8/16] 0.0, 128
      %1203 = vxpose.xlu0.b32.cont [9/16] 0.0, 128
      %1204 = vxpose.xlu0.b32.cont [10/16] 0.0, 128
      %1205 = vxpose.xlu0.b32.cont [11/16] 0.0, 128
      %1206 = vxpose.xlu0.b32.cont [12/16] 0.0, 128
      %1207 = vxpose.xlu0.b32.cont [13/16] 0.0, 128
      %1208 = vxpose.xlu0.b32.cont [14/16] 0.0, 128
      %1209 = vxpose.xlu0.b32.cont [15/16] 0.0, 128
      %1210 = vxpose.xlu0.b32.end [16/16] 0.0, 128
      %v1211 = vpop.trf.xlu0
      %v1212 = vpop.trf.xlu0
      %v1213 = vpop.trf.xlu0
      %v1214 = vpop.trf.xlu0
      %v1215 = vpop.trf.xlu0
      %v1216 = vpop.trf.xlu0
      %v1217 = vpop.trf.xlu0
      %v1218 = vpop.trf.xlu0
      %v1219 = vpop.trf.xlu0
      %v1220 = vpop.trf.xlu0
      %v1221 = vpop.trf.xlu0
      %v1222 = vpop.trf.xlu0
      %v1223 = vpop.trf.xlu0
      %v1224 = vpop.trf.xlu0
      %v1225 = vpop.trf.xlu0
      %v1226 = vpop.trf.xlu0
      %1227 = vxpose.xlu0.b32.start [1/16] %v871, 128
      %1228 = vxpose.xlu0.b32.cont [2/16] 0.0, 128
      %1229 = vxpose.xlu0.b32.cont [3/16] 0.0, 128
      %1230 = vxpose.xlu0.b32.cont [4/16] 0.0, 128
      %1231 = vxpose.xlu0.b32.cont [5/16] 0.0, 128
      %1232 = vxpose.xlu0.b32.cont [6/16] 0.0, 128
      %1233 = vxpose.xlu0.b32.cont [7/16] 0.0, 128
      %1234 = vxpose.xlu0.b32.cont [8/16] 0.0, 128
      %1235 = vxpose.xlu0.b32.cont [9/16] 0.0, 128
      %1236 = vxpose.xlu0.b32.cont [10/16] 0.0, 128
      %1237 = vxpose.xlu0.b32.cont [11/16] 0.0, 128
      %1238 = vxpose.xlu0.b32.cont [12/16] 0.0, 128
      %1239 = vxpose.xlu0.b32.cont [13/16] 0.0, 128
      %1240 = vxpose.xlu0.b32.cont [14/16] 0.0, 128
      %1241 = vxpose.xlu0.b32.cont [15/16] 0.0, 128
      %1242 = vxpose.xlu0.b32.end [16/16] 0.0, 128
      %v1243 = vpop.trf.xlu0
      %v1244 = vpop.trf.xlu0
      %v1245 = vpop.trf.xlu0
      %v1246 = vpop.trf.xlu0
      %v1247 = vpop.trf.xlu0
      %v1248 = vpop.trf.xlu0
      %v1249 = vpop.trf.xlu0
      %v1250 = vpop.trf.xlu0
      %v1251 = vpop.trf.xlu0
      %v1252 = vpop.trf.xlu0
      %v1253 = vpop.trf.xlu0
      %v1254 = vpop.trf.xlu0
      %v1255 = vpop.trf.xlu0
      %v1256 = vpop.trf.xlu0
      %v1257 = vpop.trf.xlu0
      %v1258 = vpop.trf.xlu0
      %1259 = vxpose.xlu0.b32.start [1/16] %v874, 128
      %1260 = vxpose.xlu0.b32.cont [2/16] 0.0, 128
      %1261 = vxpose.xlu0.b32.cont [3/16] 0.0, 128
      %1262 = vxpose.xlu0.b32.cont [4/16] 0.0, 128
      %1263 = vxpose.xlu0.b32.cont [5/16] 0.0, 128
      %1264 = vxpose.xlu0.b32.cont [6/16] 0.0, 128
      %1265 = vxpose.xlu0.b32.cont [7/16] 0.0, 128
      %1266 = vxpose.xlu0.b32.cont [8/16] 0.0, 128
      %1267 = vxpose.xlu0.b32.cont [9/16] 0.0, 128
      %1268 = vxpose.xlu0.b32.cont [10/16] 0.0, 128
      %1269 = vxpose.xlu0.b32.cont [11/16] 0.0, 128
      %1270 = vxpose.xlu0.b32.cont [12/16] 0.0, 128
      %1271 = vxpose.xlu0.b32.cont [13/16] 0.0, 128
      %1272 = vxpose.xlu0.b32.cont [14/16] 0.0, 128
      %1273 = vxpose.xlu0.b32.cont [15/16] 0.0, 128
      %1274 = vxpose.xlu0.b32.end [16/16] 0.0, 128
      %v1275 = vpop.trf.xlu0
      %v1276 = vpop.trf.xlu0
      %v1277 = vpop.trf.xlu0
      %v1278 = vpop.trf.xlu0
      %v1279 = vpop.trf.xlu0
      %v1280 = vpop.trf.xlu0
      %v1281 = vpop.trf.xlu0
      %v1282 = vpop.trf.xlu0
      %v1283 = vpop.trf.xlu0
      %v1284 = vpop.trf.xlu0
      %v1285 = vpop.trf.xlu0
      %v1286 = vpop.trf.xlu0
      %v1287 = vpop.trf.xlu0
      %v1288 = vpop.trf.xlu0
      %v1289 = vpop.trf.xlu0
      %v1290 = vpop.trf.xlu0
      %1291 = vxpose.xlu0.b32.start [1/16] %v877, 128
      %1292 = vxpose.xlu0.b32.cont [2/16] 0.0, 128
      %1293 = vxpose.xlu0.b32.cont [3/16] 0.0, 128
      %1294 = vxpose.xlu0.b32.cont [4/16] 0.0, 128
      %1295 = vxpose.xlu0.b32.cont [5/16] 0.0, 128
      %1296 = vxpose.xlu0.b32.cont [6/16] 0.0, 128
      %1297 = vxpose.xlu0.b32.cont [7/16] 0.0, 128
      %1298 = vxpose.xlu0.b32.cont [8/16] 0.0, 128
      %1299 = vxpose.xlu0.b32.cont [9/16] 0.0, 128
      %1300 = vxpose.xlu0.b32.cont [10/16] 0.0, 128
      %1301 = vxpose.xlu0.b32.cont [11/16] 0.0, 128
      %1302 = vxpose.xlu0.b32.cont [12/16] 0.0, 128
      %1303 = vxpose.xlu0.b32.cont [13/16] 0.0, 128
      %1304 = vxpose.xlu0.b32.cont [14/16] 0.0, 128
      %1305 = vxpose.xlu0.b32.cont [15/16] 0.0, 128
      %1306 = vxpose.xlu0.b32.end [16/16] 0.0, 128
      %v1307 = vpop.trf.xlu0
      %v1308 = vpop.trf.xlu0
      %v1309 = vpop.trf.xlu0
      %v1310 = vpop.trf.xlu0
      %v1311 = vpop.trf.xlu0
      %v1312 = vpop.trf.xlu0
      %v1313 = vpop.trf.xlu0
      %v1314 = vpop.trf.xlu0
      %v1315 = vpop.trf.xlu0
      %v1316 = vpop.trf.xlu0
      %v1317 = vpop.trf.xlu0
      %v1318 = vpop.trf.xlu0
      %v1319 = vpop.trf.xlu0
      %v1320 = vpop.trf.xlu0
      %v1321 = vpop.trf.xlu0
      %v1322 = vpop.trf.xlu0
      %1323 = vxpose.xlu0.b32.start [1/16] %v880, 128
      %1324 = vxpose.xlu0.b32.cont [2/16] 0.0, 128
      %1325 = vxpose.xlu0.b32.cont [3/16] 0.0, 128
      %1326 = vxpose.xlu0.b32.cont [4/16] 0.0, 128
      %1327 = vxpose.xlu0.b32.cont [5/16] 0.0, 128
      %1328 = vxpose.xlu0.b32.cont [6/16] 0.0, 128
      %1329 = vxpose.xlu0.b32.cont [7/16] 0.0, 128
      %1330 = vxpose.xlu0.b32.cont [8/16] 0.0, 128
      %1331 = vxpose.xlu0.b32.cont [9/16] 0.0, 128
      %1332 = vxpose.xlu0.b32.cont [10/16] 0.0, 128
      %1333 = vxpose.xlu0.b32.cont [11/16] 0.0, 128
      %1334 = vxpose.xlu0.b32.cont [12/16] 0.0, 128
      %1335 = vxpose.xlu0.b32.cont [13/16] 0.0, 128
      %1336 = vxpose.xlu0.b32.cont [14/16] 0.0, 128
      %1337 = vxpose.xlu0.b32.cont [15/16] 0.0, 128
      %1338 = vxpose.xlu0.b32.end [16/16] 0.0, 128
      %v1339 = vpop.trf.xlu0
      %v1340 = vpop.trf.xlu0
      %v1341 = vpop.trf.xlu0
      %v1342 = vpop.trf.xlu0
      %v1343 = vpop.trf.xlu0
      %v1344 = vpop.trf.xlu0
      %v1345 = vpop.trf.xlu0
      %v1346 = vpop.trf.xlu0
      %v1347 = vpop.trf.xlu0
      %v1348 = vpop.trf.xlu0
      %v1349 = vpop.trf.xlu0
      %v1350 = vpop.trf.xlu0
      %v1351 = vpop.trf.xlu0
      %v1352 = vpop.trf.xlu0
      %v1353 = vpop.trf.xlu0
      %v1354 = vpop.trf.xlu0
      %1355 = vxpose.xlu0.b32.start [1/16] %v883, 128
      %1356 = vxpose.xlu0.b32.cont [2/16] 0.0, 128
      %1357 = vxpose.xlu0.b32.cont [3/16] 0.0, 128
      %1358 = vxpose.xlu0.b32.cont [4/16] 0.0, 128
      %1359 = vxpose.xlu0.b32.cont [5/16] 0.0, 128
      %1360 = vxpose.xlu0.b32.cont [6/16] 0.0, 128
      %1361 = vxpose.xlu0.b32.cont [7/16] 0.0, 128
      %1362 = vxpose.xlu0.b32.cont [8/16] 0.0, 128
      %1363 = vxpose.xlu0.b32.cont [9/16] 0.0, 128
      %1364 = vxpose.xlu0.b32.cont [10/16] 0.0, 128
      %1365 = vxpose.xlu0.b32.cont [11/16] 0.0, 128
      %1366 = vxpose.xlu0.b32.cont [12/16] 0.0, 128
      %1367 = vxpose.xlu0.b32.cont [13/16] 0.0, 128
      %1368 = vxpose.xlu0.b32.cont [14/16] 0.0, 128
      %1369 = vxpose.xlu0.b32.cont [15/16] 0.0, 128
      %1370 = vxpose.xlu0.b32.end [16/16] 0.0, 128
      %v1371 = vpop.trf.xlu0
      %v1372 = vpop.trf.xlu0
      %v1373 = vpop.trf.xlu0
      %v1374 = vpop.trf.xlu0
      %v1375 = vpop.trf.xlu0
      %v1376 = vpop.trf.xlu0
      %v1377 = vpop.trf.xlu0
      %v1378 = vpop.trf.xlu0
      %v1379 = vpop.trf.xlu0
      %v1380 = vpop.trf.xlu0
      %v1381 = vpop.trf.xlu0
      %v1382 = vpop.trf.xlu0
      %v1383 = vpop.trf.xlu0
      %v1384 = vpop.trf.xlu0
      %v1385 = vpop.trf.xlu0
      %v1386 = vpop.trf.xlu0
      %1387 = vxpose.xlu0.b32.start [1/16] %v886, 128
      %1388 = vxpose.xlu0.b32.cont [2/16] 0.0, 128
      %1389 = vxpose.xlu0.b32.cont [3/16] 0.0, 128
      %1390 = vxpose.xlu0.b32.cont [4/16] 0.0, 128
      %1391 = vxpose.xlu0.b32.cont [5/16] 0.0, 128
      %1392 = vxpose.xlu0.b32.cont [6/16] 0.0, 128
      %1393 = vxpose.xlu0.b32.cont [7/16] 0.0, 128
      %1394 = vxpose.xlu0.b32.cont [8/16] 0.0, 128
      %1395 = vxpose.xlu0.b32.cont [9/16] 0.0, 128
      %1396 = vxpose.xlu0.b32.cont [10/16] 0.0, 128
      %1397 = vxpose.xlu0.b32.cont [11/16] 0.0, 128
      %1398 = vxpose.xlu0.b32.cont [12/16] 0.0, 128
      %1399 = vxpose.xlu0.b32.cont [13/16] 0.0, 128
      %1400 = vxpose.xlu0.b32.cont [14/16] 0.0, 128
      %1401 = vxpose.xlu0.b32.cont [15/16] 0.0, 128
      %1402 = vxpose.xlu0.b32.end [16/16] 0.0, 128
      %v1403 = vpop.trf.xlu0
      %v1404 = vpop.trf.xlu0
      %v1405 = vpop.trf.xlu0
      %v1406 = vpop.trf.xlu0
      %v1407 = vpop.trf.xlu0
      %v1408 = vpop.trf.xlu0
      %v1409 = vpop.trf.xlu0
      %v1410 = vpop.trf.xlu0
      %v1411 = vpop.trf.xlu0
      %v1412 = vpop.trf.xlu0
      %v1413 = vpop.trf.xlu0
      %v1414 = vpop.trf.xlu0
      %v1415 = vpop.trf.xlu0
      %v1416 = vpop.trf.xlu0
      %v1417 = vpop.trf.xlu0
      %v1418 = vpop.trf.xlu0
      %1419 = vxpose.xlu0.b32.start [1/16] %v889, 128
      %1420 = vxpose.xlu0.b32.cont [2/16] 0.0, 128
      %1421 = vxpose.xlu0.b32.cont [3/16] 0.0, 128
      %1422 = vxpose.xlu0.b32.cont [4/16] 0.0, 128
      %1423 = vxpose.xlu0.b32.cont [5/16] 0.0, 128
      %1424 = vxpose.xlu0.b32.cont [6/16] 0.0, 128
      %1425 = vxpose.xlu0.b32.cont [7/16] 0.0, 128
      %1426 = vxpose.xlu0.b32.cont [8/16] 0.0, 128
      %1427 = vxpose.xlu0.b32.cont [9/16] 0.0, 128
      %1428 = vxpose.xlu0.b32.cont [10/16] 0.0, 128
      %1429 = vxpose.xlu0.b32.cont [11/16] 0.0, 128
      %1430 = vxpose.xlu0.b32.cont [12/16] 0.0, 128
      %1431 = vxpose.xlu0.b32.cont [13/16] 0.0, 128
      %1432 = vxpose.xlu0.b32.cont [14/16] 0.0, 128
      %1433 = vxpose.xlu0.b32.cont [15/16] 0.0, 128
      %1434 = vxpose.xlu0.b32.end [16/16] 0.0, 128
      %v1435 = vpop.trf.xlu0
      %v1436 = vpop.trf.xlu0
      %v1437 = vpop.trf.xlu0
      %v1438 = vpop.trf.xlu0
      %v1439 = vpop.trf.xlu0
      %v1440 = vpop.trf.xlu0
      %v1441 = vpop.trf.xlu0
      %v1442 = vpop.trf.xlu0
      %v1443 = vpop.trf.xlu0
      %v1444 = vpop.trf.xlu0
      %v1445 = vpop.trf.xlu0
      %v1446 = vpop.trf.xlu0
      %v1447 = vpop.trf.xlu0
      %v1448 = vpop.trf.xlu0
      %v1449 = vpop.trf.xlu0
      %v1450 = vpop.trf.xlu0
      %1451 = vxpose.xlu0.b32.start [1/16] %v892, 128
      %1452 = vxpose.xlu0.b32.cont [2/16] 0.0, 128
      %1453 = vxpose.xlu0.b32.cont [3/16] 0.0, 128
      %1454 = vxpose.xlu0.b32.cont [4/16] 0.0, 128
      %1455 = vxpose.xlu0.b32.cont [5/16] 0.0, 128
      %1456 = vxpose.xlu0.b32.cont [6/16] 0.0, 128
      %1457 = vxpose.xlu0.b32.cont [7/16] 0.0, 128
      %1458 = vxpose.xlu0.b32.cont [8/16] 0.0, 128
      %1459 = vxpose.xlu0.b32.cont [9/16] 0.0, 128
      %1460 = vxpose.xlu0.b32.cont [10/16] 0.0, 128
      %1461 = vxpose.xlu0.b32.cont [11/16] 0.0, 128
      %1462 = vxpose.xlu0.b32.cont [12/16] 0.0, 128
      %1463 = vxpose.xlu0.b32.cont [13/16] 0.0, 128
      %1464 = vxpose.xlu0.b32.cont [14/16] 0.0, 128
      %1465 = vxpose.xlu0.b32.cont [15/16] 0.0, 128
      %1466 = vxpose.xlu0.b32.end [16/16] 0.0, 128
      %v1467 = vpop.trf.xlu0
      %v1468 = vpop.trf.xlu0
      %v1469 = vpop.trf.xlu0
      %v1470 = vpop.trf.xlu0
      %v1471 = vpop.trf.xlu0
      %v1472 = vpop.trf.xlu0
      %v1473 = vpop.trf.xlu0
      %v1474 = vpop.trf.xlu0
      %v1475 = vpop.trf.xlu0
      %v1476 = vpop.trf.xlu0
      %v1477 = vpop.trf.xlu0
      %v1478 = vpop.trf.xlu0
      %v1479 = vpop.trf.xlu0
      %v1480 = vpop.trf.xlu0
      %v1481 = vpop.trf.xlu0
      %v1482 = vpop.trf.xlu0
      %1483 = vxpose.xlu0.b32.start [1/16] %v895, 128
      %1484 = vxpose.xlu0.b32.cont [2/16] 0.0, 128
      %1485 = vxpose.xlu0.b32.cont [3/16] 0.0, 128
      %1486 = vxpose.xlu0.b32.cont [4/16] 0.0, 128
      %1487 = vxpose.xlu0.b32.cont [5/16] 0.0, 128
      %1488 = vxpose.xlu0.b32.cont [6/16] 0.0, 128
      %1489 = vxpose.xlu0.b32.cont [7/16] 0.0, 128
      %1490 = vxpose.xlu0.b32.cont [8/16] 0.0, 128
      %1491 = vxpose.xlu0.b32.cont [9/16] 0.0, 128
      %1492 = vxpose.xlu0.b32.cont [10/16] 0.0, 128
      %1493 = vxpose.xlu0.b32.cont [11/16] 0.0, 128
      %1494 = vxpose.xlu0.b32.cont [12/16] 0.0, 128
      %1495 = vxpose.xlu0.b32.cont [13/16] 0.0, 128
      %1496 = vxpose.xlu0.b32.cont [14/16] 0.0, 128
      %1497 = vxpose.xlu0.b32.cont [15/16] 0.0, 128
      %1498 = vxpose.xlu0.b32.end [16/16] 0.0, 128
      %v1499 = vpop.trf.xlu0
      %v1500 = vpop.trf.xlu0
      %v1501 = vpop.trf.xlu0
      %v1502 = vpop.trf.xlu0
      %v1503 = vpop.trf.xlu0
      %v1504 = vpop.trf.xlu0
      %v1505 = vpop.trf.xlu0
      %v1506 = vpop.trf.xlu0
      %v1507 = vpop.trf.xlu0
      %v1508 = vpop.trf.xlu0
      %v1509 = vpop.trf.xlu0
      %v1510 = vpop.trf.xlu0
      %v1511 = vpop.trf.xlu0
      %v1512 = vpop.trf.xlu0
      %v1513 = vpop.trf.xlu0
      %v1514 = vpop.trf.xlu0
      %1515 = vxpose.xlu0.b32.start [1/16] %v898, 128
      %1516 = vxpose.xlu0.b32.cont [2/16] 0.0, 128
      %1517 = vxpose.xlu0.b32.cont [3/16] 0.0, 128
      %1518 = vxpose.xlu0.b32.cont [4/16] 0.0, 128
      %1519 = vxpose.xlu0.b32.cont [5/16] 0.0, 128
      %1520 = vxpose.xlu0.b32.cont [6/16] 0.0, 128
      %1521 = vxpose.xlu0.b32.cont [7/16] 0.0, 128
      %1522 = vxpose.xlu0.b32.cont [8/16] 0.0, 128
      %1523 = vxpose.xlu0.b32.cont [9/16] 0.0, 128
      %1524 = vxpose.xlu0.b32.cont [10/16] 0.0, 128
      %1525 = vxpose.xlu0.b32.cont [11/16] 0.0, 128
      %1526 = vxpose.xlu0.b32.cont [12/16] 0.0, 128
      %1527 = vxpose.xlu0.b32.cont [13/16] 0.0, 128
      %1528 = vxpose.xlu0.b32.cont [14/16] 0.0, 128
      %1529 = vxpose.xlu0.b32.cont [15/16] 0.0, 128
      %1530 = vxpose.xlu0.b32.end [16/16] 0.0, 128
      %v1531 = vpop.trf.xlu0
      %v1532 = vpop.trf.xlu0
      %v1533 = vpop.trf.xlu0
      %v1534 = vpop.trf.xlu0
      %v1535 = vpop.trf.xlu0
      %v1536 = vpop.trf.xlu0
      %v1537 = vpop.trf.xlu0
      %v1538 = vpop.trf.xlu0
      %v1539 = vpop.trf.xlu0
      %v1540 = vpop.trf.xlu0
      %v1541 = vpop.trf.xlu0
      %v1542 = vpop.trf.xlu0
      %v1543 = vpop.trf.xlu0
      %v1544 = vpop.trf.xlu0
      %v1545 = vpop.trf.xlu0
      %v1546 = vpop.trf.xlu0
      %1547 = vxpose.xlu0.b32.start [1/16] %v901, 128
      %1548 = vxpose.xlu0.b32.cont [2/16] 0.0, 128
      %1549 = vxpose.xlu0.b32.cont [3/16] 0.0, 128
      %1550 = vxpose.xlu0.b32.cont [4/16] 0.0, 128
      %1551 = vxpose.xlu0.b32.cont [5/16] 0.0, 128
      %1552 = vxpose.xlu0.b32.cont [6/16] 0.0, 128
      %1553 = vxpose.xlu0.b32.cont [7/16] 0.0, 128
      %1554 = vxpose.xlu0.b32.cont [8/16] 0.0, 128
      %1555 = vxpose.xlu0.b32.cont [9/16] 0.0, 128
      %1556 = vxpose.xlu0.b32.cont [10/16] 0.0, 128
      %1557 = vxpose.xlu0.b32.cont [11/16] 0.0, 128
      %1558 = vxpose.xlu0.b32.cont [12/16] 0.0, 128
      %1559 = vxpose.xlu0.b32.cont [13/16] 0.0, 128
      %1560 = vxpose.xlu0.b32.cont [14/16] 0.0, 128
      %1561 = vxpose.xlu0.b32.cont [15/16] 0.0, 128
      %1562 = vxpose.xlu0.b32.end [16/16] 0.0, 128
      %v1563 = vpop.trf.xlu0
      %v1564 = vpop.trf.xlu0
      %v1565 = vpop.trf.xlu0
      %v1566 = vpop.trf.xlu0
      %v1567 = vpop.trf.xlu0
      %v1568 = vpop.trf.xlu0
      %v1569 = vpop.trf.xlu0
      %v1570 = vpop.trf.xlu0
      %v1571 = vpop.trf.xlu0
      %v1572 = vpop.trf.xlu0
      %v1573 = vpop.trf.xlu0
      %v1574 = vpop.trf.xlu0
      %v1575 = vpop.trf.xlu0
      %v1576 = vpop.trf.xlu0
      %v1577 = vpop.trf.xlu0
      %v1578 = vpop.trf.xlu0
      %1579 = vxpose.xlu0.b32.start [1/16] %v904, 128
      %1580 = vxpose.xlu0.b32.cont [2/16] 0.0, 128
      %1581 = vxpose.xlu0.b32.cont [3/16] 0.0, 128
      %1582 = vxpose.xlu0.b32.cont [4/16] 0.0, 128
      %1583 = vxpose.xlu0.b32.cont [5/16] 0.0, 128
      %1584 = vxpose.xlu0.b32.cont [6/16] 0.0, 128
      %1585 = vxpose.xlu0.b32.cont [7/16] 0.0, 128
      %1586 = vxpose.xlu0.b32.cont [8/16] 0.0, 128
      %1587 = vxpose.xlu0.b32.cont [9/16] 0.0, 128
      %1588 = vxpose.xlu0.b32.cont [10/16] 0.0, 128
      %1589 = vxpose.xlu0.b32.cont [11/16] 0.0, 128
      %1590 = vxpose.xlu0.b32.cont [12/16] 0.0, 128
      %1591 = vxpose.xlu0.b32.cont [13/16] 0.0, 128
      %1592 = vxpose.xlu0.b32.cont [14/16] 0.0, 128
      %1593 = vxpose.xlu0.b32.cont [15/16] 0.0, 128
      %1594 = vxpose.xlu0.b32.end [16/16] 0.0, 128
      %v1595 = vpop.trf.xlu0
      %v1596 = vpop.trf.xlu0
      %v1597 = vpop.trf.xlu0
      %v1598 = vpop.trf.xlu0
      %v1599 = vpop.trf.xlu0
      %v1600 = vpop.trf.xlu0
      %v1601 = vpop.trf.xlu0
      %v1602 = vpop.trf.xlu0
      %v1603 = vpop.trf.xlu0
      %v1604 = vpop.trf.xlu0
      %v1605 = vpop.trf.xlu0
      %v1606 = vpop.trf.xlu0
      %v1607 = vpop.trf.xlu0
      %v1608 = vpop.trf.xlu0
      %v1609 = vpop.trf.xlu0
      %v1610 = vpop.trf.xlu0
      %1611 = vxpose.xlu0.b32.start [1/16] %v907, 128
      %1612 = vxpose.xlu0.b32.cont [2/16] 0.0, 128
      %1613 = vxpose.xlu0.b32.cont [3/16] 0.0, 128
      %1614 = vxpose.xlu0.b32.cont [4/16] 0.0, 128
      %1615 = vxpose.xlu0.b32.cont [5/16] 0.0, 128
      %1616 = vxpose.xlu0.b32.cont [6/16] 0.0, 128
      %1617 = vxpose.xlu0.b32.cont [7/16] 0.0, 128
      %1618 = vxpose.xlu0.b32.cont [8/16] 0.0, 128
      %1619 = vxpose.xlu0.b32.cont [9/16] 0.0, 128
      %1620 = vxpose.xlu0.b32.cont [10/16] 0.0, 128
      %1621 = vxpose.xlu0.b32.cont [11/16] 0.0, 128
      %1622 = vxpose.xlu0.b32.cont [12/16] 0.0, 128
      %1623 = vxpose.xlu0.b32.cont [13/16] 0.0, 128
      %1624 = vxpose.xlu0.b32.cont [14/16] 0.0, 128
      %1625 = vxpose.xlu0.b32.cont [15/16] 0.0, 128
      %1626 = vxpose.xlu0.b32.end [16/16] 0.0, 128
      %v1627 = vpop.trf.xlu0
      %v1628 = vpop.trf.xlu0
      %v1629 = vpop.trf.xlu0
      %v1630 = vpop.trf.xlu0
      %v1631 = vpop.trf.xlu0
      %v1632 = vpop.trf.xlu0
      %v1633 = vpop.trf.xlu0
      %v1634 = vpop.trf.xlu0
      %v1635 = vpop.trf.xlu0
      %v1636 = vpop.trf.xlu0
      %v1637 = vpop.trf.xlu0
      %v1638 = vpop.trf.xlu0
      %v1639 = vpop.trf.xlu0
      %v1640 = vpop.trf.xlu0
      %v1641 = vpop.trf.xlu0
      %v1642 = vpop.trf.xlu0
      %1643 = vxpose.xlu0.b32.start [1/16] %v910, 128
      %1644 = vxpose.xlu0.b32.cont [2/16] 0.0, 128
      %1645 = vxpose.xlu0.b32.cont [3/16] 0.0, 128
      %1646 = vxpose.xlu0.b32.cont [4/16] 0.0, 128
      %1647 = vxpose.xlu0.b32.cont [5/16] 0.0, 128
      %1648 = vxpose.xlu0.b32.cont [6/16] 0.0, 128
      %1649 = vxpose.xlu0.b32.cont [7/16] 0.0, 128
      %1650 = vxpose.xlu0.b32.cont [8/16] 0.0, 128
      %1651 = vxpose.xlu0.b32.cont [9/16] 0.0, 128
      %1652 = vxpose.xlu0.b32.cont [10/16] 0.0, 128
      %1653 = vxpose.xlu0.b32.cont [11/16] 0.0, 128
      %1654 = vxpose.xlu0.b32.cont [12/16] 0.0, 128
      %1655 = vxpose.xlu0.b32.cont [13/16] 0.0, 128
      %1656 = vxpose.xlu0.b32.cont [14/16] 0.0, 128
      %1657 = vxpose.xlu0.b32.cont [15/16] 0.0, 128
      %1658 = vxpose.xlu0.b32.end [16/16] 0.0, 128
      %v1659 = vpop.trf.xlu0
      %v1660 = vpop.trf.xlu0
      %v1661 = vpop.trf.xlu0
      %v1662 = vpop.trf.xlu0
      %v1663 = vpop.trf.xlu0
      %v1664 = vpop.trf.xlu0
      %v1665 = vpop.trf.xlu0
      %v1666 = vpop.trf.xlu0
      %v1667 = vpop.trf.xlu0
      %v1668 = vpop.trf.xlu0
      %v1669 = vpop.trf.xlu0
      %v1670 = vpop.trf.xlu0
      %v1671 = vpop.trf.xlu0
      %v1672 = vpop.trf.xlu0
      %v1673 = vpop.trf.xlu0
      %v1674 = vpop.trf.xlu0
      %1675 = vxpose.xlu0.b32.start [1/16] %v913, 128
      %1676 = vxpose.xlu0.b32.cont [2/16] 0.0, 128
      %1677 = vxpose.xlu0.b32.cont [3/16] 0.0, 128
      %1678 = vxpose.xlu0.b32.cont [4/16] 0.0, 128
      %1679 = vxpose.xlu0.b32.cont [5/16] 0.0, 128
      %1680 = vxpose.xlu0.b32.cont [6/16] 0.0, 128
      %1681 = vxpose.xlu0.b32.cont [7/16] 0.0, 128
      %1682 = vxpose.xlu0.b32.cont [8/16] 0.0, 128
      %1683 = vxpose.xlu0.b32.cont [9/16] 0.0, 128
      %1684 = vxpose.xlu0.b32.cont [10/16] 0.0, 128
      %1685 = vxpose.xlu0.b32.cont [11/16] 0.0, 128
      %1686 = vxpose.xlu0.b32.cont [12/16] 0.0, 128
      %1687 = vxpose.xlu0.b32.cont [13/16] 0.0, 128
      %1688 = vxpose.xlu0.b32.cont [14/16] 0.0, 128
      %1689 = vxpose.xlu0.b32.cont [15/16] 0.0, 128
      %1690 = vxpose.xlu0.b32.end [16/16] 0.0, 128
      %v1691 = vpop.trf.xlu0
      %v1692 = vpop.trf.xlu0
      %v1693 = vpop.trf.xlu0
      %v1694 = vpop.trf.xlu0
      %v1695 = vpop.trf.xlu0
      %v1696 = vpop.trf.xlu0
      %v1697 = vpop.trf.xlu0
      %v1698 = vpop.trf.xlu0
      %v1699 = vpop.trf.xlu0
      %v1700 = vpop.trf.xlu0
      %v1701 = vpop.trf.xlu0
      %v1702 = vpop.trf.xlu0
      %v1703 = vpop.trf.xlu0
      %v1704 = vpop.trf.xlu0
      %v1705 = vpop.trf.xlu0
      %v1706 = vpop.trf.xlu0
      %1707 = vxpose.xlu0.b32.start [1/16] %v916, 128
      %1708 = vxpose.xlu0.b32.cont [2/16] 0.0, 128
      %1709 = vxpose.xlu0.b32.cont [3/16] 0.0, 128
      %1710 = vxpose.xlu0.b32.cont [4/16] 0.0, 128
      %1711 = vxpose.xlu0.b32.cont [5/16] 0.0, 128
      %1712 = vxpose.xlu0.b32.cont [6/16] 0.0, 128
      %1713 = vxpose.xlu0.b32.cont [7/16] 0.0, 128
      %1714 = vxpose.xlu0.b32.cont [8/16] 0.0, 128
      %1715 = vxpose.xlu0.b32.cont [9/16] 0.0, 128
      %1716 = vxpose.xlu0.b32.cont [10/16] 0.0, 128
      %1717 = vxpose.xlu0.b32.cont [11/16] 0.0, 128
      %1718 = vxpose.xlu0.b32.cont [12/16] 0.0, 128
      %1719 = vxpose.xlu0.b32.cont [13/16] 0.0, 128
      %1720 = vxpose.xlu0.b32.cont [14/16] 0.0, 128
      %1721 = vxpose.xlu0.b32.cont [15/16] 0.0, 128
      %1722 = vxpose.xlu0.b32.end [16/16] 0.0, 128
      %v1723 = vpop.trf.xlu0
      %v1724 = vpop.trf.xlu0
      %v1725 = vpop.trf.xlu0
      %v1726 = vpop.trf.xlu0
      %v1727 = vpop.trf.xlu0
      %v1728 = vpop.trf.xlu0
      %v1729 = vpop.trf.xlu0
      %v1730 = vpop.trf.xlu0
      %v1731 = vpop.trf.xlu0
      %v1732 = vpop.trf.xlu0
      %v1733 = vpop.trf.xlu0
      %v1734 = vpop.trf.xlu0
      %v1735 = vpop.trf.xlu0
      %v1736 = vpop.trf.xlu0
      %v1737 = vpop.trf.xlu0
      %v1738 = vpop.trf.xlu0
      %1739 = vxpose.xlu0.b32.start [1/16] %v919, 128
      %1740 = vxpose.xlu0.b32.cont [2/16] 0.0, 128
      %1741 = vxpose.xlu0.b32.cont [3/16] 0.0, 128
      %1742 = vxpose.xlu0.b32.cont [4/16] 0.0, 128
      %1743 = vxpose.xlu0.b32.cont [5/16] 0.0, 128
      %1744 = vxpose.xlu0.b32.cont [6/16] 0.0, 128
      %1745 = vxpose.xlu0.b32.cont [7/16] 0.0, 128
      %1746 = vxpose.xlu0.b32.cont [8/16] 0.0, 128
      %1747 = vxpose.xlu0.b32.cont [9/16] 0.0, 128
      %1748 = vxpose.xlu0.b32.cont [10/16] 0.0, 128
      %1749 = vxpose.xlu0.b32.cont [11/16] 0.0, 128
      %1750 = vxpose.xlu0.b32.cont [12/16] 0.0, 128
      %1751 = vxpose.xlu0.b32.cont [13/16] 0.0, 128
      %1752 = vxpose.xlu0.b32.cont [14/16] 0.0, 128
      %1753 = vxpose.xlu0.b32.cont [15/16] 0.0, 128
      %1754 = vxpose.xlu0.b32.end [16/16] 0.0, 128
      %v1755 = vpop.trf.xlu0
      %v1756 = vpop.trf.xlu0
      %v1757 = vpop.trf.xlu0
      %v1758 = vpop.trf.xlu0
      %v1759 = vpop.trf.xlu0
      %v1760 = vpop.trf.xlu0
      %v1761 = vpop.trf.xlu0
      %v1762 = vpop.trf.xlu0
      %v1763 = vpop.trf.xlu0
      %v1764 = vpop.trf.xlu0
      %v1765 = vpop.trf.xlu0
      %v1766 = vpop.trf.xlu0
      %v1767 = vpop.trf.xlu0
      %v1768 = vpop.trf.xlu0
      %v1769 = vpop.trf.xlu0
      %v1770 = vpop.trf.xlu0
      %1771 = vxpose.xlu0.b32.start [1/16] %v922, 128
      %1772 = vxpose.xlu0.b32.cont [2/16] 0.0, 128
      %1773 = vxpose.xlu0.b32.cont [3/16] 0.0, 128
      %1774 = vxpose.xlu0.b32.cont [4/16] 0.0, 128
      %1775 = vxpose.xlu0.b32.cont [5/16] 0.0, 128
      %1776 = vxpose.xlu0.b32.cont [6/16] 0.0, 128
      %1777 = vxpose.xlu0.b32.cont [7/16] 0.0, 128
      %1778 = vxpose.xlu0.b32.cont [8/16] 0.0, 128
      %1779 = vxpose.xlu0.b32.cont [9/16] 0.0, 128
      %1780 = vxpose.xlu0.b32.cont [10/16] 0.0, 128
      %1781 = vxpose.xlu0.b32.cont [11/16] 0.0, 128
      %1782 = vxpose.xlu0.b32.cont [12/16] 0.0, 128
      %1783 = vxpose.xlu0.b32.cont [13/16] 0.0, 128
      %1784 = vxpose.xlu0.b32.cont [14/16] 0.0, 128
      %1785 = vxpose.xlu0.b32.cont [15/16] 0.0, 128
      %1786 = vxpose.xlu0.b32.end [16/16] 0.0, 128
      %v1787 = vpop.trf.xlu0
      %v1788 = vpop.trf.xlu0
      %v1789 = vpop.trf.xlu0
      %v1790 = vpop.trf.xlu0
      %v1791 = vpop.trf.xlu0
      %v1792 = vpop.trf.xlu0
      %v1793 = vpop.trf.xlu0
      %v1794 = vpop.trf.xlu0
      %v1795 = vpop.trf.xlu0
      %v1796 = vpop.trf.xlu0
      %v1797 = vpop.trf.xlu0
      %v1798 = vpop.trf.xlu0
      %v1799 = vpop.trf.xlu0
      %v1800 = vpop.trf.xlu0
      %v1801 = vpop.trf.xlu0
      %v1802 = vpop.trf.xlu0
      %1803 = vxpose.xlu0.b32.start [1/16] %v925, 128
      %1804 = vxpose.xlu0.b32.cont [2/16] 0.0, 128
      %1805 = vxpose.xlu0.b32.cont [3/16] 0.0, 128
      %1806 = vxpose.xlu0.b32.cont [4/16] 0.0, 128
      %1807 = vxpose.xlu0.b32.cont [5/16] 0.0, 128
      %1808 = vxpose.xlu0.b32.cont [6/16] 0.0, 128
      %1809 = vxpose.xlu0.b32.cont [7/16] 0.0, 128
      %1810 = vxpose.xlu0.b32.cont [8/16] 0.0, 128
      %1811 = vxpose.xlu0.b32.cont [9/16] 0.0, 128
      %1812 = vxpose.xlu0.b32.cont [10/16] 0.0, 128
      %1813 = vxpose.xlu0.b32.cont [11/16] 0.0, 128
      %1814 = vxpose.xlu0.b32.cont [12/16] 0.0, 128
      %1815 = vxpose.xlu0.b32.cont [13/16] 0.0, 128
      %1816 = vxpose.xlu0.b32.cont [14/16] 0.0, 128
      %1817 = vxpose.xlu0.b32.cont [15/16] 0.0, 128
      %1818 = vxpose.xlu0.b32.end [16/16] 0.0, 128
      %v1819 = vpop.trf.xlu0
      %v1820 = vpop.trf.xlu0
      %v1821 = vpop.trf.xlu0
      %v1822 = vpop.trf.xlu0
      %v1823 = vpop.trf.xlu0
      %v1824 = vpop.trf.xlu0
      %v1825 = vpop.trf.xlu0
      %v1826 = vpop.trf.xlu0
      %v1827 = vpop.trf.xlu0
      %v1828 = vpop.trf.xlu0
      %v1829 = vpop.trf.xlu0
      %v1830 = vpop.trf.xlu0
      %v1831 = vpop.trf.xlu0
      %v1832 = vpop.trf.xlu0
      %v1833 = vpop.trf.xlu0
      %v1834 = vpop.trf.xlu0
      %1835 = vxpose.xlu0.b32.start [1/16] %v928, 128
      %1836 = vxpose.xlu0.b32.cont [2/16] 0.0, 128
      %1837 = vxpose.xlu0.b32.cont [3/16] 0.0, 128
      %1838 = vxpose.xlu0.b32.cont [4/16] 0.0, 128
      %1839 = vxpose.xlu0.b32.cont [5/16] 0.0, 128
      %1840 = vxpose.xlu0.b32.cont [6/16] 0.0, 128
      %1841 = vxpose.xlu0.b32.cont [7/16] 0.0, 128
      %1842 = vxpose.xlu0.b32.cont [8/16] 0.0, 128
      %1843 = vxpose.xlu0.b32.cont [9/16] 0.0, 128
      %1844 = vxpose.xlu0.b32.cont [10/16] 0.0, 128
      %1845 = vxpose.xlu0.b32.cont [11/16] 0.0, 128
      %1846 = vxpose.xlu0.b32.cont [12/16] 0.0, 128
      %1847 = vxpose.xlu0.b32.cont [13/16] 0.0, 128
      %1848 = vxpose.xlu0.b32.cont [14/16] 0.0, 128
      %1849 = vxpose.xlu0.b32.cont [15/16] 0.0, 128
      %1850 = vxpose.xlu0.b32.end [16/16] 0.0, 128
      %v1851 = vpop.trf.xlu0
      %v1852 = vpop.trf.xlu0
      %v1853 = vpop.trf.xlu0
      %v1854 = vpop.trf.xlu0
      %v1855 = vpop.trf.xlu0
      %v1856 = vpop.trf.xlu0
      %v1857 = vpop.trf.xlu0
      %v1858 = vpop.trf.xlu0
      %v1859 = vpop.trf.xlu0
      %v1860 = vpop.trf.xlu0
      %v1861 = vpop.trf.xlu0
      %v1862 = vpop.trf.xlu0
      %v1863 = vpop.trf.xlu0
      %v1864 = vpop.trf.xlu0
      %v1865 = vpop.trf.xlu0
      %v1866 = vpop.trf.xlu0
      %1867 = vxpose.xlu0.b32.start [1/16] %v931, 128
      %1868 = vxpose.xlu0.b32.cont [2/16] 0.0, 128
      %1869 = vxpose.xlu0.b32.cont [3/16] 0.0, 128
      %1870 = vxpose.xlu0.b32.cont [4/16] 0.0, 128
      %1871 = vxpose.xlu0.b32.cont [5/16] 0.0, 128
      %1872 = vxpose.xlu0.b32.cont [6/16] 0.0, 128
      %1873 = vxpose.xlu0.b32.cont [7/16] 0.0, 128
      %1874 = vxpose.xlu0.b32.cont [8/16] 0.0, 128
      %1875 = vxpose.xlu0.b32.cont [9/16] 0.0, 128
      %1876 = vxpose.xlu0.b32.cont [10/16] 0.0, 128
      %1877 = vxpose.xlu0.b32.cont [11/16] 0.0, 128
      %1878 = vxpose.xlu0.b32.cont [12/16] 0.0, 128
      %1879 = vxpose.xlu0.b32.cont [13/16] 0.0, 128
      %1880 = vxpose.xlu0.b32.cont [14/16] 0.0, 128
      %1881 = vxpose.xlu0.b32.cont [15/16] 0.0, 128
      %1882 = vxpose.xlu0.b32.end [16/16] 0.0, 128
      %v1883 = vpop.trf.xlu0
      %v1884 = vpop.trf.xlu0
      %v1885 = vpop.trf.xlu0
      %v1886 = vpop.trf.xlu0
      %v1887 = vpop.trf.xlu0
      %v1888 = vpop.trf.xlu0
      %v1889 = vpop.trf.xlu0
      %v1890 = vpop.trf.xlu0
      %v1891 = vpop.trf.xlu0
      %v1892 = vpop.trf.xlu0
      %v1893 = vpop.trf.xlu0
      %v1894 = vpop.trf.xlu0
      %v1895 = vpop.trf.xlu0
      %v1896 = vpop.trf.xlu0
      %v1897 = vpop.trf.xlu0
      %v1898 = vpop.trf.xlu0
      %1899 = vxpose.xlu0.b32.start [1/16] %v934, 128
      %1900 = vxpose.xlu0.b32.cont [2/16] 0.0, 128
      %1901 = vxpose.xlu0.b32.cont [3/16] 0.0, 128
      %1902 = vxpose.xlu0.b32.cont [4/16] 0.0, 128
      %1903 = vxpose.xlu0.b32.cont [5/16] 0.0, 128
      %1904 = vxpose.xlu0.b32.cont [6/16] 0.0, 128
      %1905 = vxpose.xlu0.b32.cont [7/16] 0.0, 128
      %1906 = vxpose.xlu0.b32.cont [8/16] 0.0, 128
      %1907 = vxpose.xlu0.b32.cont [9/16] 0.0, 128
      %1908 = vxpose.xlu0.b32.cont [10/16] 0.0, 128
      %1909 = vxpose.xlu0.b32.cont [11/16] 0.0, 128
      %1910 = vxpose.xlu0.b32.cont [12/16] 0.0, 128
      %1911 = vxpose.xlu0.b32.cont [13/16] 0.0, 128
      %1912 = vxpose.xlu0.b32.cont [14/16] 0.0, 128
      %1913 = vxpose.xlu0.b32.cont [15/16] 0.0, 128
      %1914 = vxpose.xlu0.b32.end [16/16] 0.0, 128
      %v1915 = vpop.trf.xlu0
      %v1916 = vpop.trf.xlu0
      %v1917 = vpop.trf.xlu0
      %v1918 = vpop.trf.xlu0
      %v1919 = vpop.trf.xlu0
      %v1920 = vpop.trf.xlu0
      %v1921 = vpop.trf.xlu0
      %v1922 = vpop.trf.xlu0
      %v1923 = vpop.trf.xlu0
      %v1924 = vpop.trf.xlu0
      %v1925 = vpop.trf.xlu0
      %v1926 = vpop.trf.xlu0
      %v1927 = vpop.trf.xlu0
      %v1928 = vpop.trf.xlu0
      %v1929 = vpop.trf.xlu0
      %v1930 = vpop.trf.xlu0
      %1931 = vxpose.xlu0.b32.start [1/16] %v937, 128
      %1932 = vxpose.xlu0.b32.cont [2/16] 0.0, 128
      %1933 = vxpose.xlu0.b32.cont [3/16] 0.0, 128
      %1934 = vxpose.xlu0.b32.cont [4/16] 0.0, 128
      %1935 = vxpose.xlu0.b32.cont [5/16] 0.0, 128
      %1936 = vxpose.xlu0.b32.cont [6/16] 0.0, 128
      %1937 = vxpose.xlu0.b32.cont [7/16] 0.0, 128
      %1938 = vxpose.xlu0.b32.cont [8/16] 0.0, 128
      %1939 = vxpose.xlu0.b32.cont [9/16] 0.0, 128
      %1940 = vxpose.xlu0.b32.cont [10/16] 0.0, 128
      %1941 = vxpose.xlu0.b32.cont [11/16] 0.0, 128
      %1942 = vxpose.xlu0.b32.cont [12/16] 0.0, 128
      %1943 = vxpose.xlu0.b32.cont [13/16] 0.0, 128
      %1944 = vxpose.xlu0.b32.cont [14/16] 0.0, 128
      %1945 = vxpose.xlu0.b32.cont [15/16] 0.0, 128
      %1946 = vxpose.xlu0.b32.end [16/16] 0.0, 128
      %v1947 = vpop.trf.xlu0
      %v1948 = vpop.trf.xlu0
      %v1949 = vpop.trf.xlu0
      %v1950 = vpop.trf.xlu0
      %v1951 = vpop.trf.xlu0
      %v1952 = vpop.trf.xlu0
      %v1953 = vpop.trf.xlu0
      %v1954 = vpop.trf.xlu0
      %v1955 = vpop.trf.xlu0
      %v1956 = vpop.trf.xlu0
      %v1957 = vpop.trf.xlu0
      %v1958 = vpop.trf.xlu0
      %v1959 = vpop.trf.xlu0
      %v1960 = vpop.trf.xlu0
      %v1961 = vpop.trf.xlu0
      %v1962 = vpop.trf.xlu0
      %v1963 = vld [vmem:[%s323] sm:$0x3]
      %v1964 = vld [vmem:[%s323 + $0x2] sm:$0x3]
      %v1965 = vld [vmem:[%s323 + $0x4] sm:$0x3]
      %v1966 = vld [vmem:[%s323 + $0x6] sm:$0x3]
      %v1967 = vld [vmem:[%s323 + $0x8] sm:$0x3]
      %v1968 = vld [vmem:[%s323 + $0xa] sm:$0x3]
      %v1969 = vld [vmem:[%s323 + $0xc] sm:$0x3]
      %v1970 = vld [vmem:[%s323 + $0xe] sm:$0x3]
      %v1971 = vld [vmem:[%s323 + $0x10] sm:$0x3]
      %v1972 = vld [vmem:[%s323 + $0x12] sm:$0x3]
      %v1973 = vld [vmem:[%s323 + $0x14] sm:$0x3]
      %v1974 = vld [vmem:[%s323 + $0x16] sm:$0x3]
      %v1975 = vld [vmem:[%s323 + $0x18] sm:$0x3]
      %v1976 = vld [vmem:[%s323 + $0x1a] sm:$0x3]
      %v1977 = vld [vmem:[%s323 + $0x1c] sm:$0x3]
      %v1978 = vld [vmem:[%s323 + $0x1e] sm:$0x3]
      %v1979 = vld [vmem:[%s323 + $0x20] sm:$0x3]
      %v1980 = vld [vmem:[%s323 + $0x22] sm:$0x3]
      %v1981 = vld [vmem:[%s323 + $0x24] sm:$0x3]
      %v1982 = vld [vmem:[%s323 + $0x26] sm:$0x3]
      %v1983 = vld [vmem:[%s323 + $0x28] sm:$0x3]
      %v1984 = vld [vmem:[%s323 + $0x2a] sm:$0x3]
      %v1985 = vld [vmem:[%s323 + $0x2c] sm:$0x3]
      %v1986 = vld [vmem:[%s323 + $0x2e] sm:$0x3]
      %v1987 = vld [vmem:[%s323 + $0x30] sm:$0x3]
      %v1988 = vld [vmem:[%s323 + $0x32] sm:$0x3]
      %v1989 = vld [vmem:[%s323 + $0x34] sm:$0x3]
      %v1990 = vld [vmem:[%s323 + $0x36] sm:$0x3]
      %v1991 = vld [vmem:[%s323 + $0x38] sm:$0x3]
      %v1992 = vld [vmem:[%s323 + $0x3a] sm:$0x3]
      %v1993 = vld [vmem:[%s323 + $0x3c] sm:$0x3]
      %v1994 = vld [vmem:[%s323 + $0x3e] sm:$0x3]
      %v1995 = vunpack.c.0.s8 %v1963
      %v1996 = vunpack.c.0.s8 %v1964
      %v1997 = vunpack.c.0.s8 %v1965
      %v1998 = vunpack.c.0.s8 %v1966
      %v1999 = vunpack.c.0.s8 %v1967
      %v2000 = vunpack.c.0.s8 %v1968
      %v2001 = vunpack.c.0.s8 %v1969
      %v2002 = vunpack.c.0.s8 %v1970
      %v2003 = vunpack.c.0.s8 %v1971
      %v2004 = vunpack.c.0.s8 %v1972
      %v2005 = vunpack.c.0.s8 %v1973
      %v2006 = vunpack.c.0.s8 %v1974
      %v2007 = vunpack.c.0.s8 %v1975
      %v2008 = vunpack.c.0.s8 %v1976
      %v2009 = vunpack.c.0.s8 %v1977
      %v2010 = vunpack.c.0.s8 %v1978
      %v2011 = vunpack.c.0.s8 %v1979
      %v2012 = vunpack.c.0.s8 %v1980
      %v2013 = vunpack.c.0.s8 %v1981
      %v2014 = vunpack.c.0.s8 %v1982
      %v2015 = vunpack.c.0.s8 %v1983
      %v2016 = vunpack.c.0.s8 %v1984
      %v2017 = vunpack.c.0.s8 %v1985
      %v2018 = vunpack.c.0.s8 %v1986
      %v2019 = vunpack.c.0.s8 %v1987
      %v2020 = vunpack.c.0.s8 %v1988
      %v2021 = vunpack.c.0.s8 %v1989
      %v2022 = vunpack.c.0.s8 %v1990
      %v2023 = vunpack.c.0.s8 %v1991
      %v2024 = vunpack.c.0.s8 %v1992
      %v2025 = vunpack.c.0.s8 %v1993
      %v2026 = vunpack.c.0.s8 %v1994
      %v2027 = vcvt.s32.f32 %v1995
      %v2028 = vcvt.s32.f32 %v1996
      %v2029 = vcvt.s32.f32 %v1997
      %v2030 = vcvt.s32.f32 %v1998
      %v2031 = vcvt.s32.f32 %v1999
      %v2032 = vcvt.s32.f32 %v2000
      %v2033 = vcvt.s32.f32 %v2001
      %v2034 = vcvt.s32.f32 %v2002
      %v2035 = vcvt.s32.f32 %v2003
      %v2036 = vcvt.s32.f32 %v2004
      %v2037 = vcvt.s32.f32 %v2005
      %v2038 = vcvt.s32.f32 %v2006
      %v2039 = vcvt.s32.f32 %v2007
      %v2040 = vcvt.s32.f32 %v2008
      %v2041 = vcvt.s32.f32 %v2009
      %v2042 = vcvt.s32.f32 %v2010
      %v2043 = vcvt.s32.f32 %v2011
      %v2044 = vcvt.s32.f32 %v2012
      %v2045 = vcvt.s32.f32 %v2013
      %v2046 = vcvt.s32.f32 %v2014
      %v2047 = vcvt.s32.f32 %v2015
      %v2048 = vcvt.s32.f32 %v2016
      %v2049 = vcvt.s32.f32 %v2017
      %v2050 = vcvt.s32.f32 %v2018
      %v2051 = vcvt.s32.f32 %v2019
      %v2052 = vcvt.s32.f32 %v2020
      %v2053 = vcvt.s32.f32 %v2021
      %v2054 = vcvt.s32.f32 %v2022
      %v2055 = vcvt.s32.f32 %v2023
      %v2056 = vcvt.s32.f32 %v2024
      %v2057 = vcvt.s32.f32 %v2025
      %v2058 = vcvt.s32.f32 %v2026
      %vm2059 = vcmp.gt.f32.partialorder %v2027, 0.5
      %vm2060 = vcmp.gt.f32.partialorder %v2028, 0.5
      %vm2061 = vcmp.gt.f32.partialorder %v2029, 0.5
      %vm2062 = vcmp.gt.f32.partialorder %v2030, 0.5
      %vm2063 = vcmp.gt.f32.partialorder %v2031, 0.5
      %vm2064 = vcmp.gt.f32.partialorder %v2032, 0.5
      %vm2065 = vcmp.gt.f32.partialorder %v2033, 0.5
      %vm2066 = vcmp.gt.f32.partialorder %v2034, 0.5
      %vm2067 = vcmp.gt.f32.partialorder %v2035, 0.5
      %vm2068 = vcmp.gt.f32.partialorder %v2036, 0.5
      %vm2069 = vcmp.gt.f32.partialorder %v2037, 0.5
      %vm2070 = vcmp.gt.f32.partialorder %v2038, 0.5
      %vm2071 = vcmp.gt.f32.partialorder %v2039, 0.5
      %vm2072 = vcmp.gt.f32.partialorder %v2040, 0.5
      %vm2073 = vcmp.gt.f32.partialorder %v2041, 0.5
      %vm2074 = vcmp.gt.f32.partialorder %v2042, 0.5
      %vm2075 = vcmp.gt.f32.partialorder %v2043, 0.5
      %vm2076 = vcmp.gt.f32.partialorder %v2044, 0.5
      %vm2077 = vcmp.gt.f32.partialorder %v2045, 0.5
      %vm2078 = vcmp.gt.f32.partialorder %v2046, 0.5
      %vm2079 = vcmp.gt.f32.partialorder %v2047, 0.5
      %vm2080 = vcmp.gt.f32.partialorder %v2048, 0.5
      %vm2081 = vcmp.gt.f32.partialorder %v2049, 0.5
      %vm2082 = vcmp.gt.f32.partialorder %v2050, 0.5
      %vm2083 = vcmp.gt.f32.partialorder %v2051, 0.5
      %vm2084 = vcmp.gt.f32.partialorder %v2052, 0.5
      %vm2085 = vcmp.gt.f32.partialorder %v2053, 0.5
      %vm2086 = vcmp.gt.f32.partialorder %v2054, 0.5
      %vm2087 = vcmp.gt.f32.partialorder %v2055, 0.5
      %vm2088 = vcmp.gt.f32.partialorder %v2056, 0.5
      %vm2089 = vcmp.gt.f32.partialorder %v2057, 0.5
      %vm2090 = vcmp.gt.f32.partialorder %v2058, 0.5
      %2092 = vset.pattern.permute.xlu0 0
      %2093 = vperm.xlu0 %2092, %v727
      %v2094 = vpop.permute.xlu0 %2093
      %2097 = vset.pattern.permute.xlu0 0
      %2098 = vperm.xlu0 %2097, %v730
      %v2099 = vpop.permute.xlu0 %2098
      %2102 = vset.pattern.permute.xlu0 0
      %2103 = vperm.xlu0 %2102, %v733
      %v2104 = vpop.permute.xlu0 %2103
      %2107 = vset.pattern.permute.xlu0 0
      %2108 = vperm.xlu0 %2107, %v736
      %v2109 = vpop.permute.xlu0 %2108
      %2112 = vset.pattern.permute.xlu0 0
      %2113 = vperm.xlu0 %2112, %v739
      %v2114 = vpop.permute.xlu0 %2113
      %2117 = vset.pattern.permute.xlu0 0
      %2118 = vperm.xlu0 %2117, %v742
      %v2119 = vpop.permute.xlu0 %2118
      %2122 = vset.pattern.permute.xlu0 0
      %2123 = vperm.xlu0 %2122, %v745
      %v2124 = vpop.permute.xlu0 %2123
      %2127 = vset.pattern.permute.xlu0 0
      %2128 = vperm.xlu0 %2127, %v748
      %v2129 = vpop.permute.xlu0 %2128
      %2132 = vset.pattern.permute.xlu0 0
      %2133 = vperm.xlu0 %2132, %v751
      %v2134 = vpop.permute.xlu0 %2133
      %2137 = vset.pattern.permute.xlu0 0
      %2138 = vperm.xlu0 %2137, %v754
      %v2139 = vpop.permute.xlu0 %2138
      %2142 = vset.pattern.permute.xlu0 0
      %2143 = vperm.xlu0 %2142, %v757
      %v2144 = vpop.permute.xlu0 %2143
      %2147 = vset.pattern.permute.xlu0 0
      %2148 = vperm.xlu0 %2147, %v760
      %v2149 = vpop.permute.xlu0 %2148
      %2152 = vset.pattern.permute.xlu0 0
      %2153 = vperm.xlu0 %2152, %v763
      %v2154 = vpop.permute.xlu0 %2153
      %2157 = vset.pattern.permute.xlu0 0
      %2158 = vperm.xlu0 %2157, %v766
      %v2159 = vpop.permute.xlu0 %2158
      %2162 = vset.pattern.permute.xlu0 0
      %2163 = vperm.xlu0 %2162, %v769
      %v2164 = vpop.permute.xlu0 %2163
      %2167 = vset.pattern.permute.xlu0 0
      %2168 = vperm.xlu0 %2167, %v772
      %v2169 = vpop.permute.xlu0 %2168
      %2172 = vset.pattern.permute.xlu0 0
      %2173 = vperm.xlu0 %2172, %v775
      %v2174 = vpop.permute.xlu0 %2173
      %2177 = vset.pattern.permute.xlu0 0
      %2178 = vperm.xlu0 %2177, %v778
      %v2179 = vpop.permute.xlu0 %2178
      %2182 = vset.pattern.permute.xlu0 0
      %2183 = vperm.xlu0 %2182, %v781
      %v2184 = vpop.permute.xlu0 %2183
      %2187 = vset.pattern.permute.xlu0 0
      %2188 = vperm.xlu0 %2187, %v784
      %v2189 = vpop.permute.xlu0 %2188
      %2192 = vset.pattern.permute.xlu0 0
      %2193 = vperm.xlu0 %2192, %v787
      %v2194 = vpop.permute.xlu0 %2193
      %2197 = vset.pattern.permute.xlu0 0
      %2198 = vperm.xlu0 %2197, %v790
      %v2199 = vpop.permute.xlu0 %2198
      %2202 = vset.pattern.permute.xlu0 0
      %2203 = vperm.xlu0 %2202, %v793
      %v2204 = vpop.permute.xlu0 %2203
      %2207 = vset.pattern.permute.xlu0 0
      %2208 = vperm.xlu0 %2207, %v796
      %v2209 = vpop.permute.xlu0 %2208
      %2212 = vset.pattern.permute.xlu0 0
      %2213 = vperm.xlu0 %2212, %v799
      %v2214 = vpop.permute.xlu0 %2213
      %2217 = vset.pattern.permute.xlu0 0
      %2218 = vperm.xlu0 %2217, %v802
      %v2219 = vpop.permute.xlu0 %2218
      %2222 = vset.pattern.permute.xlu0 0
      %2223 = vperm.xlu0 %2222, %v805
      %v2224 = vpop.permute.xlu0 %2223
      %2227 = vset.pattern.permute.xlu0 0
      %2228 = vperm.xlu0 %2227, %v808
      %v2229 = vpop.permute.xlu0 %2228
      %2232 = vset.pattern.permute.xlu0 0
      %2233 = vperm.xlu0 %2232, %v811
      %v2234 = vpop.permute.xlu0 %2233
      %2237 = vset.pattern.permute.xlu0 0
      %2238 = vperm.xlu0 %2237, %v814
      %v2239 = vpop.permute.xlu0 %2238
      %2242 = vset.pattern.permute.xlu0 0
      %2243 = vperm.xlu0 %2242, %v817
      %v2244 = vpop.permute.xlu0 %2243
      %2247 = vset.pattern.permute.xlu0 0
      %2248 = vperm.xlu0 %2247, %v820
      %v2249 = vpop.permute.xlu0 %2248
      %v2251 = vperm.slane %v955, 0
      %v2252 = vperm.slane %v987, 0
      %v2253 = vperm.slane %v1019, 0
      %v2254 = vperm.slane %v1051, 0
      %v2255 = vperm.slane %v1083, 0
      %v2256 = vperm.slane %v1115, 0
      %v2257 = vperm.slane %v1147, 0
      %v2258 = vperm.slane %v1179, 0
      %v2259 = vperm.slane %v1211, 0
      %v2260 = vperm.slane %v1243, 0
      %v2261 = vperm.slane %v1275, 0
      %v2262 = vperm.slane %v1307, 0
      %v2263 = vperm.slane %v1339, 0
      %v2264 = vperm.slane %v1371, 0
      %v2265 = vperm.slane %v1403, 0
      %v2266 = vperm.slane %v1435, 0
      %v2267 = vperm.slane %v1467, 0
      %v2268 = vperm.slane %v1499, 0
      %v2269 = vperm.slane %v1531, 0
      %v2270 = vperm.slane %v1563, 0
      %v2271 = vperm.slane %v1595, 0
      %v2272 = vperm.slane %v1627, 0
      %v2273 = vperm.slane %v1659, 0
      %v2274 = vperm.slane %v1691, 0
      %v2275 = vperm.slane %v1723, 0
      %v2276 = vperm.slane %v1755, 0
      %v2277 = vperm.slane %v1787, 0
      %v2278 = vperm.slane %v1819, 0
      %v2279 = vperm.slane %v1851, 0
      %v2280 = vperm.slane %v1883, 0
      %v2281 = vperm.slane %v1915, 0
      %v2282 = vperm.slane %v1947, 0
      %v2283 = vadd.f32 %v2094, %v2251
      %v2284 = vadd.f32 %v2099, %v2252
      %v2285 = vadd.f32 %v2104, %v2253
      %v2286 = vadd.f32 %v2109, %v2254
      %v2287 = vadd.f32 %v2114, %v2255
      %v2288 = vadd.f32 %v2119, %v2256
      %v2289 = vadd.f32 %v2124, %v2257
      %v2290 = vadd.f32 %v2129, %v2258
      %v2291 = vadd.f32 %v2134, %v2259
      %v2292 = vadd.f32 %v2139, %v2260
      %v2293 = vadd.f32 %v2144, %v2261
      %v2294 = vadd.f32 %v2149, %v2262
      %v2295 = vadd.f32 %v2154, %v2263
      %v2296 = vadd.f32 %v2159, %v2264
      %v2297 = vadd.f32 %v2164, %v2265
      %v2298 = vadd.f32 %v2169, %v2266
      %v2299 = vadd.f32 %v2174, %v2267
      %v2300 = vadd.f32 %v2179, %v2268
      %v2301 = vadd.f32 %v2184, %v2269
      %v2302 = vadd.f32 %v2189, %v2270
      %v2303 = vadd.f32 %v2194, %v2271
      %v2304 = vadd.f32 %v2199, %v2272
      %v2305 = vadd.f32 %v2204, %v2273
      %v2306 = vadd.f32 %v2209, %v2274
      %v2307 = vadd.f32 %v2214, %v2275
      %v2308 = vadd.f32 %v2219, %v2276
      %v2309 = vadd.f32 %v2224, %v2277
      %v2310 = vadd.f32 %v2229, %v2278
      %v2311 = vadd.f32 %v2234, %v2279
      %v2312 = vadd.f32 %v2239, %v2280
      %v2313 = vadd.f32 %v2244, %v2281
      %v2314 = vadd.f32 %v2249, %v2282
      %vm2315 = vcmp.gt.f32.partialorder %v2283, 0.0
      %vm2316 = vcmp.gt.f32.partialorder %v2284, 0.0
      %vm2317 = vcmp.gt.f32.partialorder %v2285, 0.0
      %vm2318 = vcmp.gt.f32.partialorder %v2286, 0.0
      %vm2319 = vcmp.gt.f32.partialorder %v2287, 0.0
      %vm2320 = vcmp.gt.f32.partialorder %v2288, 0.0
      %vm2321 = vcmp.gt.f32.partialorder %v2289, 0.0
      %vm2322 = vcmp.gt.f32.partialorder %v2290, 0.0
      %vm2323 = vcmp.gt.f32.partialorder %v2291, 0.0
      %vm2324 = vcmp.gt.f32.partialorder %v2292, 0.0
      %vm2325 = vcmp.gt.f32.partialorder %v2293, 0.0
      %vm2326 = vcmp.gt.f32.partialorder %v2294, 0.0
      %vm2327 = vcmp.gt.f32.partialorder %v2295, 0.0
      %vm2328 = vcmp.gt.f32.partialorder %v2296, 0.0
      %vm2329 = vcmp.gt.f32.partialorder %v2297, 0.0
      %vm2330 = vcmp.gt.f32.partialorder %v2298, 0.0
      %vm2331 = vcmp.gt.f32.partialorder %v2299, 0.0
      %vm2332 = vcmp.gt.f32.partialorder %v2300, 0.0
      %vm2333 = vcmp.gt.f32.partialorder %v2301, 0.0
      %vm2334 = vcmp.gt.f32.partialorder %v2302, 0.0
      %vm2335 = vcmp.gt.f32.partialorder %v2303, 0.0
      %vm2336 = vcmp.gt.f32.partialorder %v2304, 0.0
      %vm2337 = vcmp.gt.f32.partialorder %v2305, 0.0
      %vm2338 = vcmp.gt.f32.partialorder %v2306, 0.0
      %vm2339 = vcmp.gt.f32.partialorder %v2307, 0.0
      %vm2340 = vcmp.gt.f32.partialorder %v2308, 0.0
      %vm2341 = vcmp.gt.f32.partialorder %v2309, 0.0
      %vm2342 = vcmp.gt.f32.partialorder %v2310, 0.0
      %vm2343 = vcmp.gt.f32.partialorder %v2311, 0.0
      %vm2344 = vcmp.gt.f32.partialorder %v2312, 0.0
      %vm2345 = vcmp.gt.f32.partialorder %v2313, 0.0
      %vm2346 = vcmp.gt.f32.partialorder %v2314, 0.0
      %v2347 = vmul.f32 %v2283, 0.2
      %v2348 = vmul.f32 %v2284, 0.2
      %v2349 = vmul.f32 %v2285, 0.2
      %v2350 = vmul.f32 %v2286, 0.2
      %v2351 = vmul.f32 %v2287, 0.2
      %v2352 = vmul.f32 %v2288, 0.2
      %v2353 = vmul.f32 %v2289, 0.2
      %v2354 = vmul.f32 %v2290, 0.2
      %v2355 = vmul.f32 %v2291, 0.2
      %v2356 = vmul.f32 %v2292, 0.2
      %v2357 = vmul.f32 %v2293, 0.2
      %v2358 = vmul.f32 %v2294, 0.2
      %v2359 = vmul.f32 %v2295, 0.2
      %v2360 = vmul.f32 %v2296, 0.2
      %v2361 = vmul.f32 %v2297, 0.2
      %v2362 = vmul.f32 %v2298, 0.2
      %v2363 = vmul.f32 %v2299, 0.2
      %v2364 = vmul.f32 %v2300, 0.2
      %v2365 = vmul.f32 %v2301, 0.2
      %v2366 = vmul.f32 %v2302, 0.2
      %v2367 = vmul.f32 %v2303, 0.2
      %v2368 = vmul.f32 %v2304, 0.2
      %v2369 = vmul.f32 %v2305, 0.2
      %v2370 = vmul.f32 %v2306, 0.2
      %v2371 = vmul.f32 %v2307, 0.2
      %v2372 = vmul.f32 %v2308, 0.2
      %v2373 = vmul.f32 %v2309, 0.2
      %v2374 = vmul.f32 %v2310, 0.2
      %v2375 = vmul.f32 %v2311, 0.2
      %v2376 = vmul.f32 %v2312, 0.2
      %v2377 = vmul.f32 %v2313, 0.2
      %v2378 = vmul.f32 %v2314, 0.2
      %v2379 = vsel %vm2315, %v2283, %v2347
      %v2380 = vsel %vm2316, %v2284, %v2348
      %v2381 = vsel %vm2317, %v2285, %v2349
      %v2382 = vsel %vm2318, %v2286, %v2350
      %v2383 = vsel %vm2319, %v2287, %v2351
      %v2384 = vsel %vm2320, %v2288, %v2352
      %v2385 = vsel %vm2321, %v2289, %v2353
      %v2386 = vsel %vm2322, %v2290, %v2354
      %v2387 = vsel %vm2323, %v2291, %v2355
      %v2388 = vsel %vm2324, %v2292, %v2356
      %v2389 = vsel %vm2325, %v2293, %v2357
      %v2390 = vsel %vm2326, %v2294, %v2358
      %v2391 = vsel %vm2327, %v2295, %v2359
      %v2392 = vsel %vm2328, %v2296, %v2360
      %v2393 = vsel %vm2329, %v2297, %v2361
      %v2394 = vsel %vm2330, %v2298, %v2362
      %v2395 = vsel %vm2331, %v2299, %v2363
      %v2396 = vsel %vm2332, %v2300, %v2364
      %v2397 = vsel %vm2333, %v2301, %v2365
      %v2398 = vsel %vm2334, %v2302, %v2366
      %v2399 = vsel %vm2335, %v2303, %v2367
      %v2400 = vsel %vm2336, %v2304, %v2368
      %v2401 = vsel %vm2337, %v2305, %v2369
      %v2402 = vsel %vm2338, %v2306, %v2370
      %v2403 = vsel %vm2339, %v2307, %v2371
      %v2404 = vsel %vm2340, %v2308, %v2372
      %v2405 = vsel %vm2341, %v2309, %v2373
      %v2406 = vsel %vm2342, %v2310, %v2374
      %v2407 = vsel %vm2343, %v2311, %v2375
      %v2408 = vsel %vm2344, %v2312, %v2376
      %v2409 = vsel %vm2345, %v2313, %v2377
      %v2410 = vsel %vm2346, %v2314, %v2378
      %v2411 = vsel %vm2059, %v2379, -999.0
      %v2412 = vsel %vm2060, %v2380, -999.0
      %v2413 = vsel %vm2061, %v2381, -999.0
      %v2414 = vsel %vm2062, %v2382, -999.0
      %v2415 = vsel %vm2063, %v2383, -999.0
      %v2416 = vsel %vm2064, %v2384, -999.0
      %v2417 = vsel %vm2065, %v2385, -999.0
      %v2418 = vsel %vm2066, %v2386, -999.0
      %v2419 = vsel %vm2067, %v2387, -999.0
      %v2420 = vsel %vm2068, %v2388, -999.0
      %v2421 = vsel %vm2069, %v2389, -999.0
      %v2422 = vsel %vm2070, %v2390, -999.0
      %v2423 = vsel %vm2071, %v2391, -999.0
      %v2424 = vsel %vm2072, %v2392, -999.0
      %v2425 = vsel %vm2073, %v2393, -999.0
      %v2426 = vsel %vm2074, %v2394, -999.0
      %v2427 = vsel %vm2075, %v2395, -999.0
      %v2428 = vsel %vm2076, %v2396, -999.0
      %v2429 = vsel %vm2077, %v2397, -999.0
      %v2430 = vsel %vm2078, %v2398, -999.0
      %v2431 = vsel %vm2079, %v2399, -999.0
      %v2432 = vsel %vm2080, %v2400, -999.0
      %v2433 = vsel %vm2081, %v2401, -999.0
      %v2434 = vsel %vm2082, %v2402, -999.0
      %v2435 = vsel %vm2083, %v2403, -999.0
      %v2436 = vsel %vm2084, %v2404, -999.0
      %v2437 = vsel %vm2085, %v2405, -999.0
      %v2438 = vsel %vm2086, %v2406, -999.0
      %v2439 = vsel %vm2087, %v2407, -999.0
      %v2440 = vsel %vm2088, %v2408, -999.0
      %v2441 = vsel %vm2089, %v2409, -999.0
      %v2442 = vsel %vm2090, %v2410, -999.0
      %vm2443 = vcmask 64512
      %v2444 = vsel %vm2443, %v2411, -inf
      %2445 = vmax.xlane.f32.xlu0 %v2444
      %v2446 = vpop.xlane.xlu0 %2445
      %v2447 = vsel %vm2443, %v2412, -inf
      %2448 = vmax.xlane.f32.xlu0 %v2447
      %v2449 = vpop.xlane.xlu0 %2448
      %v2450 = vsel %vm2443, %v2413, -inf
      %2451 = vmax.xlane.f32.xlu0 %v2450
      %v2452 = vpop.xlane.xlu0 %2451
      %v2453 = vsel %vm2443, %v2414, -inf
      %2454 = vmax.xlane.f32.xlu0 %v2453
      %v2455 = vpop.xlane.xlu0 %2454
      %v2456 = vsel %vm2443, %v2415, -inf
      %2457 = vmax.xlane.f32.xlu0 %v2456
      %v2458 = vpop.xlane.xlu0 %2457
      %v2459 = vsel %vm2443, %v2416, -inf
      %2460 = vmax.xlane.f32.xlu0 %v2459
      %v2461 = vpop.xlane.xlu0 %2460
      %v2462 = vsel %vm2443, %v2417, -inf
      %2463 = vmax.xlane.f32.xlu0 %v2462
      %v2464 = vpop.xlane.xlu0 %2463
      %v2465 = vsel %vm2443, %v2418, -inf
      %2466 = vmax.xlane.f32.xlu0 %v2465
      %v2467 = vpop.xlane.xlu0 %2466
      %v2468 = vsel %vm2443, %v2419, -inf
      %2469 = vmax.xlane.f32.xlu0 %v2468
      %v2470 = vpop.xlane.xlu0 %2469
      %v2471 = vsel %vm2443, %v2420, -inf
      %2472 = vmax.xlane.f32.xlu0 %v2471
      %v2473 = vpop.xlane.xlu0 %2472
      %v2474 = vsel %vm2443, %v2421, -inf
      %2475 = vmax.xlane.f32.xlu0 %v2474
      %v2476 = vpop.xlane.xlu0 %2475
      %v2477 = vsel %vm2443, %v2422, -inf
      %2478 = vmax.xlane.f32.xlu0 %v2477
      %v2479 = vpop.xlane.xlu0 %2478
      %v2480 = vsel %vm2443, %v2423, -inf
      %2481 = vmax.xlane.f32.xlu0 %v2480
      %v2482 = vpop.xlane.xlu0 %2481
      %v2483 = vsel %vm2443, %v2424, -inf
      %2484 = vmax.xlane.f32.xlu0 %v2483
      %v2485 = vpop.xlane.xlu0 %2484
      %v2486 = vsel %vm2443, %v2425, -inf
      %2487 = vmax.xlane.f32.xlu0 %v2486
      %v2488 = vpop.xlane.xlu0 %2487
      %v2489 = vsel %vm2443, %v2426, -inf
      %2490 = vmax.xlane.f32.xlu0 %v2489
      %v2491 = vpop.xlane.xlu0 %2490
      %v2492 = vsel %vm2443, %v2427, -inf
      %2493 = vmax.xlane.f32.xlu0 %v2492
      %v2494 = vpop.xlane.xlu0 %2493
      %v2495 = vsel %vm2443, %v2428, -inf
      %2496 = vmax.xlane.f32.xlu0 %v2495
      %v2497 = vpop.xlane.xlu0 %2496
      %v2498 = vsel %vm2443, %v2429, -inf
      %2499 = vmax.xlane.f32.xlu0 %v2498
      %v2500 = vpop.xlane.xlu0 %2499
      %v2501 = vsel %vm2443, %v2430, -inf
      %2502 = vmax.xlane.f32.xlu0 %v2501
      %v2503 = vpop.xlane.xlu0 %2502
      %v2504 = vsel %vm2443, %v2431, -inf
      %2505 = vmax.xlane.f32.xlu0 %v2504
      %v2506 = vpop.xlane.xlu0 %2505
      %v2507 = vsel %vm2443, %v2432, -inf
      %2508 = vmax.xlane.f32.xlu0 %v2507
      %v2509 = vpop.xlane.xlu0 %2508
      %v2510 = vsel %vm2443, %v2433, -inf
      %2511 = vmax.xlane.f32.xlu0 %v2510
      %v2512 = vpop.xlane.xlu0 %2511
      %v2513 = vsel %vm2443, %v2434, -inf
      %2514 = vmax.xlane.f32.xlu0 %v2513
      %v2515 = vpop.xlane.xlu0 %2514
      %v2516 = vsel %vm2443, %v2435, -inf
      %2517 = vmax.xlane.f32.xlu0 %v2516
      %v2518 = vpop.xlane.xlu0 %2517
      %v2519 = vsel %vm2443, %v2436, -inf
      %2520 = vmax.xlane.f32.xlu0 %v2519
      %v2521 = vpop.xlane.xlu0 %2520
      %v2522 = vsel %vm2443, %v2437, -inf
      %2523 = vmax.xlane.f32.xlu0 %v2522
      %v2524 = vpop.xlane.xlu0 %2523
      %v2525 = vsel %vm2443, %v2438, -inf
      %2526 = vmax.xlane.f32.xlu0 %v2525
      %v2527 = vpop.xlane.xlu0 %2526
      %v2528 = vsel %vm2443, %v2439, -inf
      %2529 = vmax.xlane.f32.xlu0 %v2528
      %v2530 = vpop.xlane.xlu0 %2529
      %v2531 = vsel %vm2443, %v2440, -inf
      %2532 = vmax.xlane.f32.xlu0 %v2531
      %v2533 = vpop.xlane.xlu0 %2532
      %v2534 = vsel %vm2443, %v2441, -inf
      %2535 = vmax.xlane.f32.xlu0 %v2534
      %v2536 = vpop.xlane.xlu0 %2535
      %v2537 = vsel %vm2443, %v2442, -inf
      %2538 = vmax.xlane.f32.xlu0 %v2537
      %v2539 = vpop.xlane.xlu0 %2538
      %v2540 = vsub.f32 %v2411, %v2446
      %v2541 = vsub.f32 %v2412, %v2449
      %v2542 = vsub.f32 %v2413, %v2452
      %v2543 = vsub.f32 %v2414, %v2455
      %v2544 = vsub.f32 %v2415, %v2458
      %v2545 = vsub.f32 %v2416, %v2461
      %v2546 = vsub.f32 %v2417, %v2464
      %v2547 = vsub.f32 %v2418, %v2467
      %v2548 = vsub.f32 %v2419, %v2470
      %v2549 = vsub.f32 %v2420, %v2473
      %v2550 = vsub.f32 %v2421, %v2476
      %v2551 = vsub.f32 %v2422, %v2479
      %v2552 = vsub.f32 %v2423, %v2482
      %v2553 = vsub.f32 %v2424, %v2485
      %v2554 = vsub.f32 %v2425, %v2488
      %v2555 = vsub.f32 %v2426, %v2491
      %v2556 = vsub.f32 %v2427, %v2494
      %v2557 = vsub.f32 %v2428, %v2497
      %v2558 = vsub.f32 %v2429, %v2500
      %v2559 = vsub.f32 %v2430, %v2503
      %v2560 = vsub.f32 %v2431, %v2506
      %v2561 = vsub.f32 %v2432, %v2509
      %v2562 = vsub.f32 %v2433, %v2512
      %v2563 = vsub.f32 %v2434, %v2515
      %v2564 = vsub.f32 %v2435, %v2518
      %v2565 = vsub.f32 %v2436, %v2521
      %v2566 = vsub.f32 %v2437, %v2524
      %v2567 = vsub.f32 %v2438, %v2527
      %v2568 = vsub.f32 %v2439, %v2530
      %v2569 = vsub.f32 %v2440, %v2533
      %v2570 = vsub.f32 %v2441, %v2536
      %v2571 = vsub.f32 %v2442, %v2539
      %v2572 = vmul.f32 %v2540, 1.442695
      %v2573 = vpow.pop %v2572
      %v2574 = vmul.f32 %v2541, 1.442695
      %v2575 = vpow.pop %v2574
      %v2576 = vmul.f32 %v2542, 1.442695
      %v2577 = vpow.pop %v2576
      %v2578 = vmul.f32 %v2543, 1.442695
      %v2579 = vpow.pop %v2578
      %v2580 = vmul.f32 %v2544, 1.442695
      %v2581 = vpow.pop %v2580
      %v2582 = vmul.f32 %v2545, 1.442695
      %v2583 = vpow.pop %v2582
      %v2584 = vmul.f32 %v2546, 1.442695
      %v2585 = vpow.pop %v2584
      %v2586 = vmul.f32 %v2547, 1.442695
      %v2587 = vpow.pop %v2586
      %v2588 = vmul.f32 %v2548, 1.442695
      %v2589 = vpow.pop %v2588
      %v2590 = vmul.f32 %v2549, 1.442695
      %v2591 = vpow.pop %v2590
      %v2592 = vmul.f32 %v2550, 1.442695
      %v2593 = vpow.pop %v2592
      %v2594 = vmul.f32 %v2551, 1.442695
      %v2595 = vpow.pop %v2594
      %v2596 = vmul.f32 %v2552, 1.442695
      %v2597 = vpow.pop %v2596
      %v2598 = vmul.f32 %v2553, 1.442695
      %v2599 = vpow.pop %v2598
      %v2600 = vmul.f32 %v2554, 1.442695
      %v2601 = vpow.pop %v2600
      %v2602 = vmul.f32 %v2555, 1.442695
      %v2603 = vpow.pop %v2602
      %v2604 = vmul.f32 %v2556, 1.442695
      %v2605 = vpow.pop %v2604
      %v2606 = vmul.f32 %v2557, 1.442695
      %v2607 = vpow.pop %v2606
      %v2608 = vmul.f32 %v2558, 1.442695
      %v2609 = vpow.pop %v2608
      %v2610 = vmul.f32 %v2559, 1.442695
      %v2611 = vpow.pop %v2610
      %v2612 = vmul.f32 %v2560, 1.442695
      %v2613 = vpow.pop %v2612
      %v2614 = vmul.f32 %v2561, 1.442695
      %v2615 = vpow.pop %v2614
      %v2616 = vmul.f32 %v2562, 1.442695
      %v2617 = vpow.pop %v2616
      %v2618 = vmul.f32 %v2563, 1.442695
      %v2619 = vpow.pop %v2618
      %v2620 = vmul.f32 %v2564, 1.442695
      %v2621 = vpow.pop %v2620
      %v2622 = vmul.f32 %v2565, 1.442695
      %v2623 = vpow.pop %v2622
      %v2624 = vmul.f32 %v2566, 1.442695
      %v2625 = vpow.pop %v2624
      %v2626 = vmul.f32 %v2567, 1.442695
      %v2627 = vpow.pop %v2626
      %v2628 = vmul.f32 %v2568, 1.442695
      %v2629 = vpow.pop %v2628
      %v2630 = vmul.f32 %v2569, 1.442695
      %v2631 = vpow.pop %v2630
      %v2632 = vmul.f32 %v2570, 1.442695
      %v2633 = vpow.pop %v2632
      %v2634 = vmul.f32 %v2571, 1.442695
      %v2635 = vpow.pop %v2634
      %v2636 = vsel %vm2443, %v2573, 0.0
      %2637 = vadd.xlane.f32.xlu0 %v2636
      %v2638 = vpop.xlane.xlu0 %2637
      %v2639 = vsel %vm2443, %v2575, 0.0
      %2640 = vadd.xlane.f32.xlu0 %v2639
      %v2641 = vpop.xlane.xlu0 %2640
      %v2642 = vsel %vm2443, %v2577, 0.0
      %2643 = vadd.xlane.f32.xlu0 %v2642
      %v2644 = vpop.xlane.xlu0 %2643
      %v2645 = vsel %vm2443, %v2579, 0.0
      %2646 = vadd.xlane.f32.xlu0 %v2645
      %v2647 = vpop.xlane.xlu0 %2646
      %v2648 = vsel %vm2443, %v2581, 0.0
      %2649 = vadd.xlane.f32.xlu0 %v2648
      %v2650 = vpop.xlane.xlu0 %2649
      %v2651 = vsel %vm2443, %v2583, 0.0
      %2652 = vadd.xlane.f32.xlu0 %v2651
      %v2653 = vpop.xlane.xlu0 %2652
      %v2654 = vsel %vm2443, %v2585, 0.0
      %2655 = vadd.xlane.f32.xlu0 %v2654
      %v2656 = vpop.xlane.xlu0 %2655
      %v2657 = vsel %vm2443, %v2587, 0.0
      %2658 = vadd.xlane.f32.xlu0 %v2657
      %v2659 = vpop.xlane.xlu0 %2658
      %v2660 = vsel %vm2443, %v2589, 0.0
      %2661 = vadd.xlane.f32.xlu0 %v2660
      %v2662 = vpop.xlane.xlu0 %2661
      %v2663 = vsel %vm2443, %v2591, 0.0
      %2664 = vadd.xlane.f32.xlu0 %v2663
      %v2665 = vpop.xlane.xlu0 %2664
      %v2666 = vsel %vm2443, %v2593, 0.0
      %2667 = vadd.xlane.f32.xlu0 %v2666
      %v2668 = vpop.xlane.xlu0 %2667
      %v2669 = vsel %vm2443, %v2595, 0.0
      %2670 = vadd.xlane.f32.xlu0 %v2669
      %v2671 = vpop.xlane.xlu0 %2670
      %v2672 = vsel %vm2443, %v2597, 0.0
      %2673 = vadd.xlane.f32.xlu0 %v2672
      %v2674 = vpop.xlane.xlu0 %2673
      %v2675 = vsel %vm2443, %v2599, 0.0
      %2676 = vadd.xlane.f32.xlu0 %v2675
      %v2677 = vpop.xlane.xlu0 %2676
      %v2678 = vsel %vm2443, %v2601, 0.0
      %2679 = vadd.xlane.f32.xlu0 %v2678
      %v2680 = vpop.xlane.xlu0 %2679
      %v2681 = vsel %vm2443, %v2603, 0.0
      %2682 = vadd.xlane.f32.xlu0 %v2681
      %v2683 = vpop.xlane.xlu0 %2682
      %v2684 = vsel %vm2443, %v2605, 0.0
      %2685 = vadd.xlane.f32.xlu0 %v2684
      %v2686 = vpop.xlane.xlu0 %2685
      %v2687 = vsel %vm2443, %v2607, 0.0
      %2688 = vadd.xlane.f32.xlu0 %v2687
      %v2689 = vpop.xlane.xlu0 %2688
      %v2690 = vsel %vm2443, %v2609, 0.0
      %2691 = vadd.xlane.f32.xlu0 %v2690
      %v2692 = vpop.xlane.xlu0 %2691
      %v2693 = vsel %vm2443, %v2611, 0.0
      %2694 = vadd.xlane.f32.xlu0 %v2693
      %v2695 = vpop.xlane.xlu0 %2694
      %v2696 = vsel %vm2443, %v2613, 0.0
      %2697 = vadd.xlane.f32.xlu0 %v2696
      %v2698 = vpop.xlane.xlu0 %2697
      %v2699 = vsel %vm2443, %v2615, 0.0
      %2700 = vadd.xlane.f32.xlu0 %v2699
      %v2701 = vpop.xlane.xlu0 %2700
      %v2702 = vsel %vm2443, %v2617, 0.0
      %2703 = vadd.xlane.f32.xlu0 %v2702
      %v2704 = vpop.xlane.xlu0 %2703
      %v2705 = vsel %vm2443, %v2619, 0.0
      %2706 = vadd.xlane.f32.xlu0 %v2705
      %v2707 = vpop.xlane.xlu0 %2706
      %v2708 = vsel %vm2443, %v2621, 0.0
      %2709 = vadd.xlane.f32.xlu0 %v2708
      %v2710 = vpop.xlane.xlu0 %2709
      %v2711 = vsel %vm2443, %v2623, 0.0
      %2712 = vadd.xlane.f32.xlu0 %v2711
      %v2713 = vpop.xlane.xlu0 %2712
      %v2714 = vsel %vm2443, %v2625, 0.0
      %2715 = vadd.xlane.f32.xlu0 %v2714
      %v2716 = vpop.xlane.xlu0 %2715
      %v2717 = vsel %vm2443, %v2627, 0.0
      %2718 = vadd.xlane.f32.xlu0 %v2717
      %v2719 = vpop.xlane.xlu0 %2718
      %v2720 = vsel %vm2443, %v2629, 0.0
      %2721 = vadd.xlane.f32.xlu0 %v2720
      %v2722 = vpop.xlane.xlu0 %2721
      %v2723 = vsel %vm2443, %v2631, 0.0
      %2724 = vadd.xlane.f32.xlu0 %v2723
      %v2725 = vpop.xlane.xlu0 %2724
      %v2726 = vsel %vm2443, %v2633, 0.0
      %2727 = vadd.xlane.f32.xlu0 %v2726
      %v2728 = vpop.xlane.xlu0 %2727
      %v2729 = vsel %vm2443, %v2635, 0.0
      %2730 = vadd.xlane.f32.xlu0 %v2729
      %v2731 = vpop.xlane.xlu0 %2730
      %v2732 = vrcp.pop %v2638
      %v2733 = vrcp.pop %v2641
      %v2734 = vrcp.pop %v2644
      %v2735 = vrcp.pop %v2647
      %v2736 = vrcp.pop %v2650
      %v2737 = vrcp.pop %v2653
      %v2738 = vrcp.pop %v2656
      %v2739 = vrcp.pop %v2659
      %v2740 = vrcp.pop %v2662
      %v2741 = vrcp.pop %v2665
      %v2742 = vrcp.pop %v2668
      %v2743 = vrcp.pop %v2671
      %v2744 = vrcp.pop %v2674
      %v2745 = vrcp.pop %v2677
      %v2746 = vrcp.pop %v2680
      %v2747 = vrcp.pop %v2683
      %v2748 = vrcp.pop %v2686
      %v2749 = vrcp.pop %v2689
      %v2750 = vrcp.pop %v2692
      %v2751 = vrcp.pop %v2695
      %v2752 = vrcp.pop %v2698
      %v2753 = vrcp.pop %v2701
      %v2754 = vrcp.pop %v2704
      %v2755 = vrcp.pop %v2707
      %v2756 = vrcp.pop %v2710
      %v2757 = vrcp.pop %v2713
      %v2758 = vrcp.pop %v2716
      %v2759 = vrcp.pop %v2719
      %v2760 = vrcp.pop %v2722
      %v2761 = vrcp.pop %v2725
      %v2762 = vrcp.pop %v2728
      %v2763 = vrcp.pop %v2731
      %v2764 = vmul.f32 %v2573, %v2732
      %v2765 = vmul.f32 %v2575, %v2733
      %v2766 = vmul.f32 %v2577, %v2734
      %v2767 = vmul.f32 %v2579, %v2735
      %v2768 = vmul.f32 %v2581, %v2736
      %v2769 = vmul.f32 %v2583, %v2737
      %v2770 = vmul.f32 %v2585, %v2738
      %v2771 = vmul.f32 %v2587, %v2739
      %v2772 = vmul.f32 %v2589, %v2740
      %v2773 = vmul.f32 %v2591, %v2741
      %v2774 = vmul.f32 %v2593, %v2742
      %v2775 = vmul.f32 %v2595, %v2743
      %v2776 = vmul.f32 %v2597, %v2744
      %v2777 = vmul.f32 %v2599, %v2745
      %v2778 = vmul.f32 %v2601, %v2746
      %v2779 = vmul.f32 %v2603, %v2747
      %v2780 = vmul.f32 %v2605, %v2748
      %v2781 = vmul.f32 %v2607, %v2749
      %v2782 = vmul.f32 %v2609, %v2750
      %v2783 = vmul.f32 %v2611, %v2751
      %v2784 = vmul.f32 %v2613, %v2752
      %v2785 = vmul.f32 %v2615, %v2753
      %v2786 = vmul.f32 %v2617, %v2754
      %v2787 = vmul.f32 %v2619, %v2755
      %v2788 = vmul.f32 %v2621, %v2756
      %v2789 = vmul.f32 %v2623, %v2757
      %v2790 = vmul.f32 %v2625, %v2758
      %v2791 = vmul.f32 %v2627, %v2759
      %v2792 = vmul.f32 %v2629, %v2760
      %v2793 = vmul.f32 %v2631, %v2761
      %v2794 = vmul.f32 %v2633, %v2762
      %v2795 = vmul.f32 %v2635, %v2763
      %v2797 = vsel %vm2443, %v2764, 0
      %2799 = vmatpush.msra.mxu0 0.0
      %2800 = vmatpush.msra.mxu0 0.0
      %2801 = vmatpush.msra.mxu0 0.0
      %2802 = vmatpush.msra.mxu0 0.0
      %2803 = vmatpush.msra.mxu0 0.0
      %2804 = vmatpush.msra.mxu0 0.0
      %2805 = vmatpush.msra.mxu0 0.0
      %2806 = vmatpush.msra.mxu0 0.0
      %2807 = vmatpush.msra.mxu0 0.0
      %2808 = vmatpush.msra.mxu0 0.0
      %2809 = vmatpush.msra.mxu0 0.0
      %2810 = vmatpush.msra.mxu0 0.0
      %2811 = vmatpush.msra.mxu0 0.0
      %2812 = vmatpush.msra.mxu0 0.0
      %2813 = vmatpush.msra.mxu0 0.0
      %2814 = vmatpush.msra.mxu0 %v482
      %2815 = vmatmul.f32.gmra.mxu0 %v2797
      %v2816 = vpop.f32.mrf.mxu0
      %v2817 = vadd.f32 0.0, %v2816
      %2818 = vdwg.mxu0
      %v2820 = vsel %vm2443, %v2765, 0
      %2822 = vmatpush.msra.mxu0 0.0
      %2823 = vmatpush.msra.mxu0 0.0
      %2824 = vmatpush.msra.mxu0 0.0
      %2825 = vmatpush.msra.mxu0 0.0
      %2826 = vmatpush.msra.mxu0 0.0
      %2827 = vmatpush.msra.mxu0 0.0
      %2828 = vmatpush.msra.mxu0 0.0
      %2829 = vmatpush.msra.mxu0 0.0
      %2830 = vmatpush.msra.mxu0 0.0
      %2831 = vmatpush.msra.mxu0 0.0
      %2832 = vmatpush.msra.mxu0 0.0
      %2833 = vmatpush.msra.mxu0 0.0
      %2834 = vmatpush.msra.mxu0 0.0
      %2835 = vmatpush.msra.mxu0 0.0
      %2836 = vmatpush.msra.mxu0 0.0
      %2837 = vmatpush.msra.mxu0 %v485
      %2838 = vmatmul.f32.gmra.mxu0 %v2820
      %v2839 = vpop.f32.mrf.mxu0
      %v2840 = vadd.f32 0.0, %v2839
      %2841 = vdwg.mxu0
      %v2843 = vsel %vm2443, %v2766, 0
      %2845 = vmatpush.msra.mxu0 0.0
      %2846 = vmatpush.msra.mxu0 0.0
      %2847 = vmatpush.msra.mxu0 0.0
      %2848 = vmatpush.msra.mxu0 0.0
      %2849 = vmatpush.msra.mxu0 0.0
      %2850 = vmatpush.msra.mxu0 0.0
      %2851 = vmatpush.msra.mxu0 0.0
      %2852 = vmatpush.msra.mxu0 0.0
      %2853 = vmatpush.msra.mxu0 0.0
      %2854 = vmatpush.msra.mxu0 0.0
      %2855 = vmatpush.msra.mxu0 0.0
      %2856 = vmatpush.msra.mxu0 0.0
      %2857 = vmatpush.msra.mxu0 0.0
      %2858 = vmatpush.msra.mxu0 0.0
      %2859 = vmatpush.msra.mxu0 0.0
      %2860 = vmatpush.msra.mxu0 %v488
      %2861 = vmatmul.f32.gmra.mxu0 %v2843
      %v2862 = vpop.f32.mrf.mxu0
      %v2863 = vadd.f32 0.0, %v2862
      %2864 = vdwg.mxu0
      %v2866 = vsel %vm2443, %v2767, 0
      %2868 = vmatpush.msra.mxu0 0.0
      %2869 = vmatpush.msra.mxu0 0.0
      %2870 = vmatpush.msra.mxu0 0.0
      %2871 = vmatpush.msra.mxu0 0.0
      %2872 = vmatpush.msra.mxu0 0.0
      %2873 = vmatpush.msra.mxu0 0.0
      %2874 = vmatpush.msra.mxu0 0.0
      %2875 = vmatpush.msra.mxu0 0.0
      %2876 = vmatpush.msra.mxu0 0.0
      %2877 = vmatpush.msra.mxu0 0.0
      %2878 = vmatpush.msra.mxu0 0.0
      %2879 = vmatpush.msra.mxu0 0.0
      %2880 = vmatpush.msra.mxu0 0.0
      %2881 = vmatpush.msra.mxu0 0.0
      %2882 = vmatpush.msra.mxu0 0.0
      %2883 = vmatpush.msra.mxu0 %v491
      %2884 = vmatmul.f32.gmra.mxu0 %v2866
      %v2885 = vpop.f32.mrf.mxu0
      %v2886 = vadd.f32 0.0, %v2885
      %2887 = vdwg.mxu0
      %v2889 = vsel %vm2443, %v2768, 0
      %2891 = vmatpush.msra.mxu0 0.0
      %2892 = vmatpush.msra.mxu0 0.0
      %2893 = vmatpush.msra.mxu0 0.0
      %2894 = vmatpush.msra.mxu0 0.0
      %2895 = vmatpush.msra.mxu0 0.0
      %2896 = vmatpush.msra.mxu0 0.0
      %2897 = vmatpush.msra.mxu0 0.0
      %2898 = vmatpush.msra.mxu0 0.0
      %2899 = vmatpush.msra.mxu0 0.0
      %2900 = vmatpush.msra.mxu0 0.0
      %2901 = vmatpush.msra.mxu0 0.0
      %2902 = vmatpush.msra.mxu0 0.0
      %2903 = vmatpush.msra.mxu0 0.0
      %2904 = vmatpush.msra.mxu0 0.0
      %2905 = vmatpush.msra.mxu0 0.0
      %2906 = vmatpush.msra.mxu0 %v494
      %2907 = vmatmul.f32.gmra.mxu0 %v2889
      %v2908 = vpop.f32.mrf.mxu0
      %v2909 = vadd.f32 0.0, %v2908
      %2910 = vdwg.mxu0
      %v2912 = vsel %vm2443, %v2769, 0
      %2914 = vmatpush.msra.mxu0 0.0
      %2915 = vmatpush.msra.mxu0 0.0
      %2916 = vmatpush.msra.mxu0 0.0
      %2917 = vmatpush.msra.mxu0 0.0
      %2918 = vmatpush.msra.mxu0 0.0
      %2919 = vmatpush.msra.mxu0 0.0
      %2920 = vmatpush.msra.mxu0 0.0
      %2921 = vmatpush.msra.mxu0 0.0
      %2922 = vmatpush.msra.mxu0 0.0
      %2923 = vmatpush.msra.mxu0 0.0
      %2924 = vmatpush.msra.mxu0 0.0
      %2925 = vmatpush.msra.mxu0 0.0
      %2926 = vmatpush.msra.mxu0 0.0
      %2927 = vmatpush.msra.mxu0 0.0
      %2928 = vmatpush.msra.mxu0 0.0
      %2929 = vmatpush.msra.mxu0 %v497
      %2930 = vmatmul.f32.gmra.mxu0 %v2912
      %v2931 = vpop.f32.mrf.mxu0
      %v2932 = vadd.f32 0.0, %v2931
      %2933 = vdwg.mxu0
      %v2935 = vsel %vm2443, %v2770, 0
      %2937 = vmatpush.msra.mxu0 0.0
      %2938 = vmatpush.msra.mxu0 0.0
      %2939 = vmatpush.msra.mxu0 0.0
      %2940 = vmatpush.msra.mxu0 0.0
      %2941 = vmatpush.msra.mxu0 0.0
      %2942 = vmatpush.msra.mxu0 0.0
      %2943 = vmatpush.msra.mxu0 0.0
      %2944 = vmatpush.msra.mxu0 0.0
      %2945 = vmatpush.msra.mxu0 0.0
      %2946 = vmatpush.msra.mxu0 0.0
      %2947 = vmatpush.msra.mxu0 0.0
      %2948 = vmatpush.msra.mxu0 0.0
      %2949 = vmatpush.msra.mxu0 0.0
      %2950 = vmatpush.msra.mxu0 0.0
      %2951 = vmatpush.msra.mxu0 0.0
      %2952 = vmatpush.msra.mxu0 %v500
      %2953 = vmatmul.f32.gmra.mxu0 %v2935
      %v2954 = vpop.f32.mrf.mxu0
      %v2955 = vadd.f32 0.0, %v2954
      %2956 = vdwg.mxu0
      %v2958 = vsel %vm2443, %v2771, 0
      %2960 = vmatpush.msra.mxu0 0.0
      %2961 = vmatpush.msra.mxu0 0.0
      %2962 = vmatpush.msra.mxu0 0.0
      %2963 = vmatpush.msra.mxu0 0.0
      %2964 = vmatpush.msra.mxu0 0.0
      %2965 = vmatpush.msra.mxu0 0.0
      %2966 = vmatpush.msra.mxu0 0.0
      %2967 = vmatpush.msra.mxu0 0.0
      %2968 = vmatpush.msra.mxu0 0.0
      %2969 = vmatpush.msra.mxu0 0.0
      %2970 = vmatpush.msra.mxu0 0.0
      %2971 = vmatpush.msra.mxu0 0.0
      %2972 = vmatpush.msra.mxu0 0.0
      %2973 = vmatpush.msra.mxu0 0.0
      %2974 = vmatpush.msra.mxu0 0.0
      %2975 = vmatpush.msra.mxu0 %v503
      %2976 = vmatmul.f32.gmra.mxu0 %v2958
      %v2977 = vpop.f32.mrf.mxu0
      %v2978 = vadd.f32 0.0, %v2977
      %2979 = vdwg.mxu0
      %v2981 = vsel %vm2443, %v2772, 0
      %2983 = vmatpush.msra.mxu0 0.0
      %2984 = vmatpush.msra.mxu0 0.0
      %2985 = vmatpush.msra.mxu0 0.0
      %2986 = vmatpush.msra.mxu0 0.0
      %2987 = vmatpush.msra.mxu0 0.0
      %2988 = vmatpush.msra.mxu0 0.0
      %2989 = vmatpush.msra.mxu0 0.0
      %2990 = vmatpush.msra.mxu0 0.0
      %2991 = vmatpush.msra.mxu0 0.0
      %2992 = vmatpush.msra.mxu0 0.0
      %2993 = vmatpush.msra.mxu0 0.0
      %2994 = vmatpush.msra.mxu0 0.0
      %2995 = vmatpush.msra.mxu0 0.0
      %2996 = vmatpush.msra.mxu0 0.0
      %2997 = vmatpush.msra.mxu0 0.0
      %2998 = vmatpush.msra.mxu0 %v506
      %2999 = vmatmul.f32.gmra.mxu0 %v2981
      %v3000 = vpop.f32.mrf.mxu0
      %v3001 = vadd.f32 0.0, %v3000
      %3002 = vdwg.mxu0
      %v3004 = vsel %vm2443, %v2773, 0
      %3006 = vmatpush.msra.mxu0 0.0
      %3007 = vmatpush.msra.mxu0 0.0
      %3008 = vmatpush.msra.mxu0 0.0
      %3009 = vmatpush.msra.mxu0 0.0
      %3010 = vmatpush.msra.mxu0 0.0
      %3011 = vmatpush.msra.mxu0 0.0
      %3012 = vmatpush.msra.mxu0 0.0
      %3013 = vmatpush.msra.mxu0 0.0
      %3014 = vmatpush.msra.mxu0 0.0
      %3015 = vmatpush.msra.mxu0 0.0
      %3016 = vmatpush.msra.mxu0 0.0
      %3017 = vmatpush.msra.mxu0 0.0
      %3018 = vmatpush.msra.mxu0 0.0
      %3019 = vmatpush.msra.mxu0 0.0
      %3020 = vmatpush.msra.mxu0 0.0
      %3021 = vmatpush.msra.mxu0 %v509
      %3022 = vmatmul.f32.gmra.mxu0 %v3004
      %v3023 = vpop.f32.mrf.mxu0
      %v3024 = vadd.f32 0.0, %v3023
      %3025 = vdwg.mxu0
      %v3027 = vsel %vm2443, %v2774, 0
      %3029 = vmatpush.msra.mxu0 0.0
      %3030 = vmatpush.msra.mxu0 0.0
      %3031 = vmatpush.msra.mxu0 0.0
      %3032 = vmatpush.msra.mxu0 0.0
      %3033 = vmatpush.msra.mxu0 0.0
      %3034 = vmatpush.msra.mxu0 0.0
      %3035 = vmatpush.msra.mxu0 0.0
      %3036 = vmatpush.msra.mxu0 0.0
      %3037 = vmatpush.msra.mxu0 0.0
      %3038 = vmatpush.msra.mxu0 0.0
      %3039 = vmatpush.msra.mxu0 0.0
      %3040 = vmatpush.msra.mxu0 0.0
      %3041 = vmatpush.msra.mxu0 0.0
      %3042 = vmatpush.msra.mxu0 0.0
      %3043 = vmatpush.msra.mxu0 0.0
      %3044 = vmatpush.msra.mxu0 %v512
      %3045 = vmatmul.f32.gmra.mxu0 %v3027
      %v3046 = vpop.f32.mrf.mxu0
      %v3047 = vadd.f32 0.0, %v3046
      %3048 = vdwg.mxu0
      %v3050 = vsel %vm2443, %v2775, 0
      %3052 = vmatpush.msra.mxu0 0.0
      %3053 = vmatpush.msra.mxu0 0.0
      %3054 = vmatpush.msra.mxu0 0.0
      %3055 = vmatpush.msra.mxu0 0.0
      %3056 = vmatpush.msra.mxu0 0.0
      %3057 = vmatpush.msra.mxu0 0.0
      %3058 = vmatpush.msra.mxu0 0.0
      %3059 = vmatpush.msra.mxu0 0.0
      %3060 = vmatpush.msra.mxu0 0.0
      %3061 = vmatpush.msra.mxu0 0.0
      %3062 = vmatpush.msra.mxu0 0.0
      %3063 = vmatpush.msra.mxu0 0.0
      %3064 = vmatpush.msra.mxu0 0.0
      %3065 = vmatpush.msra.mxu0 0.0
      %3066 = vmatpush.msra.mxu0 0.0
      %3067 = vmatpush.msra.mxu0 %v515
      %3068 = vmatmul.f32.gmra.mxu0 %v3050
      %v3069 = vpop.f32.mrf.mxu0
      %v3070 = vadd.f32 0.0, %v3069
      %3071 = vdwg.mxu0
      %v3073 = vsel %vm2443, %v2776, 0
      %3075 = vmatpush.msra.mxu0 0.0
      %3076 = vmatpush.msra.mxu0 0.0
      %3077 = vmatpush.msra.mxu0 0.0
      %3078 = vmatpush.msra.mxu0 0.0
      %3079 = vmatpush.msra.mxu0 0.0
      %3080 = vmatpush.msra.mxu0 0.0
      %3081 = vmatpush.msra.mxu0 0.0
      %3082 = vmatpush.msra.mxu0 0.0
      %3083 = vmatpush.msra.mxu0 0.0
      %3084 = vmatpush.msra.mxu0 0.0
      %3085 = vmatpush.msra.mxu0 0.0
      %3086 = vmatpush.msra.mxu0 0.0
      %3087 = vmatpush.msra.mxu0 0.0
      %3088 = vmatpush.msra.mxu0 0.0
      %3089 = vmatpush.msra.mxu0 0.0
      %3090 = vmatpush.msra.mxu0 %v518
      %3091 = vmatmul.f32.gmra.mxu0 %v3073
      %v3092 = vpop.f32.mrf.mxu0
      %v3093 = vadd.f32 0.0, %v3092
      %3094 = vdwg.mxu0
      %v3096 = vsel %vm2443, %v2777, 0
      %3098 = vmatpush.msra.mxu0 0.0
      %3099 = vmatpush.msra.mxu0 0.0
      %3100 = vmatpush.msra.mxu0 0.0
      %3101 = vmatpush.msra.mxu0 0.0
      %3102 = vmatpush.msra.mxu0 0.0
      %3103 = vmatpush.msra.mxu0 0.0
      %3104 = vmatpush.msra.mxu0 0.0
      %3105 = vmatpush.msra.mxu0 0.0
      %3106 = vmatpush.msra.mxu0 0.0
      %3107 = vmatpush.msra.mxu0 0.0
      %3108 = vmatpush.msra.mxu0 0.0
      %3109 = vmatpush.msra.mxu0 0.0
      %3110 = vmatpush.msra.mxu0 0.0
      %3111 = vmatpush.msra.mxu0 0.0
      %3112 = vmatpush.msra.mxu0 0.0
      %3113 = vmatpush.msra.mxu0 %v521
      %3114 = vmatmul.f32.gmra.mxu0 %v3096
      %v3115 = vpop.f32.mrf.mxu0
      %v3116 = vadd.f32 0.0, %v3115
      %3117 = vdwg.mxu0
      %v3119 = vsel %vm2443, %v2778, 0
      %3121 = vmatpush.msra.mxu0 0.0
      %3122 = vmatpush.msra.mxu0 0.0
      %3123 = vmatpush.msra.mxu0 0.0
      %3124 = vmatpush.msra.mxu0 0.0
      %3125 = vmatpush.msra.mxu0 0.0
      %3126 = vmatpush.msra.mxu0 0.0
      %3127 = vmatpush.msra.mxu0 0.0
      %3128 = vmatpush.msra.mxu0 0.0
      %3129 = vmatpush.msra.mxu0 0.0
      %3130 = vmatpush.msra.mxu0 0.0
      %3131 = vmatpush.msra.mxu0 0.0
      %3132 = vmatpush.msra.mxu0 0.0
      %3133 = vmatpush.msra.mxu0 0.0
      %3134 = vmatpush.msra.mxu0 0.0
      %3135 = vmatpush.msra.mxu0 0.0
      %3136 = vmatpush.msra.mxu0 %v524
      %3137 = vmatmul.f32.gmra.mxu0 %v3119
      %v3138 = vpop.f32.mrf.mxu0
      %v3139 = vadd.f32 0.0, %v3138
      %3140 = vdwg.mxu0
      %v3142 = vsel %vm2443, %v2779, 0
      %3144 = vmatpush.msra.mxu0 0.0
      %3145 = vmatpush.msra.mxu0 0.0
      %3146 = vmatpush.msra.mxu0 0.0
      %3147 = vmatpush.msra.mxu0 0.0
      %3148 = vmatpush.msra.mxu0 0.0
      %3149 = vmatpush.msra.mxu0 0.0
      %3150 = vmatpush.msra.mxu0 0.0
      %3151 = vmatpush.msra.mxu0 0.0
      %3152 = vmatpush.msra.mxu0 0.0
      %3153 = vmatpush.msra.mxu0 0.0
      %3154 = vmatpush.msra.mxu0 0.0
      %3155 = vmatpush.msra.mxu0 0.0
      %3156 = vmatpush.msra.mxu0 0.0
      %3157 = vmatpush.msra.mxu0 0.0
      %3158 = vmatpush.msra.mxu0 0.0
      %3159 = vmatpush.msra.mxu0 %v527
      %3160 = vmatmul.f32.gmra.mxu0 %v3142
      %v3161 = vpop.f32.mrf.mxu0
      %v3162 = vadd.f32 0.0, %v3161
      %3163 = vdwg.mxu0
      %v3165 = vsel %vm2443, %v2780, 0
      %3167 = vmatpush.msra.mxu0 0.0
      %3168 = vmatpush.msra.mxu0 0.0
      %3169 = vmatpush.msra.mxu0 0.0
      %3170 = vmatpush.msra.mxu0 0.0
      %3171 = vmatpush.msra.mxu0 0.0
      %3172 = vmatpush.msra.mxu0 0.0
      %3173 = vmatpush.msra.mxu0 0.0
      %3174 = vmatpush.msra.mxu0 0.0
      %3175 = vmatpush.msra.mxu0 0.0
      %3176 = vmatpush.msra.mxu0 0.0
      %3177 = vmatpush.msra.mxu0 0.0
      %3178 = vmatpush.msra.mxu0 0.0
      %3179 = vmatpush.msra.mxu0 0.0
      %3180 = vmatpush.msra.mxu0 0.0
      %3181 = vmatpush.msra.mxu0 0.0
      %3182 = vmatpush.msra.mxu0 %v530
      %3183 = vmatmul.f32.gmra.mxu0 %v3165
      %v3184 = vpop.f32.mrf.mxu0
      %v3185 = vadd.f32 0.0, %v3184
      %3186 = vdwg.mxu0
      %v3188 = vsel %vm2443, %v2781, 0
      %3190 = vmatpush.msra.mxu0 0.0
      %3191 = vmatpush.msra.mxu0 0.0
      %3192 = vmatpush.msra.mxu0 0.0
      %3193 = vmatpush.msra.mxu0 0.0
      %3194 = vmatpush.msra.mxu0 0.0
      %3195 = vmatpush.msra.mxu0 0.0
      %3196 = vmatpush.msra.mxu0 0.0
      %3197 = vmatpush.msra.mxu0 0.0
      %3198 = vmatpush.msra.mxu0 0.0
      %3199 = vmatpush.msra.mxu0 0.0
      %3200 = vmatpush.msra.mxu0 0.0
      %3201 = vmatpush.msra.mxu0 0.0
      %3202 = vmatpush.msra.mxu0 0.0
      %3203 = vmatpush.msra.mxu0 0.0
      %3204 = vmatpush.msra.mxu0 0.0
      %3205 = vmatpush.msra.mxu0 %v533
      %3206 = vmatmul.f32.gmra.mxu0 %v3188
      %v3207 = vpop.f32.mrf.mxu0
      %v3208 = vadd.f32 0.0, %v3207
      %3209 = vdwg.mxu0
      %v3211 = vsel %vm2443, %v2782, 0
      %3213 = vmatpush.msra.mxu0 0.0
      %3214 = vmatpush.msra.mxu0 0.0
      %3215 = vmatpush.msra.mxu0 0.0
      %3216 = vmatpush.msra.mxu0 0.0
      %3217 = vmatpush.msra.mxu0 0.0
      %3218 = vmatpush.msra.mxu0 0.0
      %3219 = vmatpush.msra.mxu0 0.0
      %3220 = vmatpush.msra.mxu0 0.0
      %3221 = vmatpush.msra.mxu0 0.0
      %3222 = vmatpush.msra.mxu0 0.0
      %3223 = vmatpush.msra.mxu0 0.0
      %3224 = vmatpush.msra.mxu0 0.0
      %3225 = vmatpush.msra.mxu0 0.0
      %3226 = vmatpush.msra.mxu0 0.0
      %3227 = vmatpush.msra.mxu0 0.0
      %3228 = vmatpush.msra.mxu0 %v536
      %3229 = vmatmul.f32.gmra.mxu0 %v3211
      %v3230 = vpop.f32.mrf.mxu0
      %v3231 = vadd.f32 0.0, %v3230
      %3232 = vdwg.mxu0
      %v3234 = vsel %vm2443, %v2783, 0
      %3236 = vmatpush.msra.mxu0 0.0
      %3237 = vmatpush.msra.mxu0 0.0
      %3238 = vmatpush.msra.mxu0 0.0
      %3239 = vmatpush.msra.mxu0 0.0
      %3240 = vmatpush.msra.mxu0 0.0
      %3241 = vmatpush.msra.mxu0 0.0
      %3242 = vmatpush.msra.mxu0 0.0
      %3243 = vmatpush.msra.mxu0 0.0
      %3244 = vmatpush.msra.mxu0 0.0
      %3245 = vmatpush.msra.mxu0 0.0
      %3246 = vmatpush.msra.mxu0 0.0
      %3247 = vmatpush.msra.mxu0 0.0
      %3248 = vmatpush.msra.mxu0 0.0
      %3249 = vmatpush.msra.mxu0 0.0
      %3250 = vmatpush.msra.mxu0 0.0
      %3251 = vmatpush.msra.mxu0 %v539
      %3252 = vmatmul.f32.gmra.mxu0 %v3234
      %v3253 = vpop.f32.mrf.mxu0
      %v3254 = vadd.f32 0.0, %v3253
      %3255 = vdwg.mxu0
      %v3257 = vsel %vm2443, %v2784, 0
      %3259 = vmatpush.msra.mxu0 0.0
      %3260 = vmatpush.msra.mxu0 0.0
      %3261 = vmatpush.msra.mxu0 0.0
      %3262 = vmatpush.msra.mxu0 0.0
      %3263 = vmatpush.msra.mxu0 0.0
      %3264 = vmatpush.msra.mxu0 0.0
      %3265 = vmatpush.msra.mxu0 0.0
      %3266 = vmatpush.msra.mxu0 0.0
      %3267 = vmatpush.msra.mxu0 0.0
      %3268 = vmatpush.msra.mxu0 0.0
      %3269 = vmatpush.msra.mxu0 0.0
      %3270 = vmatpush.msra.mxu0 0.0
      %3271 = vmatpush.msra.mxu0 0.0
      %3272 = vmatpush.msra.mxu0 0.0
      %3273 = vmatpush.msra.mxu0 0.0
      %3274 = vmatpush.msra.mxu0 %v542
      %3275 = vmatmul.f32.gmra.mxu0 %v3257
      %v3276 = vpop.f32.mrf.mxu0
      %v3277 = vadd.f32 0.0, %v3276
      %3278 = vdwg.mxu0
      %v3280 = vsel %vm2443, %v2785, 0
      %3282 = vmatpush.msra.mxu0 0.0
      %3283 = vmatpush.msra.mxu0 0.0
      %3284 = vmatpush.msra.mxu0 0.0
      %3285 = vmatpush.msra.mxu0 0.0
      %3286 = vmatpush.msra.mxu0 0.0
      %3287 = vmatpush.msra.mxu0 0.0
      %3288 = vmatpush.msra.mxu0 0.0
      %3289 = vmatpush.msra.mxu0 0.0
      %3290 = vmatpush.msra.mxu0 0.0
      %3291 = vmatpush.msra.mxu0 0.0
      %3292 = vmatpush.msra.mxu0 0.0
      %3293 = vmatpush.msra.mxu0 0.0
      %3294 = vmatpush.msra.mxu0 0.0
      %3295 = vmatpush.msra.mxu0 0.0
      %3296 = vmatpush.msra.mxu0 0.0
      %3297 = vmatpush.msra.mxu0 %v545
      %3298 = vmatmul.f32.gmra.mxu0 %v3280
      %v3299 = vpop.f32.mrf.mxu0
      %v3300 = vadd.f32 0.0, %v3299
      %3301 = vdwg.mxu0
      %v3303 = vsel %vm2443, %v2786, 0
      %3305 = vmatpush.msra.mxu0 0.0
      %3306 = vmatpush.msra.mxu0 0.0
      %3307 = vmatpush.msra.mxu0 0.0
      %3308 = vmatpush.msra.mxu0 0.0
      %3309 = vmatpush.msra.mxu0 0.0
      %3310 = vmatpush.msra.mxu0 0.0
      %3311 = vmatpush.msra.mxu0 0.0
      %3312 = vmatpush.msra.mxu0 0.0
      %3313 = vmatpush.msra.mxu0 0.0
      %3314 = vmatpush.msra.mxu0 0.0
      %3315 = vmatpush.msra.mxu0 0.0
      %3316 = vmatpush.msra.mxu0 0.0
      %3317 = vmatpush.msra.mxu0 0.0
      %3318 = vmatpush.msra.mxu0 0.0
      %3319 = vmatpush.msra.mxu0 0.0
      %3320 = vmatpush.msra.mxu0 %v548
      %3321 = vmatmul.f32.gmra.mxu0 %v3303
      %v3322 = vpop.f32.mrf.mxu0
      %v3323 = vadd.f32 0.0, %v3322
      %3324 = vdwg.mxu0
      %v3326 = vsel %vm2443, %v2787, 0
      %3328 = vmatpush.msra.mxu0 0.0
      %3329 = vmatpush.msra.mxu0 0.0
      %3330 = vmatpush.msra.mxu0 0.0
      %3331 = vmatpush.msra.mxu0 0.0
      %3332 = vmatpush.msra.mxu0 0.0
      %3333 = vmatpush.msra.mxu0 0.0
      %3334 = vmatpush.msra.mxu0 0.0
      %3335 = vmatpush.msra.mxu0 0.0
      %3336 = vmatpush.msra.mxu0 0.0
      %3337 = vmatpush.msra.mxu0 0.0
      %3338 = vmatpush.msra.mxu0 0.0
      %3339 = vmatpush.msra.mxu0 0.0
      %3340 = vmatpush.msra.mxu0 0.0
      %3341 = vmatpush.msra.mxu0 0.0
      %3342 = vmatpush.msra.mxu0 0.0
      %3343 = vmatpush.msra.mxu0 %v551
      %3344 = vmatmul.f32.gmra.mxu0 %v3326
      %v3345 = vpop.f32.mrf.mxu0
      %v3346 = vadd.f32 0.0, %v3345
      %3347 = vdwg.mxu0
      %v3349 = vsel %vm2443, %v2788, 0
      %3351 = vmatpush.msra.mxu0 0.0
      %3352 = vmatpush.msra.mxu0 0.0
      %3353 = vmatpush.msra.mxu0 0.0
      %3354 = vmatpush.msra.mxu0 0.0
      %3355 = vmatpush.msra.mxu0 0.0
      %3356 = vmatpush.msra.mxu0 0.0
      %3357 = vmatpush.msra.mxu0 0.0
      %3358 = vmatpush.msra.mxu0 0.0
      %3359 = vmatpush.msra.mxu0 0.0
      %3360 = vmatpush.msra.mxu0 0.0
      %3361 = vmatpush.msra.mxu0 0.0
      %3362 = vmatpush.msra.mxu0 0.0
      %3363 = vmatpush.msra.mxu0 0.0
      %3364 = vmatpush.msra.mxu0 0.0
      %3365 = vmatpush.msra.mxu0 0.0
      %3366 = vmatpush.msra.mxu0 %v554
      %3367 = vmatmul.f32.gmra.mxu0 %v3349
      %v3368 = vpop.f32.mrf.mxu0
      %v3369 = vadd.f32 0.0, %v3368
      %3370 = vdwg.mxu0
      %v3372 = vsel %vm2443, %v2789, 0
      %3374 = vmatpush.msra.mxu0 0.0
      %3375 = vmatpush.msra.mxu0 0.0
      %3376 = vmatpush.msra.mxu0 0.0
      %3377 = vmatpush.msra.mxu0 0.0
      %3378 = vmatpush.msra.mxu0 0.0
      %3379 = vmatpush.msra.mxu0 0.0
      %3380 = vmatpush.msra.mxu0 0.0
      %3381 = vmatpush.msra.mxu0 0.0
      %3382 = vmatpush.msra.mxu0 0.0
      %3383 = vmatpush.msra.mxu0 0.0
      %3384 = vmatpush.msra.mxu0 0.0
      %3385 = vmatpush.msra.mxu0 0.0
      %3386 = vmatpush.msra.mxu0 0.0
      %3387 = vmatpush.msra.mxu0 0.0
      %3388 = vmatpush.msra.mxu0 0.0
      %3389 = vmatpush.msra.mxu0 %v557
      %3390 = vmatmul.f32.gmra.mxu0 %v3372
      %v3391 = vpop.f32.mrf.mxu0
      %v3392 = vadd.f32 0.0, %v3391
      %3393 = vdwg.mxu0
      %v3395 = vsel %vm2443, %v2790, 0
      %3397 = vmatpush.msra.mxu0 0.0
      %3398 = vmatpush.msra.mxu0 0.0
      %3399 = vmatpush.msra.mxu0 0.0
      %3400 = vmatpush.msra.mxu0 0.0
      %3401 = vmatpush.msra.mxu0 0.0
      %3402 = vmatpush.msra.mxu0 0.0
      %3403 = vmatpush.msra.mxu0 0.0
      %3404 = vmatpush.msra.mxu0 0.0
      %3405 = vmatpush.msra.mxu0 0.0
      %3406 = vmatpush.msra.mxu0 0.0
      %3407 = vmatpush.msra.mxu0 0.0
      %3408 = vmatpush.msra.mxu0 0.0
      %3409 = vmatpush.msra.mxu0 0.0
      %3410 = vmatpush.msra.mxu0 0.0
      %3411 = vmatpush.msra.mxu0 0.0
      %3412 = vmatpush.msra.mxu0 %v560
      %3413 = vmatmul.f32.gmra.mxu0 %v3395
      %v3414 = vpop.f32.mrf.mxu0
      %v3415 = vadd.f32 0.0, %v3414
      %3416 = vdwg.mxu0
      %v3418 = vsel %vm2443, %v2791, 0
      %3420 = vmatpush.msra.mxu0 0.0
      %3421 = vmatpush.msra.mxu0 0.0
      %3422 = vmatpush.msra.mxu0 0.0
      %3423 = vmatpush.msra.mxu0 0.0
      %3424 = vmatpush.msra.mxu0 0.0
      %3425 = vmatpush.msra.mxu0 0.0
      %3426 = vmatpush.msra.mxu0 0.0
      %3427 = vmatpush.msra.mxu0 0.0
      %3428 = vmatpush.msra.mxu0 0.0
      %3429 = vmatpush.msra.mxu0 0.0
      %3430 = vmatpush.msra.mxu0 0.0
      %3431 = vmatpush.msra.mxu0 0.0
      %3432 = vmatpush.msra.mxu0 0.0
      %3433 = vmatpush.msra.mxu0 0.0
      %3434 = vmatpush.msra.mxu0 0.0
      %3435 = vmatpush.msra.mxu0 %v563
      %3436 = vmatmul.f32.gmra.mxu0 %v3418
      %v3437 = vpop.f32.mrf.mxu0
      %v3438 = vadd.f32 0.0, %v3437
      %3439 = vdwg.mxu0
      %v3441 = vsel %vm2443, %v2792, 0
      %3443 = vmatpush.msra.mxu0 0.0
      %3444 = vmatpush.msra.mxu0 0.0
      %3445 = vmatpush.msra.mxu0 0.0
      %3446 = vmatpush.msra.mxu0 0.0
      %3447 = vmatpush.msra.mxu0 0.0
      %3448 = vmatpush.msra.mxu0 0.0
      %3449 = vmatpush.msra.mxu0 0.0
      %3450 = vmatpush.msra.mxu0 0.0
      %3451 = vmatpush.msra.mxu0 0.0
      %3452 = vmatpush.msra.mxu0 0.0
      %3453 = vmatpush.msra.mxu0 0.0
      %3454 = vmatpush.msra.mxu0 0.0
      %3455 = vmatpush.msra.mxu0 0.0
      %3456 = vmatpush.msra.mxu0 0.0
      %3457 = vmatpush.msra.mxu0 0.0
      %3458 = vmatpush.msra.mxu0 %v566
      %3459 = vmatmul.f32.gmra.mxu0 %v3441
      %v3460 = vpop.f32.mrf.mxu0
      %v3461 = vadd.f32 0.0, %v3460
      %3462 = vdwg.mxu0
      %v3464 = vsel %vm2443, %v2793, 0
      %3466 = vmatpush.msra.mxu0 0.0
      %3467 = vmatpush.msra.mxu0 0.0
      %3468 = vmatpush.msra.mxu0 0.0
      %3469 = vmatpush.msra.mxu0 0.0
      %3470 = vmatpush.msra.mxu0 0.0
      %3471 = vmatpush.msra.mxu0 0.0
      %3472 = vmatpush.msra.mxu0 0.0
      %3473 = vmatpush.msra.mxu0 0.0
      %3474 = vmatpush.msra.mxu0 0.0
      %3475 = vmatpush.msra.mxu0 0.0
      %3476 = vmatpush.msra.mxu0 0.0
      %3477 = vmatpush.msra.mxu0 0.0
      %3478 = vmatpush.msra.mxu0 0.0
      %3479 = vmatpush.msra.mxu0 0.0
      %3480 = vmatpush.msra.mxu0 0.0
      %3481 = vmatpush.msra.mxu0 %v569
      %3482 = vmatmul.f32.gmra.mxu0 %v3464
      %v3483 = vpop.f32.mrf.mxu0
      %v3484 = vadd.f32 0.0, %v3483
      %3485 = vdwg.mxu0
      %v3487 = vsel %vm2443, %v2794, 0
      %3489 = vmatpush.msra.mxu0 0.0
      %3490 = vmatpush.msra.mxu0 0.0
      %3491 = vmatpush.msra.mxu0 0.0
      %3492 = vmatpush.msra.mxu0 0.0
      %3493 = vmatpush.msra.mxu0 0.0
      %3494 = vmatpush.msra.mxu0 0.0
      %3495 = vmatpush.msra.mxu0 0.0
      %3496 = vmatpush.msra.mxu0 0.0
      %3497 = vmatpush.msra.mxu0 0.0
      %3498 = vmatpush.msra.mxu0 0.0
      %3499 = vmatpush.msra.mxu0 0.0
      %3500 = vmatpush.msra.mxu0 0.0
      %3501 = vmatpush.msra.mxu0 0.0
      %3502 = vmatpush.msra.mxu0 0.0
      %3503 = vmatpush.msra.mxu0 0.0
      %3504 = vmatpush.msra.mxu0 %v572
      %3505 = vmatmul.f32.gmra.mxu0 %v3487
      %v3506 = vpop.f32.mrf.mxu0
      %v3507 = vadd.f32 0.0, %v3506
      %3508 = vdwg.mxu0
      %v3510 = vsel %vm2443, %v2795, 0
      %3512 = vmatpush.msra.mxu0 0.0
      %3513 = vmatpush.msra.mxu0 0.0
      %3514 = vmatpush.msra.mxu0 0.0
      %3515 = vmatpush.msra.mxu0 0.0
      %3516 = vmatpush.msra.mxu0 0.0
      %3517 = vmatpush.msra.mxu0 0.0
      %3518 = vmatpush.msra.mxu0 0.0
      %3519 = vmatpush.msra.mxu0 0.0
      %3520 = vmatpush.msra.mxu0 0.0
      %3521 = vmatpush.msra.mxu0 0.0
      %3522 = vmatpush.msra.mxu0 0.0
      %3523 = vmatpush.msra.mxu0 0.0
      %3524 = vmatpush.msra.mxu0 0.0
      %3525 = vmatpush.msra.mxu0 0.0
      %3526 = vmatpush.msra.mxu0 0.0
      %3527 = vmatpush.msra.mxu0 %v575
      %3528 = vmatmul.f32.gmra.mxu0 %v3510
      %v3529 = vpop.f32.mrf.mxu0
      %v3530 = vadd.f32 0.0, %v3529
      %3531 = vdwg.mxu0
      %3532 = vset.pattern.permute.xlu0 1
      %3533 = vperm.xlu0 %3532, %v727
      %v3534 = vpop.permute.xlu0 %3533
      %3536 = vset.pattern.permute.xlu0 1
      %3537 = vperm.xlu0 %3536, %v730
      %v3538 = vpop.permute.xlu0 %3537
      %3540 = vset.pattern.permute.xlu0 1
      %3541 = vperm.xlu0 %3540, %v733
      %v3542 = vpop.permute.xlu0 %3541
      %3544 = vset.pattern.permute.xlu0 1
      %3545 = vperm.xlu0 %3544, %v736
      %v3546 = vpop.permute.xlu0 %3545
      %3548 = vset.pattern.permute.xlu0 1
      %3549 = vperm.xlu0 %3548, %v739
      %v3550 = vpop.permute.xlu0 %3549
      %3552 = vset.pattern.permute.xlu0 1
      %3553 = vperm.xlu0 %3552, %v742
      %v3554 = vpop.permute.xlu0 %3553
      %3556 = vset.pattern.permute.xlu0 1
      %3557 = vperm.xlu0 %3556, %v745
      %v3558 = vpop.permute.xlu0 %3557
      %3560 = vset.pattern.permute.xlu0 1
      %3561 = vperm.xlu0 %3560, %v748
      %v3562 = vpop.permute.xlu0 %3561
      %3564 = vset.pattern.permute.xlu0 1
      %3565 = vperm.xlu0 %3564, %v751
      %v3566 = vpop.permute.xlu0 %3565
      %3568 = vset.pattern.permute.xlu0 1
      %3569 = vperm.xlu0 %3568, %v754
      %v3570 = vpop.permute.xlu0 %3569
      %3572 = vset.pattern.permute.xlu0 1
      %3573 = vperm.xlu0 %3572, %v757
      %v3574 = vpop.permute.xlu0 %3573
      %3576 = vset.pattern.permute.xlu0 1
      %3577 = vperm.xlu0 %3576, %v760
      %v3578 = vpop.permute.xlu0 %3577
      %3580 = vset.pattern.permute.xlu0 1
      %3581 = vperm.xlu0 %3580, %v763
      %v3582 = vpop.permute.xlu0 %3581
      %3584 = vset.pattern.permute.xlu0 1
      %3585 = vperm.xlu0 %3584, %v766
      %v3586 = vpop.permute.xlu0 %3585
      %3588 = vset.pattern.permute.xlu0 1
      %3589 = vperm.xlu0 %3588, %v769
      %v3590 = vpop.permute.xlu0 %3589
      %3592 = vset.pattern.permute.xlu0 1
      %3593 = vperm.xlu0 %3592, %v772
      %v3594 = vpop.permute.xlu0 %3593
      %3596 = vset.pattern.permute.xlu0 1
      %3597 = vperm.xlu0 %3596, %v775
      %v3598 = vpop.permute.xlu0 %3597
      %3600 = vset.pattern.permute.xlu0 1
      %3601 = vperm.xlu0 %3600, %v778
      %v3602 = vpop.permute.xlu0 %3601
      %3604 = vset.pattern.permute.xlu0 1
      %3605 = vperm.xlu0 %3604, %v781
      %v3606 = vpop.permute.xlu0 %3605
      %3608 = vset.pattern.permute.xlu0 1
      %3609 = vperm.xlu0 %3608, %v784
      %v3610 = vpop.permute.xlu0 %3609
      %3612 = vset.pattern.permute.xlu0 1
      %3613 = vperm.xlu0 %3612, %v787
      %v3614 = vpop.permute.xlu0 %3613
      %3616 = vset.pattern.permute.xlu0 1
      %3617 = vperm.xlu0 %3616, %v790
      %v3618 = vpop.permute.xlu0 %3617
      %3620 = vset.pattern.permute.xlu0 1
      %3621 = vperm.xlu0 %3620, %v793
      %v3622 = vpop.permute.xlu0 %3621
      %3624 = vset.pattern.permute.xlu0 1
      %3625 = vperm.xlu0 %3624, %v796
      %v3626 = vpop.permute.xlu0 %3625
      %3628 = vset.pattern.permute.xlu0 1
      %3629 = vperm.xlu0 %3628, %v799
      %v3630 = vpop.permute.xlu0 %3629
      %3632 = vset.pattern.permute.xlu0 1
      %3633 = vperm.xlu0 %3632, %v802
      %v3634 = vpop.permute.xlu0 %3633
      %3636 = vset.pattern.permute.xlu0 1
      %3637 = vperm.xlu0 %3636, %v805
      %v3638 = vpop.permute.xlu0 %3637
      %3640 = vset.pattern.permute.xlu0 1
      %3641 = vperm.xlu0 %3640, %v808
      %v3642 = vpop.permute.xlu0 %3641
      %3644 = vset.pattern.permute.xlu0 1
      %3645 = vperm.xlu0 %3644, %v811
      %v3646 = vpop.permute.xlu0 %3645
      %3648 = vset.pattern.permute.xlu0 1
      %3649 = vperm.xlu0 %3648, %v814
      %v3650 = vpop.permute.xlu0 %3649
      %3652 = vset.pattern.permute.xlu0 1
      %3653 = vperm.xlu0 %3652, %v817
      %v3654 = vpop.permute.xlu0 %3653
      %3656 = vset.pattern.permute.xlu0 1
      %3657 = vperm.xlu0 %3656, %v820
      %v3658 = vpop.permute.xlu0 %3657
      %v3660 = vperm.slane %v955, 1
      %v3661 = vperm.slane %v987, 1
      %v3662 = vperm.slane %v1019, 1
      %v3663 = vperm.slane %v1051, 1
      %v3664 = vperm.slane %v1083, 1
      %v3665 = vperm.slane %v1115, 1
      %v3666 = vperm.slane %v1147, 1
      %v3667 = vperm.slane %v1179, 1
      %v3668 = vperm.slane %v1211, 1
      %v3669 = vperm.slane %v1243, 1
      %v3670 = vperm.slane %v1275, 1
      %v3671 = vperm.slane %v1307, 1
      %v3672 = vperm.slane %v1339, 1
      %v3673 = vperm.slane %v1371, 1
      %v3674 = vperm.slane %v1403, 1
      %v3675 = vperm.slane %v1435, 1
      %v3676 = vperm.slane %v1467, 1
      %v3677 = vperm.slane %v1499, 1
      %v3678 = vperm.slane %v1531, 1
      %v3679 = vperm.slane %v1563, 1
      %v3680 = vperm.slane %v1595, 1
      %v3681 = vperm.slane %v1627, 1
      %v3682 = vperm.slane %v1659, 1
      %v3683 = vperm.slane %v1691, 1
      %v3684 = vperm.slane %v1723, 1
      %v3685 = vperm.slane %v1755, 1
      %v3686 = vperm.slane %v1787, 1
      %v3687 = vperm.slane %v1819, 1
      %v3688 = vperm.slane %v1851, 1
      %v3689 = vperm.slane %v1883, 1
      %v3690 = vperm.slane %v1915, 1
      %v3691 = vperm.slane %v1947, 1
      %v3692 = vadd.f32 %v3534, %v3660
      %v3693 = vadd.f32 %v3538, %v3661
      %v3694 = vadd.f32 %v3542, %v3662
      %v3695 = vadd.f32 %v3546, %v3663
      %v3696 = vadd.f32 %v3550, %v3664
      %v3697 = vadd.f32 %v3554, %v3665
      %v3698 = vadd.f32 %v3558, %v3666
      %v3699 = vadd.f32 %v3562, %v3667
      %v3700 = vadd.f32 %v3566, %v3668
      %v3701 = vadd.f32 %v3570, %v3669
      %v3702 = vadd.f32 %v3574, %v3670
      %v3703 = vadd.f32 %v3578, %v3671
      %v3704 = vadd.f32 %v3582, %v3672
      %v3705 = vadd.f32 %v3586, %v3673
      %v3706 = vadd.f32 %v3590, %v3674
      %v3707 = vadd.f32 %v3594, %v3675
      %v3708 = vadd.f32 %v3598, %v3676
      %v3709 = vadd.f32 %v3602, %v3677
      %v3710 = vadd.f32 %v3606, %v3678
      %v3711 = vadd.f32 %v3610, %v3679
      %v3712 = vadd.f32 %v3614, %v3680
      %v3713 = vadd.f32 %v3618, %v3681
      %v3714 = vadd.f32 %v3622, %v3682
      %v3715 = vadd.f32 %v3626, %v3683
      %v3716 = vadd.f32 %v3630, %v3684
      %v3717 = vadd.f32 %v3634, %v3685
      %v3718 = vadd.f32 %v3638, %v3686
      %v3719 = vadd.f32 %v3642, %v3687
      %v3720 = vadd.f32 %v3646, %v3688
      %v3721 = vadd.f32 %v3650, %v3689
      %v3722 = vadd.f32 %v3654, %v3690
      %v3723 = vadd.f32 %v3658, %v3691
      %vm3724 = vcmp.gt.f32.partialorder %v3692, 0.0
      %vm3725 = vcmp.gt.f32.partialorder %v3693, 0.0
      %vm3726 = vcmp.gt.f32.partialorder %v3694, 0.0
      %vm3727 = vcmp.gt.f32.partialorder %v3695, 0.0
      %vm3728 = vcmp.gt.f32.partialorder %v3696, 0.0
      %vm3729 = vcmp.gt.f32.partialorder %v3697, 0.0
      %vm3730 = vcmp.gt.f32.partialorder %v3698, 0.0
      %vm3731 = vcmp.gt.f32.partialorder %v3699, 0.0
      %vm3732 = vcmp.gt.f32.partialorder %v3700, 0.0
      %vm3733 = vcmp.gt.f32.partialorder %v3701, 0.0
      %vm3734 = vcmp.gt.f32.partialorder %v3702, 0.0
      %vm3735 = vcmp.gt.f32.partialorder %v3703, 0.0
      %vm3736 = vcmp.gt.f32.partialorder %v3704, 0.0
      %vm3737 = vcmp.gt.f32.partialorder %v3705, 0.0
      %vm3738 = vcmp.gt.f32.partialorder %v3706, 0.0
      %vm3739 = vcmp.gt.f32.partialorder %v3707, 0.0
      %vm3740 = vcmp.gt.f32.partialorder %v3708, 0.0
      %vm3741 = vcmp.gt.f32.partialorder %v3709, 0.0
      %vm3742 = vcmp.gt.f32.partialorder %v3710, 0.0
      %vm3743 = vcmp.gt.f32.partialorder %v3711, 0.0
      %vm3744 = vcmp.gt.f32.partialorder %v3712, 0.0
      %vm3745 = vcmp.gt.f32.partialorder %v3713, 0.0
      %vm3746 = vcmp.gt.f32.partialorder %v3714, 0.0
      %vm3747 = vcmp.gt.f32.partialorder %v3715, 0.0
      %vm3748 = vcmp.gt.f32.partialorder %v3716, 0.0
      %vm3749 = vcmp.gt.f32.partialorder %v3717, 0.0
      %vm3750 = vcmp.gt.f32.partialorder %v3718, 0.0
      %vm3751 = vcmp.gt.f32.partialorder %v3719, 0.0
      %vm3752 = vcmp.gt.f32.partialorder %v3720, 0.0
      %vm3753 = vcmp.gt.f32.partialorder %v3721, 0.0
      %vm3754 = vcmp.gt.f32.partialorder %v3722, 0.0
      %vm3755 = vcmp.gt.f32.partialorder %v3723, 0.0
      %v3756 = vmul.f32 %v3692, 0.2
      %v3757 = vmul.f32 %v3693, 0.2
      %v3758 = vmul.f32 %v3694, 0.2
      %v3759 = vmul.f32 %v3695, 0.2
      %v3760 = vmul.f32 %v3696, 0.2
      %v3761 = vmul.f32 %v3697, 0.2
      %v3762 = vmul.f32 %v3698, 0.2
      %v3763 = vmul.f32 %v3699, 0.2
      %v3764 = vmul.f32 %v3700, 0.2
      %v3765 = vmul.f32 %v3701, 0.2
      %v3766 = vmul.f32 %v3702, 0.2
      %v3767 = vmul.f32 %v3703, 0.2
      %v3768 = vmul.f32 %v3704, 0.2
      %v3769 = vmul.f32 %v3705, 0.2
      %v3770 = vmul.f32 %v3706, 0.2
      %v3771 = vmul.f32 %v3707, 0.2
      %v3772 = vmul.f32 %v3708, 0.2
      %v3773 = vmul.f32 %v3709, 0.2
      %v3774 = vmul.f32 %v3710, 0.2
      %v3775 = vmul.f32 %v3711, 0.2
      %v3776 = vmul.f32 %v3712, 0.2
      %v3777 = vmul.f32 %v3713, 0.2
      %v3778 = vmul.f32 %v3714, 0.2
      %v3779 = vmul.f32 %v3715, 0.2
      %v3780 = vmul.f32 %v3716, 0.2
      %v3781 = vmul.f32 %v3717, 0.2
      %v3782 = vmul.f32 %v3718, 0.2
      %v3783 = vmul.f32 %v3719, 0.2
      %v3784 = vmul.f32 %v3720, 0.2
      %v3785 = vmul.f32 %v3721, 0.2
      %v3786 = vmul.f32 %v3722, 0.2
      %v3787 = vmul.f32 %v3723, 0.2
      %v3788 = vsel %vm3724, %v3692, %v3756
      %v3789 = vsel %vm3725, %v3693, %v3757
      %v3790 = vsel %vm3726, %v3694, %v3758
      %v3791 = vsel %vm3727, %v3695, %v3759
      %v3792 = vsel %vm3728, %v3696, %v3760
      %v3793 = vsel %vm3729, %v3697, %v3761
      %v3794 = vsel %vm3730, %v3698, %v3762
      %v3795 = vsel %vm3731, %v3699, %v3763
      %v3796 = vsel %vm3732, %v3700, %v3764
      %v3797 = vsel %vm3733, %v3701, %v3765
      %v3798 = vsel %vm3734, %v3702, %v3766
      %v3799 = vsel %vm3735, %v3703, %v3767
      %v3800 = vsel %vm3736, %v3704, %v3768
      %v3801 = vsel %vm3737, %v3705, %v3769
      %v3802 = vsel %vm3738, %v3706, %v3770
      %v3803 = vsel %vm3739, %v3707, %v3771
      %v3804 = vsel %vm3740, %v3708, %v3772
      %v3805 = vsel %vm3741, %v3709, %v3773
      %v3806 = vsel %vm3742, %v3710, %v3774
      %v3807 = vsel %vm3743, %v3711, %v3775
      %v3808 = vsel %vm3744, %v3712, %v3776
      %v3809 = vsel %vm3745, %v3713, %v3777
      %v3810 = vsel %vm3746, %v3714, %v3778
      %v3811 = vsel %vm3747, %v3715, %v3779
      %v3812 = vsel %vm3748, %v3716, %v3780
      %v3813 = vsel %vm3749, %v3717, %v3781
      %v3814 = vsel %vm3750, %v3718, %v3782
      %v3815 = vsel %vm3751, %v3719, %v3783
      %v3816 = vsel %vm3752, %v3720, %v3784
      %v3817 = vsel %vm3753, %v3721, %v3785
      %v3818 = vsel %vm3754, %v3722, %v3786
      %v3819 = vsel %vm3755, %v3723, %v3787
      %v3820 = vsel %vm2059, %v3788, -999.0
      %v3821 = vsel %vm2060, %v3789, -999.0
      %v3822 = vsel %vm2061, %v3790, -999.0
      %v3823 = vsel %vm2062, %v3791, -999.0
      %v3824 = vsel %vm2063, %v3792, -999.0
      %v3825 = vsel %vm2064, %v3793, -999.0
      %v3826 = vsel %vm2065, %v3794, -999.0
      %v3827 = vsel %vm2066, %v3795, -999.0
      %v3828 = vsel %vm2067, %v3796, -999.0
      %v3829 = vsel %vm2068, %v3797, -999.0
      %v3830 = vsel %vm2069, %v3798, -999.0
      %v3831 = vsel %vm2070, %v3799, -999.0
      %v3832 = vsel %vm2071, %v3800, -999.0
      %v3833 = vsel %vm2072, %v3801, -999.0
      %v3834 = vsel %vm2073, %v3802, -999.0
      %v3835 = vsel %vm2074, %v3803, -999.0
      %v3836 = vsel %vm2075, %v3804, -999.0
      %v3837 = vsel %vm2076, %v3805, -999.0
      %v3838 = vsel %vm2077, %v3806, -999.0
      %v3839 = vsel %vm2078, %v3807, -999.0
      %v3840 = vsel %vm2079, %v3808, -999.0
      %v3841 = vsel %vm2080, %v3809, -999.0
      %v3842 = vsel %vm2081, %v3810, -999.0
      %v3843 = vsel %vm2082, %v3811, -999.0
      %v3844 = vsel %vm2083, %v3812, -999.0
      %v3845 = vsel %vm2084, %v3813, -999.0
      %v3846 = vsel %vm2085, %v3814, -999.0
      %v3847 = vsel %vm2086, %v3815, -999.0
      %v3848 = vsel %vm2087, %v3816, -999.0
      %v3849 = vsel %vm2088, %v3817, -999.0
      %v3850 = vsel %vm2089, %v3818, -999.0
      %v3851 = vsel %vm2090, %v3819, -999.0
      %v3852 = vsel %vm2443, %v3820, -inf
      %3853 = vmax.xlane.f32.xlu0 %v3852
      %v3854 = vpop.xlane.xlu0 %3853
      %v3855 = vsel %vm2443, %v3821, -inf
      %3856 = vmax.xlane.f32.xlu0 %v3855
      %v3857 = vpop.xlane.xlu0 %3856
      %v3858 = vsel %vm2443, %v3822, -inf
      %3859 = vmax.xlane.f32.xlu0 %v3858
      %v3860 = vpop.xlane.xlu0 %3859
      %v3861 = vsel %vm2443, %v3823, -inf
      %3862 = vmax.xlane.f32.xlu0 %v3861
      %v3863 = vpop.xlane.xlu0 %3862
      %v3864 = vsel %vm2443, %v3824, -inf
      %3865 = vmax.xlane.f32.xlu0 %v3864
      %v3866 = vpop.xlane.xlu0 %3865
      %v3867 = vsel %vm2443, %v3825, -inf
      %3868 = vmax.xlane.f32.xlu0 %v3867
      %v3869 = vpop.xlane.xlu0 %3868
      %v3870 = vsel %vm2443, %v3826, -inf
      %3871 = vmax.xlane.f32.xlu0 %v3870
      %v3872 = vpop.xlane.xlu0 %3871
      %v3873 = vsel %vm2443, %v3827, -inf
      %3874 = vmax.xlane.f32.xlu0 %v3873
      %v3875 = vpop.xlane.xlu0 %3874
      %v3876 = vsel %vm2443, %v3828, -inf
      %3877 = vmax.xlane.f32.xlu0 %v3876
      %v3878 = vpop.xlane.xlu0 %3877
      %v3879 = vsel %vm2443, %v3829, -inf
      %3880 = vmax.xlane.f32.xlu0 %v3879
      %v3881 = vpop.xlane.xlu0 %3880
      %v3882 = vsel %vm2443, %v3830, -inf
      %3883 = vmax.xlane.f32.xlu0 %v3882
      %v3884 = vpop.xlane.xlu0 %3883
      %v3885 = vsel %vm2443, %v3831, -inf
      %3886 = vmax.xlane.f32.xlu0 %v3885
      %v3887 = vpop.xlane.xlu0 %3886
      %v3888 = vsel %vm2443, %v3832, -inf
      %3889 = vmax.xlane.f32.xlu0 %v3888
      %v3890 = vpop.xlane.xlu0 %3889
      %v3891 = vsel %vm2443, %v3833, -inf
      %3892 = vmax.xlane.f32.xlu0 %v3891
      %v3893 = vpop.xlane.xlu0 %3892
      %v3894 = vsel %vm2443, %v3834, -inf
      %3895 = vmax.xlane.f32.xlu0 %v3894
      %v3896 = vpop.xlane.xlu0 %3895
      %v3897 = vsel %vm2443, %v3835, -inf
      %3898 = vmax.xlane.f32.xlu0 %v3897
      %v3899 = vpop.xlane.xlu0 %3898
      %v3900 = vsel %vm2443, %v3836, -inf
      %3901 = vmax.xlane.f32.xlu0 %v3900
      %v3902 = vpop.xlane.xlu0 %3901
      %v3903 = vsel %vm2443, %v3837, -inf
      %3904 = vmax.xlane.f32.xlu0 %v3903
      %v3905 = vpop.xlane.xlu0 %3904
      %v3906 = vsel %vm2443, %v3838, -inf
      %3907 = vmax.xlane.f32.xlu0 %v3906
      %v3908 = vpop.xlane.xlu0 %3907
      %v3909 = vsel %vm2443, %v3839, -inf
      %3910 = vmax.xlane.f32.xlu0 %v3909
      %v3911 = vpop.xlane.xlu0 %3910
      %v3912 = vsel %vm2443, %v3840, -inf
      %3913 = vmax.xlane.f32.xlu0 %v3912
      %v3914 = vpop.xlane.xlu0 %3913
      %v3915 = vsel %vm2443, %v3841, -inf
      %3916 = vmax.xlane.f32.xlu0 %v3915
      %v3917 = vpop.xlane.xlu0 %3916
      %v3918 = vsel %vm2443, %v3842, -inf
      %3919 = vmax.xlane.f32.xlu0 %v3918
      %v3920 = vpop.xlane.xlu0 %3919
      %v3921 = vsel %vm2443, %v3843, -inf
      %3922 = vmax.xlane.f32.xlu0 %v3921
      %v3923 = vpop.xlane.xlu0 %3922
      %v3924 = vsel %vm2443, %v3844, -inf
      %3925 = vmax.xlane.f32.xlu0 %v3924
      %v3926 = vpop.xlane.xlu0 %3925
      %v3927 = vsel %vm2443, %v3845, -inf
      %3928 = vmax.xlane.f32.xlu0 %v3927
      %v3929 = vpop.xlane.xlu0 %3928
      %v3930 = vsel %vm2443, %v3846, -inf
      %3931 = vmax.xlane.f32.xlu0 %v3930
      %v3932 = vpop.xlane.xlu0 %3931
      %v3933 = vsel %vm2443, %v3847, -inf
      %3934 = vmax.xlane.f32.xlu0 %v3933
      %v3935 = vpop.xlane.xlu0 %3934
      %v3936 = vsel %vm2443, %v3848, -inf
      %3937 = vmax.xlane.f32.xlu0 %v3936
      %v3938 = vpop.xlane.xlu0 %3937
      %v3939 = vsel %vm2443, %v3849, -inf
      %3940 = vmax.xlane.f32.xlu0 %v3939
      %v3941 = vpop.xlane.xlu0 %3940
      %v3942 = vsel %vm2443, %v3850, -inf
      %3943 = vmax.xlane.f32.xlu0 %v3942
      %v3944 = vpop.xlane.xlu0 %3943
      %v3945 = vsel %vm2443, %v3851, -inf
      %3946 = vmax.xlane.f32.xlu0 %v3945
      %v3947 = vpop.xlane.xlu0 %3946
      %v3948 = vsub.f32 %v3820, %v3854
      %v3949 = vsub.f32 %v3821, %v3857
      %v3950 = vsub.f32 %v3822, %v3860
      %v3951 = vsub.f32 %v3823, %v3863
      %v3952 = vsub.f32 %v3824, %v3866
      %v3953 = vsub.f32 %v3825, %v3869
      %v3954 = vsub.f32 %v3826, %v3872
      %v3955 = vsub.f32 %v3827, %v3875
      %v3956 = vsub.f32 %v3828, %v3878
      %v3957 = vsub.f32 %v3829, %v3881
      %v3958 = vsub.f32 %v3830, %v3884
      %v3959 = vsub.f32 %v3831, %v3887
      %v3960 = vsub.f32 %v3832, %v3890
      %v3961 = vsub.f32 %v3833, %v3893
      %v3962 = vsub.f32 %v3834, %v3896
      %v3963 = vsub.f32 %v3835, %v3899
      %v3964 = vsub.f32 %v3836, %v3902
      %v3965 = vsub.f32 %v3837, %v3905
      %v3966 = vsub.f32 %v3838, %v3908
      %v3967 = vsub.f32 %v3839, %v3911
      %v3968 = vsub.f32 %v3840, %v3914
      %v3969 = vsub.f32 %v3841, %v3917
      %v3970 = vsub.f32 %v3842, %v3920
      %v3971 = vsub.f32 %v3843, %v3923
      %v3972 = vsub.f32 %v3844, %v3926
      %v3973 = vsub.f32 %v3845, %v3929
      %v3974 = vsub.f32 %v3846, %v3932
      %v3975 = vsub.f32 %v3847, %v3935
      %v3976 = vsub.f32 %v3848, %v3938
      %v3977 = vsub.f32 %v3849, %v3941
      %v3978 = vsub.f32 %v3850, %v3944
      %v3979 = vsub.f32 %v3851, %v3947
      %v3980 = vmul.f32 %v3948, 1.442695
      %v3981 = vpow.pop %v3980
      %v3982 = vmul.f32 %v3949, 1.442695
      %v3983 = vpow.pop %v3982
      %v3984 = vmul.f32 %v3950, 1.442695
      %v3985 = vpow.pop %v3984
      %v3986 = vmul.f32 %v3951, 1.442695
      %v3987 = vpow.pop %v3986
      %v3988 = vmul.f32 %v3952, 1.442695
      %v3989 = vpow.pop %v3988
      %v3990 = vmul.f32 %v3953, 1.442695
      %v3991 = vpow.pop %v3990
      %v3992 = vmul.f32 %v3954, 1.442695
      %v3993 = vpow.pop %v3992
      %v3994 = vmul.f32 %v3955, 1.442695
      %v3995 = vpow.pop %v3994
      %v3996 = vmul.f32 %v3956, 1.442695
      %v3997 = vpow.pop %v3996
      %v3998 = vmul.f32 %v3957, 1.442695
      %v3999 = vpow.pop %v3998
      %v4000 = vmul.f32 %v3958, 1.442695
      %v4001 = vpow.pop %v4000
      %v4002 = vmul.f32 %v3959, 1.442695
      %v4003 = vpow.pop %v4002
      %v4004 = vmul.f32 %v3960, 1.442695
      %v4005 = vpow.pop %v4004
      %v4006 = vmul.f32 %v3961, 1.442695
      %v4007 = vpow.pop %v4006
      %v4008 = vmul.f32 %v3962, 1.442695
      %v4009 = vpow.pop %v4008
      %v4010 = vmul.f32 %v3963, 1.442695
      %v4011 = vpow.pop %v4010
      %v4012 = vmul.f32 %v3964, 1.442695
      %v4013 = vpow.pop %v4012
      %v4014 = vmul.f32 %v3965, 1.442695
      %v4015 = vpow.pop %v4014
      %v4016 = vmul.f32 %v3966, 1.442695
      %v4017 = vpow.pop %v4016
      %v4018 = vmul.f32 %v3967, 1.442695
      %v4019 = vpow.pop %v4018
      %v4020 = vmul.f32 %v3968, 1.442695
      %v4021 = vpow.pop %v4020
      %v4022 = vmul.f32 %v3969, 1.442695
      %v4023 = vpow.pop %v4022
      %v4024 = vmul.f32 %v3970, 1.442695
      %v4025 = vpow.pop %v4024
      %v4026 = vmul.f32 %v3971, 1.442695
      %v4027 = vpow.pop %v4026
      %v4028 = vmul.f32 %v3972, 1.442695
      %v4029 = vpow.pop %v4028
      %v4030 = vmul.f32 %v3973, 1.442695
      %v4031 = vpow.pop %v4030
      %v4032 = vmul.f32 %v3974, 1.442695
      %v4033 = vpow.pop %v4032
      %v4034 = vmul.f32 %v3975, 1.442695
      %v4035 = vpow.pop %v4034
      %v4036 = vmul.f32 %v3976, 1.442695
      %v4037 = vpow.pop %v4036
      %v4038 = vmul.f32 %v3977, 1.442695
      %v4039 = vpow.pop %v4038
      %v4040 = vmul.f32 %v3978, 1.442695
      %v4041 = vpow.pop %v4040
      %v4042 = vmul.f32 %v3979, 1.442695
      %v4043 = vpow.pop %v4042
      %v4044 = vsel %vm2443, %v3981, 0.0
      %4045 = vadd.xlane.f32.xlu0 %v4044
      %v4046 = vpop.xlane.xlu0 %4045
      %v4047 = vsel %vm2443, %v3983, 0.0
      %4048 = vadd.xlane.f32.xlu0 %v4047
      %v4049 = vpop.xlane.xlu0 %4048
      %v4050 = vsel %vm2443, %v3985, 0.0
      %4051 = vadd.xlane.f32.xlu0 %v4050
      %v4052 = vpop.xlane.xlu0 %4051
      %v4053 = vsel %vm2443, %v3987, 0.0
      %4054 = vadd.xlane.f32.xlu0 %v4053
      %v4055 = vpop.xlane.xlu0 %4054
      %v4056 = vsel %vm2443, %v3989, 0.0
      %4057 = vadd.xlane.f32.xlu0 %v4056
      %v4058 = vpop.xlane.xlu0 %4057
      %v4059 = vsel %vm2443, %v3991, 0.0
      %4060 = vadd.xlane.f32.xlu0 %v4059
      %v4061 = vpop.xlane.xlu0 %4060
      %v4062 = vsel %vm2443, %v3993, 0.0
      %4063 = vadd.xlane.f32.xlu0 %v4062
      %v4064 = vpop.xlane.xlu0 %4063
      %v4065 = vsel %vm2443, %v3995, 0.0
      %4066 = vadd.xlane.f32.xlu0 %v4065
      %v4067 = vpop.xlane.xlu0 %4066
      %v4068 = vsel %vm2443, %v3997, 0.0
      %4069 = vadd.xlane.f32.xlu0 %v4068
      %v4070 = vpop.xlane.xlu0 %4069
      %v4071 = vsel %vm2443, %v3999, 0.0
      %4072 = vadd.xlane.f32.xlu0 %v4071
      %v4073 = vpop.xlane.xlu0 %4072
      %v4074 = vsel %vm2443, %v4001, 0.0
      %4075 = vadd.xlane.f32.xlu0 %v4074
      %v4076 = vpop.xlane.xlu0 %4075
      %v4077 = vsel %vm2443, %v4003, 0.0
      %4078 = vadd.xlane.f32.xlu0 %v4077
      %v4079 = vpop.xlane.xlu0 %4078
      %v4080 = vsel %vm2443, %v4005, 0.0
      %4081 = vadd.xlane.f32.xlu0 %v4080
      %v4082 = vpop.xlane.xlu0 %4081
      %v4083 = vsel %vm2443, %v4007, 0.0
      %4084 = vadd.xlane.f32.xlu0 %v4083
      %v4085 = vpop.xlane.xlu0 %4084
      %v4086 = vsel %vm2443, %v4009, 0.0
      %4087 = vadd.xlane.f32.xlu0 %v4086
      %v4088 = vpop.xlane.xlu0 %4087
      %v4089 = vsel %vm2443, %v4011, 0.0
      %4090 = vadd.xlane.f32.xlu0 %v4089
      %v4091 = vpop.xlane.xlu0 %4090
      %v4092 = vsel %vm2443, %v4013, 0.0
      %4093 = vadd.xlane.f32.xlu0 %v4092
      %v4094 = vpop.xlane.xlu0 %4093
      %v4095 = vsel %vm2443, %v4015, 0.0
      %4096 = vadd.xlane.f32.xlu0 %v4095
      %v4097 = vpop.xlane.xlu0 %4096
      %v4098 = vsel %vm2443, %v4017, 0.0
      %4099 = vadd.xlane.f32.xlu0 %v4098
      %v4100 = vpop.xlane.xlu0 %4099
      %v4101 = vsel %vm2443, %v4019, 0.0
      %4102 = vadd.xlane.f32.xlu0 %v4101
      %v4103 = vpop.xlane.xlu0 %4102
      %v4104 = vsel %vm2443, %v4021, 0.0
      %4105 = vadd.xlane.f32.xlu0 %v4104
      %v4106 = vpop.xlane.xlu0 %4105
      %v4107 = vsel %vm2443, %v4023, 0.0
      %4108 = vadd.xlane.f32.xlu0 %v4107
      %v4109 = vpop.xlane.xlu0 %4108
      %v4110 = vsel %vm2443, %v4025, 0.0
      %4111 = vadd.xlane.f32.xlu0 %v4110
      %v4112 = vpop.xlane.xlu0 %4111
      %v4113 = vsel %vm2443, %v4027, 0.0
      %4114 = vadd.xlane.f32.xlu0 %v4113
      %v4115 = vpop.xlane.xlu0 %4114
      %v4116 = vsel %vm2443, %v4029, 0.0
      %4117 = vadd.xlane.f32.xlu0 %v4116
      %v4118 = vpop.xlane.xlu0 %4117
      %v4119 = vsel %vm2443, %v4031, 0.0
      %4120 = vadd.xlane.f32.xlu0 %v4119
      %v4121 = vpop.xlane.xlu0 %4120
      %v4122 = vsel %vm2443, %v4033, 0.0
      %4123 = vadd.xlane.f32.xlu0 %v4122
      %v4124 = vpop.xlane.xlu0 %4123
      %v4125 = vsel %vm2443, %v4035, 0.0
      %4126 = vadd.xlane.f32.xlu0 %v4125
      %v4127 = vpop.xlane.xlu0 %4126
      %v4128 = vsel %vm2443, %v4037, 0.0
      %4129 = vadd.xlane.f32.xlu0 %v4128
      %v4130 = vpop.xlane.xlu0 %4129
      %v4131 = vsel %vm2443, %v4039, 0.0
      %4132 = vadd.xlane.f32.xlu0 %v4131
      %v4133 = vpop.xlane.xlu0 %4132
      %v4134 = vsel %vm2443, %v4041, 0.0
      %4135 = vadd.xlane.f32.xlu0 %v4134
      %v4136 = vpop.xlane.xlu0 %4135
      %v4137 = vsel %vm2443, %v4043, 0.0
      %4138 = vadd.xlane.f32.xlu0 %v4137
      %v4139 = vpop.xlane.xlu0 %4138
      %v4140 = vrcp.pop %v4046
      %v4141 = vrcp.pop %v4049
      %v4142 = vrcp.pop %v4052
      %v4143 = vrcp.pop %v4055
      %v4144 = vrcp.pop %v4058
      %v4145 = vrcp.pop %v4061
      %v4146 = vrcp.pop %v4064
      %v4147 = vrcp.pop %v4067
      %v4148 = vrcp.pop %v4070
      %v4149 = vrcp.pop %v4073
      %v4150 = vrcp.pop %v4076
      %v4151 = vrcp.pop %v4079
      %v4152 = vrcp.pop %v4082
      %v4153 = vrcp.pop %v4085
      %v4154 = vrcp.pop %v4088
      %v4155 = vrcp.pop %v4091
      %v4156 = vrcp.pop %v4094
      %v4157 = vrcp.pop %v4097
      %v4158 = vrcp.pop %v4100
      %v4159 = vrcp.pop %v4103
      %v4160 = vrcp.pop %v4106
      %v4161 = vrcp.pop %v4109
      %v4162 = vrcp.pop %v4112
      %v4163 = vrcp.pop %v4115
      %v4164 = vrcp.pop %v4118
      %v4165 = vrcp.pop %v4121
      %v4166 = vrcp.pop %v4124
      %v4167 = vrcp.pop %v4127
      %v4168 = vrcp.pop %v4130
      %v4169 = vrcp.pop %v4133
      %v4170 = vrcp.pop %v4136
      %v4171 = vrcp.pop %v4139
      %v4172 = vmul.f32 %v3981, %v4140
      %v4173 = vmul.f32 %v3983, %v4141
      %v4174 = vmul.f32 %v3985, %v4142
      %v4175 = vmul.f32 %v3987, %v4143
      %v4176 = vmul.f32 %v3989, %v4144
      %v4177 = vmul.f32 %v3991, %v4145
      %v4178 = vmul.f32 %v3993, %v4146
      %v4179 = vmul.f32 %v3995, %v4147
      %v4180 = vmul.f32 %v3997, %v4148
      %v4181 = vmul.f32 %v3999, %v4149
      %v4182 = vmul.f32 %v4001, %v4150
      %v4183 = vmul.f32 %v4003, %v4151
      %v4184 = vmul.f32 %v4005, %v4152
      %v4185 = vmul.f32 %v4007, %v4153
      %v4186 = vmul.f32 %v4009, %v4154
      %v4187 = vmul.f32 %v4011, %v4155
      %v4188 = vmul.f32 %v4013, %v4156
      %v4189 = vmul.f32 %v4015, %v4157
      %v4190 = vmul.f32 %v4017, %v4158
      %v4191 = vmul.f32 %v4019, %v4159
      %v4192 = vmul.f32 %v4021, %v4160
      %v4193 = vmul.f32 %v4023, %v4161
      %v4194 = vmul.f32 %v4025, %v4162
      %v4195 = vmul.f32 %v4027, %v4163
      %v4196 = vmul.f32 %v4029, %v4164
      %v4197 = vmul.f32 %v4031, %v4165
      %v4198 = vmul.f32 %v4033, %v4166
      %v4199 = vmul.f32 %v4035, %v4167
      %v4200 = vmul.f32 %v4037, %v4168
      %v4201 = vmul.f32 %v4039, %v4169
      %v4202 = vmul.f32 %v4041, %v4170
      %v4203 = vmul.f32 %v4043, %v4171
      %4205 = vrot.lane.b32.xlu0 %v482, 120
      %v4206 = vpop.permute.xlu0 %4205
      %v4209 = vsel %vm2443, %v4172, 0
      %4211 = vmatpush.msra.mxu0 0.0
      %4212 = vmatpush.msra.mxu0 0.0
      %4213 = vmatpush.msra.mxu0 0.0
      %4214 = vmatpush.msra.mxu0 0.0
      %4215 = vmatpush.msra.mxu0 0.0
      %4216 = vmatpush.msra.mxu0 0.0
      %4217 = vmatpush.msra.mxu0 0.0
      %4218 = vmatpush.msra.mxu0 0.0
      %4219 = vmatpush.msra.mxu0 0.0
      %4220 = vmatpush.msra.mxu0 0.0
      %4221 = vmatpush.msra.mxu0 0.0
      %4222 = vmatpush.msra.mxu0 0.0
      %4223 = vmatpush.msra.mxu0 0.0
      %4224 = vmatpush.msra.mxu0 0.0
      %4225 = vmatpush.msra.mxu0 0.0
      %4226 = vmatpush.msra.mxu0 %v4206
      %4227 = vmatmul.f32.gmra.mxu0 %v4209
      %v4228 = vpop.f32.mrf.mxu0
      %v4229 = vadd.f32 0.0, %v4228
      %4230 = vdwg.mxu0
      %4232 = vrot.lane.b32.xlu0 %v485, 120
      %v4233 = vpop.permute.xlu0 %4232
      %v4236 = vsel %vm2443, %v4173, 0
      %4238 = vmatpush.msra.mxu0 0.0
      %4239 = vmatpush.msra.mxu0 0.0
      %4240 = vmatpush.msra.mxu0 0.0
      %4241 = vmatpush.msra.mxu0 0.0
      %4242 = vmatpush.msra.mxu0 0.0
      %4243 = vmatpush.msra.mxu0 0.0
      %4244 = vmatpush.msra.mxu0 0.0
      %4245 = vmatpush.msra.mxu0 0.0
      %4246 = vmatpush.msra.mxu0 0.0
      %4247 = vmatpush.msra.mxu0 0.0
      %4248 = vmatpush.msra.mxu0 0.0
      %4249 = vmatpush.msra.mxu0 0.0
      %4250 = vmatpush.msra.mxu0 0.0
      %4251 = vmatpush.msra.mxu0 0.0
      %4252 = vmatpush.msra.mxu0 0.0
      %4253 = vmatpush.msra.mxu0 %v4233
      %4254 = vmatmul.f32.gmra.mxu0 %v4236
      %v4255 = vpop.f32.mrf.mxu0
      %v4256 = vadd.f32 0.0, %v4255
      %4257 = vdwg.mxu0
      %4259 = vrot.lane.b32.xlu0 %v488, 120
      %v4260 = vpop.permute.xlu0 %4259
      %v4263 = vsel %vm2443, %v4174, 0
      %4265 = vmatpush.msra.mxu0 0.0
      %4266 = vmatpush.msra.mxu0 0.0
      %4267 = vmatpush.msra.mxu0 0.0
      %4268 = vmatpush.msra.mxu0 0.0
      %4269 = vmatpush.msra.mxu0 0.0
      %4270 = vmatpush.msra.mxu0 0.0
      %4271 = vmatpush.msra.mxu0 0.0
      %4272 = vmatpush.msra.mxu0 0.0
      %4273 = vmatpush.msra.mxu0 0.0
      %4274 = vmatpush.msra.mxu0 0.0
      %4275 = vmatpush.msra.mxu0 0.0
      %4276 = vmatpush.msra.mxu0 0.0
      %4277 = vmatpush.msra.mxu0 0.0
      %4278 = vmatpush.msra.mxu0 0.0
      %4279 = vmatpush.msra.mxu0 0.0
      %4280 = vmatpush.msra.mxu0 %v4260
      %4281 = vmatmul.f32.gmra.mxu0 %v4263
      %v4282 = vpop.f32.mrf.mxu0
      %v4283 = vadd.f32 0.0, %v4282
      %4284 = vdwg.mxu0
      %4286 = vrot.lane.b32.xlu0 %v491, 120
      %v4287 = vpop.permute.xlu0 %4286
      %v4290 = vsel %vm2443, %v4175, 0
      %4292 = vmatpush.msra.mxu0 0.0
      %4293 = vmatpush.msra.mxu0 0.0
      %4294 = vmatpush.msra.mxu0 0.0
      %4295 = vmatpush.msra.mxu0 0.0
      %4296 = vmatpush.msra.mxu0 0.0
      %4297 = vmatpush.msra.mxu0 0.0
      %4298 = vmatpush.msra.mxu0 0.0
      %4299 = vmatpush.msra.mxu0 0.0
      %4300 = vmatpush.msra.mxu0 0.0
      %4301 = vmatpush.msra.mxu0 0.0
      %4302 = vmatpush.msra.mxu0 0.0
      %4303 = vmatpush.msra.mxu0 0.0
      %4304 = vmatpush.msra.mxu0 0.0
      %4305 = vmatpush.msra.mxu0 0.0
      %4306 = vmatpush.msra.mxu0 0.0
      %4307 = vmatpush.msra.mxu0 %v4287
      %4308 = vmatmul.f32.gmra.mxu0 %v4290
      %v4309 = vpop.f32.mrf.mxu0
      %v4310 = vadd.f32 0.0, %v4309
      %4311 = vdwg.mxu0
      %4313 = vrot.lane.b32.xlu0 %v494, 120
      %v4314 = vpop.permute.xlu0 %4313
      %v4317 = vsel %vm2443, %v4176, 0
      %4319 = vmatpush.msra.mxu0 0.0
      %4320 = vmatpush.msra.mxu0 0.0
      %4321 = vmatpush.msra.mxu0 0.0
      %4322 = vmatpush.msra.mxu0 0.0
      %4323 = vmatpush.msra.mxu0 0.0
      %4324 = vmatpush.msra.mxu0 0.0
      %4325 = vmatpush.msra.mxu0 0.0
      %4326 = vmatpush.msra.mxu0 0.0
      %4327 = vmatpush.msra.mxu0 0.0
      %4328 = vmatpush.msra.mxu0 0.0
      %4329 = vmatpush.msra.mxu0 0.0
      %4330 = vmatpush.msra.mxu0 0.0
      %4331 = vmatpush.msra.mxu0 0.0
      %4332 = vmatpush.msra.mxu0 0.0
      %4333 = vmatpush.msra.mxu0 0.0
      %4334 = vmatpush.msra.mxu0 %v4314
      %4335 = vmatmul.f32.gmra.mxu0 %v4317
      %v4336 = vpop.f32.mrf.mxu0
      %v4337 = vadd.f32 0.0, %v4336
      %4338 = vdwg.mxu0
      %4340 = vrot.lane.b32.xlu0 %v497, 120
      %v4341 = vpop.permute.xlu0 %4340
      %v4344 = vsel %vm2443, %v4177, 0
      %4346 = vmatpush.msra.mxu0 0.0
      %4347 = vmatpush.msra.mxu0 0.0
      %4348 = vmatpush.msra.mxu0 0.0
      %4349 = vmatpush.msra.mxu0 0.0
      %4350 = vmatpush.msra.mxu0 0.0
      %4351 = vmatpush.msra.mxu0 0.0
      %4352 = vmatpush.msra.mxu0 0.0
      %4353 = vmatpush.msra.mxu0 0.0
      %4354 = vmatpush.msra.mxu0 0.0
      %4355 = vmatpush.msra.mxu0 0.0
      %4356 = vmatpush.msra.mxu0 0.0
      %4357 = vmatpush.msra.mxu0 0.0
      %4358 = vmatpush.msra.mxu0 0.0
      %4359 = vmatpush.msra.mxu0 0.0
      %4360 = vmatpush.msra.mxu0 0.0
      %4361 = vmatpush.msra.mxu0 %v4341
      %4362 = vmatmul.f32.gmra.mxu0 %v4344
      %v4363 = vpop.f32.mrf.mxu0
      %v4364 = vadd.f32 0.0, %v4363
      %4365 = vdwg.mxu0
      %4367 = vrot.lane.b32.xlu0 %v500, 120
      %v4368 = vpop.permute.xlu0 %4367
      %v4371 = vsel %vm2443, %v4178, 0
      %4373 = vmatpush.msra.mxu0 0.0
      %4374 = vmatpush.msra.mxu0 0.0
      %4375 = vmatpush.msra.mxu0 0.0
      %4376 = vmatpush.msra.mxu0 0.0
      %4377 = vmatpush.msra.mxu0 0.0
      %4378 = vmatpush.msra.mxu0 0.0
      %4379 = vmatpush.msra.mxu0 0.0
      %4380 = vmatpush.msra.mxu0 0.0
      %4381 = vmatpush.msra.mxu0 0.0
      %4382 = vmatpush.msra.mxu0 0.0
      %4383 = vmatpush.msra.mxu0 0.0
      %4384 = vmatpush.msra.mxu0 0.0
      %4385 = vmatpush.msra.mxu0 0.0
      %4386 = vmatpush.msra.mxu0 0.0
      %4387 = vmatpush.msra.mxu0 0.0
      %4388 = vmatpush.msra.mxu0 %v4368
      %4389 = vmatmul.f32.gmra.mxu0 %v4371
      %v4390 = vpop.f32.mrf.mxu0
      %v4391 = vadd.f32 0.0, %v4390
      %4392 = vdwg.mxu0
      %4394 = vrot.lane.b32.xlu0 %v503, 120
      %v4395 = vpop.permute.xlu0 %4394
      %v4398 = vsel %vm2443, %v4179, 0
      %4400 = vmatpush.msra.mxu0 0.0
      %4401 = vmatpush.msra.mxu0 0.0
      %4402 = vmatpush.msra.mxu0 0.0
      %4403 = vmatpush.msra.mxu0 0.0
      %4404 = vmatpush.msra.mxu0 0.0
      %4405 = vmatpush.msra.mxu0 0.0
      %4406 = vmatpush.msra.mxu0 0.0
      %4407 = vmatpush.msra.mxu0 0.0
      %4408 = vmatpush.msra.mxu0 0.0
      %4409 = vmatpush.msra.mxu0 0.0
      %4410 = vmatpush.msra.mxu0 0.0
      %4411 = vmatpush.msra.mxu0 0.0
      %4412 = vmatpush.msra.mxu0 0.0
      %4413 = vmatpush.msra.mxu0 0.0
      %4414 = vmatpush.msra.mxu0 0.0
      %4415 = vmatpush.msra.mxu0 %v4395
      %4416 = vmatmul.f32.gmra.mxu0 %v4398
      %v4417 = vpop.f32.mrf.mxu0
      %v4418 = vadd.f32 0.0, %v4417
      %4419 = vdwg.mxu0
      %4421 = vrot.lane.b32.xlu0 %v506, 120
      %v4422 = vpop.permute.xlu0 %4421
      %v4425 = vsel %vm2443, %v4180, 0
      %4427 = vmatpush.msra.mxu0 0.0
      %4428 = vmatpush.msra.mxu0 0.0
      %4429 = vmatpush.msra.mxu0 0.0
      %4430 = vmatpush.msra.mxu0 0.0
      %4431 = vmatpush.msra.mxu0 0.0
      %4432 = vmatpush.msra.mxu0 0.0
      %4433 = vmatpush.msra.mxu0 0.0
      %4434 = vmatpush.msra.mxu0 0.0
      %4435 = vmatpush.msra.mxu0 0.0
      %4436 = vmatpush.msra.mxu0 0.0
      %4437 = vmatpush.msra.mxu0 0.0
      %4438 = vmatpush.msra.mxu0 0.0
      %4439 = vmatpush.msra.mxu0 0.0
      %4440 = vmatpush.msra.mxu0 0.0
      %4441 = vmatpush.msra.mxu0 0.0
      %4442 = vmatpush.msra.mxu0 %v4422
      %4443 = vmatmul.f32.gmra.mxu0 %v4425
      %v4444 = vpop.f32.mrf.mxu0
      %v4445 = vadd.f32 0.0, %v4444
      %4446 = vdwg.mxu0
      %4448 = vrot.lane.b32.xlu0 %v509, 120
      %v4449 = vpop.permute.xlu0 %4448
      %v4452 = vsel %vm2443, %v4181, 0
      %4454 = vmatpush.msra.mxu0 0.0
      %4455 = vmatpush.msra.mxu0 0.0
      %4456 = vmatpush.msra.mxu0 0.0
      %4457 = vmatpush.msra.mxu0 0.0
      %4458 = vmatpush.msra.mxu0 0.0
      %4459 = vmatpush.msra.mxu0 0.0
      %4460 = vmatpush.msra.mxu0 0.0
      %4461 = vmatpush.msra.mxu0 0.0
      %4462 = vmatpush.msra.mxu0 0.0
      %4463 = vmatpush.msra.mxu0 0.0
      %4464 = vmatpush.msra.mxu0 0.0
      %4465 = vmatpush.msra.mxu0 0.0
      %4466 = vmatpush.msra.mxu0 0.0
      %4467 = vmatpush.msra.mxu0 0.0
      %4468 = vmatpush.msra.mxu0 0.0
      %4469 = vmatpush.msra.mxu0 %v4449
      %4470 = vmatmul.f32.gmra.mxu0 %v4452
      %v4471 = vpop.f32.mrf.mxu0
      %v4472 = vadd.f32 0.0, %v4471
      %4473 = vdwg.mxu0
      %4475 = vrot.lane.b32.xlu0 %v512, 120
      %v4476 = vpop.permute.xlu0 %4475
      %v4479 = vsel %vm2443, %v4182, 0
      %4481 = vmatpush.msra.mxu0 0.0
      %4482 = vmatpush.msra.mxu0 0.0
      %4483 = vmatpush.msra.mxu0 0.0
      %4484 = vmatpush.msra.mxu0 0.0
      %4485 = vmatpush.msra.mxu0 0.0
      %4486 = vmatpush.msra.mxu0 0.0
      %4487 = vmatpush.msra.mxu0 0.0
      %4488 = vmatpush.msra.mxu0 0.0
      %4489 = vmatpush.msra.mxu0 0.0
      %4490 = vmatpush.msra.mxu0 0.0
      %4491 = vmatpush.msra.mxu0 0.0
      %4492 = vmatpush.msra.mxu0 0.0
      %4493 = vmatpush.msra.mxu0 0.0
      %4494 = vmatpush.msra.mxu0 0.0
      %4495 = vmatpush.msra.mxu0 0.0
      %4496 = vmatpush.msra.mxu0 %v4476
      %4497 = vmatmul.f32.gmra.mxu0 %v4479
      %v4498 = vpop.f32.mrf.mxu0
      %v4499 = vadd.f32 0.0, %v4498
      %4500 = vdwg.mxu0
      %4502 = vrot.lane.b32.xlu0 %v515, 120
      %v4503 = vpop.permute.xlu0 %4502
      %v4506 = vsel %vm2443, %v4183, 0
      %4508 = vmatpush.msra.mxu0 0.0
      %4509 = vmatpush.msra.mxu0 0.0
      %4510 = vmatpush.msra.mxu0 0.0
      %4511 = vmatpush.msra.mxu0 0.0
      %4512 = vmatpush.msra.mxu0 0.0
      %4513 = vmatpush.msra.mxu0 0.0
      %4514 = vmatpush.msra.mxu0 0.0
      %4515 = vmatpush.msra.mxu0 0.0
      %4516 = vmatpush.msra.mxu0 0.0
      %4517 = vmatpush.msra.mxu0 0.0
      %4518 = vmatpush.msra.mxu0 0.0
      %4519 = vmatpush.msra.mxu0 0.0
      %4520 = vmatpush.msra.mxu0 0.0
      %4521 = vmatpush.msra.mxu0 0.0
      %4522 = vmatpush.msra.mxu0 0.0
      %4523 = vmatpush.msra.mxu0 %v4503
      %4524 = vmatmul.f32.gmra.mxu0 %v4506
      %v4525 = vpop.f32.mrf.mxu0
      %v4526 = vadd.f32 0.0, %v4525
      %4527 = vdwg.mxu0
      %4529 = vrot.lane.b32.xlu0 %v518, 120
      %v4530 = vpop.permute.xlu0 %4529
      %v4533 = vsel %vm2443, %v4184, 0
      %4535 = vmatpush.msra.mxu0 0.0
      %4536 = vmatpush.msra.mxu0 0.0
      %4537 = vmatpush.msra.mxu0 0.0
      %4538 = vmatpush.msra.mxu0 0.0
      %4539 = vmatpush.msra.mxu0 0.0
      %4540 = vmatpush.msra.mxu0 0.0
      %4541 = vmatpush.msra.mxu0 0.0
      %4542 = vmatpush.msra.mxu0 0.0
      %4543 = vmatpush.msra.mxu0 0.0
      %4544 = vmatpush.msra.mxu0 0.0
      %4545 = vmatpush.msra.mxu0 0.0
      %4546 = vmatpush.msra.mxu0 0.0
      %4547 = vmatpush.msra.mxu0 0.0
      %4548 = vmatpush.msra.mxu0 0.0
      %4549 = vmatpush.msra.mxu0 0.0
      %4550 = vmatpush.msra.mxu0 %v4530
      %4551 = vmatmul.f32.gmra.mxu0 %v4533
      %v4552 = vpop.f32.mrf.mxu0
      %v4553 = vadd.f32 0.0, %v4552
      %4554 = vdwg.mxu0
      %4556 = vrot.lane.b32.xlu0 %v521, 120
      %v4557 = vpop.permute.xlu0 %4556
      %v4560 = vsel %vm2443, %v4185, 0
      %4562 = vmatpush.msra.mxu0 0.0
      %4563 = vmatpush.msra.mxu0 0.0
      %4564 = vmatpush.msra.mxu0 0.0
      %4565 = vmatpush.msra.mxu0 0.0
      %4566 = vmatpush.msra.mxu0 0.0
      %4567 = vmatpush.msra.mxu0 0.0
      %4568 = vmatpush.msra.mxu0 0.0
      %4569 = vmatpush.msra.mxu0 0.0
      %4570 = vmatpush.msra.mxu0 0.0
      %4571 = vmatpush.msra.mxu0 0.0
      %4572 = vmatpush.msra.mxu0 0.0
      %4573 = vmatpush.msra.mxu0 0.0
      %4574 = vmatpush.msra.mxu0 0.0
      %4575 = vmatpush.msra.mxu0 0.0
      %4576 = vmatpush.msra.mxu0 0.0
      %4577 = vmatpush.msra.mxu0 %v4557
      %4578 = vmatmul.f32.gmra.mxu0 %v4560
      %v4579 = vpop.f32.mrf.mxu0
      %v4580 = vadd.f32 0.0, %v4579
      %4581 = vdwg.mxu0
      %4583 = vrot.lane.b32.xlu0 %v524, 120
      %v4584 = vpop.permute.xlu0 %4583
      %v4587 = vsel %vm2443, %v4186, 0
      %4589 = vmatpush.msra.mxu0 0.0
      %4590 = vmatpush.msra.mxu0 0.0
      %4591 = vmatpush.msra.mxu0 0.0
      %4592 = vmatpush.msra.mxu0 0.0
      %4593 = vmatpush.msra.mxu0 0.0
      %4594 = vmatpush.msra.mxu0 0.0
      %4595 = vmatpush.msra.mxu0 0.0
      %4596 = vmatpush.msra.mxu0 0.0
      %4597 = vmatpush.msra.mxu0 0.0
      %4598 = vmatpush.msra.mxu0 0.0
      %4599 = vmatpush.msra.mxu0 0.0
      %4600 = vmatpush.msra.mxu0 0.0
      %4601 = vmatpush.msra.mxu0 0.0
      %4602 = vmatpush.msra.mxu0 0.0
      %4603 = vmatpush.msra.mxu0 0.0
      %4604 = vmatpush.msra.mxu0 %v4584
      %4605 = vmatmul.f32.gmra.mxu0 %v4587
      %v4606 = vpop.f32.mrf.mxu0
      %v4607 = vadd.f32 0.0, %v4606
      %4608 = vdwg.mxu0
      %4610 = vrot.lane.b32.xlu0 %v527, 120
      %v4611 = vpop.permute.xlu0 %4610
      %v4614 = vsel %vm2443, %v4187, 0
      %4616 = vmatpush.msra.mxu0 0.0
      %4617 = vmatpush.msra.mxu0 0.0
      %4618 = vmatpush.msra.mxu0 0.0
      %4619 = vmatpush.msra.mxu0 0.0
      %4620 = vmatpush.msra.mxu0 0.0
      %4621 = vmatpush.msra.mxu0 0.0
      %4622 = vmatpush.msra.mxu0 0.0
      %4623 = vmatpush.msra.mxu0 0.0
      %4624 = vmatpush.msra.mxu0 0.0
      %4625 = vmatpush.msra.mxu0 0.0
      %4626 = vmatpush.msra.mxu0 0.0
      %4627 = vmatpush.msra.mxu0 0.0
      %4628 = vmatpush.msra.mxu0 0.0
      %4629 = vmatpush.msra.mxu0 0.0
      %4630 = vmatpush.msra.mxu0 0.0
      %4631 = vmatpush.msra.mxu0 %v4611
      %4632 = vmatmul.f32.gmra.mxu0 %v4614
      %v4633 = vpop.f32.mrf.mxu0
      %v4634 = vadd.f32 0.0, %v4633
      %4635 = vdwg.mxu0
      %4637 = vrot.lane.b32.xlu0 %v530, 120
      %v4638 = vpop.permute.xlu0 %4637
      %v4641 = vsel %vm2443, %v4188, 0
      %4643 = vmatpush.msra.mxu0 0.0
      %4644 = vmatpush.msra.mxu0 0.0
      %4645 = vmatpush.msra.mxu0 0.0
      %4646 = vmatpush.msra.mxu0 0.0
      %4647 = vmatpush.msra.mxu0 0.0
      %4648 = vmatpush.msra.mxu0 0.0
      %4649 = vmatpush.msra.mxu0 0.0
      %4650 = vmatpush.msra.mxu0 0.0
      %4651 = vmatpush.msra.mxu0 0.0
      %4652 = vmatpush.msra.mxu0 0.0
      %4653 = vmatpush.msra.mxu0 0.0
      %4654 = vmatpush.msra.mxu0 0.0
      %4655 = vmatpush.msra.mxu0 0.0
      %4656 = vmatpush.msra.mxu0 0.0
      %4657 = vmatpush.msra.mxu0 0.0
      %4658 = vmatpush.msra.mxu0 %v4638
      %4659 = vmatmul.f32.gmra.mxu0 %v4641
      %v4660 = vpop.f32.mrf.mxu0
      %v4661 = vadd.f32 0.0, %v4660
      %4662 = vdwg.mxu0
      %4664 = vrot.lane.b32.xlu0 %v533, 120
      %v4665 = vpop.permute.xlu0 %4664
      %v4668 = vsel %vm2443, %v4189, 0
      %4670 = vmatpush.msra.mxu0 0.0
      %4671 = vmatpush.msra.mxu0 0.0
      %4672 = vmatpush.msra.mxu0 0.0
      %4673 = vmatpush.msra.mxu0 0.0
      %4674 = vmatpush.msra.mxu0 0.0
      %4675 = vmatpush.msra.mxu0 0.0
      %4676 = vmatpush.msra.mxu0 0.0
      %4677 = vmatpush.msra.mxu0 0.0
      %4678 = vmatpush.msra.mxu0 0.0
      %4679 = vmatpush.msra.mxu0 0.0
      %4680 = vmatpush.msra.mxu0 0.0
      %4681 = vmatpush.msra.mxu0 0.0
      %4682 = vmatpush.msra.mxu0 0.0
      %4683 = vmatpush.msra.mxu0 0.0
      %4684 = vmatpush.msra.mxu0 0.0
      %4685 = vmatpush.msra.mxu0 %v4665
      %4686 = vmatmul.f32.gmra.mxu0 %v4668
      %v4687 = vpop.f32.mrf.mxu0
      %v4688 = vadd.f32 0.0, %v4687
      %4689 = vdwg.mxu0
      %4691 = vrot.lane.b32.xlu0 %v536, 120
      %v4692 = vpop.permute.xlu0 %4691
      %v4695 = vsel %vm2443, %v4190, 0
      %4697 = vmatpush.msra.mxu0 0.0
      %4698 = vmatpush.msra.mxu0 0.0
      %4699 = vmatpush.msra.mxu0 0.0
      %4700 = vmatpush.msra.mxu0 0.0
      %4701 = vmatpush.msra.mxu0 0.0
      %4702 = vmatpush.msra.mxu0 0.0
      %4703 = vmatpush.msra.mxu0 0.0
      %4704 = vmatpush.msra.mxu0 0.0
      %4705 = vmatpush.msra.mxu0 0.0
      %4706 = vmatpush.msra.mxu0 0.0
      %4707 = vmatpush.msra.mxu0 0.0
      %4708 = vmatpush.msra.mxu0 0.0
      %4709 = vmatpush.msra.mxu0 0.0
      %4710 = vmatpush.msra.mxu0 0.0
      %4711 = vmatpush.msra.mxu0 0.0
      %4712 = vmatpush.msra.mxu0 %v4692
      %4713 = vmatmul.f32.gmra.mxu0 %v4695
      %v4714 = vpop.f32.mrf.mxu0
      %v4715 = vadd.f32 0.0, %v4714
      %4716 = vdwg.mxu0
      %4718 = vrot.lane.b32.xlu0 %v539, 120
      %v4719 = vpop.permute.xlu0 %4718
      %v4722 = vsel %vm2443, %v4191, 0
      %4724 = vmatpush.msra.mxu0 0.0
      %4725 = vmatpush.msra.mxu0 0.0
      %4726 = vmatpush.msra.mxu0 0.0
      %4727 = vmatpush.msra.mxu0 0.0
      %4728 = vmatpush.msra.mxu0 0.0
      %4729 = vmatpush.msra.mxu0 0.0
      %4730 = vmatpush.msra.mxu0 0.0
      %4731 = vmatpush.msra.mxu0 0.0
      %4732 = vmatpush.msra.mxu0 0.0
      %4733 = vmatpush.msra.mxu0 0.0
      %4734 = vmatpush.msra.mxu0 0.0
      %4735 = vmatpush.msra.mxu0 0.0
      %4736 = vmatpush.msra.mxu0 0.0
      %4737 = vmatpush.msra.mxu0 0.0
      %4738 = vmatpush.msra.mxu0 0.0
      %4739 = vmatpush.msra.mxu0 %v4719
      %4740 = vmatmul.f32.gmra.mxu0 %v4722
      %v4741 = vpop.f32.mrf.mxu0
      %v4742 = vadd.f32 0.0, %v4741
      %4743 = vdwg.mxu0
      %4745 = vrot.lane.b32.xlu0 %v542, 120
      %v4746 = vpop.permute.xlu0 %4745
      %v4749 = vsel %vm2443, %v4192, 0
      %4751 = vmatpush.msra.mxu0 0.0
      %4752 = vmatpush.msra.mxu0 0.0
      %4753 = vmatpush.msra.mxu0 0.0
      %4754 = vmatpush.msra.mxu0 0.0
      %4755 = vmatpush.msra.mxu0 0.0
      %4756 = vmatpush.msra.mxu0 0.0
      %4757 = vmatpush.msra.mxu0 0.0
      %4758 = vmatpush.msra.mxu0 0.0
      %4759 = vmatpush.msra.mxu0 0.0
      %4760 = vmatpush.msra.mxu0 0.0
      %4761 = vmatpush.msra.mxu0 0.0
      %4762 = vmatpush.msra.mxu0 0.0
      %4763 = vmatpush.msra.mxu0 0.0
      %4764 = vmatpush.msra.mxu0 0.0
      %4765 = vmatpush.msra.mxu0 0.0
      %4766 = vmatpush.msra.mxu0 %v4746
      %4767 = vmatmul.f32.gmra.mxu0 %v4749
      %v4768 = vpop.f32.mrf.mxu0
      %v4769 = vadd.f32 0.0, %v4768
      %4770 = vdwg.mxu0
      %4772 = vrot.lane.b32.xlu0 %v545, 120
      %v4773 = vpop.permute.xlu0 %4772
      %v4776 = vsel %vm2443, %v4193, 0
      %4778 = vmatpush.msra.mxu0 0.0
      %4779 = vmatpush.msra.mxu0 0.0
      %4780 = vmatpush.msra.mxu0 0.0
      %4781 = vmatpush.msra.mxu0 0.0
      %4782 = vmatpush.msra.mxu0 0.0
      %4783 = vmatpush.msra.mxu0 0.0
      %4784 = vmatpush.msra.mxu0 0.0
      %4785 = vmatpush.msra.mxu0 0.0
      %4786 = vmatpush.msra.mxu0 0.0
      %4787 = vmatpush.msra.mxu0 0.0
      %4788 = vmatpush.msra.mxu0 0.0
      %4789 = vmatpush.msra.mxu0 0.0
      %4790 = vmatpush.msra.mxu0 0.0
      %4791 = vmatpush.msra.mxu0 0.0
      %4792 = vmatpush.msra.mxu0 0.0
      %4793 = vmatpush.msra.mxu0 %v4773
      %4794 = vmatmul.f32.gmra.mxu0 %v4776
      %v4795 = vpop.f32.mrf.mxu0
      %v4796 = vadd.f32 0.0, %v4795
      %4797 = vdwg.mxu0
      %4799 = vrot.lane.b32.xlu0 %v548, 120
      %v4800 = vpop.permute.xlu0 %4799
      %v4803 = vsel %vm2443, %v4194, 0
      %4805 = vmatpush.msra.mxu0 0.0
      %4806 = vmatpush.msra.mxu0 0.0
      %4807 = vmatpush.msra.mxu0 0.0
      %4808 = vmatpush.msra.mxu0 0.0
      %4809 = vmatpush.msra.mxu0 0.0
      %4810 = vmatpush.msra.mxu0 0.0
      %4811 = vmatpush.msra.mxu0 0.0
      %4812 = vmatpush.msra.mxu0 0.0
      %4813 = vmatpush.msra.mxu0 0.0
      %4814 = vmatpush.msra.mxu0 0.0
      %4815 = vmatpush.msra.mxu0 0.0
      %4816 = vmatpush.msra.mxu0 0.0
      %4817 = vmatpush.msra.mxu0 0.0
      %4818 = vmatpush.msra.mxu0 0.0
      %4819 = vmatpush.msra.mxu0 0.0
      %4820 = vmatpush.msra.mxu0 %v4800
      %4821 = vmatmul.f32.gmra.mxu0 %v4803
      %v4822 = vpop.f32.mrf.mxu0
      %v4823 = vadd.f32 0.0, %v4822
      %4824 = vdwg.mxu0
      %4826 = vrot.lane.b32.xlu0 %v551, 120
      %v4827 = vpop.permute.xlu0 %4826
      %v4830 = vsel %vm2443, %v4195, 0
      %4832 = vmatpush.msra.mxu0 0.0
      %4833 = vmatpush.msra.mxu0 0.0
      %4834 = vmatpush.msra.mxu0 0.0
      %4835 = vmatpush.msra.mxu0 0.0
      %4836 = vmatpush.msra.mxu0 0.0
      %4837 = vmatpush.msra.mxu0 0.0
      %4838 = vmatpush.msra.mxu0 0.0
      %4839 = vmatpush.msra.mxu0 0.0
      %4840 = vmatpush.msra.mxu0 0.0
      %4841 = vmatpush.msra.mxu0 0.0
      %4842 = vmatpush.msra.mxu0 0.0
      %4843 = vmatpush.msra.mxu0 0.0
      %4844 = vmatpush.msra.mxu0 0.0
      %4845 = vmatpush.msra.mxu0 0.0
      %4846 = vmatpush.msra.mxu0 0.0
      %4847 = vmatpush.msra.mxu0 %v4827
      %4848 = vmatmul.f32.gmra.mxu0 %v4830
      %v4849 = vpop.f32.mrf.mxu0
      %v4850 = vadd.f32 0.0, %v4849
      %4851 = vdwg.mxu0
      %4853 = vrot.lane.b32.xlu0 %v554, 120
      %v4854 = vpop.permute.xlu0 %4853
      %v4857 = vsel %vm2443, %v4196, 0
      %4859 = vmatpush.msra.mxu0 0.0
      %4860 = vmatpush.msra.mxu0 0.0
      %4861 = vmatpush.msra.mxu0 0.0
      %4862 = vmatpush.msra.mxu0 0.0
      %4863 = vmatpush.msra.mxu0 0.0
      %4864 = vmatpush.msra.mxu0 0.0
      %4865 = vmatpush.msra.mxu0 0.0
      %4866 = vmatpush.msra.mxu0 0.0
      %4867 = vmatpush.msra.mxu0 0.0
      %4868 = vmatpush.msra.mxu0 0.0
      %4869 = vmatpush.msra.mxu0 0.0
      %4870 = vmatpush.msra.mxu0 0.0
      %4871 = vmatpush.msra.mxu0 0.0
      %4872 = vmatpush.msra.mxu0 0.0
      %4873 = vmatpush.msra.mxu0 0.0
      %4874 = vmatpush.msra.mxu0 %v4854
      %4875 = vmatmul.f32.gmra.mxu0 %v4857
      %v4876 = vpop.f32.mrf.mxu0
      %v4877 = vadd.f32 0.0, %v4876
      %4878 = vdwg.mxu0
      %4880 = vrot.lane.b32.xlu0 %v557, 120
      %v4881 = vpop.permute.xlu0 %4880
      %v4884 = vsel %vm2443, %v4197, 0
      %4886 = vmatpush.msra.mxu0 0.0
      %4887 = vmatpush.msra.mxu0 0.0
      %4888 = vmatpush.msra.mxu0 0.0
      %4889 = vmatpush.msra.mxu0 0.0
      %4890 = vmatpush.msra.mxu0 0.0
      %4891 = vmatpush.msra.mxu0 0.0
      %4892 = vmatpush.msra.mxu0 0.0
      %4893 = vmatpush.msra.mxu0 0.0
      %4894 = vmatpush.msra.mxu0 0.0
      %4895 = vmatpush.msra.mxu0 0.0
      %4896 = vmatpush.msra.mxu0 0.0
      %4897 = vmatpush.msra.mxu0 0.0
      %4898 = vmatpush.msra.mxu0 0.0
      %4899 = vmatpush.msra.mxu0 0.0
      %4900 = vmatpush.msra.mxu0 0.0
      %4901 = vmatpush.msra.mxu0 %v4881
      %4902 = vmatmul.f32.gmra.mxu0 %v4884
      %v4903 = vpop.f32.mrf.mxu0
      %v4904 = vadd.f32 0.0, %v4903
      %4905 = vdwg.mxu0
      %4907 = vrot.lane.b32.xlu0 %v560, 120
      %v4908 = vpop.permute.xlu0 %4907
      %v4911 = vsel %vm2443, %v4198, 0
      %4913 = vmatpush.msra.mxu0 0.0
      %4914 = vmatpush.msra.mxu0 0.0
      %4915 = vmatpush.msra.mxu0 0.0
      %4916 = vmatpush.msra.mxu0 0.0
      %4917 = vmatpush.msra.mxu0 0.0
      %4918 = vmatpush.msra.mxu0 0.0
      %4919 = vmatpush.msra.mxu0 0.0
      %4920 = vmatpush.msra.mxu0 0.0
      %4921 = vmatpush.msra.mxu0 0.0
      %4922 = vmatpush.msra.mxu0 0.0
      %4923 = vmatpush.msra.mxu0 0.0
      %4924 = vmatpush.msra.mxu0 0.0
      %4925 = vmatpush.msra.mxu0 0.0
      %4926 = vmatpush.msra.mxu0 0.0
      %4927 = vmatpush.msra.mxu0 0.0
      %4928 = vmatpush.msra.mxu0 %v4908
      %4929 = vmatmul.f32.gmra.mxu0 %v4911
      %v4930 = vpop.f32.mrf.mxu0
      %v4931 = vadd.f32 0.0, %v4930
      %4932 = vdwg.mxu0
      %4934 = vrot.lane.b32.xlu0 %v563, 120
      %v4935 = vpop.permute.xlu0 %4934
      %v4938 = vsel %vm2443, %v4199, 0
      %4940 = vmatpush.msra.mxu0 0.0
      %4941 = vmatpush.msra.mxu0 0.0
      %4942 = vmatpush.msra.mxu0 0.0
      %4943 = vmatpush.msra.mxu0 0.0
      %4944 = vmatpush.msra.mxu0 0.0
      %4945 = vmatpush.msra.mxu0 0.0
      %4946 = vmatpush.msra.mxu0 0.0
      %4947 = vmatpush.msra.mxu0 0.0
      %4948 = vmatpush.msra.mxu0 0.0
      %4949 = vmatpush.msra.mxu0 0.0
      %4950 = vmatpush.msra.mxu0 0.0
      %4951 = vmatpush.msra.mxu0 0.0
      %4952 = vmatpush.msra.mxu0 0.0
      %4953 = vmatpush.msra.mxu0 0.0
      %4954 = vmatpush.msra.mxu0 0.0
      %4955 = vmatpush.msra.mxu0 %v4935
      %4956 = vmatmul.f32.gmra.mxu0 %v4938
      %v4957 = vpop.f32.mrf.mxu0
      %v4958 = vadd.f32 0.0, %v4957
      %4959 = vdwg.mxu0
      %4961 = vrot.lane.b32.xlu0 %v566, 120
      %v4962 = vpop.permute.xlu0 %4961
      %v4965 = vsel %vm2443, %v4200, 0
      %4967 = vmatpush.msra.mxu0 0.0
      %4968 = vmatpush.msra.mxu0 0.0
      %4969 = vmatpush.msra.mxu0 0.0
      %4970 = vmatpush.msra.mxu0 0.0
      %4971 = vmatpush.msra.mxu0 0.0
      %4972 = vmatpush.msra.mxu0 0.0
      %4973 = vmatpush.msra.mxu0 0.0
      %4974 = vmatpush.msra.mxu0 0.0
      %4975 = vmatpush.msra.mxu0 0.0
      %4976 = vmatpush.msra.mxu0 0.0
      %4977 = vmatpush.msra.mxu0 0.0
      %4978 = vmatpush.msra.mxu0 0.0
      %4979 = vmatpush.msra.mxu0 0.0
      %4980 = vmatpush.msra.mxu0 0.0
      %4981 = vmatpush.msra.mxu0 0.0
      %4982 = vmatpush.msra.mxu0 %v4962
      %4983 = vmatmul.f32.gmra.mxu0 %v4965
      %v4984 = vpop.f32.mrf.mxu0
      %v4985 = vadd.f32 0.0, %v4984
      %4986 = vdwg.mxu0
      %4988 = vrot.lane.b32.xlu0 %v569, 120
      %v4989 = vpop.permute.xlu0 %4988
      %v4992 = vsel %vm2443, %v4201, 0
      %4994 = vmatpush.msra.mxu0 0.0
      %4995 = vmatpush.msra.mxu0 0.0
      %4996 = vmatpush.msra.mxu0 0.0
      %4997 = vmatpush.msra.mxu0 0.0
      %4998 = vmatpush.msra.mxu0 0.0
      %4999 = vmatpush.msra.mxu0 0.0
      %5000 = vmatpush.msra.mxu0 0.0
      %5001 = vmatpush.msra.mxu0 0.0
      %5002 = vmatpush.msra.mxu0 0.0
      %5003 = vmatpush.msra.mxu0 0.0
      %5004 = vmatpush.msra.mxu0 0.0
      %5005 = vmatpush.msra.mxu0 0.0
      %5006 = vmatpush.msra.mxu0 0.0
      %5007 = vmatpush.msra.mxu0 0.0
      %5008 = vmatpush.msra.mxu0 0.0
      %5009 = vmatpush.msra.mxu0 %v4989
      %5010 = vmatmul.f32.gmra.mxu0 %v4992
      %v5011 = vpop.f32.mrf.mxu0
      %v5012 = vadd.f32 0.0, %v5011
      %5013 = vdwg.mxu0
      %5015 = vrot.lane.b32.xlu0 %v572, 120
      %v5016 = vpop.permute.xlu0 %5015
      %v5019 = vsel %vm2443, %v4202, 0
      %5021 = vmatpush.msra.mxu0 0.0
      %5022 = vmatpush.msra.mxu0 0.0
      %5023 = vmatpush.msra.mxu0 0.0
      %5024 = vmatpush.msra.mxu0 0.0
      %5025 = vmatpush.msra.mxu0 0.0
      %5026 = vmatpush.msra.mxu0 0.0
      %5027 = vmatpush.msra.mxu0 0.0
      %5028 = vmatpush.msra.mxu0 0.0
      %5029 = vmatpush.msra.mxu0 0.0
      %5030 = vmatpush.msra.mxu0 0.0
      %5031 = vmatpush.msra.mxu0 0.0
      %5032 = vmatpush.msra.mxu0 0.0
      %5033 = vmatpush.msra.mxu0 0.0
      %5034 = vmatpush.msra.mxu0 0.0
      %5035 = vmatpush.msra.mxu0 0.0
      %5036 = vmatpush.msra.mxu0 %v5016
      %5037 = vmatmul.f32.gmra.mxu0 %v5019
      %v5038 = vpop.f32.mrf.mxu0
      %v5039 = vadd.f32 0.0, %v5038
      %5040 = vdwg.mxu0
      %5042 = vrot.lane.b32.xlu0 %v575, 120
      %v5043 = vpop.permute.xlu0 %5042
      %v5046 = vsel %vm2443, %v4203, 0
      %5048 = vmatpush.msra.mxu0 0.0
      %5049 = vmatpush.msra.mxu0 0.0
      %5050 = vmatpush.msra.mxu0 0.0
      %5051 = vmatpush.msra.mxu0 0.0
      %5052 = vmatpush.msra.mxu0 0.0
      %5053 = vmatpush.msra.mxu0 0.0
      %5054 = vmatpush.msra.mxu0 0.0
      %5055 = vmatpush.msra.mxu0 0.0
      %5056 = vmatpush.msra.mxu0 0.0
      %5057 = vmatpush.msra.mxu0 0.0
      %5058 = vmatpush.msra.mxu0 0.0
      %5059 = vmatpush.msra.mxu0 0.0
      %5060 = vmatpush.msra.mxu0 0.0
      %5061 = vmatpush.msra.mxu0 0.0
      %5062 = vmatpush.msra.mxu0 0.0
      %5063 = vmatpush.msra.mxu0 %v5043
      %5064 = vmatmul.f32.gmra.mxu0 %v5046
      %v5065 = vpop.f32.mrf.mxu0
      %v5066 = vadd.f32 0.0, %v5065
      %5067 = vdwg.mxu0
      %5068 = vset.pattern.permute.xlu0 2
      %5069 = vperm.xlu0 %5068, %v727
      %v5070 = vpop.permute.xlu0 %5069
      %5072 = vset.pattern.permute.xlu0 2
      %5073 = vperm.xlu0 %5072, %v730
      %v5074 = vpop.permute.xlu0 %5073
      %5076 = vset.pattern.permute.xlu0 2
      %5077 = vperm.xlu0 %5076, %v733
      %v5078 = vpop.permute.xlu0 %5077
      %5080 = vset.pattern.permute.xlu0 2
      %5081 = vperm.xlu0 %5080, %v736
      %v5082 = vpop.permute.xlu0 %5081
      %5084 = vset.pattern.permute.xlu0 2
      %5085 = vperm.xlu0 %5084, %v739
      %v5086 = vpop.permute.xlu0 %5085
      %5088 = vset.pattern.permute.xlu0 2
      %5089 = vperm.xlu0 %5088, %v742
      %v5090 = vpop.permute.xlu0 %5089
      %5092 = vset.pattern.permute.xlu0 2
      %5093 = vperm.xlu0 %5092, %v745
      %v5094 = vpop.permute.xlu0 %5093
      %5096 = vset.pattern.permute.xlu0 2
      %5097 = vperm.xlu0 %5096, %v748
      %v5098 = vpop.permute.xlu0 %5097
      %5100 = vset.pattern.permute.xlu0 2
      %5101 = vperm.xlu0 %5100, %v751
      %v5102 = vpop.permute.xlu0 %5101
      %5104 = vset.pattern.permute.xlu0 2
      %5105 = vperm.xlu0 %5104, %v754
      %v5106 = vpop.permute.xlu0 %5105
      %5108 = vset.pattern.permute.xlu0 2
      %5109 = vperm.xlu0 %5108, %v757
      %v5110 = vpop.permute.xlu0 %5109
      %5112 = vset.pattern.permute.xlu0 2
      %5113 = vperm.xlu0 %5112, %v760
      %v5114 = vpop.permute.xlu0 %5113
      %5116 = vset.pattern.permute.xlu0 2
      %5117 = vperm.xlu0 %5116, %v763
      %v5118 = vpop.permute.xlu0 %5117
      %5120 = vset.pattern.permute.xlu0 2
      %5121 = vperm.xlu0 %5120, %v766
      %v5122 = vpop.permute.xlu0 %5121
      %5124 = vset.pattern.permute.xlu0 2
      %5125 = vperm.xlu0 %5124, %v769
      %v5126 = vpop.permute.xlu0 %5125
      %5128 = vset.pattern.permute.xlu0 2
      %5129 = vperm.xlu0 %5128, %v772
      %v5130 = vpop.permute.xlu0 %5129
      %5132 = vset.pattern.permute.xlu0 2
      %5133 = vperm.xlu0 %5132, %v775
      %v5134 = vpop.permute.xlu0 %5133
      %5136 = vset.pattern.permute.xlu0 2
      %5137 = vperm.xlu0 %5136, %v778
      %v5138 = vpop.permute.xlu0 %5137
      %5140 = vset.pattern.permute.xlu0 2
      %5141 = vperm.xlu0 %5140, %v781
      %v5142 = vpop.permute.xlu0 %5141
      %5144 = vset.pattern.permute.xlu0 2
      %5145 = vperm.xlu0 %5144, %v784
      %v5146 = vpop.permute.xlu0 %5145
      %5148 = vset.pattern.permute.xlu0 2
      %5149 = vperm.xlu0 %5148, %v787
      %v5150 = vpop.permute.xlu0 %5149
      %5152 = vset.pattern.permute.xlu0 2
      %5153 = vperm.xlu0 %5152, %v790
      %v5154 = vpop.permute.xlu0 %5153
      %5156 = vset.pattern.permute.xlu0 2
      %5157 = vperm.xlu0 %5156, %v793
      %v5158 = vpop.permute.xlu0 %5157
      %5160 = vset.pattern.permute.xlu0 2
      %5161 = vperm.xlu0 %5160, %v796
      %v5162 = vpop.permute.xlu0 %5161
      %5164 = vset.pattern.permute.xlu0 2
      %5165 = vperm.xlu0 %5164, %v799
      %v5166 = vpop.permute.xlu0 %5165
      %5168 = vset.pattern.permute.xlu0 2
      %5169 = vperm.xlu0 %5168, %v802
      %v5170 = vpop.permute.xlu0 %5169
      %5172 = vset.pattern.permute.xlu0 2
      %5173 = vperm.xlu0 %5172, %v805
      %v5174 = vpop.permute.xlu0 %5173
      %5176 = vset.pattern.permute.xlu0 2
      %5177 = vperm.xlu0 %5176, %v808
      %v5178 = vpop.permute.xlu0 %5177
      %5180 = vset.pattern.permute.xlu0 2
      %5181 = vperm.xlu0 %5180, %v811
      %v5182 = vpop.permute.xlu0 %5181
      %5184 = vset.pattern.permute.xlu0 2
      %5185 = vperm.xlu0 %5184, %v814
      %v5186 = vpop.permute.xlu0 %5185
      %5188 = vset.pattern.permute.xlu0 2
      %5189 = vperm.xlu0 %5188, %v817
      %v5190 = vpop.permute.xlu0 %5189
      %5192 = vset.pattern.permute.xlu0 2
      %5193 = vperm.xlu0 %5192, %v820
      %v5194 = vpop.permute.xlu0 %5193
      %v5196 = vperm.slane %v955, 2
      %v5197 = vperm.slane %v987, 2
      %v5198 = vperm.slane %v1019, 2
      %v5199 = vperm.slane %v1051, 2
      %v5200 = vperm.slane %v1083, 2
      %v5201 = vperm.slane %v1115, 2
      %v5202 = vperm.slane %v1147, 2
      %v5203 = vperm.slane %v1179, 2
      %v5204 = vperm.slane %v1211, 2
      %v5205 = vperm.slane %v1243, 2
      %v5206 = vperm.slane %v1275, 2
      %v5207 = vperm.slane %v1307, 2
      %v5208 = vperm.slane %v1339, 2
      %v5209 = vperm.slane %v1371, 2
      %v5210 = vperm.slane %v1403, 2
      %v5211 = vperm.slane %v1435, 2
      %v5212 = vperm.slane %v1467, 2
      %v5213 = vperm.slane %v1499, 2
      %v5214 = vperm.slane %v1531, 2
      %v5215 = vperm.slane %v1563, 2
      %v5216 = vperm.slane %v1595, 2
      %v5217 = vperm.slane %v1627, 2
      %v5218 = vperm.slane %v1659, 2
      %v5219 = vperm.slane %v1691, 2
      %v5220 = vperm.slane %v1723, 2
      %v5221 = vperm.slane %v1755, 2
      %v5222 = vperm.slane %v1787, 2
      %v5223 = vperm.slane %v1819, 2
      %v5224 = vperm.slane %v1851, 2
      %v5225 = vperm.slane %v1883, 2
      %v5226 = vperm.slane %v1915, 2
      %v5227 = vperm.slane %v1947, 2
      %v5228 = vadd.f32 %v5070, %v5196
      %v5229 = vadd.f32 %v5074, %v5197
      %v5230 = vadd.f32 %v5078, %v5198
      %v5231 = vadd.f32 %v5082, %v5199
      %v5232 = vadd.f32 %v5086, %v5200
      %v5233 = vadd.f32 %v5090, %v5201
      %v5234 = vadd.f32 %v5094, %v5202
      %v5235 = vadd.f32 %v5098, %v5203
      %v5236 = vadd.f32 %v5102, %v5204
      %v5237 = vadd.f32 %v5106, %v5205
      %v5238 = vadd.f32 %v5110, %v5206
      %v5239 = vadd.f32 %v5114, %v5207
      %v5240 = vadd.f32 %v5118, %v5208
      %v5241 = vadd.f32 %v5122, %v5209
      %v5242 = vadd.f32 %v5126, %v5210
      %v5243 = vadd.f32 %v5130, %v5211
      %v5244 = vadd.f32 %v5134, %v5212
      %v5245 = vadd.f32 %v5138, %v5213
      %v5246 = vadd.f32 %v5142, %v5214
      %v5247 = vadd.f32 %v5146, %v5215
      %v5248 = vadd.f32 %v5150, %v5216
      %v5249 = vadd.f32 %v5154, %v5217
      %v5250 = vadd.f32 %v5158, %v5218
      %v5251 = vadd.f32 %v5162, %v5219
      %v5252 = vadd.f32 %v5166, %v5220
      %v5253 = vadd.f32 %v5170, %v5221
      %v5254 = vadd.f32 %v5174, %v5222
      %v5255 = vadd.f32 %v5178, %v5223
      %v5256 = vadd.f32 %v5182, %v5224
      %v5257 = vadd.f32 %v5186, %v5225
      %v5258 = vadd.f32 %v5190, %v5226
      %v5259 = vadd.f32 %v5194, %v5227
      %vm5260 = vcmp.gt.f32.partialorder %v5228, 0.0
      %vm5261 = vcmp.gt.f32.partialorder %v5229, 0.0
      %vm5262 = vcmp.gt.f32.partialorder %v5230, 0.0
      %vm5263 = vcmp.gt.f32.partialorder %v5231, 0.0
      %vm5264 = vcmp.gt.f32.partialorder %v5232, 0.0
      %vm5265 = vcmp.gt.f32.partialorder %v5233, 0.0
      %vm5266 = vcmp.gt.f32.partialorder %v5234, 0.0
      %vm5267 = vcmp.gt.f32.partialorder %v5235, 0.0
      %vm5268 = vcmp.gt.f32.partialorder %v5236, 0.0
      %vm5269 = vcmp.gt.f32.partialorder %v5237, 0.0
      %vm5270 = vcmp.gt.f32.partialorder %v5238, 0.0
      %vm5271 = vcmp.gt.f32.partialorder %v5239, 0.0
      %vm5272 = vcmp.gt.f32.partialorder %v5240, 0.0
      %vm5273 = vcmp.gt.f32.partialorder %v5241, 0.0
      %vm5274 = vcmp.gt.f32.partialorder %v5242, 0.0
      %vm5275 = vcmp.gt.f32.partialorder %v5243, 0.0
      %vm5276 = vcmp.gt.f32.partialorder %v5244, 0.0
      %vm5277 = vcmp.gt.f32.partialorder %v5245, 0.0
      %vm5278 = vcmp.gt.f32.partialorder %v5246, 0.0
      %vm5279 = vcmp.gt.f32.partialorder %v5247, 0.0
      %vm5280 = vcmp.gt.f32.partialorder %v5248, 0.0
      %vm5281 = vcmp.gt.f32.partialorder %v5249, 0.0
      %vm5282 = vcmp.gt.f32.partialorder %v5250, 0.0
      %vm5283 = vcmp.gt.f32.partialorder %v5251, 0.0
      %vm5284 = vcmp.gt.f32.partialorder %v5252, 0.0
      %vm5285 = vcmp.gt.f32.partialorder %v5253, 0.0
      %vm5286 = vcmp.gt.f32.partialorder %v5254, 0.0
      %vm5287 = vcmp.gt.f32.partialorder %v5255, 0.0
      %vm5288 = vcmp.gt.f32.partialorder %v5256, 0.0
      %vm5289 = vcmp.gt.f32.partialorder %v5257, 0.0
      %vm5290 = vcmp.gt.f32.partialorder %v5258, 0.0
      %vm5291 = vcmp.gt.f32.partialorder %v5259, 0.0
      %v5292 = vmul.f32 %v5228, 0.2
      %v5293 = vmul.f32 %v5229, 0.2
      %v5294 = vmul.f32 %v5230, 0.2
      %v5295 = vmul.f32 %v5231, 0.2
      %v5296 = vmul.f32 %v5232, 0.2
      %v5297 = vmul.f32 %v5233, 0.2
      %v5298 = vmul.f32 %v5234, 0.2
      %v5299 = vmul.f32 %v5235, 0.2
      %v5300 = vmul.f32 %v5236, 0.2
      %v5301 = vmul.f32 %v5237, 0.2
      %v5302 = vmul.f32 %v5238, 0.2
      %v5303 = vmul.f32 %v5239, 0.2
      %v5304 = vmul.f32 %v5240, 0.2
      %v5305 = vmul.f32 %v5241, 0.2
      %v5306 = vmul.f32 %v5242, 0.2
      %v5307 = vmul.f32 %v5243, 0.2
      %v5308 = vmul.f32 %v5244, 0.2
      %v5309 = vmul.f32 %v5245, 0.2
      %v5310 = vmul.f32 %v5246, 0.2
      %v5311 = vmul.f32 %v5247, 0.2
      %v5312 = vmul.f32 %v5248, 0.2
      %v5313 = vmul.f32 %v5249, 0.2
      %v5314 = vmul.f32 %v5250, 0.2
      %v5315 = vmul.f32 %v5251, 0.2
      %v5316 = vmul.f32 %v5252, 0.2
      %v5317 = vmul.f32 %v5253, 0.2
      %v5318 = vmul.f32 %v5254, 0.2
      %v5319 = vmul.f32 %v5255, 0.2
      %v5320 = vmul.f32 %v5256, 0.2
      %v5321 = vmul.f32 %v5257, 0.2
      %v5322 = vmul.f32 %v5258, 0.2
      %v5323 = vmul.f32 %v5259, 0.2
      %v5324 = vsel %vm5260, %v5228, %v5292
      %v5325 = vsel %vm5261, %v5229, %v5293
      %v5326 = vsel %vm5262, %v5230, %v5294
      %v5327 = vsel %vm5263, %v5231, %v5295
      %v5328 = vsel %vm5264, %v5232, %v5296
      %v5329 = vsel %vm5265, %v5233, %v5297
      %v5330 = vsel %vm5266, %v5234, %v5298
      %v5331 = vsel %vm5267, %v5235, %v5299
      %v5332 = vsel %vm5268, %v5236, %v5300
      %v5333 = vsel %vm5269, %v5237, %v5301
      %v5334 = vsel %vm5270, %v5238, %v5302
      %v5335 = vsel %vm5271, %v5239, %v5303
      %v5336 = vsel %vm5272, %v5240, %v5304
      %v5337 = vsel %vm5273, %v5241, %v5305
      %v5338 = vsel %vm5274, %v5242, %v5306
      %v5339 = vsel %vm5275, %v5243, %v5307
      %v5340 = vsel %vm5276, %v5244, %v5308
      %v5341 = vsel %vm5277, %v5245, %v5309
      %v5342 = vsel %vm5278, %v5246, %v5310
      %v5343 = vsel %vm5279, %v5247, %v5311
      %v5344 = vsel %vm5280, %v5248, %v5312
      %v5345 = vsel %vm5281, %v5249, %v5313
      %v5346 = vsel %vm5282, %v5250, %v5314
      %v5347 = vsel %vm5283, %v5251, %v5315
      %v5348 = vsel %vm5284, %v5252, %v5316
      %v5349 = vsel %vm5285, %v5253, %v5317
      %v5350 = vsel %vm5286, %v5254, %v5318
      %v5351 = vsel %vm5287, %v5255, %v5319
      %v5352 = vsel %vm5288, %v5256, %v5320
      %v5353 = vsel %vm5289, %v5257, %v5321
      %v5354 = vsel %vm5290, %v5258, %v5322
      %v5355 = vsel %vm5291, %v5259, %v5323
      %v5356 = vsel %vm2059, %v5324, -999.0
      %v5357 = vsel %vm2060, %v5325, -999.0
      %v5358 = vsel %vm2061, %v5326, -999.0
      %v5359 = vsel %vm2062, %v5327, -999.0
      %v5360 = vsel %vm2063, %v5328, -999.0
      %v5361 = vsel %vm2064, %v5329, -999.0
      %v5362 = vsel %vm2065, %v5330, -999.0
      %v5363 = vsel %vm2066, %v5331, -999.0
      %v5364 = vsel %vm2067, %v5332, -999.0
      %v5365 = vsel %vm2068, %v5333, -999.0
      %v5366 = vsel %vm2069, %v5334, -999.0
      %v5367 = vsel %vm2070, %v5335, -999.0
      %v5368 = vsel %vm2071, %v5336, -999.0
      %v5369 = vsel %vm2072, %v5337, -999.0
      %v5370 = vsel %vm2073, %v5338, -999.0
      %v5371 = vsel %vm2074, %v5339, -999.0
      %v5372 = vsel %vm2075, %v5340, -999.0
      %v5373 = vsel %vm2076, %v5341, -999.0
      %v5374 = vsel %vm2077, %v5342, -999.0
      %v5375 = vsel %vm2078, %v5343, -999.0
      %v5376 = vsel %vm2079, %v5344, -999.0
      %v5377 = vsel %vm2080, %v5345, -999.0
      %v5378 = vsel %vm2081, %v5346, -999.0
      %v5379 = vsel %vm2082, %v5347, -999.0
      %v5380 = vsel %vm2083, %v5348, -999.0
      %v5381 = vsel %vm2084, %v5349, -999.0
      %v5382 = vsel %vm2085, %v5350, -999.0
      %v5383 = vsel %vm2086, %v5351, -999.0
      %v5384 = vsel %vm2087, %v5352, -999.0
      %v5385 = vsel %vm2088, %v5353, -999.0
      %v5386 = vsel %vm2089, %v5354, -999.0
      %v5387 = vsel %vm2090, %v5355, -999.0
      %v5388 = vsel %vm2443, %v5356, -inf
      %5389 = vmax.xlane.f32.xlu0 %v5388
      %v5390 = vpop.xlane.xlu0 %5389
      %v5391 = vsel %vm2443, %v5357, -inf
      %5392 = vmax.xlane.f32.xlu0 %v5391
      %v5393 = vpop.xlane.xlu0 %5392
      %v5394 = vsel %vm2443, %v5358, -inf
      %5395 = vmax.xlane.f32.xlu0 %v5394
      %v5396 = vpop.xlane.xlu0 %5395
      %v5397 = vsel %vm2443, %v5359, -inf
      %5398 = vmax.xlane.f32.xlu0 %v5397
      %v5399 = vpop.xlane.xlu0 %5398
      %v5400 = vsel %vm2443, %v5360, -inf
      %5401 = vmax.xlane.f32.xlu0 %v5400
      %v5402 = vpop.xlane.xlu0 %5401
      %v5403 = vsel %vm2443, %v5361, -inf
      %5404 = vmax.xlane.f32.xlu0 %v5403
      %v5405 = vpop.xlane.xlu0 %5404
      %v5406 = vsel %vm2443, %v5362, -inf
      %5407 = vmax.xlane.f32.xlu0 %v5406
      %v5408 = vpop.xlane.xlu0 %5407
      %v5409 = vsel %vm2443, %v5363, -inf
      %5410 = vmax.xlane.f32.xlu0 %v5409
      %v5411 = vpop.xlane.xlu0 %5410
      %v5412 = vsel %vm2443, %v5364, -inf
      %5413 = vmax.xlane.f32.xlu0 %v5412
      %v5414 = vpop.xlane.xlu0 %5413
      %v5415 = vsel %vm2443, %v5365, -inf
      %5416 = vmax.xlane.f32.xlu0 %v5415
      %v5417 = vpop.xlane.xlu0 %5416
      %v5418 = vsel %vm2443, %v5366, -inf
      %5419 = vmax.xlane.f32.xlu0 %v5418
      %v5420 = vpop.xlane.xlu0 %5419
      %v5421 = vsel %vm2443, %v5367, -inf
      %5422 = vmax.xlane.f32.xlu0 %v5421
      %v5423 = vpop.xlane.xlu0 %5422
      %v5424 = vsel %vm2443, %v5368, -inf
      %5425 = vmax.xlane.f32.xlu0 %v5424
      %v5426 = vpop.xlane.xlu0 %5425
      %v5427 = vsel %vm2443, %v5369, -inf
      %5428 = vmax.xlane.f32.xlu0 %v5427
      %v5429 = vpop.xlane.xlu0 %5428
      %v5430 = vsel %vm2443, %v5370, -inf
      %5431 = vmax.xlane.f32.xlu0 %v5430
      %v5432 = vpop.xlane.xlu0 %5431
      %v5433 = vsel %vm2443, %v5371, -inf
      %5434 = vmax.xlane.f32.xlu0 %v5433
      %v5435 = vpop.xlane.xlu0 %5434
      %v5436 = vsel %vm2443, %v5372, -inf
      %5437 = vmax.xlane.f32.xlu0 %v5436
      %v5438 = vpop.xlane.xlu0 %5437
      %v5439 = vsel %vm2443, %v5373, -inf
      %5440 = vmax.xlane.f32.xlu0 %v5439
      %v5441 = vpop.xlane.xlu0 %5440
      %v5442 = vsel %vm2443, %v5374, -inf
      %5443 = vmax.xlane.f32.xlu0 %v5442
      %v5444 = vpop.xlane.xlu0 %5443
      %v5445 = vsel %vm2443, %v5375, -inf
      %5446 = vmax.xlane.f32.xlu0 %v5445
      %v5447 = vpop.xlane.xlu0 %5446
      %v5448 = vsel %vm2443, %v5376, -inf
      %5449 = vmax.xlane.f32.xlu0 %v5448
      %v5450 = vpop.xlane.xlu0 %5449
      %v5451 = vsel %vm2443, %v5377, -inf
      %5452 = vmax.xlane.f32.xlu0 %v5451
      %v5453 = vpop.xlane.xlu0 %5452
      %v5454 = vsel %vm2443, %v5378, -inf
      %5455 = vmax.xlane.f32.xlu0 %v5454
      %v5456 = vpop.xlane.xlu0 %5455
      %v5457 = vsel %vm2443, %v5379, -inf
      %5458 = vmax.xlane.f32.xlu0 %v5457
      %v5459 = vpop.xlane.xlu0 %5458
      %v5460 = vsel %vm2443, %v5380, -inf
      %5461 = vmax.xlane.f32.xlu0 %v5460
      %v5462 = vpop.xlane.xlu0 %5461
      %v5463 = vsel %vm2443, %v5381, -inf
      %5464 = vmax.xlane.f32.xlu0 %v5463
      %v5465 = vpop.xlane.xlu0 %5464
      %v5466 = vsel %vm2443, %v5382, -inf
      %5467 = vmax.xlane.f32.xlu0 %v5466
      %v5468 = vpop.xlane.xlu0 %5467
      %v5469 = vsel %vm2443, %v5383, -inf
      %5470 = vmax.xlane.f32.xlu0 %v5469
      %v5471 = vpop.xlane.xlu0 %5470
      %v5472 = vsel %vm2443, %v5384, -inf
      %5473 = vmax.xlane.f32.xlu0 %v5472
      %v5474 = vpop.xlane.xlu0 %5473
      %v5475 = vsel %vm2443, %v5385, -inf
      %5476 = vmax.xlane.f32.xlu0 %v5475
      %v5477 = vpop.xlane.xlu0 %5476
      %v5478 = vsel %vm2443, %v5386, -inf
      %5479 = vmax.xlane.f32.xlu0 %v5478
      %v5480 = vpop.xlane.xlu0 %5479
      %v5481 = vsel %vm2443, %v5387, -inf
      %5482 = vmax.xlane.f32.xlu0 %v5481
      %v5483 = vpop.xlane.xlu0 %5482
      %v5484 = vsub.f32 %v5356, %v5390
      %v5485 = vsub.f32 %v5357, %v5393
      %v5486 = vsub.f32 %v5358, %v5396
      %v5487 = vsub.f32 %v5359, %v5399
      %v5488 = vsub.f32 %v5360, %v5402
      %v5489 = vsub.f32 %v5361, %v5405
      %v5490 = vsub.f32 %v5362, %v5408
      %v5491 = vsub.f32 %v5363, %v5411
      %v5492 = vsub.f32 %v5364, %v5414
      %v5493 = vsub.f32 %v5365, %v5417
      %v5494 = vsub.f32 %v5366, %v5420
      %v5495 = vsub.f32 %v5367, %v5423
      %v5496 = vsub.f32 %v5368, %v5426
      %v5497 = vsub.f32 %v5369, %v5429
      %v5498 = vsub.f32 %v5370, %v5432
      %v5499 = vsub.f32 %v5371, %v5435
      %v5500 = vsub.f32 %v5372, %v5438
      %v5501 = vsub.f32 %v5373, %v5441
      %v5502 = vsub.f32 %v5374, %v5444
      %v5503 = vsub.f32 %v5375, %v5447
      %v5504 = vsub.f32 %v5376, %v5450
      %v5505 = vsub.f32 %v5377, %v5453
      %v5506 = vsub.f32 %v5378, %v5456
      %v5507 = vsub.f32 %v5379, %v5459
      %v5508 = vsub.f32 %v5380, %v5462
      %v5509 = vsub.f32 %v5381, %v5465
      %v5510 = vsub.f32 %v5382, %v5468
      %v5511 = vsub.f32 %v5383, %v5471
      %v5512 = vsub.f32 %v5384, %v5474
      %v5513 = vsub.f32 %v5385, %v5477
      %v5514 = vsub.f32 %v5386, %v5480
      %v5515 = vsub.f32 %v5387, %v5483
      %v5516 = vmul.f32 %v5484, 1.442695
      %v5517 = vpow.pop %v5516
      %v5518 = vmul.f32 %v5485, 1.442695
      %v5519 = vpow.pop %v5518
      %v5520 = vmul.f32 %v5486, 1.442695
      %v5521 = vpow.pop %v5520
      %v5522 = vmul.f32 %v5487, 1.442695
      %v5523 = vpow.pop %v5522
      %v5524 = vmul.f32 %v5488, 1.442695
      %v5525 = vpow.pop %v5524
      %v5526 = vmul.f32 %v5489, 1.442695
      %v5527 = vpow.pop %v5526
      %v5528 = vmul.f32 %v5490, 1.442695
      %v5529 = vpow.pop %v5528
      %v5530 = vmul.f32 %v5491, 1.442695
      %v5531 = vpow.pop %v5530
      %v5532 = vmul.f32 %v5492, 1.442695
      %v5533 = vpow.pop %v5532
      %v5534 = vmul.f32 %v5493, 1.442695
      %v5535 = vpow.pop %v5534
      %v5536 = vmul.f32 %v5494, 1.442695
      %v5537 = vpow.pop %v5536
      %v5538 = vmul.f32 %v5495, 1.442695
      %v5539 = vpow.pop %v5538
      %v5540 = vmul.f32 %v5496, 1.442695
      %v5541 = vpow.pop %v5540
      %v5542 = vmul.f32 %v5497, 1.442695
      %v5543 = vpow.pop %v5542
      %v5544 = vmul.f32 %v5498, 1.442695
      %v5545 = vpow.pop %v5544
      %v5546 = vmul.f32 %v5499, 1.442695
      %v5547 = vpow.pop %v5546
      %v5548 = vmul.f32 %v5500, 1.442695
      %v5549 = vpow.pop %v5548
      %v5550 = vmul.f32 %v5501, 1.442695
      %v5551 = vpow.pop %v5550
      %v5552 = vmul.f32 %v5502, 1.442695
      %v5553 = vpow.pop %v5552
      %v5554 = vmul.f32 %v5503, 1.442695
      %v5555 = vpow.pop %v5554
      %v5556 = vmul.f32 %v5504, 1.442695
      %v5557 = vpow.pop %v5556
      %v5558 = vmul.f32 %v5505, 1.442695
      %v5559 = vpow.pop %v5558
      %v5560 = vmul.f32 %v5506, 1.442695
      %v5561 = vpow.pop %v5560
      %v5562 = vmul.f32 %v5507, 1.442695
      %v5563 = vpow.pop %v5562
      %v5564 = vmul.f32 %v5508, 1.442695
      %v5565 = vpow.pop %v5564
      %v5566 = vmul.f32 %v5509, 1.442695
      %v5567 = vpow.pop %v5566
      %v5568 = vmul.f32 %v5510, 1.442695
      %v5569 = vpow.pop %v5568
      %v5570 = vmul.f32 %v5511, 1.442695
      %v5571 = vpow.pop %v5570
      %v5572 = vmul.f32 %v5512, 1.442695
      %v5573 = vpow.pop %v5572
      %v5574 = vmul.f32 %v5513, 1.442695
      %v5575 = vpow.pop %v5574
      %v5576 = vmul.f32 %v5514, 1.442695
      %v5577 = vpow.pop %v5576
      %v5578 = vmul.f32 %v5515, 1.442695
      %v5579 = vpow.pop %v5578
      %v5580 = vsel %vm2443, %v5517, 0.0
      %5581 = vadd.xlane.f32.xlu0 %v5580
      %v5582 = vpop.xlane.xlu0 %5581
      %v5583 = vsel %vm2443, %v5519, 0.0
      %5584 = vadd.xlane.f32.xlu0 %v5583
      %v5585 = vpop.xlane.xlu0 %5584
      %v5586 = vsel %vm2443, %v5521, 0.0
      %5587 = vadd.xlane.f32.xlu0 %v5586
      %v5588 = vpop.xlane.xlu0 %5587
      %v5589 = vsel %vm2443, %v5523, 0.0
      %5590 = vadd.xlane.f32.xlu0 %v5589
      %v5591 = vpop.xlane.xlu0 %5590
      %v5592 = vsel %vm2443, %v5525, 0.0
      %5593 = vadd.xlane.f32.xlu0 %v5592
      %v5594 = vpop.xlane.xlu0 %5593
      %v5595 = vsel %vm2443, %v5527, 0.0
      %5596 = vadd.xlane.f32.xlu0 %v5595
      %v5597 = vpop.xlane.xlu0 %5596
      %v5598 = vsel %vm2443, %v5529, 0.0
      %5599 = vadd.xlane.f32.xlu0 %v5598
      %v5600 = vpop.xlane.xlu0 %5599
      %v5601 = vsel %vm2443, %v5531, 0.0
      %5602 = vadd.xlane.f32.xlu0 %v5601
      %v5603 = vpop.xlane.xlu0 %5602
      %v5604 = vsel %vm2443, %v5533, 0.0
      %5605 = vadd.xlane.f32.xlu0 %v5604
      %v5606 = vpop.xlane.xlu0 %5605
      %v5607 = vsel %vm2443, %v5535, 0.0
      %5608 = vadd.xlane.f32.xlu0 %v5607
      %v5609 = vpop.xlane.xlu0 %5608
      %v5610 = vsel %vm2443, %v5537, 0.0
      %5611 = vadd.xlane.f32.xlu0 %v5610
      %v5612 = vpop.xlane.xlu0 %5611
      %v5613 = vsel %vm2443, %v5539, 0.0
      %5614 = vadd.xlane.f32.xlu0 %v5613
      %v5615 = vpop.xlane.xlu0 %5614
      %v5616 = vsel %vm2443, %v5541, 0.0
      %5617 = vadd.xlane.f32.xlu0 %v5616
      %v5618 = vpop.xlane.xlu0 %5617
      %v5619 = vsel %vm2443, %v5543, 0.0
      %5620 = vadd.xlane.f32.xlu0 %v5619
      %v5621 = vpop.xlane.xlu0 %5620
      %v5622 = vsel %vm2443, %v5545, 0.0
      %5623 = vadd.xlane.f32.xlu0 %v5622
      %v5624 = vpop.xlane.xlu0 %5623
      %v5625 = vsel %vm2443, %v5547, 0.0
      %5626 = vadd.xlane.f32.xlu0 %v5625
      %v5627 = vpop.xlane.xlu0 %5626
      %v5628 = vsel %vm2443, %v5549, 0.0
      %5629 = vadd.xlane.f32.xlu0 %v5628
      %v5630 = vpop.xlane.xlu0 %5629
      %v5631 = vsel %vm2443, %v5551, 0.0
      %5632 = vadd.xlane.f32.xlu0 %v5631
      %v5633 = vpop.xlane.xlu0 %5632
      %v5634 = vsel %vm2443, %v5553, 0.0
      %5635 = vadd.xlane.f32.xlu0 %v5634
      %v5636 = vpop.xlane.xlu0 %5635
      %v5637 = vsel %vm2443, %v5555, 0.0
      %5638 = vadd.xlane.f32.xlu0 %v5637
      %v5639 = vpop.xlane.xlu0 %5638
      %v5640 = vsel %vm2443, %v5557, 0.0
      %5641 = vadd.xlane.f32.xlu0 %v5640
      %v5642 = vpop.xlane.xlu0 %5641
      %v5643 = vsel %vm2443, %v5559, 0.0
      %5644 = vadd.xlane.f32.xlu0 %v5643
      %v5645 = vpop.xlane.xlu0 %5644
      %v5646 = vsel %vm2443, %v5561, 0.0
      %5647 = vadd.xlane.f32.xlu0 %v5646
      %v5648 = vpop.xlane.xlu0 %5647
      %v5649 = vsel %vm2443, %v5563, 0.0
      %5650 = vadd.xlane.f32.xlu0 %v5649
      %v5651 = vpop.xlane.xlu0 %5650
      %v5652 = vsel %vm2443, %v5565, 0.0
      %5653 = vadd.xlane.f32.xlu0 %v5652
      %v5654 = vpop.xlane.xlu0 %5653
      %v5655 = vsel %vm2443, %v5567, 0.0
      %5656 = vadd.xlane.f32.xlu0 %v5655
      %v5657 = vpop.xlane.xlu0 %5656
      %v5658 = vsel %vm2443, %v5569, 0.0
      %5659 = vadd.xlane.f32.xlu0 %v5658
      %v5660 = vpop.xlane.xlu0 %5659
      %v5661 = vsel %vm2443, %v5571, 0.0
      %5662 = vadd.xlane.f32.xlu0 %v5661
      %v5663 = vpop.xlane.xlu0 %5662
      %v5664 = vsel %vm2443, %v5573, 0.0
      %5665 = vadd.xlane.f32.xlu0 %v5664
      %v5666 = vpop.xlane.xlu0 %5665
      %v5667 = vsel %vm2443, %v5575, 0.0
      %5668 = vadd.xlane.f32.xlu0 %v5667
      %v5669 = vpop.xlane.xlu0 %5668
      %v5670 = vsel %vm2443, %v5577, 0.0
      %5671 = vadd.xlane.f32.xlu0 %v5670
      %v5672 = vpop.xlane.xlu0 %5671
      %v5673 = vsel %vm2443, %v5579, 0.0
      %5674 = vadd.xlane.f32.xlu0 %v5673
      %v5675 = vpop.xlane.xlu0 %5674
      %v5676 = vrcp.pop %v5582
      %v5677 = vrcp.pop %v5585
      %v5678 = vrcp.pop %v5588
      %v5679 = vrcp.pop %v5591
      %v5680 = vrcp.pop %v5594
      %v5681 = vrcp.pop %v5597
      %v5682 = vrcp.pop %v5600
      %v5683 = vrcp.pop %v5603
      %v5684 = vrcp.pop %v5606
      %v5685 = vrcp.pop %v5609
      %v5686 = vrcp.pop %v5612
      %v5687 = vrcp.pop %v5615
      %v5688 = vrcp.pop %v5618
      %v5689 = vrcp.pop %v5621
      %v5690 = vrcp.pop %v5624
      %v5691 = vrcp.pop %v5627
      %v5692 = vrcp.pop %v5630
      %v5693 = vrcp.pop %v5633
      %v5694 = vrcp.pop %v5636
      %v5695 = vrcp.pop %v5639
      %v5696 = vrcp.pop %v5642
      %v5697 = vrcp.pop %v5645
      %v5698 = vrcp.pop %v5648
      %v5699 = vrcp.pop %v5651
      %v5700 = vrcp.pop %v5654
      %v5701 = vrcp.pop %v5657
      %v5702 = vrcp.pop %v5660
      %v5703 = vrcp.pop %v5663
      %v5704 = vrcp.pop %v5666
      %v5705 = vrcp.pop %v5669
      %v5706 = vrcp.pop %v5672
      %v5707 = vrcp.pop %v5675
      %v5708 = vmul.f32 %v5517, %v5676
      %v5709 = vmul.f32 %v5519, %v5677
      %v5710 = vmul.f32 %v5521, %v5678
      %v5711 = vmul.f32 %v5523, %v5679
      %v5712 = vmul.f32 %v5525, %v5680
      %v5713 = vmul.f32 %v5527, %v5681
      %v5714 = vmul.f32 %v5529, %v5682
      %v5715 = vmul.f32 %v5531, %v5683
      %v5716 = vmul.f32 %v5533, %v5684
      %v5717 = vmul.f32 %v5535, %v5685
      %v5718 = vmul.f32 %v5537, %v5686
      %v5719 = vmul.f32 %v5539, %v5687
      %v5720 = vmul.f32 %v5541, %v5688
      %v5721 = vmul.f32 %v5543, %v5689
      %v5722 = vmul.f32 %v5545, %v5690
      %v5723 = vmul.f32 %v5547, %v5691
      %v5724 = vmul.f32 %v5549, %v5692
      %v5725 = vmul.f32 %v5551, %v5693
      %v5726 = vmul.f32 %v5553, %v5694
      %v5727 = vmul.f32 %v5555, %v5695
      %v5728 = vmul.f32 %v5557, %v5696
      %v5729 = vmul.f32 %v5559, %v5697
      %v5730 = vmul.f32 %v5561, %v5698
      %v5731 = vmul.f32 %v5563, %v5699
      %v5732 = vmul.f32 %v5565, %v5700
      %v5733 = vmul.f32 %v5567, %v5701
      %v5734 = vmul.f32 %v5569, %v5702
      %v5735 = vmul.f32 %v5571, %v5703
      %v5736 = vmul.f32 %v5573, %v5704
      %v5737 = vmul.f32 %v5575, %v5705
      %v5738 = vmul.f32 %v5577, %v5706
      %v5739 = vmul.f32 %v5579, %v5707
      %5740 = vrot.lane.b32.xlu0 %v482, 112
      %v5741 = vpop.permute.xlu0 %5740
      %v5744 = vsel %vm2443, %v5708, 0
      %5746 = vmatpush.msra.mxu0 0.0
      %5747 = vmatpush.msra.mxu0 0.0
      %5748 = vmatpush.msra.mxu0 0.0
      %5749 = vmatpush.msra.mxu0 0.0
      %5750 = vmatpush.msra.mxu0 0.0
      %5751 = vmatpush.msra.mxu0 0.0
      %5752 = vmatpush.msra.mxu0 0.0
      %5753 = vmatpush.msra.mxu0 0.0
      %5754 = vmatpush.msra.mxu0 0.0
      %5755 = vmatpush.msra.mxu0 0.0
      %5756 = vmatpush.msra.mxu0 0.0
      %5757 = vmatpush.msra.mxu0 0.0
      %5758 = vmatpush.msra.mxu0 0.0
      %5759 = vmatpush.msra.mxu0 0.0
      %5760 = vmatpush.msra.mxu0 0.0
      %5761 = vmatpush.msra.mxu0 %v5741
      %5762 = vmatmul.f32.gmra.mxu0 %v5744
      %v5763 = vpop.f32.mrf.mxu0
      %v5764 = vadd.f32 0.0, %v5763
      %5765 = vdwg.mxu0
      %5766 = vrot.lane.b32.xlu0 %v485, 112
      %v5767 = vpop.permute.xlu0 %5766
      %v5770 = vsel %vm2443, %v5709, 0
      %5772 = vmatpush.msra.mxu0 0.0
      %5773 = vmatpush.msra.mxu0 0.0
      %5774 = vmatpush.msra.mxu0 0.0
      %5775 = vmatpush.msra.mxu0 0.0
      %5776 = vmatpush.msra.mxu0 0.0
      %5777 = vmatpush.msra.mxu0 0.0
      %5778 = vmatpush.msra.mxu0 0.0
      %5779 = vmatpush.msra.mxu0 0.0
      %5780 = vmatpush.msra.mxu0 0.0
      %5781 = vmatpush.msra.mxu0 0.0
      %5782 = vmatpush.msra.mxu0 0.0
      %5783 = vmatpush.msra.mxu0 0.0
      %5784 = vmatpush.msra.mxu0 0.0
      %5785 = vmatpush.msra.mxu0 0.0
      %5786 = vmatpush.msra.mxu0 0.0
      %5787 = vmatpush.msra.mxu0 %v5767
      %5788 = vmatmul.f32.gmra.mxu0 %v5770
      %v5789 = vpop.f32.mrf.mxu0
      %v5790 = vadd.f32 0.0, %v5789
      %5791 = vdwg.mxu0
      %5792 = vrot.lane.b32.xlu0 %v488, 112
      %v5793 = vpop.permute.xlu0 %5792
      %v5796 = vsel %vm2443, %v5710, 0
      %5798 = vmatpush.msra.mxu0 0.0
      %5799 = vmatpush.msra.mxu0 0.0
      %5800 = vmatpush.msra.mxu0 0.0
      %5801 = vmatpush.msra.mxu0 0.0
      %5802 = vmatpush.msra.mxu0 0.0
      %5803 = vmatpush.msra.mxu0 0.0
      %5804 = vmatpush.msra.mxu0 0.0
      %5805 = vmatpush.msra.mxu0 0.0
      %5806 = vmatpush.msra.mxu0 0.0
      %5807 = vmatpush.msra.mxu0 0.0
      %5808 = vmatpush.msra.mxu0 0.0
      %5809 = vmatpush.msra.mxu0 0.0
      %5810 = vmatpush.msra.mxu0 0.0
      %5811 = vmatpush.msra.mxu0 0.0
      %5812 = vmatpush.msra.mxu0 0.0
      %5813 = vmatpush.msra.mxu0 %v5793
      %5814 = vmatmul.f32.gmra.mxu0 %v5796
      %v5815 = vpop.f32.mrf.mxu0
      %v5816 = vadd.f32 0.0, %v5815
      %5817 = vdwg.mxu0
      %5818 = vrot.lane.b32.xlu0 %v491, 112
      %v5819 = vpop.permute.xlu0 %5818
      %v5822 = vsel %vm2443, %v5711, 0
      %5824 = vmatpush.msra.mxu0 0.0
      %5825 = vmatpush.msra.mxu0 0.0
      %5826 = vmatpush.msra.mxu0 0.0
      %5827 = vmatpush.msra.mxu0 0.0
      %5828 = vmatpush.msra.mxu0 0.0
      %5829 = vmatpush.msra.mxu0 0.0
      %5830 = vmatpush.msra.mxu0 0.0
      %5831 = vmatpush.msra.mxu0 0.0
      %5832 = vmatpush.msra.mxu0 0.0
      %5833 = vmatpush.msra.mxu0 0.0
      %5834 = vmatpush.msra.mxu0 0.0
      %5835 = vmatpush.msra.mxu0 0.0
      %5836 = vmatpush.msra.mxu0 0.0
      %5837 = vmatpush.msra.mxu0 0.0
      %5838 = vmatpush.msra.mxu0 0.0
      %5839 = vmatpush.msra.mxu0 %v5819
      %5840 = vmatmul.f32.gmra.mxu0 %v5822
      %v5841 = vpop.f32.mrf.mxu0
      %v5842 = vadd.f32 0.0, %v5841
      %5843 = vdwg.mxu0
      %5844 = vrot.lane.b32.xlu0 %v494, 112
      %v5845 = vpop.permute.xlu0 %5844
      %v5848 = vsel %vm2443, %v5712, 0
      %5850 = vmatpush.msra.mxu0 0.0
      %5851 = vmatpush.msra.mxu0 0.0
      %5852 = vmatpush.msra.mxu0 0.0
      %5853 = vmatpush.msra.mxu0 0.0
      %5854 = vmatpush.msra.mxu0 0.0
      %5855 = vmatpush.msra.mxu0 0.0
      %5856 = vmatpush.msra.mxu0 0.0
      %5857 = vmatpush.msra.mxu0 0.0
      %5858 = vmatpush.msra.mxu0 0.0
      %5859 = vmatpush.msra.mxu0 0.0
      %5860 = vmatpush.msra.mxu0 0.0
      %5861 = vmatpush.msra.mxu0 0.0
      %5862 = vmatpush.msra.mxu0 0.0
      %5863 = vmatpush.msra.mxu0 0.0
      %5864 = vmatpush.msra.mxu0 0.0
      %5865 = vmatpush.msra.mxu0 %v5845
      %5866 = vmatmul.f32.gmra.mxu0 %v5848
      %v5867 = vpop.f32.mrf.mxu0
      %v5868 = vadd.f32 0.0, %v5867
      %5869 = vdwg.mxu0
      %5870 = vrot.lane.b32.xlu0 %v497, 112
      %v5871 = vpop.permute.xlu0 %5870
      %v5874 = vsel %vm2443, %v5713, 0
      %5876 = vmatpush.msra.mxu0 0.0
      %5877 = vmatpush.msra.mxu0 0.0
      %5878 = vmatpush.msra.mxu0 0.0
      %5879 = vmatpush.msra.mxu0 0.0
      %5880 = vmatpush.msra.mxu0 0.0
      %5881 = vmatpush.msra.mxu0 0.0
      %5882 = vmatpush.msra.mxu0 0.0
      %5883 = vmatpush.msra.mxu0 0.0
      %5884 = vmatpush.msra.mxu0 0.0
      %5885 = vmatpush.msra.mxu0 0.0
      %5886 = vmatpush.msra.mxu0 0.0
      %5887 = vmatpush.msra.mxu0 0.0
      %5888 = vmatpush.msra.mxu0 0.0
      %5889 = vmatpush.msra.mxu0 0.0
      %5890 = vmatpush.msra.mxu0 0.0
      %5891 = vmatpush.msra.mxu0 %v5871
      %5892 = vmatmul.f32.gmra.mxu0 %v5874
      %v5893 = vpop.f32.mrf.mxu0
      %v5894 = vadd.f32 0.0, %v5893
      %5895 = vdwg.mxu0
      %5896 = vrot.lane.b32.xlu0 %v500, 112
      %v5897 = vpop.permute.xlu0 %5896
      %v5900 = vsel %vm2443, %v5714, 0
      %5902 = vmatpush.msra.mxu0 0.0
      %5903 = vmatpush.msra.mxu0 0.0
      %5904 = vmatpush.msra.mxu0 0.0
      %5905 = vmatpush.msra.mxu0 0.0
      %5906 = vmatpush.msra.mxu0 0.0
      %5907 = vmatpush.msra.mxu0 0.0
      %5908 = vmatpush.msra.mxu0 0.0
      %5909 = vmatpush.msra.mxu0 0.0
      %5910 = vmatpush.msra.mxu0 0.0
      %5911 = vmatpush.msra.mxu0 0.0
      %5912 = vmatpush.msra.mxu0 0.0
      %5913 = vmatpush.msra.mxu0 0.0
      %5914 = vmatpush.msra.mxu0 0.0
      %5915 = vmatpush.msra.mxu0 0.0
      %5916 = vmatpush.msra.mxu0 0.0
      %5917 = vmatpush.msra.mxu0 %v5897
      %5918 = vmatmul.f32.gmra.mxu0 %v5900
      %v5919 = vpop.f32.mrf.mxu0
      %v5920 = vadd.f32 0.0, %v5919
      %5921 = vdwg.mxu0
      %5922 = vrot.lane.b32.xlu0 %v503, 112
      %v5923 = vpop.permute.xlu0 %5922
      %v5926 = vsel %vm2443, %v5715, 0
      %5928 = vmatpush.msra.mxu0 0.0
      %5929 = vmatpush.msra.mxu0 0.0
      %5930 = vmatpush.msra.mxu0 0.0
      %5931 = vmatpush.msra.mxu0 0.0
      %5932 = vmatpush.msra.mxu0 0.0
      %5933 = vmatpush.msra.mxu0 0.0
      %5934 = vmatpush.msra.mxu0 0.0
      %5935 = vmatpush.msra.mxu0 0.0
      %5936 = vmatpush.msra.mxu0 0.0
      %5937 = vmatpush.msra.mxu0 0.0
      %5938 = vmatpush.msra.mxu0 0.0
      %5939 = vmatpush.msra.mxu0 0.0
      %5940 = vmatpush.msra.mxu0 0.0
      %5941 = vmatpush.msra.mxu0 0.0
      %5942 = vmatpush.msra.mxu0 0.0
      %5943 = vmatpush.msra.mxu0 %v5923
      %5944 = vmatmul.f32.gmra.mxu0 %v5926
      %v5945 = vpop.f32.mrf.mxu0
      %v5946 = vadd.f32 0.0, %v5945
      %5947 = vdwg.mxu0
      %5948 = vrot.lane.b32.xlu0 %v506, 112
      %v5949 = vpop.permute.xlu0 %5948
      %v5952 = vsel %vm2443, %v5716, 0
      %5954 = vmatpush.msra.mxu0 0.0
      %5955 = vmatpush.msra.mxu0 0.0
      %5956 = vmatpush.msra.mxu0 0.0
      %5957 = vmatpush.msra.mxu0 0.0
      %5958 = vmatpush.msra.mxu0 0.0
      %5959 = vmatpush.msra.mxu0 0.0
      %5960 = vmatpush.msra.mxu0 0.0
      %5961 = vmatpush.msra.mxu0 0.0
      %5962 = vmatpush.msra.mxu0 0.0
      %5963 = vmatpush.msra.mxu0 0.0
      %5964 = vmatpush.msra.mxu0 0.0
      %5965 = vmatpush.msra.mxu0 0.0
      %5966 = vmatpush.msra.mxu0 0.0
      %5967 = vmatpush.msra.mxu0 0.0
      %5968 = vmatpush.msra.mxu0 0.0
      %5969 = vmatpush.msra.mxu0 %v5949
      %5970 = vmatmul.f32.gmra.mxu0 %v5952
      %v5971 = vpop.f32.mrf.mxu0
      %v5972 = vadd.f32 0.0, %v5971
      %5973 = vdwg.mxu0
      %5974 = vrot.lane.b32.xlu0 %v509, 112
      %v5975 = vpop.permute.xlu0 %5974
      %v5978 = vsel %vm2443, %v5717, 0
      %5980 = vmatpush.msra.mxu0 0.0
      %5981 = vmatpush.msra.mxu0 0.0
      %5982 = vmatpush.msra.mxu0 0.0
      %5983 = vmatpush.msra.mxu0 0.0
      %5984 = vmatpush.msra.mxu0 0.0
      %5985 = vmatpush.msra.mxu0 0.0
      %5986 = vmatpush.msra.mxu0 0.0
      %5987 = vmatpush.msra.mxu0 0.0
      %5988 = vmatpush.msra.mxu0 0.0
      %5989 = vmatpush.msra.mxu0 0.0
      %5990 = vmatpush.msra.mxu0 0.0
      %5991 = vmatpush.msra.mxu0 0.0
      %5992 = vmatpush.msra.mxu0 0.0
      %5993 = vmatpush.msra.mxu0 0.0
      %5994 = vmatpush.msra.mxu0 0.0
      %5995 = vmatpush.msra.mxu0 %v5975
      %5996 = vmatmul.f32.gmra.mxu0 %v5978
      %v5997 = vpop.f32.mrf.mxu0
      %v5998 = vadd.f32 0.0, %v5997
      %5999 = vdwg.mxu0
      %6000 = vrot.lane.b32.xlu0 %v512, 112
      %v6001 = vpop.permute.xlu0 %6000
      %v6004 = vsel %vm2443, %v5718, 0
      %6006 = vmatpush.msra.mxu0 0.0
      %6007 = vmatpush.msra.mxu0 0.0
      %6008 = vmatpush.msra.mxu0 0.0
      %6009 = vmatpush.msra.mxu0 0.0
      %6010 = vmatpush.msra.mxu0 0.0
      %6011 = vmatpush.msra.mxu0 0.0
      %6012 = vmatpush.msra.mxu0 0.0
      %6013 = vmatpush.msra.mxu0 0.0
      %6014 = vmatpush.msra.mxu0 0.0
      %6015 = vmatpush.msra.mxu0 0.0
      %6016 = vmatpush.msra.mxu0 0.0
      %6017 = vmatpush.msra.mxu0 0.0
      %6018 = vmatpush.msra.mxu0 0.0
      %6019 = vmatpush.msra.mxu0 0.0
      %6020 = vmatpush.msra.mxu0 0.0
      %6021 = vmatpush.msra.mxu0 %v6001
      %6022 = vmatmul.f32.gmra.mxu0 %v6004
      %v6023 = vpop.f32.mrf.mxu0
      %v6024 = vadd.f32 0.0, %v6023
      %6025 = vdwg.mxu0
      %6026 = vrot.lane.b32.xlu0 %v515, 112
      %v6027 = vpop.permute.xlu0 %6026
      %v6030 = vsel %vm2443, %v5719, 0
      %6032 = vmatpush.msra.mxu0 0.0
      %6033 = vmatpush.msra.mxu0 0.0
      %6034 = vmatpush.msra.mxu0 0.0
      %6035 = vmatpush.msra.mxu0 0.0
      %6036 = vmatpush.msra.mxu0 0.0
      %6037 = vmatpush.msra.mxu0 0.0
      %6038 = vmatpush.msra.mxu0 0.0
      %6039 = vmatpush.msra.mxu0 0.0
      %6040 = vmatpush.msra.mxu0 0.0
      %6041 = vmatpush.msra.mxu0 0.0
      %6042 = vmatpush.msra.mxu0 0.0
      %6043 = vmatpush.msra.mxu0 0.0
      %6044 = vmatpush.msra.mxu0 0.0
      %6045 = vmatpush.msra.mxu0 0.0
      %6046 = vmatpush.msra.mxu0 0.0
      %6047 = vmatpush.msra.mxu0 %v6027
      %6048 = vmatmul.f32.gmra.mxu0 %v6030
      %v6049 = vpop.f32.mrf.mxu0
      %v6050 = vadd.f32 0.0, %v6049
      %6051 = vdwg.mxu0
      %6052 = vrot.lane.b32.xlu0 %v518, 112
      %v6053 = vpop.permute.xlu0 %6052
      %v6056 = vsel %vm2443, %v5720, 0
      %6058 = vmatpush.msra.mxu0 0.0
      %6059 = vmatpush.msra.mxu0 0.0
      %6060 = vmatpush.msra.mxu0 0.0
      %6061 = vmatpush.msra.mxu0 0.0
      %6062 = vmatpush.msra.mxu0 0.0
      %6063 = vmatpush.msra.mxu0 0.0
      %6064 = vmatpush.msra.mxu0 0.0
      %6065 = vmatpush.msra.mxu0 0.0
      %6066 = vmatpush.msra.mxu0 0.0
      %6067 = vmatpush.msra.mxu0 0.0
      %6068 = vmatpush.msra.mxu0 0.0
      %6069 = vmatpush.msra.mxu0 0.0
      %6070 = vmatpush.msra.mxu0 0.0
      %6071 = vmatpush.msra.mxu0 0.0
      %6072 = vmatpush.msra.mxu0 0.0
      %6073 = vmatpush.msra.mxu0 %v6053
      %6074 = vmatmul.f32.gmra.mxu0 %v6056
      %v6075 = vpop.f32.mrf.mxu0
      %v6076 = vadd.f32 0.0, %v6075
      %6077 = vdwg.mxu0
      %6078 = vrot.lane.b32.xlu0 %v521, 112
      %v6079 = vpop.permute.xlu0 %6078
      %v6082 = vsel %vm2443, %v5721, 0
      %6084 = vmatpush.msra.mxu0 0.0
      %6085 = vmatpush.msra.mxu0 0.0
      %6086 = vmatpush.msra.mxu0 0.0
      %6087 = vmatpush.msra.mxu0 0.0
      %6088 = vmatpush.msra.mxu0 0.0
      %6089 = vmatpush.msra.mxu0 0.0
      %6090 = vmatpush.msra.mxu0 0.0
      %6091 = vmatpush.msra.mxu0 0.0
      %6092 = vmatpush.msra.mxu0 0.0
      %6093 = vmatpush.msra.mxu0 0.0
      %6094 = vmatpush.msra.mxu0 0.0
      %6095 = vmatpush.msra.mxu0 0.0
      %6096 = vmatpush.msra.mxu0 0.0
      %6097 = vmatpush.msra.mxu0 0.0
      %6098 = vmatpush.msra.mxu0 0.0
      %6099 = vmatpush.msra.mxu0 %v6079
      %6100 = vmatmul.f32.gmra.mxu0 %v6082
      %v6101 = vpop.f32.mrf.mxu0
      %v6102 = vadd.f32 0.0, %v6101
      %6103 = vdwg.mxu0
      %6104 = vrot.lane.b32.xlu0 %v524, 112
      %v6105 = vpop.permute.xlu0 %6104
      %v6108 = vsel %vm2443, %v5722, 0
      %6110 = vmatpush.msra.mxu0 0.0
      %6111 = vmatpush.msra.mxu0 0.0
      %6112 = vmatpush.msra.mxu0 0.0
      %6113 = vmatpush.msra.mxu0 0.0
      %6114 = vmatpush.msra.mxu0 0.0
      %6115 = vmatpush.msra.mxu0 0.0
      %6116 = vmatpush.msra.mxu0 0.0
      %6117 = vmatpush.msra.mxu0 0.0
      %6118 = vmatpush.msra.mxu0 0.0
      %6119 = vmatpush.msra.mxu0 0.0
      %6120 = vmatpush.msra.mxu0 0.0
      %6121 = vmatpush.msra.mxu0 0.0
      %6122 = vmatpush.msra.mxu0 0.0
      %6123 = vmatpush.msra.mxu0 0.0
      %6124 = vmatpush.msra.mxu0 0.0
      %6125 = vmatpush.msra.mxu0 %v6105
      %6126 = vmatmul.f32.gmra.mxu0 %v6108
      %v6127 = vpop.f32.mrf.mxu0
      %v6128 = vadd.f32 0.0, %v6127
      %6129 = vdwg.mxu0
      %6130 = vrot.lane.b32.xlu0 %v527, 112
      %v6131 = vpop.permute.xlu0 %6130
      %v6134 = vsel %vm2443, %v5723, 0
      %6136 = vmatpush.msra.mxu0 0.0
      %6137 = vmatpush.msra.mxu0 0.0
      %6138 = vmatpush.msra.mxu0 0.0
      %6139 = vmatpush.msra.mxu0 0.0
      %6140 = vmatpush.msra.mxu0 0.0
      %6141 = vmatpush.msra.mxu0 0.0
      %6142 = vmatpush.msra.mxu0 0.0
      %6143 = vmatpush.msra.mxu0 0.0
      %6144 = vmatpush.msra.mxu0 0.0
      %6145 = vmatpush.msra.mxu0 0.0
      %6146 = vmatpush.msra.mxu0 0.0
      %6147 = vmatpush.msra.mxu0 0.0
      %6148 = vmatpush.msra.mxu0 0.0
      %6149 = vmatpush.msra.mxu0 0.0
      %6150 = vmatpush.msra.mxu0 0.0
      %6151 = vmatpush.msra.mxu0 %v6131
      %6152 = vmatmul.f32.gmra.mxu0 %v6134
      %v6153 = vpop.f32.mrf.mxu0
      %v6154 = vadd.f32 0.0, %v6153
      %6155 = vdwg.mxu0
      %6156 = vrot.lane.b32.xlu0 %v530, 112
      %v6157 = vpop.permute.xlu0 %6156
      %v6160 = vsel %vm2443, %v5724, 0
      %6162 = vmatpush.msra.mxu0 0.0
      %6163 = vmatpush.msra.mxu0 0.0
      %6164 = vmatpush.msra.mxu0 0.0
      %6165 = vmatpush.msra.mxu0 0.0
      %6166 = vmatpush.msra.mxu0 0.0
      %6167 = vmatpush.msra.mxu0 0.0
      %6168 = vmatpush.msra.mxu0 0.0
      %6169 = vmatpush.msra.mxu0 0.0
      %6170 = vmatpush.msra.mxu0 0.0
      %6171 = vmatpush.msra.mxu0 0.0
      %6172 = vmatpush.msra.mxu0 0.0
      %6173 = vmatpush.msra.mxu0 0.0
      %6174 = vmatpush.msra.mxu0 0.0
      %6175 = vmatpush.msra.mxu0 0.0
      %6176 = vmatpush.msra.mxu0 0.0
      %6177 = vmatpush.msra.mxu0 %v6157
      %6178 = vmatmul.f32.gmra.mxu0 %v6160
      %v6179 = vpop.f32.mrf.mxu0
      %v6180 = vadd.f32 0.0, %v6179
      %6181 = vdwg.mxu0
      %6182 = vrot.lane.b32.xlu0 %v533, 112
      %v6183 = vpop.permute.xlu0 %6182
      %v6186 = vsel %vm2443, %v5725, 0
      %6188 = vmatpush.msra.mxu0 0.0
      %6189 = vmatpush.msra.mxu0 0.0
      %6190 = vmatpush.msra.mxu0 0.0
      %6191 = vmatpush.msra.mxu0 0.0
      %6192 = vmatpush.msra.mxu0 0.0
      %6193 = vmatpush.msra.mxu0 0.0
      %6194 = vmatpush.msra.mxu0 0.0
      %6195 = vmatpush.msra.mxu0 0.0
      %6196 = vmatpush.msra.mxu0 0.0
      %6197 = vmatpush.msra.mxu0 0.0
      %6198 = vmatpush.msra.mxu0 0.0
      %6199 = vmatpush.msra.mxu0 0.0
      %6200 = vmatpush.msra.mxu0 0.0
      %6201 = vmatpush.msra.mxu0 0.0
      %6202 = vmatpush.msra.mxu0 0.0
      %6203 = vmatpush.msra.mxu0 %v6183
      %6204 = vmatmul.f32.gmra.mxu0 %v6186
      %v6205 = vpop.f32.mrf.mxu0
      %v6206 = vadd.f32 0.0, %v6205
      %6207 = vdwg.mxu0
      %6208 = vrot.lane.b32.xlu0 %v536, 112
      %v6209 = vpop.permute.xlu0 %6208
      %v6212 = vsel %vm2443, %v5726, 0
      %6214 = vmatpush.msra.mxu0 0.0
      %6215 = vmatpush.msra.mxu0 0.0
      %6216 = vmatpush.msra.mxu0 0.0
      %6217 = vmatpush.msra.mxu0 0.0
      %6218 = vmatpush.msra.mxu0 0.0
      %6219 = vmatpush.msra.mxu0 0.0
      %6220 = vmatpush.msra.mxu0 0.0
      %6221 = vmatpush.msra.mxu0 0.0
      %6222 = vmatpush.msra.mxu0 0.0
      %6223 = vmatpush.msra.mxu0 0.0
      %6224 = vmatpush.msra.mxu0 0.0
      %6225 = vmatpush.msra.mxu0 0.0
      %6226 = vmatpush.msra.mxu0 0.0
      %6227 = vmatpush.msra.mxu0 0.0
      %6228 = vmatpush.msra.mxu0 0.0
      %6229 = vmatpush.msra.mxu0 %v6209
      %6230 = vmatmul.f32.gmra.mxu0 %v6212
      %v6231 = vpop.f32.mrf.mxu0
      %v6232 = vadd.f32 0.0, %v6231
      %6233 = vdwg.mxu0
      %6234 = vrot.lane.b32.xlu0 %v539, 112
      %v6235 = vpop.permute.xlu0 %6234
      %v6238 = vsel %vm2443, %v5727, 0
      %6240 = vmatpush.msra.mxu0 0.0
      %6241 = vmatpush.msra.mxu0 0.0
      %6242 = vmatpush.msra.mxu0 0.0
      %6243 = vmatpush.msra.mxu0 0.0
      %6244 = vmatpush.msra.mxu0 0.0
      %6245 = vmatpush.msra.mxu0 0.0
      %6246 = vmatpush.msra.mxu0 0.0
      %6247 = vmatpush.msra.mxu0 0.0
      %6248 = vmatpush.msra.mxu0 0.0
      %6249 = vmatpush.msra.mxu0 0.0
      %6250 = vmatpush.msra.mxu0 0.0
      %6251 = vmatpush.msra.mxu0 0.0
      %6252 = vmatpush.msra.mxu0 0.0
      %6253 = vmatpush.msra.mxu0 0.0
      %6254 = vmatpush.msra.mxu0 0.0
      %6255 = vmatpush.msra.mxu0 %v6235
      %6256 = vmatmul.f32.gmra.mxu0 %v6238
      %v6257 = vpop.f32.mrf.mxu0
      %v6258 = vadd.f32 0.0, %v6257
      %6259 = vdwg.mxu0
      %6260 = vrot.lane.b32.xlu0 %v542, 112
      %v6261 = vpop.permute.xlu0 %6260
      %v6264 = vsel %vm2443, %v5728, 0
      %6266 = vmatpush.msra.mxu0 0.0
      %6267 = vmatpush.msra.mxu0 0.0
      %6268 = vmatpush.msra.mxu0 0.0
      %6269 = vmatpush.msra.mxu0 0.0
      %6270 = vmatpush.msra.mxu0 0.0
      %6271 = vmatpush.msra.mxu0 0.0
      %6272 = vmatpush.msra.mxu0 0.0
      %6273 = vmatpush.msra.mxu0 0.0
      %6274 = vmatpush.msra.mxu0 0.0
      %6275 = vmatpush.msra.mxu0 0.0
      %6276 = vmatpush.msra.mxu0 0.0
      %6277 = vmatpush.msra.mxu0 0.0
      %6278 = vmatpush.msra.mxu0 0.0
      %6279 = vmatpush.msra.mxu0 0.0
      %6280 = vmatpush.msra.mxu0 0.0
      %6281 = vmatpush.msra.mxu0 %v6261
      %6282 = vmatmul.f32.gmra.mxu0 %v6264
      %v6283 = vpop.f32.mrf.mxu0
      %v6284 = vadd.f32 0.0, %v6283
      %6285 = vdwg.mxu0
      %6286 = vrot.lane.b32.xlu0 %v545, 112
      %v6287 = vpop.permute.xlu0 %6286
      %v6290 = vsel %vm2443, %v5729, 0
      %6292 = vmatpush.msra.mxu0 0.0
      %6293 = vmatpush.msra.mxu0 0.0
      %6294 = vmatpush.msra.mxu0 0.0
      %6295 = vmatpush.msra.mxu0 0.0
      %6296 = vmatpush.msra.mxu0 0.0
      %6297 = vmatpush.msra.mxu0 0.0
      %6298 = vmatpush.msra.mxu0 0.0
      %6299 = vmatpush.msra.mxu0 0.0
      %6300 = vmatpush.msra.mxu0 0.0
      %6301 = vmatpush.msra.mxu0 0.0
      %6302 = vmatpush.msra.mxu0 0.0
      %6303 = vmatpush.msra.mxu0 0.0
      %6304 = vmatpush.msra.mxu0 0.0
      %6305 = vmatpush.msra.mxu0 0.0
      %6306 = vmatpush.msra.mxu0 0.0
      %6307 = vmatpush.msra.mxu0 %v6287
      %6308 = vmatmul.f32.gmra.mxu0 %v6290
      %v6309 = vpop.f32.mrf.mxu0
      %v6310 = vadd.f32 0.0, %v6309
      %6311 = vdwg.mxu0
      %6312 = vrot.lane.b32.xlu0 %v548, 112
      %v6313 = vpop.permute.xlu0 %6312
      %v6316 = vsel %vm2443, %v5730, 0
      %6318 = vmatpush.msra.mxu0 0.0
      %6319 = vmatpush.msra.mxu0 0.0
      %6320 = vmatpush.msra.mxu0 0.0
      %6321 = vmatpush.msra.mxu0 0.0
      %6322 = vmatpush.msra.mxu0 0.0
      %6323 = vmatpush.msra.mxu0 0.0
      %6324 = vmatpush.msra.mxu0 0.0
      %6325 = vmatpush.msra.mxu0 0.0
      %6326 = vmatpush.msra.mxu0 0.0
      %6327 = vmatpush.msra.mxu0 0.0
      %6328 = vmatpush.msra.mxu0 0.0
      %6329 = vmatpush.msra.mxu0 0.0
      %6330 = vmatpush.msra.mxu0 0.0
      %6331 = vmatpush.msra.mxu0 0.0
      %6332 = vmatpush.msra.mxu0 0.0
      %6333 = vmatpush.msra.mxu0 %v6313
      %6334 = vmatmul.f32.gmra.mxu0 %v6316
      %v6335 = vpop.f32.mrf.mxu0
      %v6336 = vadd.f32 0.0, %v6335
      %6337 = vdwg.mxu0
      %6338 = vrot.lane.b32.xlu0 %v551, 112
      %v6339 = vpop.permute.xlu0 %6338
      %v6342 = vsel %vm2443, %v5731, 0
      %6344 = vmatpush.msra.mxu0 0.0
      %6345 = vmatpush.msra.mxu0 0.0
      %6346 = vmatpush.msra.mxu0 0.0
      %6347 = vmatpush.msra.mxu0 0.0
      %6348 = vmatpush.msra.mxu0 0.0
      %6349 = vmatpush.msra.mxu0 0.0
      %6350 = vmatpush.msra.mxu0 0.0
      %6351 = vmatpush.msra.mxu0 0.0
      %6352 = vmatpush.msra.mxu0 0.0
      %6353 = vmatpush.msra.mxu0 0.0
      %6354 = vmatpush.msra.mxu0 0.0
      %6355 = vmatpush.msra.mxu0 0.0
      %6356 = vmatpush.msra.mxu0 0.0
      %6357 = vmatpush.msra.mxu0 0.0
      %6358 = vmatpush.msra.mxu0 0.0
      %6359 = vmatpush.msra.mxu0 %v6339
      %6360 = vmatmul.f32.gmra.mxu0 %v6342
      %v6361 = vpop.f32.mrf.mxu0
      %v6362 = vadd.f32 0.0, %v6361
      %6363 = vdwg.mxu0
      %6364 = vrot.lane.b32.xlu0 %v554, 112
      %v6365 = vpop.permute.xlu0 %6364
      %v6368 = vsel %vm2443, %v5732, 0
      %6370 = vmatpush.msra.mxu0 0.0
      %6371 = vmatpush.msra.mxu0 0.0
      %6372 = vmatpush.msra.mxu0 0.0
      %6373 = vmatpush.msra.mxu0 0.0
      %6374 = vmatpush.msra.mxu0 0.0
      %6375 = vmatpush.msra.mxu0 0.0
      %6376 = vmatpush.msra.mxu0 0.0
      %6377 = vmatpush.msra.mxu0 0.0
      %6378 = vmatpush.msra.mxu0 0.0
      %6379 = vmatpush.msra.mxu0 0.0
      %6380 = vmatpush.msra.mxu0 0.0
      %6381 = vmatpush.msra.mxu0 0.0
      %6382 = vmatpush.msra.mxu0 0.0
      %6383 = vmatpush.msra.mxu0 0.0
      %6384 = vmatpush.msra.mxu0 0.0
      %6385 = vmatpush.msra.mxu0 %v6365
      %6386 = vmatmul.f32.gmra.mxu0 %v6368
      %v6387 = vpop.f32.mrf.mxu0
      %v6388 = vadd.f32 0.0, %v6387
      %6389 = vdwg.mxu0
      %6390 = vrot.lane.b32.xlu0 %v557, 112
      %v6391 = vpop.permute.xlu0 %6390
      %v6394 = vsel %vm2443, %v5733, 0
      %6396 = vmatpush.msra.mxu0 0.0
      %6397 = vmatpush.msra.mxu0 0.0
      %6398 = vmatpush.msra.mxu0 0.0
      %6399 = vmatpush.msra.mxu0 0.0
      %6400 = vmatpush.msra.mxu0 0.0
      %6401 = vmatpush.msra.mxu0 0.0
      %6402 = vmatpush.msra.mxu0 0.0
      %6403 = vmatpush.msra.mxu0 0.0
      %6404 = vmatpush.msra.mxu0 0.0
      %6405 = vmatpush.msra.mxu0 0.0
      %6406 = vmatpush.msra.mxu0 0.0
      %6407 = vmatpush.msra.mxu0 0.0
      %6408 = vmatpush.msra.mxu0 0.0
      %6409 = vmatpush.msra.mxu0 0.0
      %6410 = vmatpush.msra.mxu0 0.0
      %6411 = vmatpush.msra.mxu0 %v6391
      %6412 = vmatmul.f32.gmra.mxu0 %v6394
      %v6413 = vpop.f32.mrf.mxu0
      %v6414 = vadd.f32 0.0, %v6413
      %6415 = vdwg.mxu0
      %6416 = vrot.lane.b32.xlu0 %v560, 112
      %v6417 = vpop.permute.xlu0 %6416
      %v6420 = vsel %vm2443, %v5734, 0
      %6422 = vmatpush.msra.mxu0 0.0
      %6423 = vmatpush.msra.mxu0 0.0
      %6424 = vmatpush.msra.mxu0 0.0
      %6425 = vmatpush.msra.mxu0 0.0
      %6426 = vmatpush.msra.mxu0 0.0
      %6427 = vmatpush.msra.mxu0 0.0
      %6428 = vmatpush.msra.mxu0 0.0
      %6429 = vmatpush.msra.mxu0 0.0
      %6430 = vmatpush.msra.mxu0 0.0
      %6431 = vmatpush.msra.mxu0 0.0
      %6432 = vmatpush.msra.mxu0 0.0
      %6433 = vmatpush.msra.mxu0 0.0
      %6434 = vmatpush.msra.mxu0 0.0
      %6435 = vmatpush.msra.mxu0 0.0
      %6436 = vmatpush.msra.mxu0 0.0
      %6437 = vmatpush.msra.mxu0 %v6417
      %6438 = vmatmul.f32.gmra.mxu0 %v6420
      %v6439 = vpop.f32.mrf.mxu0
      %v6440 = vadd.f32 0.0, %v6439
      %6441 = vdwg.mxu0
      %6442 = vrot.lane.b32.xlu0 %v563, 112
      %v6443 = vpop.permute.xlu0 %6442
      %v6446 = vsel %vm2443, %v5735, 0
      %6448 = vmatpush.msra.mxu0 0.0
      %6449 = vmatpush.msra.mxu0 0.0
      %6450 = vmatpush.msra.mxu0 0.0
      %6451 = vmatpush.msra.mxu0 0.0
      %6452 = vmatpush.msra.mxu0 0.0
      %6453 = vmatpush.msra.mxu0 0.0
      %6454 = vmatpush.msra.mxu0 0.0
      %6455 = vmatpush.msra.mxu0 0.0
      %6456 = vmatpush.msra.mxu0 0.0
      %6457 = vmatpush.msra.mxu0 0.0
      %6458 = vmatpush.msra.mxu0 0.0
      %6459 = vmatpush.msra.mxu0 0.0
      %6460 = vmatpush.msra.mxu0 0.0
      %6461 = vmatpush.msra.mxu0 0.0
      %6462 = vmatpush.msra.mxu0 0.0
      %6463 = vmatpush.msra.mxu0 %v6443
      %6464 = vmatmul.f32.gmra.mxu0 %v6446
      %v6465 = vpop.f32.mrf.mxu0
      %v6466 = vadd.f32 0.0, %v6465
      %6467 = vdwg.mxu0
      %6468 = vrot.lane.b32.xlu0 %v566, 112
      %v6469 = vpop.permute.xlu0 %6468
      %v6472 = vsel %vm2443, %v5736, 0
      %6474 = vmatpush.msra.mxu0 0.0
      %6475 = vmatpush.msra.mxu0 0.0
      %6476 = vmatpush.msra.mxu0 0.0
      %6477 = vmatpush.msra.mxu0 0.0
      %6478 = vmatpush.msra.mxu0 0.0
      %6479 = vmatpush.msra.mxu0 0.0
      %6480 = vmatpush.msra.mxu0 0.0
      %6481 = vmatpush.msra.mxu0 0.0
      %6482 = vmatpush.msra.mxu0 0.0
      %6483 = vmatpush.msra.mxu0 0.0
      %6484 = vmatpush.msra.mxu0 0.0
      %6485 = vmatpush.msra.mxu0 0.0
      %6486 = vmatpush.msra.mxu0 0.0
      %6487 = vmatpush.msra.mxu0 0.0
      %6488 = vmatpush.msra.mxu0 0.0
      %6489 = vmatpush.msra.mxu0 %v6469
      %6490 = vmatmul.f32.gmra.mxu0 %v6472
      %v6491 = vpop.f32.mrf.mxu0
      %v6492 = vadd.f32 0.0, %v6491
      %6493 = vdwg.mxu0
      %6494 = vrot.lane.b32.xlu0 %v569, 112
      %v6495 = vpop.permute.xlu0 %6494
      %v6498 = vsel %vm2443, %v5737, 0
      %6500 = vmatpush.msra.mxu0 0.0
      %6501 = vmatpush.msra.mxu0 0.0
      %6502 = vmatpush.msra.mxu0 0.0
      %6503 = vmatpush.msra.mxu0 0.0
      %6504 = vmatpush.msra.mxu0 0.0
      %6505 = vmatpush.msra.mxu0 0.0
      %6506 = vmatpush.msra.mxu0 0.0
      %6507 = vmatpush.msra.mxu0 0.0
      %6508 = vmatpush.msra.mxu0 0.0
      %6509 = vmatpush.msra.mxu0 0.0
      %6510 = vmatpush.msra.mxu0 0.0
      %6511 = vmatpush.msra.mxu0 0.0
      %6512 = vmatpush.msra.mxu0 0.0
      %6513 = vmatpush.msra.mxu0 0.0
      %6514 = vmatpush.msra.mxu0 0.0
      %6515 = vmatpush.msra.mxu0 %v6495
      %6516 = vmatmul.f32.gmra.mxu0 %v6498
      %v6517 = vpop.f32.mrf.mxu0
      %v6518 = vadd.f32 0.0, %v6517
      %6519 = vdwg.mxu0
      %6520 = vrot.lane.b32.xlu0 %v572, 112
      %v6521 = vpop.permute.xlu0 %6520
      %v6524 = vsel %vm2443, %v5738, 0
      %6526 = vmatpush.msra.mxu0 0.0
      %6527 = vmatpush.msra.mxu0 0.0
      %6528 = vmatpush.msra.mxu0 0.0
      %6529 = vmatpush.msra.mxu0 0.0
      %6530 = vmatpush.msra.mxu0 0.0
      %6531 = vmatpush.msra.mxu0 0.0
      %6532 = vmatpush.msra.mxu0 0.0
      %6533 = vmatpush.msra.mxu0 0.0
      %6534 = vmatpush.msra.mxu0 0.0
      %6535 = vmatpush.msra.mxu0 0.0
      %6536 = vmatpush.msra.mxu0 0.0
      %6537 = vmatpush.msra.mxu0 0.0
      %6538 = vmatpush.msra.mxu0 0.0
      %6539 = vmatpush.msra.mxu0 0.0
      %6540 = vmatpush.msra.mxu0 0.0
      %6541 = vmatpush.msra.mxu0 %v6521
      %6542 = vmatmul.f32.gmra.mxu0 %v6524
      %v6543 = vpop.f32.mrf.mxu0
      %v6544 = vadd.f32 0.0, %v6543
      %6545 = vdwg.mxu0
      %6546 = vrot.lane.b32.xlu0 %v575, 112
      %v6547 = vpop.permute.xlu0 %6546
      %v6550 = vsel %vm2443, %v5739, 0
      %6552 = vmatpush.msra.mxu0 0.0
      %6553 = vmatpush.msra.mxu0 0.0
      %6554 = vmatpush.msra.mxu0 0.0
      %6555 = vmatpush.msra.mxu0 0.0
      %6556 = vmatpush.msra.mxu0 0.0
      %6557 = vmatpush.msra.mxu0 0.0
      %6558 = vmatpush.msra.mxu0 0.0
      %6559 = vmatpush.msra.mxu0 0.0
      %6560 = vmatpush.msra.mxu0 0.0
      %6561 = vmatpush.msra.mxu0 0.0
      %6562 = vmatpush.msra.mxu0 0.0
      %6563 = vmatpush.msra.mxu0 0.0
      %6564 = vmatpush.msra.mxu0 0.0
      %6565 = vmatpush.msra.mxu0 0.0
      %6566 = vmatpush.msra.mxu0 0.0
      %6567 = vmatpush.msra.mxu0 %v6547
      %6568 = vmatmul.f32.gmra.mxu0 %v6550
      %v6569 = vpop.f32.mrf.mxu0
      %v6570 = vadd.f32 0.0, %v6569
      %6571 = vdwg.mxu0
      %6572 = vset.pattern.permute.xlu0 3
      %6573 = vperm.xlu0 %6572, %v727
      %v6574 = vpop.permute.xlu0 %6573
      %6576 = vset.pattern.permute.xlu0 3
      %6577 = vperm.xlu0 %6576, %v730
      %v6578 = vpop.permute.xlu0 %6577
      %6580 = vset.pattern.permute.xlu0 3
      %6581 = vperm.xlu0 %6580, %v733
      %v6582 = vpop.permute.xlu0 %6581
      %6584 = vset.pattern.permute.xlu0 3
      %6585 = vperm.xlu0 %6584, %v736
      %v6586 = vpop.permute.xlu0 %6585
      %6588 = vset.pattern.permute.xlu0 3
      %6589 = vperm.xlu0 %6588, %v739
      %v6590 = vpop.permute.xlu0 %6589
      %6592 = vset.pattern.permute.xlu0 3
      %6593 = vperm.xlu0 %6592, %v742
      %v6594 = vpop.permute.xlu0 %6593
      %6596 = vset.pattern.permute.xlu0 3
      %6597 = vperm.xlu0 %6596, %v745
      %v6598 = vpop.permute.xlu0 %6597
      %6600 = vset.pattern.permute.xlu0 3
      %6601 = vperm.xlu0 %6600, %v748
      %v6602 = vpop.permute.xlu0 %6601
      %6604 = vset.pattern.permute.xlu0 3
      %6605 = vperm.xlu0 %6604, %v751
      %v6606 = vpop.permute.xlu0 %6605
      %6608 = vset.pattern.permute.xlu0 3
      %6609 = vperm.xlu0 %6608, %v754
      %v6610 = vpop.permute.xlu0 %6609
      %6612 = vset.pattern.permute.xlu0 3
      %6613 = vperm.xlu0 %6612, %v757
      %v6614 = vpop.permute.xlu0 %6613
      %6616 = vset.pattern.permute.xlu0 3
      %6617 = vperm.xlu0 %6616, %v760
      %v6618 = vpop.permute.xlu0 %6617
      %6620 = vset.pattern.permute.xlu0 3
      %6621 = vperm.xlu0 %6620, %v763
      %v6622 = vpop.permute.xlu0 %6621
      %6624 = vset.pattern.permute.xlu0 3
      %6625 = vperm.xlu0 %6624, %v766
      %v6626 = vpop.permute.xlu0 %6625
      %6628 = vset.pattern.permute.xlu0 3
      %6629 = vperm.xlu0 %6628, %v769
      %v6630 = vpop.permute.xlu0 %6629
      %6632 = vset.pattern.permute.xlu0 3
      %6633 = vperm.xlu0 %6632, %v772
      %v6634 = vpop.permute.xlu0 %6633
      %6636 = vset.pattern.permute.xlu0 3
      %6637 = vperm.xlu0 %6636, %v775
      %v6638 = vpop.permute.xlu0 %6637
      %6640 = vset.pattern.permute.xlu0 3
      %6641 = vperm.xlu0 %6640, %v778
      %v6642 = vpop.permute.xlu0 %6641
      %6644 = vset.pattern.permute.xlu0 3
      %6645 = vperm.xlu0 %6644, %v781
      %v6646 = vpop.permute.xlu0 %6645
      %6648 = vset.pattern.permute.xlu0 3
      %6649 = vperm.xlu0 %6648, %v784
      %v6650 = vpop.permute.xlu0 %6649
      %6652 = vset.pattern.permute.xlu0 3
      %6653 = vperm.xlu0 %6652, %v787
      %v6654 = vpop.permute.xlu0 %6653
      %6656 = vset.pattern.permute.xlu0 3
      %6657 = vperm.xlu0 %6656, %v790
      %v6658 = vpop.permute.xlu0 %6657
      %6660 = vset.pattern.permute.xlu0 3
      %6661 = vperm.xlu0 %6660, %v793
      %v6662 = vpop.permute.xlu0 %6661
      %6664 = vset.pattern.permute.xlu0 3
      %6665 = vperm.xlu0 %6664, %v796
      %v6666 = vpop.permute.xlu0 %6665
      %6668 = vset.pattern.permute.xlu0 3
      %6669 = vperm.xlu0 %6668, %v799
      %v6670 = vpop.permute.xlu0 %6669
      %6672 = vset.pattern.permute.xlu0 3
      %6673 = vperm.xlu0 %6672, %v802
      %v6674 = vpop.permute.xlu0 %6673
      %6676 = vset.pattern.permute.xlu0 3
      %6677 = vperm.xlu0 %6676, %v805
      %v6678 = vpop.permute.xlu0 %6677
      %6680 = vset.pattern.permute.xlu0 3
      %6681 = vperm.xlu0 %6680, %v808
      %v6682 = vpop.permute.xlu0 %6681
      %6684 = vset.pattern.permute.xlu0 3
      %6685 = vperm.xlu0 %6684, %v811
      %v6686 = vpop.permute.xlu0 %6685
      %6688 = vset.pattern.permute.xlu0 3
      %6689 = vperm.xlu0 %6688, %v814
      %v6690 = vpop.permute.xlu0 %6689
      %6692 = vset.pattern.permute.xlu0 3
      %6693 = vperm.xlu0 %6692, %v817
      %v6694 = vpop.permute.xlu0 %6693
      %6696 = vset.pattern.permute.xlu0 3
      %6697 = vperm.xlu0 %6696, %v820
      %v6698 = vpop.permute.xlu0 %6697
      %v6700 = vperm.slane %v955, 3
      %v6701 = vperm.slane %v987, 3
      %v6702 = vperm.slane %v1019, 3
      %v6703 = vperm.slane %v1051, 3
      %v6704 = vperm.slane %v1083, 3
      %v6705 = vperm.slane %v1115, 3
      %v6706 = vperm.slane %v1147, 3
      %v6707 = vperm.slane %v1179, 3
      %v6708 = vperm.slane %v1211, 3
      %v6709 = vperm.slane %v1243, 3
      %v6710 = vperm.slane %v1275, 3
      %v6711 = vperm.slane %v1307, 3
      %v6712 = vperm.slane %v1339, 3
      %v6713 = vperm.slane %v1371, 3
      %v6714 = vperm.slane %v1403, 3
      %v6715 = vperm.slane %v1435, 3
      %v6716 = vperm.slane %v1467, 3
      %v6717 = vperm.slane %v1499, 3
      %v6718 = vperm.slane %v1531, 3
      %v6719 = vperm.slane %v1563, 3
      %v6720 = vperm.slane %v1595, 3
      %v6721 = vperm.slane %v1627, 3
      %v6722 = vperm.slane %v1659, 3
      %v6723 = vperm.slane %v1691, 3
      %v6724 = vperm.slane %v1723, 3
      %v6725 = vperm.slane %v1755, 3
      %v6726 = vperm.slane %v1787, 3
      %v6727 = vperm.slane %v1819, 3
      %v6728 = vperm.slane %v1851, 3
      %v6729 = vperm.slane %v1883, 3
      %v6730 = vperm.slane %v1915, 3
      %v6731 = vperm.slane %v1947, 3
      %v6732 = vadd.f32 %v6574, %v6700
      %v6733 = vadd.f32 %v6578, %v6701
      %v6734 = vadd.f32 %v6582, %v6702
      %v6735 = vadd.f32 %v6586, %v6703
      %v6736 = vadd.f32 %v6590, %v6704
      %v6737 = vadd.f32 %v6594, %v6705
      %v6738 = vadd.f32 %v6598, %v6706
      %v6739 = vadd.f32 %v6602, %v6707
      %v6740 = vadd.f32 %v6606, %v6708
      %v6741 = vadd.f32 %v6610, %v6709
      %v6742 = vadd.f32 %v6614, %v6710
      %v6743 = vadd.f32 %v6618, %v6711
      %v6744 = vadd.f32 %v6622, %v6712
      %v6745 = vadd.f32 %v6626, %v6713
      %v6746 = vadd.f32 %v6630, %v6714
      %v6747 = vadd.f32 %v6634, %v6715
      %v6748 = vadd.f32 %v6638, %v6716
      %v6749 = vadd.f32 %v6642, %v6717
      %v6750 = vadd.f32 %v6646, %v6718
      %v6751 = vadd.f32 %v6650, %v6719
      %v6752 = vadd.f32 %v6654, %v6720
      %v6753 = vadd.f32 %v6658, %v6721
      %v6754 = vadd.f32 %v6662, %v6722
      %v6755 = vadd.f32 %v6666, %v6723
      %v6756 = vadd.f32 %v6670, %v6724
      %v6757 = vadd.f32 %v6674, %v6725
      %v6758 = vadd.f32 %v6678, %v6726
      %v6759 = vadd.f32 %v6682, %v6727
      %v6760 = vadd.f32 %v6686, %v6728
      %v6761 = vadd.f32 %v6690, %v6729
      %v6762 = vadd.f32 %v6694, %v6730
      %v6763 = vadd.f32 %v6698, %v6731
      %vm6764 = vcmp.gt.f32.partialorder %v6732, 0.0
      %vm6765 = vcmp.gt.f32.partialorder %v6733, 0.0
      %vm6766 = vcmp.gt.f32.partialorder %v6734, 0.0
      %vm6767 = vcmp.gt.f32.partialorder %v6735, 0.0
      %vm6768 = vcmp.gt.f32.partialorder %v6736, 0.0
      %vm6769 = vcmp.gt.f32.partialorder %v6737, 0.0
      %vm6770 = vcmp.gt.f32.partialorder %v6738, 0.0
      %vm6771 = vcmp.gt.f32.partialorder %v6739, 0.0
      %vm6772 = vcmp.gt.f32.partialorder %v6740, 0.0
      %vm6773 = vcmp.gt.f32.partialorder %v6741, 0.0
      %vm6774 = vcmp.gt.f32.partialorder %v6742, 0.0
      %vm6775 = vcmp.gt.f32.partialorder %v6743, 0.0
      %vm6776 = vcmp.gt.f32.partialorder %v6744, 0.0
      %vm6777 = vcmp.gt.f32.partialorder %v6745, 0.0
      %vm6778 = vcmp.gt.f32.partialorder %v6746, 0.0
      %vm6779 = vcmp.gt.f32.partialorder %v6747, 0.0
      %vm6780 = vcmp.gt.f32.partialorder %v6748, 0.0
      %vm6781 = vcmp.gt.f32.partialorder %v6749, 0.0
      %vm6782 = vcmp.gt.f32.partialorder %v6750, 0.0
      %vm6783 = vcmp.gt.f32.partialorder %v6751, 0.0
      %vm6784 = vcmp.gt.f32.partialorder %v6752, 0.0
      %vm6785 = vcmp.gt.f32.partialorder %v6753, 0.0
      %vm6786 = vcmp.gt.f32.partialorder %v6754, 0.0
      %vm6787 = vcmp.gt.f32.partialorder %v6755, 0.0
      %vm6788 = vcmp.gt.f32.partialorder %v6756, 0.0
      %vm6789 = vcmp.gt.f32.partialorder %v6757, 0.0
      %vm6790 = vcmp.gt.f32.partialorder %v6758, 0.0
      %vm6791 = vcmp.gt.f32.partialorder %v6759, 0.0
      %vm6792 = vcmp.gt.f32.partialorder %v6760, 0.0
      %vm6793 = vcmp.gt.f32.partialorder %v6761, 0.0
      %vm6794 = vcmp.gt.f32.partialorder %v6762, 0.0
      %vm6795 = vcmp.gt.f32.partialorder %v6763, 0.0
      %v6796 = vmul.f32 %v6732, 0.2
      %v6797 = vmul.f32 %v6733, 0.2
      %v6798 = vmul.f32 %v6734, 0.2
      %v6799 = vmul.f32 %v6735, 0.2
      %v6800 = vmul.f32 %v6736, 0.2
      %v6801 = vmul.f32 %v6737, 0.2
      %v6802 = vmul.f32 %v6738, 0.2
      %v6803 = vmul.f32 %v6739, 0.2
      %v6804 = vmul.f32 %v6740, 0.2
      %v6805 = vmul.f32 %v6741, 0.2
      %v6806 = vmul.f32 %v6742, 0.2
      %v6807 = vmul.f32 %v6743, 0.2
      %v6808 = vmul.f32 %v6744, 0.2
      %v6809 = vmul.f32 %v6745, 0.2
      %v6810 = vmul.f32 %v6746, 0.2
      %v6811 = vmul.f32 %v6747, 0.2
      %v6812 = vmul.f32 %v6748, 0.2
      %v6813 = vmul.f32 %v6749, 0.2
      %v6814 = vmul.f32 %v6750, 0.2
      %v6815 = vmul.f32 %v6751, 0.2
      %v6816 = vmul.f32 %v6752, 0.2
      %v6817 = vmul.f32 %v6753, 0.2
      %v6818 = vmul.f32 %v6754, 0.2
      %v6819 = vmul.f32 %v6755, 0.2
      %v6820 = vmul.f32 %v6756, 0.2
      %v6821 = vmul.f32 %v6757, 0.2
      %v6822 = vmul.f32 %v6758, 0.2
      %v6823 = vmul.f32 %v6759, 0.2
      %v6824 = vmul.f32 %v6760, 0.2
      %v6825 = vmul.f32 %v6761, 0.2
      %v6826 = vmul.f32 %v6762, 0.2
      %v6827 = vmul.f32 %v6763, 0.2
      %v6828 = vsel %vm6764, %v6732, %v6796
      %v6829 = vsel %vm6765, %v6733, %v6797
      %v6830 = vsel %vm6766, %v6734, %v6798
      %v6831 = vsel %vm6767, %v6735, %v6799
      %v6832 = vsel %vm6768, %v6736, %v6800
      %v6833 = vsel %vm6769, %v6737, %v6801
      %v6834 = vsel %vm6770, %v6738, %v6802
      %v6835 = vsel %vm6771, %v6739, %v6803
      %v6836 = vsel %vm6772, %v6740, %v6804
      %v6837 = vsel %vm6773, %v6741, %v6805
      %v6838 = vsel %vm6774, %v6742, %v6806
      %v6839 = vsel %vm6775, %v6743, %v6807
      %v6840 = vsel %vm6776, %v6744, %v6808
      %v6841 = vsel %vm6777, %v6745, %v6809
      %v6842 = vsel %vm6778, %v6746, %v6810
      %v6843 = vsel %vm6779, %v6747, %v6811
      %v6844 = vsel %vm6780, %v6748, %v6812
      %v6845 = vsel %vm6781, %v6749, %v6813
      %v6846 = vsel %vm6782, %v6750, %v6814
      %v6847 = vsel %vm6783, %v6751, %v6815
      %v6848 = vsel %vm6784, %v6752, %v6816
      %v6849 = vsel %vm6785, %v6753, %v6817
      %v6850 = vsel %vm6786, %v6754, %v6818
      %v6851 = vsel %vm6787, %v6755, %v6819
      %v6852 = vsel %vm6788, %v6756, %v6820
      %v6853 = vsel %vm6789, %v6757, %v6821
      %v6854 = vsel %vm6790, %v6758, %v6822
      %v6855 = vsel %vm6791, %v6759, %v6823
      %v6856 = vsel %vm6792, %v6760, %v6824
      %v6857 = vsel %vm6793, %v6761, %v6825
      %v6858 = vsel %vm6794, %v6762, %v6826
      %v6859 = vsel %vm6795, %v6763, %v6827
      %v6860 = vsel %vm2059, %v6828, -999.0
      %v6861 = vsel %vm2060, %v6829, -999.0
      %v6862 = vsel %vm2061, %v6830, -999.0
      %v6863 = vsel %vm2062, %v6831, -999.0
      %v6864 = vsel %vm2063, %v6832, -999.0
      %v6865 = vsel %vm2064, %v6833, -999.0
      %v6866 = vsel %vm2065, %v6834, -999.0
      %v6867 = vsel %vm2066, %v6835, -999.0
      %v6868 = vsel %vm2067, %v6836, -999.0
      %v6869 = vsel %vm2068, %v6837, -999.0
      %v6870 = vsel %vm2069, %v6838, -999.0
      %v6871 = vsel %vm2070, %v6839, -999.0
      %v6872 = vsel %vm2071, %v6840, -999.0
      %v6873 = vsel %vm2072, %v6841, -999.0
      %v6874 = vsel %vm2073, %v6842, -999.0
      %v6875 = vsel %vm2074, %v6843, -999.0
      %v6876 = vsel %vm2075, %v6844, -999.0
      %v6877 = vsel %vm2076, %v6845, -999.0
      %v6878 = vsel %vm2077, %v6846, -999.0
      %v6879 = vsel %vm2078, %v6847, -999.0
      %v6880 = vsel %vm2079, %v6848, -999.0
      %v6881 = vsel %vm2080, %v6849, -999.0
      %v6882 = vsel %vm2081, %v6850, -999.0
      %v6883 = vsel %vm2082, %v6851, -999.0
      %v6884 = vsel %vm2083, %v6852, -999.0
      %v6885 = vsel %vm2084, %v6853, -999.0
      %v6886 = vsel %vm2085, %v6854, -999.0
      %v6887 = vsel %vm2086, %v6855, -999.0
      %v6888 = vsel %vm2087, %v6856, -999.0
      %v6889 = vsel %vm2088, %v6857, -999.0
      %v6890 = vsel %vm2089, %v6858, -999.0
      %v6891 = vsel %vm2090, %v6859, -999.0
      %v6892 = vsel %vm2443, %v6860, -inf
      %6893 = vmax.xlane.f32.xlu0 %v6892
      %v6894 = vpop.xlane.xlu0 %6893
      %v6895 = vsel %vm2443, %v6861, -inf
      %6896 = vmax.xlane.f32.xlu0 %v6895
      %v6897 = vpop.xlane.xlu0 %6896
      %v6898 = vsel %vm2443, %v6862, -inf
      %6899 = vmax.xlane.f32.xlu0 %v6898
      %v6900 = vpop.xlane.xlu0 %6899
      %v6901 = vsel %vm2443, %v6863, -inf
      %6902 = vmax.xlane.f32.xlu0 %v6901
      %v6903 = vpop.xlane.xlu0 %6902
      %v6904 = vsel %vm2443, %v6864, -inf
      %6905 = vmax.xlane.f32.xlu0 %v6904
      %v6906 = vpop.xlane.xlu0 %6905
      %v6907 = vsel %vm2443, %v6865, -inf
      %6908 = vmax.xlane.f32.xlu0 %v6907
      %v6909 = vpop.xlane.xlu0 %6908
      %v6910 = vsel %vm2443, %v6866, -inf
      %6911 = vmax.xlane.f32.xlu0 %v6910
      %v6912 = vpop.xlane.xlu0 %6911
      %v6913 = vsel %vm2443, %v6867, -inf
      %6914 = vmax.xlane.f32.xlu0 %v6913
      %v6915 = vpop.xlane.xlu0 %6914
      %v6916 = vsel %vm2443, %v6868, -inf
      %6917 = vmax.xlane.f32.xlu0 %v6916
      %v6918 = vpop.xlane.xlu0 %6917
      %v6919 = vsel %vm2443, %v6869, -inf
      %6920 = vmax.xlane.f32.xlu0 %v6919
      %v6921 = vpop.xlane.xlu0 %6920
      %v6922 = vsel %vm2443, %v6870, -inf
      %6923 = vmax.xlane.f32.xlu0 %v6922
      %v6924 = vpop.xlane.xlu0 %6923
      %v6925 = vsel %vm2443, %v6871, -inf
      %6926 = vmax.xlane.f32.xlu0 %v6925
      %v6927 = vpop.xlane.xlu0 %6926
      %v6928 = vsel %vm2443, %v6872, -inf
      %6929 = vmax.xlane.f32.xlu0 %v6928
      %v6930 = vpop.xlane.xlu0 %6929
      %v6931 = vsel %vm2443, %v6873, -inf
      %6932 = vmax.xlane.f32.xlu0 %v6931
      %v6933 = vpop.xlane.xlu0 %6932
      %v6934 = vsel %vm2443, %v6874, -inf
      %6935 = vmax.xlane.f32.xlu0 %v6934
      %v6936 = vpop.xlane.xlu0 %6935
      %v6937 = vsel %vm2443, %v6875, -inf
      %6938 = vmax.xlane.f32.xlu0 %v6937
      %v6939 = vpop.xlane.xlu0 %6938
      %v6940 = vsel %vm2443, %v6876, -inf
      %6941 = vmax.xlane.f32.xlu0 %v6940
      %v6942 = vpop.xlane.xlu0 %6941
      %v6943 = vsel %vm2443, %v6877, -inf
      %6944 = vmax.xlane.f32.xlu0 %v6943
      %v6945 = vpop.xlane.xlu0 %6944
      %v6946 = vsel %vm2443, %v6878, -inf
      %6947 = vmax.xlane.f32.xlu0 %v6946
      %v6948 = vpop.xlane.xlu0 %6947
      %v6949 = vsel %vm2443, %v6879, -inf
      %6950 = vmax.xlane.f32.xlu0 %v6949
      %v6951 = vpop.xlane.xlu0 %6950
      %v6952 = vsel %vm2443, %v6880, -inf
      %6953 = vmax.xlane.f32.xlu0 %v6952
      %v6954 = vpop.xlane.xlu0 %6953
      %v6955 = vsel %vm2443, %v6881, -inf
      %6956 = vmax.xlane.f32.xlu0 %v6955
      %v6957 = vpop.xlane.xlu0 %6956
      %v6958 = vsel %vm2443, %v6882, -inf
      %6959 = vmax.xlane.f32.xlu0 %v6958
      %v6960 = vpop.xlane.xlu0 %6959
      %v6961 = vsel %vm2443, %v6883, -inf
      %6962 = vmax.xlane.f32.xlu0 %v6961
      %v6963 = vpop.xlane.xlu0 %6962
      %v6964 = vsel %vm2443, %v6884, -inf
      %6965 = vmax.xlane.f32.xlu0 %v6964
      %v6966 = vpop.xlane.xlu0 %6965
      %v6967 = vsel %vm2443, %v6885, -inf
      %6968 = vmax.xlane.f32.xlu0 %v6967
      %v6969 = vpop.xlane.xlu0 %6968
      %v6970 = vsel %vm2443, %v6886, -inf
      %6971 = vmax.xlane.f32.xlu0 %v6970
      %v6972 = vpop.xlane.xlu0 %6971
      %v6973 = vsel %vm2443, %v6887, -inf
      %6974 = vmax.xlane.f32.xlu0 %v6973
      %v6975 = vpop.xlane.xlu0 %6974
      %v6976 = vsel %vm2443, %v6888, -inf
      %6977 = vmax.xlane.f32.xlu0 %v6976
      %v6978 = vpop.xlane.xlu0 %6977
      %v6979 = vsel %vm2443, %v6889, -inf
      %6980 = vmax.xlane.f32.xlu0 %v6979
      %v6981 = vpop.xlane.xlu0 %6980
      %v6982 = vsel %vm2443, %v6890, -inf
      %6983 = vmax.xlane.f32.xlu0 %v6982
      %v6984 = vpop.xlane.xlu0 %6983
      %v6985 = vsel %vm2443, %v6891, -inf
      %6986 = vmax.xlane.f32.xlu0 %v6985
      %v6987 = vpop.xlane.xlu0 %6986
      %v6988 = vsub.f32 %v6860, %v6894
      %v6989 = vsub.f32 %v6861, %v6897
      %v6990 = vsub.f32 %v6862, %v6900
      %v6991 = vsub.f32 %v6863, %v6903
      %v6992 = vsub.f32 %v6864, %v6906
      %v6993 = vsub.f32 %v6865, %v6909
      %v6994 = vsub.f32 %v6866, %v6912
      %v6995 = vsub.f32 %v6867, %v6915
      %v6996 = vsub.f32 %v6868, %v6918
      %v6997 = vsub.f32 %v6869, %v6921
      %v6998 = vsub.f32 %v6870, %v6924
      %v6999 = vsub.f32 %v6871, %v6927
      %v7000 = vsub.f32 %v6872, %v6930
      %v7001 = vsub.f32 %v6873, %v6933
      %v7002 = vsub.f32 %v6874, %v6936
      %v7003 = vsub.f32 %v6875, %v6939
      %v7004 = vsub.f32 %v6876, %v6942
      %v7005 = vsub.f32 %v6877, %v6945
      %v7006 = vsub.f32 %v6878, %v6948
      %v7007 = vsub.f32 %v6879, %v6951
      %v7008 = vsub.f32 %v6880, %v6954
      %v7009 = vsub.f32 %v6881, %v6957
      %v7010 = vsub.f32 %v6882, %v6960
      %v7011 = vsub.f32 %v6883, %v6963
      %v7012 = vsub.f32 %v6884, %v6966
      %v7013 = vsub.f32 %v6885, %v6969
      %v7014 = vsub.f32 %v6886, %v6972
      %v7015 = vsub.f32 %v6887, %v6975
      %v7016 = vsub.f32 %v6888, %v6978
      %v7017 = vsub.f32 %v6889, %v6981
      %v7018 = vsub.f32 %v6890, %v6984
      %v7019 = vsub.f32 %v6891, %v6987
      %v7020 = vmul.f32 %v6988, 1.442695
      %v7021 = vpow.pop %v7020
      %v7022 = vmul.f32 %v6989, 1.442695
      %v7023 = vpow.pop %v7022
      %v7024 = vmul.f32 %v6990, 1.442695
      %v7025 = vpow.pop %v7024
      %v7026 = vmul.f32 %v6991, 1.442695
      %v7027 = vpow.pop %v7026
      %v7028 = vmul.f32 %v6992, 1.442695
      %v7029 = vpow.pop %v7028
      %v7030 = vmul.f32 %v6993, 1.442695
      %v7031 = vpow.pop %v7030
      %v7032 = vmul.f32 %v6994, 1.442695
      %v7033 = vpow.pop %v7032
      %v7034 = vmul.f32 %v6995, 1.442695
      %v7035 = vpow.pop %v7034
      %v7036 = vmul.f32 %v6996, 1.442695
      %v7037 = vpow.pop %v7036
      %v7038 = vmul.f32 %v6997, 1.442695
      %v7039 = vpow.pop %v7038
      %v7040 = vmul.f32 %v6998, 1.442695
      %v7041 = vpow.pop %v7040
      %v7042 = vmul.f32 %v6999, 1.442695
      %v7043 = vpow.pop %v7042
      %v7044 = vmul.f32 %v7000, 1.442695
      %v7045 = vpow.pop %v7044
      %v7046 = vmul.f32 %v7001, 1.442695
      %v7047 = vpow.pop %v7046
      %v7048 = vmul.f32 %v7002, 1.442695
      %v7049 = vpow.pop %v7048
      %v7050 = vmul.f32 %v7003, 1.442695
      %v7051 = vpow.pop %v7050
      %v7052 = vmul.f32 %v7004, 1.442695
      %v7053 = vpow.pop %v7052
      %v7054 = vmul.f32 %v7005, 1.442695
      %v7055 = vpow.pop %v7054
      %v7056 = vmul.f32 %v7006, 1.442695
      %v7057 = vpow.pop %v7056
      %v7058 = vmul.f32 %v7007, 1.442695
      %v7059 = vpow.pop %v7058
      %v7060 = vmul.f32 %v7008, 1.442695
      %v7061 = vpow.pop %v7060
      %v7062 = vmul.f32 %v7009, 1.442695
      %v7063 = vpow.pop %v7062
      %v7064 = vmul.f32 %v7010, 1.442695
      %v7065 = vpow.pop %v7064
      %v7066 = vmul.f32 %v7011, 1.442695
      %v7067 = vpow.pop %v7066
      %v7068 = vmul.f32 %v7012, 1.442695
      %v7069 = vpow.pop %v7068
      %v7070 = vmul.f32 %v7013, 1.442695
      %v7071 = vpow.pop %v7070
      %v7072 = vmul.f32 %v7014, 1.442695
      %v7073 = vpow.pop %v7072
      %v7074 = vmul.f32 %v7015, 1.442695
      %v7075 = vpow.pop %v7074
      %v7076 = vmul.f32 %v7016, 1.442695
      %v7077 = vpow.pop %v7076
      %v7078 = vmul.f32 %v7017, 1.442695
      %v7079 = vpow.pop %v7078
      %v7080 = vmul.f32 %v7018, 1.442695
      %v7081 = vpow.pop %v7080
      %v7082 = vmul.f32 %v7019, 1.442695
      %v7083 = vpow.pop %v7082
      %v7084 = vsel %vm2443, %v7021, 0.0
      %7085 = vadd.xlane.f32.xlu0 %v7084
      %v7086 = vpop.xlane.xlu0 %7085
      %v7087 = vsel %vm2443, %v7023, 0.0
      %7088 = vadd.xlane.f32.xlu0 %v7087
      %v7089 = vpop.xlane.xlu0 %7088
      %v7090 = vsel %vm2443, %v7025, 0.0
      %7091 = vadd.xlane.f32.xlu0 %v7090
      %v7092 = vpop.xlane.xlu0 %7091
      %v7093 = vsel %vm2443, %v7027, 0.0
      %7094 = vadd.xlane.f32.xlu0 %v7093
      %v7095 = vpop.xlane.xlu0 %7094
      %v7096 = vsel %vm2443, %v7029, 0.0
      %7097 = vadd.xlane.f32.xlu0 %v7096
      %v7098 = vpop.xlane.xlu0 %7097
      %v7099 = vsel %vm2443, %v7031, 0.0
      %7100 = vadd.xlane.f32.xlu0 %v7099
      %v7101 = vpop.xlane.xlu0 %7100
      %v7102 = vsel %vm2443, %v7033, 0.0
      %7103 = vadd.xlane.f32.xlu0 %v7102
      %v7104 = vpop.xlane.xlu0 %7103
      %v7105 = vsel %vm2443, %v7035, 0.0
      %7106 = vadd.xlane.f32.xlu0 %v7105
      %v7107 = vpop.xlane.xlu0 %7106
      %v7108 = vsel %vm2443, %v7037, 0.0
      %7109 = vadd.xlane.f32.xlu0 %v7108
      %v7110 = vpop.xlane.xlu0 %7109
      %v7111 = vsel %vm2443, %v7039, 0.0
      %7112 = vadd.xlane.f32.xlu0 %v7111
      %v7113 = vpop.xlane.xlu0 %7112
      %v7114 = vsel %vm2443, %v7041, 0.0
      %7115 = vadd.xlane.f32.xlu0 %v7114
      %v7116 = vpop.xlane.xlu0 %7115
      %v7117 = vsel %vm2443, %v7043, 0.0
      %7118 = vadd.xlane.f32.xlu0 %v7117
      %v7119 = vpop.xlane.xlu0 %7118
      %v7120 = vsel %vm2443, %v7045, 0.0
      %7121 = vadd.xlane.f32.xlu0 %v7120
      %v7122 = vpop.xlane.xlu0 %7121
      %v7123 = vsel %vm2443, %v7047, 0.0
      %7124 = vadd.xlane.f32.xlu0 %v7123
      %v7125 = vpop.xlane.xlu0 %7124
      %v7126 = vsel %vm2443, %v7049, 0.0
      %7127 = vadd.xlane.f32.xlu0 %v7126
      %v7128 = vpop.xlane.xlu0 %7127
      %v7129 = vsel %vm2443, %v7051, 0.0
      %7130 = vadd.xlane.f32.xlu0 %v7129
      %v7131 = vpop.xlane.xlu0 %7130
      %v7132 = vsel %vm2443, %v7053, 0.0
      %7133 = vadd.xlane.f32.xlu0 %v7132
      %v7134 = vpop.xlane.xlu0 %7133
      %v7135 = vsel %vm2443, %v7055, 0.0
      %7136 = vadd.xlane.f32.xlu0 %v7135
      %v7137 = vpop.xlane.xlu0 %7136
      %v7138 = vsel %vm2443, %v7057, 0.0
      %7139 = vadd.xlane.f32.xlu0 %v7138
      %v7140 = vpop.xlane.xlu0 %7139
      %v7141 = vsel %vm2443, %v7059, 0.0
      %7142 = vadd.xlane.f32.xlu0 %v7141
      %v7143 = vpop.xlane.xlu0 %7142
      %v7144 = vsel %vm2443, %v7061, 0.0
      %7145 = vadd.xlane.f32.xlu0 %v7144
      %v7146 = vpop.xlane.xlu0 %7145
      %v7147 = vsel %vm2443, %v7063, 0.0
      %7148 = vadd.xlane.f32.xlu0 %v7147
      %v7149 = vpop.xlane.xlu0 %7148
      %v7150 = vsel %vm2443, %v7065, 0.0
      %7151 = vadd.xlane.f32.xlu0 %v7150
      %v7152 = vpop.xlane.xlu0 %7151
      %v7153 = vsel %vm2443, %v7067, 0.0
      %7154 = vadd.xlane.f32.xlu0 %v7153
      %v7155 = vpop.xlane.xlu0 %7154
      %v7156 = vsel %vm2443, %v7069, 0.0
      %7157 = vadd.xlane.f32.xlu0 %v7156
      %v7158 = vpop.xlane.xlu0 %7157
      %v7159 = vsel %vm2443, %v7071, 0.0
      %7160 = vadd.xlane.f32.xlu0 %v7159
      %v7161 = vpop.xlane.xlu0 %7160
      %v7162 = vsel %vm2443, %v7073, 0.0
      %7163 = vadd.xlane.f32.xlu0 %v7162
      %v7164 = vpop.xlane.xlu0 %7163
      %v7165 = vsel %vm2443, %v7075, 0.0
      %7166 = vadd.xlane.f32.xlu0 %v7165
      %v7167 = vpop.xlane.xlu0 %7166
      %v7168 = vsel %vm2443, %v7077, 0.0
      %7169 = vadd.xlane.f32.xlu0 %v7168
      %v7170 = vpop.xlane.xlu0 %7169
      %v7171 = vsel %vm2443, %v7079, 0.0
      %7172 = vadd.xlane.f32.xlu0 %v7171
      %v7173 = vpop.xlane.xlu0 %7172
      %v7174 = vsel %vm2443, %v7081, 0.0
      %7175 = vadd.xlane.f32.xlu0 %v7174
      %v7176 = vpop.xlane.xlu0 %7175
      %v7177 = vsel %vm2443, %v7083, 0.0
      %7178 = vadd.xlane.f32.xlu0 %v7177
      %v7179 = vpop.xlane.xlu0 %7178
      %v7180 = vrcp.pop %v7086
      %v7181 = vrcp.pop %v7089
      %v7182 = vrcp.pop %v7092
      %v7183 = vrcp.pop %v7095
      %v7184 = vrcp.pop %v7098
      %v7185 = vrcp.pop %v7101
      %v7186 = vrcp.pop %v7104
      %v7187 = vrcp.pop %v7107
      %v7188 = vrcp.pop %v7110
      %v7189 = vrcp.pop %v7113
      %v7190 = vrcp.pop %v7116
      %v7191 = vrcp.pop %v7119
      %v7192 = vrcp.pop %v7122
      %v7193 = vrcp.pop %v7125
      %v7194 = vrcp.pop %v7128
      %v7195 = vrcp.pop %v7131
      %v7196 = vrcp.pop %v7134
      %v7197 = vrcp.pop %v7137
      %v7198 = vrcp.pop %v7140
      %v7199 = vrcp.pop %v7143
      %v7200 = vrcp.pop %v7146
      %v7201 = vrcp.pop %v7149
      %v7202 = vrcp.pop %v7152
      %v7203 = vrcp.pop %v7155
      %v7204 = vrcp.pop %v7158
      %v7205 = vrcp.pop %v7161
      %v7206 = vrcp.pop %v7164
      %v7207 = vrcp.pop %v7167
      %v7208 = vrcp.pop %v7170
      %v7209 = vrcp.pop %v7173
      %v7210 = vrcp.pop %v7176
      %v7211 = vrcp.pop %v7179
      %v7212 = vmul.f32 %v7021, %v7180
      %v7213 = vmul.f32 %v7023, %v7181
      %v7214 = vmul.f32 %v7025, %v7182
      %v7215 = vmul.f32 %v7027, %v7183
      %v7216 = vmul.f32 %v7029, %v7184
      %v7217 = vmul.f32 %v7031, %v7185
      %v7218 = vmul.f32 %v7033, %v7186
      %v7219 = vmul.f32 %v7035, %v7187
      %v7220 = vmul.f32 %v7037, %v7188
      %v7221 = vmul.f32 %v7039, %v7189
      %v7222 = vmul.f32 %v7041, %v7190
      %v7223 = vmul.f32 %v7043, %v7191
      %v7224 = vmul.f32 %v7045, %v7192
      %v7225 = vmul.f32 %v7047, %v7193
      %v7226 = vmul.f32 %v7049, %v7194
      %v7227 = vmul.f32 %v7051, %v7195
      %v7228 = vmul.f32 %v7053, %v7196
      %v7229 = vmul.f32 %v7055, %v7197
      %v7230 = vmul.f32 %v7057, %v7198
      %v7231 = vmul.f32 %v7059, %v7199
      %v7232 = vmul.f32 %v7061, %v7200
      %v7233 = vmul.f32 %v7063, %v7201
      %v7234 = vmul.f32 %v7065, %v7202
      %v7235 = vmul.f32 %v7067, %v7203
      %v7236 = vmul.f32 %v7069, %v7204
      %v7237 = vmul.f32 %v7071, %v7205
      %v7238 = vmul.f32 %v7073, %v7206
      %v7239 = vmul.f32 %v7075, %v7207
      %v7240 = vmul.f32 %v7077, %v7208
      %v7241 = vmul.f32 %v7079, %v7209
      %v7242 = vmul.f32 %v7081, %v7210
      %v7243 = vmul.f32 %v7083, %v7211
      %7244 = vrot.lane.b32.xlu0 %v482, 104
      %v7245 = vpop.permute.xlu0 %7244
      %v7248 = vsel %vm2443, %v7212, 0
      %7250 = vmatpush.msra.mxu0 0.0
      %7251 = vmatpush.msra.mxu0 0.0
      %7252 = vmatpush.msra.mxu0 0.0
      %7253 = vmatpush.msra.mxu0 0.0
      %7254 = vmatpush.msra.mxu0 0.0
      %7255 = vmatpush.msra.mxu0 0.0
      %7256 = vmatpush.msra.mxu0 0.0
      %7257 = vmatpush.msra.mxu0 0.0
      %7258 = vmatpush.msra.mxu0 0.0
      %7259 = vmatpush.msra.mxu0 0.0
      %7260 = vmatpush.msra.mxu0 0.0
      %7261 = vmatpush.msra.mxu0 0.0
      %7262 = vmatpush.msra.mxu0 0.0
      %7263 = vmatpush.msra.mxu0 0.0
      %7264 = vmatpush.msra.mxu0 0.0
      %7265 = vmatpush.msra.mxu0 %v7245
      %7266 = vmatmul.f32.gmra.mxu0 %v7248
      %v7267 = vpop.f32.mrf.mxu0
      %v7268 = vadd.f32 0.0, %v7267
      %7269 = vdwg.mxu0
      %7270 = vrot.lane.b32.xlu0 %v485, 104
      %v7271 = vpop.permute.xlu0 %7270
      %v7274 = vsel %vm2443, %v7213, 0
      %7276 = vmatpush.msra.mxu0 0.0
      %7277 = vmatpush.msra.mxu0 0.0
      %7278 = vmatpush.msra.mxu0 0.0
      %7279 = vmatpush.msra.mxu0 0.0
      %7280 = vmatpush.msra.mxu0 0.0
      %7281 = vmatpush.msra.mxu0 0.0
      %7282 = vmatpush.msra.mxu0 0.0
      %7283 = vmatpush.msra.mxu0 0.0
      %7284 = vmatpush.msra.mxu0 0.0
      %7285 = vmatpush.msra.mxu0 0.0
      %7286 = vmatpush.msra.mxu0 0.0
      %7287 = vmatpush.msra.mxu0 0.0
      %7288 = vmatpush.msra.mxu0 0.0
      %7289 = vmatpush.msra.mxu0 0.0
      %7290 = vmatpush.msra.mxu0 0.0
      %7291 = vmatpush.msra.mxu0 %v7271
      %7292 = vmatmul.f32.gmra.mxu0 %v7274
      %v7293 = vpop.f32.mrf.mxu0
      %v7294 = vadd.f32 0.0, %v7293
      %7295 = vdwg.mxu0
      %7296 = vrot.lane.b32.xlu0 %v488, 104
      %v7297 = vpop.permute.xlu0 %7296
      %v7300 = vsel %vm2443, %v7214, 0
      %7302 = vmatpush.msra.mxu0 0.0
      %7303 = vmatpush.msra.mxu0 0.0
      %7304 = vmatpush.msra.mxu0 0.0
      %7305 = vmatpush.msra.mxu0 0.0
      %7306 = vmatpush.msra.mxu0 0.0
      %7307 = vmatpush.msra.mxu0 0.0
      %7308 = vmatpush.msra.mxu0 0.0
      %7309 = vmatpush.msra.mxu0 0.0
      %7310 = vmatpush.msra.mxu0 0.0
      %7311 = vmatpush.msra.mxu0 0.0
      %7312 = vmatpush.msra.mxu0 0.0
      %7313 = vmatpush.msra.mxu0 0.0
      %7314 = vmatpush.msra.mxu0 0.0
      %7315 = vmatpush.msra.mxu0 0.0
      %7316 = vmatpush.msra.mxu0 0.0
      %7317 = vmatpush.msra.mxu0 %v7297
      %7318 = vmatmul.f32.gmra.mxu0 %v7300
      %v7319 = vpop.f32.mrf.mxu0
      %v7320 = vadd.f32 0.0, %v7319
      %7321 = vdwg.mxu0
      %7322 = vrot.lane.b32.xlu0 %v491, 104
      %v7323 = vpop.permute.xlu0 %7322
      %v7326 = vsel %vm2443, %v7215, 0
      %7328 = vmatpush.msra.mxu0 0.0
      %7329 = vmatpush.msra.mxu0 0.0
      %7330 = vmatpush.msra.mxu0 0.0
      %7331 = vmatpush.msra.mxu0 0.0
      %7332 = vmatpush.msra.mxu0 0.0
      %7333 = vmatpush.msra.mxu0 0.0
      %7334 = vmatpush.msra.mxu0 0.0
      %7335 = vmatpush.msra.mxu0 0.0
      %7336 = vmatpush.msra.mxu0 0.0
      %7337 = vmatpush.msra.mxu0 0.0
      %7338 = vmatpush.msra.mxu0 0.0
      %7339 = vmatpush.msra.mxu0 0.0
      %7340 = vmatpush.msra.mxu0 0.0
      %7341 = vmatpush.msra.mxu0 0.0
      %7342 = vmatpush.msra.mxu0 0.0
      %7343 = vmatpush.msra.mxu0 %v7323
      %7344 = vmatmul.f32.gmra.mxu0 %v7326
      %v7345 = vpop.f32.mrf.mxu0
      %v7346 = vadd.f32 0.0, %v7345
      %7347 = vdwg.mxu0
      %7348 = vrot.lane.b32.xlu0 %v494, 104
      %v7349 = vpop.permute.xlu0 %7348
      %v7352 = vsel %vm2443, %v7216, 0
      %7354 = vmatpush.msra.mxu0 0.0
      %7355 = vmatpush.msra.mxu0 0.0
      %7356 = vmatpush.msra.mxu0 0.0
      %7357 = vmatpush.msra.mxu0 0.0
      %7358 = vmatpush.msra.mxu0 0.0
      %7359 = vmatpush.msra.mxu0 0.0
      %7360 = vmatpush.msra.mxu0 0.0
      %7361 = vmatpush.msra.mxu0 0.0
      %7362 = vmatpush.msra.mxu0 0.0
      %7363 = vmatpush.msra.mxu0 0.0
      %7364 = vmatpush.msra.mxu0 0.0
      %7365 = vmatpush.msra.mxu0 0.0
      %7366 = vmatpush.msra.mxu0 0.0
      %7367 = vmatpush.msra.mxu0 0.0
      %7368 = vmatpush.msra.mxu0 0.0
      %7369 = vmatpush.msra.mxu0 %v7349
      %7370 = vmatmul.f32.gmra.mxu0 %v7352
      %v7371 = vpop.f32.mrf.mxu0
      %v7372 = vadd.f32 0.0, %v7371
      %7373 = vdwg.mxu0
      %7374 = vrot.lane.b32.xlu0 %v497, 104
      %v7375 = vpop.permute.xlu0 %7374
      %v7378 = vsel %vm2443, %v7217, 0
      %7380 = vmatpush.msra.mxu0 0.0
      %7381 = vmatpush.msra.mxu0 0.0
      %7382 = vmatpush.msra.mxu0 0.0
      %7383 = vmatpush.msra.mxu0 0.0
      %7384 = vmatpush.msra.mxu0 0.0
      %7385 = vmatpush.msra.mxu0 0.0
      %7386 = vmatpush.msra.mxu0 0.0
      %7387 = vmatpush.msra.mxu0 0.0
      %7388 = vmatpush.msra.mxu0 0.0
      %7389 = vmatpush.msra.mxu0 0.0
      %7390 = vmatpush.msra.mxu0 0.0
      %7391 = vmatpush.msra.mxu0 0.0
      %7392 = vmatpush.msra.mxu0 0.0
      %7393 = vmatpush.msra.mxu0 0.0
      %7394 = vmatpush.msra.mxu0 0.0
      %7395 = vmatpush.msra.mxu0 %v7375
      %7396 = vmatmul.f32.gmra.mxu0 %v7378
      %v7397 = vpop.f32.mrf.mxu0
      %v7398 = vadd.f32 0.0, %v7397
      %7399 = vdwg.mxu0
      %7400 = vrot.lane.b32.xlu0 %v500, 104
      %v7401 = vpop.permute.xlu0 %7400
      %v7404 = vsel %vm2443, %v7218, 0
      %7406 = vmatpush.msra.mxu0 0.0
      %7407 = vmatpush.msra.mxu0 0.0
      %7408 = vmatpush.msra.mxu0 0.0
      %7409 = vmatpush.msra.mxu0 0.0
      %7410 = vmatpush.msra.mxu0 0.0
      %7411 = vmatpush.msra.mxu0 0.0
      %7412 = vmatpush.msra.mxu0 0.0
      %7413 = vmatpush.msra.mxu0 0.0
      %7414 = vmatpush.msra.mxu0 0.0
      %7415 = vmatpush.msra.mxu0 0.0
      %7416 = vmatpush.msra.mxu0 0.0
      %7417 = vmatpush.msra.mxu0 0.0
      %7418 = vmatpush.msra.mxu0 0.0
      %7419 = vmatpush.msra.mxu0 0.0
      %7420 = vmatpush.msra.mxu0 0.0
      %7421 = vmatpush.msra.mxu0 %v7401
      %7422 = vmatmul.f32.gmra.mxu0 %v7404
      %v7423 = vpop.f32.mrf.mxu0
      %v7424 = vadd.f32 0.0, %v7423
      %7425 = vdwg.mxu0
      %7426 = vrot.lane.b32.xlu0 %v503, 104
      %v7427 = vpop.permute.xlu0 %7426
      %v7430 = vsel %vm2443, %v7219, 0
      %7432 = vmatpush.msra.mxu0 0.0
      %7433 = vmatpush.msra.mxu0 0.0
      %7434 = vmatpush.msra.mxu0 0.0
      %7435 = vmatpush.msra.mxu0 0.0
      %7436 = vmatpush.msra.mxu0 0.0
      %7437 = vmatpush.msra.mxu0 0.0
      %7438 = vmatpush.msra.mxu0 0.0
      %7439 = vmatpush.msra.mxu0 0.0
      %7440 = vmatpush.msra.mxu0 0.0
      %7441 = vmatpush.msra.mxu0 0.0
      %7442 = vmatpush.msra.mxu0 0.0
      %7443 = vmatpush.msra.mxu0 0.0
      %7444 = vmatpush.msra.mxu0 0.0
      %7445 = vmatpush.msra.mxu0 0.0
      %7446 = vmatpush.msra.mxu0 0.0
      %7447 = vmatpush.msra.mxu0 %v7427
      %7448 = vmatmul.f32.gmra.mxu0 %v7430
      %v7449 = vpop.f32.mrf.mxu0
      %v7450 = vadd.f32 0.0, %v7449
      %7451 = vdwg.mxu0
      %7452 = vrot.lane.b32.xlu0 %v506, 104
      %v7453 = vpop.permute.xlu0 %7452
      %v7456 = vsel %vm2443, %v7220, 0
      %7458 = vmatpush.msra.mxu0 0.0
      %7459 = vmatpush.msra.mxu0 0.0
      %7460 = vmatpush.msra.mxu0 0.0
      %7461 = vmatpush.msra.mxu0 0.0
      %7462 = vmatpush.msra.mxu0 0.0
      %7463 = vmatpush.msra.mxu0 0.0
      %7464 = vmatpush.msra.mxu0 0.0
      %7465 = vmatpush.msra.mxu0 0.0
      %7466 = vmatpush.msra.mxu0 0.0
      %7467 = vmatpush.msra.mxu0 0.0
      %7468 = vmatpush.msra.mxu0 0.0
      %7469 = vmatpush.msra.mxu0 0.0
      %7470 = vmatpush.msra.mxu0 0.0
      %7471 = vmatpush.msra.mxu0 0.0
      %7472 = vmatpush.msra.mxu0 0.0
      %7473 = vmatpush.msra.mxu0 %v7453
      %7474 = vmatmul.f32.gmra.mxu0 %v7456
      %v7475 = vpop.f32.mrf.mxu0
      %v7476 = vadd.f32 0.0, %v7475
      %7477 = vdwg.mxu0
      %7478 = vrot.lane.b32.xlu0 %v509, 104
      %v7479 = vpop.permute.xlu0 %7478
      %v7482 = vsel %vm2443, %v7221, 0
      %7484 = vmatpush.msra.mxu0 0.0
      %7485 = vmatpush.msra.mxu0 0.0
      %7486 = vmatpush.msra.mxu0 0.0
      %7487 = vmatpush.msra.mxu0 0.0
      %7488 = vmatpush.msra.mxu0 0.0
      %7489 = vmatpush.msra.mxu0 0.0
      %7490 = vmatpush.msra.mxu0 0.0
      %7491 = vmatpush.msra.mxu0 0.0
      %7492 = vmatpush.msra.mxu0 0.0
      %7493 = vmatpush.msra.mxu0 0.0
      %7494 = vmatpush.msra.mxu0 0.0
      %7495 = vmatpush.msra.mxu0 0.0
      %7496 = vmatpush.msra.mxu0 0.0
      %7497 = vmatpush.msra.mxu0 0.0
      %7498 = vmatpush.msra.mxu0 0.0
      %7499 = vmatpush.msra.mxu0 %v7479
      %7500 = vmatmul.f32.gmra.mxu0 %v7482
      %v7501 = vpop.f32.mrf.mxu0
      %v7502 = vadd.f32 0.0, %v7501
      %7503 = vdwg.mxu0
      %7504 = vrot.lane.b32.xlu0 %v512, 104
      %v7505 = vpop.permute.xlu0 %7504
      %v7508 = vsel %vm2443, %v7222, 0
      %7510 = vmatpush.msra.mxu0 0.0
      %7511 = vmatpush.msra.mxu0 0.0
      %7512 = vmatpush.msra.mxu0 0.0
      %7513 = vmatpush.msra.mxu0 0.0
      %7514 = vmatpush.msra.mxu0 0.0
      %7515 = vmatpush.msra.mxu0 0.0
      %7516 = vmatpush.msra.mxu0 0.0
      %7517 = vmatpush.msra.mxu0 0.0
      %7518 = vmatpush.msra.mxu0 0.0
      %7519 = vmatpush.msra.mxu0 0.0
      %7520 = vmatpush.msra.mxu0 0.0
      %7521 = vmatpush.msra.mxu0 0.0
      %7522 = vmatpush.msra.mxu0 0.0
      %7523 = vmatpush.msra.mxu0 0.0
      %7524 = vmatpush.msra.mxu0 0.0
      %7525 = vmatpush.msra.mxu0 %v7505
      %7526 = vmatmul.f32.gmra.mxu0 %v7508
      %v7527 = vpop.f32.mrf.mxu0
      %v7528 = vadd.f32 0.0, %v7527
      %7529 = vdwg.mxu0
      %7530 = vrot.lane.b32.xlu0 %v515, 104
      %v7531 = vpop.permute.xlu0 %7530
      %v7534 = vsel %vm2443, %v7223, 0
      %7536 = vmatpush.msra.mxu0 0.0
      %7537 = vmatpush.msra.mxu0 0.0
      %7538 = vmatpush.msra.mxu0 0.0
      %7539 = vmatpush.msra.mxu0 0.0
      %7540 = vmatpush.msra.mxu0 0.0
      %7541 = vmatpush.msra.mxu0 0.0
      %7542 = vmatpush.msra.mxu0 0.0
      %7543 = vmatpush.msra.mxu0 0.0
      %7544 = vmatpush.msra.mxu0 0.0
      %7545 = vmatpush.msra.mxu0 0.0
      %7546 = vmatpush.msra.mxu0 0.0
      %7547 = vmatpush.msra.mxu0 0.0
      %7548 = vmatpush.msra.mxu0 0.0
      %7549 = vmatpush.msra.mxu0 0.0
      %7550 = vmatpush.msra.mxu0 0.0
      %7551 = vmatpush.msra.mxu0 %v7531
      %7552 = vmatmul.f32.gmra.mxu0 %v7534
      %v7553 = vpop.f32.mrf.mxu0
      %v7554 = vadd.f32 0.0, %v7553
      %7555 = vdwg.mxu0
      %7556 = vrot.lane.b32.xlu0 %v518, 104
      %v7557 = vpop.permute.xlu0 %7556
      %v7560 = vsel %vm2443, %v7224, 0
      %7562 = vmatpush.msra.mxu0 0.0
      %7563 = vmatpush.msra.mxu0 0.0
      %7564 = vmatpush.msra.mxu0 0.0
      %7565 = vmatpush.msra.mxu0 0.0
      %7566 = vmatpush.msra.mxu0 0.0
      %7567 = vmatpush.msra.mxu0 0.0
      %7568 = vmatpush.msra.mxu0 0.0
      %7569 = vmatpush.msra.mxu0 0.0
      %7570 = vmatpush.msra.mxu0 0.0
      %7571 = vmatpush.msra.mxu0 0.0
      %7572 = vmatpush.msra.mxu0 0.0
      %7573 = vmatpush.msra.mxu0 0.0
      %7574 = vmatpush.msra.mxu0 0.0
      %7575 = vmatpush.msra.mxu0 0.0
      %7576 = vmatpush.msra.mxu0 0.0
      %7577 = vmatpush.msra.mxu0 %v7557
      %7578 = vmatmul.f32.gmra.mxu0 %v7560
      %v7579 = vpop.f32.mrf.mxu0
      %v7580 = vadd.f32 0.0, %v7579
      %7581 = vdwg.mxu0
      %7582 = vrot.lane.b32.xlu0 %v521, 104
      %v7583 = vpop.permute.xlu0 %7582
      %v7586 = vsel %vm2443, %v7225, 0
      %7588 = vmatpush.msra.mxu0 0.0
      %7589 = vmatpush.msra.mxu0 0.0
      %7590 = vmatpush.msra.mxu0 0.0
      %7591 = vmatpush.msra.mxu0 0.0
      %7592 = vmatpush.msra.mxu0 0.0
      %7593 = vmatpush.msra.mxu0 0.0
      %7594 = vmatpush.msra.mxu0 0.0
      %7595 = vmatpush.msra.mxu0 0.0
      %7596 = vmatpush.msra.mxu0 0.0
      %7597 = vmatpush.msra.mxu0 0.0
      %7598 = vmatpush.msra.mxu0 0.0
      %7599 = vmatpush.msra.mxu0 0.0
      %7600 = vmatpush.msra.mxu0 0.0
      %7601 = vmatpush.msra.mxu0 0.0
      %7602 = vmatpush.msra.mxu0 0.0
      %7603 = vmatpush.msra.mxu0 %v7583
      %7604 = vmatmul.f32.gmra.mxu0 %v7586
      %v7605 = vpop.f32.mrf.mxu0
      %v7606 = vadd.f32 0.0, %v7605
      %7607 = vdwg.mxu0
      %7608 = vrot.lane.b32.xlu0 %v524, 104
      %v7609 = vpop.permute.xlu0 %7608
      %v7612 = vsel %vm2443, %v7226, 0
      %7614 = vmatpush.msra.mxu0 0.0
      %7615 = vmatpush.msra.mxu0 0.0
      %7616 = vmatpush.msra.mxu0 0.0
      %7617 = vmatpush.msra.mxu0 0.0
      %7618 = vmatpush.msra.mxu0 0.0
      %7619 = vmatpush.msra.mxu0 0.0
      %7620 = vmatpush.msra.mxu0 0.0
      %7621 = vmatpush.msra.mxu0 0.0
      %7622 = vmatpush.msra.mxu0 0.0
      %7623 = vmatpush.msra.mxu0 0.0
      %7624 = vmatpush.msra.mxu0 0.0
      %7625 = vmatpush.msra.mxu0 0.0
      %7626 = vmatpush.msra.mxu0 0.0
      %7627 = vmatpush.msra.mxu0 0.0
      %7628 = vmatpush.msra.mxu0 0.0
      %7629 = vmatpush.msra.mxu0 %v7609
      %7630 = vmatmul.f32.gmra.mxu0 %v7612
      %v7631 = vpop.f32.mrf.mxu0
      %v7632 = vadd.f32 0.0, %v7631
      %7633 = vdwg.mxu0
      %7634 = vrot.lane.b32.xlu0 %v527, 104
      %v7635 = vpop.permute.xlu0 %7634
      %v7638 = vsel %vm2443, %v7227, 0
      %7640 = vmatpush.msra.mxu0 0.0
      %7641 = vmatpush.msra.mxu0 0.0
      %7642 = vmatpush.msra.mxu0 0.0
      %7643 = vmatpush.msra.mxu0 0.0
      %7644 = vmatpush.msra.mxu0 0.0
      %7645 = vmatpush.msra.mxu0 0.0
      %7646 = vmatpush.msra.mxu0 0.0
      %7647 = vmatpush.msra.mxu0 0.0
      %7648 = vmatpush.msra.mxu0 0.0
      %7649 = vmatpush.msra.mxu0 0.0
      %7650 = vmatpush.msra.mxu0 0.0
      %7651 = vmatpush.msra.mxu0 0.0
      %7652 = vmatpush.msra.mxu0 0.0
      %7653 = vmatpush.msra.mxu0 0.0
      %7654 = vmatpush.msra.mxu0 0.0
      %7655 = vmatpush.msra.mxu0 %v7635
      %7656 = vmatmul.f32.gmra.mxu0 %v7638
      %v7657 = vpop.f32.mrf.mxu0
      %v7658 = vadd.f32 0.0, %v7657
      %7659 = vdwg.mxu0
      %7660 = vrot.lane.b32.xlu0 %v530, 104
      %v7661 = vpop.permute.xlu0 %7660
      %v7664 = vsel %vm2443, %v7228, 0
      %7666 = vmatpush.msra.mxu0 0.0
      %7667 = vmatpush.msra.mxu0 0.0
      %7668 = vmatpush.msra.mxu0 0.0
      %7669 = vmatpush.msra.mxu0 0.0
      %7670 = vmatpush.msra.mxu0 0.0
      %7671 = vmatpush.msra.mxu0 0.0
      %7672 = vmatpush.msra.mxu0 0.0
      %7673 = vmatpush.msra.mxu0 0.0
      %7674 = vmatpush.msra.mxu0 0.0
      %7675 = vmatpush.msra.mxu0 0.0
      %7676 = vmatpush.msra.mxu0 0.0
      %7677 = vmatpush.msra.mxu0 0.0
      %7678 = vmatpush.msra.mxu0 0.0
      %7679 = vmatpush.msra.mxu0 0.0
      %7680 = vmatpush.msra.mxu0 0.0
      %7681 = vmatpush.msra.mxu0 %v7661
      %7682 = vmatmul.f32.gmra.mxu0 %v7664
      %v7683 = vpop.f32.mrf.mxu0
      %v7684 = vadd.f32 0.0, %v7683
      %7685 = vdwg.mxu0
      %7686 = vrot.lane.b32.xlu0 %v533, 104
      %v7687 = vpop.permute.xlu0 %7686
      %v7690 = vsel %vm2443, %v7229, 0
      %7692 = vmatpush.msra.mxu0 0.0
      %7693 = vmatpush.msra.mxu0 0.0
      %7694 = vmatpush.msra.mxu0 0.0
      %7695 = vmatpush.msra.mxu0 0.0
      %7696 = vmatpush.msra.mxu0 0.0
      %7697 = vmatpush.msra.mxu0 0.0
      %7698 = vmatpush.msra.mxu0 0.0
      %7699 = vmatpush.msra.mxu0 0.0
      %7700 = vmatpush.msra.mxu0 0.0
      %7701 = vmatpush.msra.mxu0 0.0
      %7702 = vmatpush.msra.mxu0 0.0
      %7703 = vmatpush.msra.mxu0 0.0
      %7704 = vmatpush.msra.mxu0 0.0
      %7705 = vmatpush.msra.mxu0 0.0
      %7706 = vmatpush.msra.mxu0 0.0
      %7707 = vmatpush.msra.mxu0 %v7687
      %7708 = vmatmul.f32.gmra.mxu0 %v7690
      %v7709 = vpop.f32.mrf.mxu0
      %v7710 = vadd.f32 0.0, %v7709
      %7711 = vdwg.mxu0
      %7712 = vrot.lane.b32.xlu0 %v536, 104
      %v7713 = vpop.permute.xlu0 %7712
      %v7716 = vsel %vm2443, %v7230, 0
      %7718 = vmatpush.msra.mxu0 0.0
      %7719 = vmatpush.msra.mxu0 0.0
      %7720 = vmatpush.msra.mxu0 0.0
      %7721 = vmatpush.msra.mxu0 0.0
      %7722 = vmatpush.msra.mxu0 0.0
      %7723 = vmatpush.msra.mxu0 0.0
      %7724 = vmatpush.msra.mxu0 0.0
      %7725 = vmatpush.msra.mxu0 0.0
      %7726 = vmatpush.msra.mxu0 0.0
      %7727 = vmatpush.msra.mxu0 0.0
      %7728 = vmatpush.msra.mxu0 0.0
      %7729 = vmatpush.msra.mxu0 0.0
      %7730 = vmatpush.msra.mxu0 0.0
      %7731 = vmatpush.msra.mxu0 0.0
      %7732 = vmatpush.msra.mxu0 0.0
      %7733 = vmatpush.msra.mxu0 %v7713
      %7734 = vmatmul.f32.gmra.mxu0 %v7716
      %v7735 = vpop.f32.mrf.mxu0
      %v7736 = vadd.f32 0.0, %v7735
      %7737 = vdwg.mxu0
      %7738 = vrot.lane.b32.xlu0 %v539, 104
      %v7739 = vpop.permute.xlu0 %7738
      %v7742 = vsel %vm2443, %v7231, 0
      %7744 = vmatpush.msra.mxu0 0.0
      %7745 = vmatpush.msra.mxu0 0.0
      %7746 = vmatpush.msra.mxu0 0.0
      %7747 = vmatpush.msra.mxu0 0.0
      %7748 = vmatpush.msra.mxu0 0.0
      %7749 = vmatpush.msra.mxu0 0.0
      %7750 = vmatpush.msra.mxu0 0.0
      %7751 = vmatpush.msra.mxu0 0.0
      %7752 = vmatpush.msra.mxu0 0.0
      %7753 = vmatpush.msra.mxu0 0.0
      %7754 = vmatpush.msra.mxu0 0.0
      %7755 = vmatpush.msra.mxu0 0.0
      %7756 = vmatpush.msra.mxu0 0.0
      %7757 = vmatpush.msra.mxu0 0.0
      %7758 = vmatpush.msra.mxu0 0.0
      %7759 = vmatpush.msra.mxu0 %v7739
      %7760 = vmatmul.f32.gmra.mxu0 %v7742
      %v7761 = vpop.f32.mrf.mxu0
      %v7762 = vadd.f32 0.0, %v7761
      %7763 = vdwg.mxu0
      %7764 = vrot.lane.b32.xlu0 %v542, 104
      %v7765 = vpop.permute.xlu0 %7764
      %v7768 = vsel %vm2443, %v7232, 0
      %7770 = vmatpush.msra.mxu0 0.0
      %7771 = vmatpush.msra.mxu0 0.0
      %7772 = vmatpush.msra.mxu0 0.0
      %7773 = vmatpush.msra.mxu0 0.0
      %7774 = vmatpush.msra.mxu0 0.0
      %7775 = vmatpush.msra.mxu0 0.0
      %7776 = vmatpush.msra.mxu0 0.0
      %7777 = vmatpush.msra.mxu0 0.0
      %7778 = vmatpush.msra.mxu0 0.0
      %7779 = vmatpush.msra.mxu0 0.0
      %7780 = vmatpush.msra.mxu0 0.0
      %7781 = vmatpush.msra.mxu0 0.0
      %7782 = vmatpush.msra.mxu0 0.0
      %7783 = vmatpush.msra.mxu0 0.0
      %7784 = vmatpush.msra.mxu0 0.0
      %7785 = vmatpush.msra.mxu0 %v7765
      %7786 = vmatmul.f32.gmra.mxu0 %v7768
      %v7787 = vpop.f32.mrf.mxu0
      %v7788 = vadd.f32 0.0, %v7787
      %7789 = vdwg.mxu0
      %7790 = vrot.lane.b32.xlu0 %v545, 104
      %v7791 = vpop.permute.xlu0 %7790
      %v7794 = vsel %vm2443, %v7233, 0
      %7796 = vmatpush.msra.mxu0 0.0
      %7797 = vmatpush.msra.mxu0 0.0
      %7798 = vmatpush.msra.mxu0 0.0
      %7799 = vmatpush.msra.mxu0 0.0
      %7800 = vmatpush.msra.mxu0 0.0
      %7801 = vmatpush.msra.mxu0 0.0
      %7802 = vmatpush.msra.mxu0 0.0
      %7803 = vmatpush.msra.mxu0 0.0
      %7804 = vmatpush.msra.mxu0 0.0
      %7805 = vmatpush.msra.mxu0 0.0
      %7806 = vmatpush.msra.mxu0 0.0
      %7807 = vmatpush.msra.mxu0 0.0
      %7808 = vmatpush.msra.mxu0 0.0
      %7809 = vmatpush.msra.mxu0 0.0
      %7810 = vmatpush.msra.mxu0 0.0
      %7811 = vmatpush.msra.mxu0 %v7791
      %7812 = vmatmul.f32.gmra.mxu0 %v7794
      %v7813 = vpop.f32.mrf.mxu0
      %v7814 = vadd.f32 0.0, %v7813
      %7815 = vdwg.mxu0
      %7816 = vrot.lane.b32.xlu0 %v548, 104
      %v7817 = vpop.permute.xlu0 %7816
      %v7820 = vsel %vm2443, %v7234, 0
      %7822 = vmatpush.msra.mxu0 0.0
      %7823 = vmatpush.msra.mxu0 0.0
      %7824 = vmatpush.msra.mxu0 0.0
      %7825 = vmatpush.msra.mxu0 0.0
      %7826 = vmatpush.msra.mxu0 0.0
      %7827 = vmatpush.msra.mxu0 0.0
      %7828 = vmatpush.msra.mxu0 0.0
      %7829 = vmatpush.msra.mxu0 0.0
      %7830 = vmatpush.msra.mxu0 0.0
      %7831 = vmatpush.msra.mxu0 0.0
      %7832 = vmatpush.msra.mxu0 0.0
      %7833 = vmatpush.msra.mxu0 0.0
      %7834 = vmatpush.msra.mxu0 0.0
      %7835 = vmatpush.msra.mxu0 0.0
      %7836 = vmatpush.msra.mxu0 0.0
      %7837 = vmatpush.msra.mxu0 %v7817
      %7838 = vmatmul.f32.gmra.mxu0 %v7820
      %v7839 = vpop.f32.mrf.mxu0
      %v7840 = vadd.f32 0.0, %v7839
      %7841 = vdwg.mxu0
      %7842 = vrot.lane.b32.xlu0 %v551, 104
      %v7843 = vpop.permute.xlu0 %7842
      %v7846 = vsel %vm2443, %v7235, 0
      %7848 = vmatpush.msra.mxu0 0.0
      %7849 = vmatpush.msra.mxu0 0.0
      %7850 = vmatpush.msra.mxu0 0.0
      %7851 = vmatpush.msra.mxu0 0.0
      %7852 = vmatpush.msra.mxu0 0.0
      %7853 = vmatpush.msra.mxu0 0.0
      %7854 = vmatpush.msra.mxu0 0.0
      %7855 = vmatpush.msra.mxu0 0.0
      %7856 = vmatpush.msra.mxu0 0.0
      %7857 = vmatpush.msra.mxu0 0.0
      %7858 = vmatpush.msra.mxu0 0.0
      %7859 = vmatpush.msra.mxu0 0.0
      %7860 = vmatpush.msra.mxu0 0.0
      %7861 = vmatpush.msra.mxu0 0.0
      %7862 = vmatpush.msra.mxu0 0.0
      %7863 = vmatpush.msra.mxu0 %v7843
      %7864 = vmatmul.f32.gmra.mxu0 %v7846
      %v7865 = vpop.f32.mrf.mxu0
      %v7866 = vadd.f32 0.0, %v7865
      %7867 = vdwg.mxu0
      %7868 = vrot.lane.b32.xlu0 %v554, 104
      %v7869 = vpop.permute.xlu0 %7868
      %v7872 = vsel %vm2443, %v7236, 0
      %7874 = vmatpush.msra.mxu0 0.0
      %7875 = vmatpush.msra.mxu0 0.0
      %7876 = vmatpush.msra.mxu0 0.0
      %7877 = vmatpush.msra.mxu0 0.0
      %7878 = vmatpush.msra.mxu0 0.0
      %7879 = vmatpush.msra.mxu0 0.0
      %7880 = vmatpush.msra.mxu0 0.0
      %7881 = vmatpush.msra.mxu0 0.0
      %7882 = vmatpush.msra.mxu0 0.0
      %7883 = vmatpush.msra.mxu0 0.0
      %7884 = vmatpush.msra.mxu0 0.0
      %7885 = vmatpush.msra.mxu0 0.0
      %7886 = vmatpush.msra.mxu0 0.0
      %7887 = vmatpush.msra.mxu0 0.0
      %7888 = vmatpush.msra.mxu0 0.0
      %7889 = vmatpush.msra.mxu0 %v7869
      %7890 = vmatmul.f32.gmra.mxu0 %v7872
      %v7891 = vpop.f32.mrf.mxu0
      %v7892 = vadd.f32 0.0, %v7891
      %7893 = vdwg.mxu0
      %7894 = vrot.lane.b32.xlu0 %v557, 104
      %v7895 = vpop.permute.xlu0 %7894
      %v7898 = vsel %vm2443, %v7237, 0
      %7900 = vmatpush.msra.mxu0 0.0
      %7901 = vmatpush.msra.mxu0 0.0
      %7902 = vmatpush.msra.mxu0 0.0
      %7903 = vmatpush.msra.mxu0 0.0
      %7904 = vmatpush.msra.mxu0 0.0
      %7905 = vmatpush.msra.mxu0 0.0
      %7906 = vmatpush.msra.mxu0 0.0
      %7907 = vmatpush.msra.mxu0 0.0
      %7908 = vmatpush.msra.mxu0 0.0
      %7909 = vmatpush.msra.mxu0 0.0
      %7910 = vmatpush.msra.mxu0 0.0
      %7911 = vmatpush.msra.mxu0 0.0
      %7912 = vmatpush.msra.mxu0 0.0
      %7913 = vmatpush.msra.mxu0 0.0
      %7914 = vmatpush.msra.mxu0 0.0
      %7915 = vmatpush.msra.mxu0 %v7895
      %7916 = vmatmul.f32.gmra.mxu0 %v7898
      %v7917 = vpop.f32.mrf.mxu0
      %v7918 = vadd.f32 0.0, %v7917
      %7919 = vdwg.mxu0
      %7920 = vrot.lane.b32.xlu0 %v560, 104
      %v7921 = vpop.permute.xlu0 %7920
      %v7924 = vsel %vm2443, %v7238, 0
      %7926 = vmatpush.msra.mxu0 0.0
      %7927 = vmatpush.msra.mxu0 0.0
      %7928 = vmatpush.msra.mxu0 0.0
      %7929 = vmatpush.msra.mxu0 0.0
      %7930 = vmatpush.msra.mxu0 0.0
      %7931 = vmatpush.msra.mxu0 0.0
      %7932 = vmatpush.msra.mxu0 0.0
      %7933 = vmatpush.msra.mxu0 0.0
      %7934 = vmatpush.msra.mxu0 0.0
      %7935 = vmatpush.msra.mxu0 0.0
      %7936 = vmatpush.msra.mxu0 0.0
      %7937 = vmatpush.msra.mxu0 0.0
      %7938 = vmatpush.msra.mxu0 0.0
      %7939 = vmatpush.msra.mxu0 0.0
      %7940 = vmatpush.msra.mxu0 0.0
      %7941 = vmatpush.msra.mxu0 %v7921
      %7942 = vmatmul.f32.gmra.mxu0 %v7924
      %v7943 = vpop.f32.mrf.mxu0
      %v7944 = vadd.f32 0.0, %v7943
      %7945 = vdwg.mxu0
      %7946 = vrot.lane.b32.xlu0 %v563, 104
      %v7947 = vpop.permute.xlu0 %7946
      %v7950 = vsel %vm2443, %v7239, 0
      %7952 = vmatpush.msra.mxu0 0.0
      %7953 = vmatpush.msra.mxu0 0.0
      %7954 = vmatpush.msra.mxu0 0.0
      %7955 = vmatpush.msra.mxu0 0.0
      %7956 = vmatpush.msra.mxu0 0.0
      %7957 = vmatpush.msra.mxu0 0.0
      %7958 = vmatpush.msra.mxu0 0.0
      %7959 = vmatpush.msra.mxu0 0.0
      %7960 = vmatpush.msra.mxu0 0.0
      %7961 = vmatpush.msra.mxu0 0.0
      %7962 = vmatpush.msra.mxu0 0.0
      %7963 = vmatpush.msra.mxu0 0.0
      %7964 = vmatpush.msra.mxu0 0.0
      %7965 = vmatpush.msra.mxu0 0.0
      %7966 = vmatpush.msra.mxu0 0.0
      %7967 = vmatpush.msra.mxu0 %v7947
      %7968 = vmatmul.f32.gmra.mxu0 %v7950
      %v7969 = vpop.f32.mrf.mxu0
      %v7970 = vadd.f32 0.0, %v7969
      %7971 = vdwg.mxu0
      %7972 = vrot.lane.b32.xlu0 %v566, 104
      %v7973 = vpop.permute.xlu0 %7972
      %v7976 = vsel %vm2443, %v7240, 0
      %7978 = vmatpush.msra.mxu0 0.0
      %7979 = vmatpush.msra.mxu0 0.0
      %7980 = vmatpush.msra.mxu0 0.0
      %7981 = vmatpush.msra.mxu0 0.0
      %7982 = vmatpush.msra.mxu0 0.0
      %7983 = vmatpush.msra.mxu0 0.0
      %7984 = vmatpush.msra.mxu0 0.0
      %7985 = vmatpush.msra.mxu0 0.0
      %7986 = vmatpush.msra.mxu0 0.0
      %7987 = vmatpush.msra.mxu0 0.0
      %7988 = vmatpush.msra.mxu0 0.0
      %7989 = vmatpush.msra.mxu0 0.0
      %7990 = vmatpush.msra.mxu0 0.0
      %7991 = vmatpush.msra.mxu0 0.0
      %7992 = vmatpush.msra.mxu0 0.0
      %7993 = vmatpush.msra.mxu0 %v7973
      %7994 = vmatmul.f32.gmra.mxu0 %v7976
      %v7995 = vpop.f32.mrf.mxu0
      %v7996 = vadd.f32 0.0, %v7995
      %7997 = vdwg.mxu0
      %7998 = vrot.lane.b32.xlu0 %v569, 104
      %v7999 = vpop.permute.xlu0 %7998
      %v8002 = vsel %vm2443, %v7241, 0
      %8004 = vmatpush.msra.mxu0 0.0
      %8005 = vmatpush.msra.mxu0 0.0
      %8006 = vmatpush.msra.mxu0 0.0
      %8007 = vmatpush.msra.mxu0 0.0
      %8008 = vmatpush.msra.mxu0 0.0
      %8009 = vmatpush.msra.mxu0 0.0
      %8010 = vmatpush.msra.mxu0 0.0
      %8011 = vmatpush.msra.mxu0 0.0
      %8012 = vmatpush.msra.mxu0 0.0
      %8013 = vmatpush.msra.mxu0 0.0
      %8014 = vmatpush.msra.mxu0 0.0
      %8015 = vmatpush.msra.mxu0 0.0
      %8016 = vmatpush.msra.mxu0 0.0
      %8017 = vmatpush.msra.mxu0 0.0
      %8018 = vmatpush.msra.mxu0 0.0
      %8019 = vmatpush.msra.mxu0 %v7999
      %8020 = vmatmul.f32.gmra.mxu0 %v8002
      %v8021 = vpop.f32.mrf.mxu0
      %v8022 = vadd.f32 0.0, %v8021
      %8023 = vdwg.mxu0
      %8024 = vrot.lane.b32.xlu0 %v572, 104
      %v8025 = vpop.permute.xlu0 %8024
      %v8028 = vsel %vm2443, %v7242, 0
      %8030 = vmatpush.msra.mxu0 0.0
      %8031 = vmatpush.msra.mxu0 0.0
      %8032 = vmatpush.msra.mxu0 0.0
      %8033 = vmatpush.msra.mxu0 0.0
      %8034 = vmatpush.msra.mxu0 0.0
      %8035 = vmatpush.msra.mxu0 0.0
      %8036 = vmatpush.msra.mxu0 0.0
      %8037 = vmatpush.msra.mxu0 0.0
      %8038 = vmatpush.msra.mxu0 0.0
      %8039 = vmatpush.msra.mxu0 0.0
      %8040 = vmatpush.msra.mxu0 0.0
      %8041 = vmatpush.msra.mxu0 0.0
      %8042 = vmatpush.msra.mxu0 0.0
      %8043 = vmatpush.msra.mxu0 0.0
      %8044 = vmatpush.msra.mxu0 0.0
      %8045 = vmatpush.msra.mxu0 %v8025
      %8046 = vmatmul.f32.gmra.mxu0 %v8028
      %v8047 = vpop.f32.mrf.mxu0
      %v8048 = vadd.f32 0.0, %v8047
      %8049 = vdwg.mxu0
      %8050 = vrot.lane.b32.xlu0 %v575, 104
      %v8051 = vpop.permute.xlu0 %8050
      %v8054 = vsel %vm2443, %v7243, 0
      %8056 = vmatpush.msra.mxu0 0.0
      %8057 = vmatpush.msra.mxu0 0.0
      %8058 = vmatpush.msra.mxu0 0.0
      %8059 = vmatpush.msra.mxu0 0.0
      %8060 = vmatpush.msra.mxu0 0.0
      %8061 = vmatpush.msra.mxu0 0.0
      %8062 = vmatpush.msra.mxu0 0.0
      %8063 = vmatpush.msra.mxu0 0.0
      %8064 = vmatpush.msra.mxu0 0.0
      %8065 = vmatpush.msra.mxu0 0.0
      %8066 = vmatpush.msra.mxu0 0.0
      %8067 = vmatpush.msra.mxu0 0.0
      %8068 = vmatpush.msra.mxu0 0.0
      %8069 = vmatpush.msra.mxu0 0.0
      %8070 = vmatpush.msra.mxu0 0.0
      %8071 = vmatpush.msra.mxu0 %v8051
      %8072 = vmatmul.f32.gmra.mxu0 %v8054
      %v8073 = vpop.f32.mrf.mxu0
      %v8074 = vadd.f32 0.0, %v8073
      %8075 = vdwg.mxu0
      %8108 = vrot.lane.b32.xlu0 %v4229, 8
      %v8109 = vpop.permute.xlu0 %8108
      %8110 = vrot.lane.b32.xlu0 %v4256, 8
      %v8111 = vpop.permute.xlu0 %8110
      %8112 = vrot.lane.b32.xlu0 %v4283, 8
      %v8113 = vpop.permute.xlu0 %8112
      %8114 = vrot.lane.b32.xlu0 %v4310, 8
      %v8115 = vpop.permute.xlu0 %8114
      %8116 = vrot.lane.b32.xlu0 %v4337, 8
      %v8117 = vpop.permute.xlu0 %8116
      %8118 = vrot.lane.b32.xlu0 %v4364, 8
      %v8119 = vpop.permute.xlu0 %8118
      %8120 = vrot.lane.b32.xlu0 %v4391, 8
      %v8121 = vpop.permute.xlu0 %8120
      %8122 = vrot.lane.b32.xlu0 %v4418, 8
      %v8123 = vpop.permute.xlu0 %8122
      %8124 = vrot.lane.b32.xlu0 %v4445, 8
      %v8125 = vpop.permute.xlu0 %8124
      %8126 = vrot.lane.b32.xlu0 %v4472, 8
      %v8127 = vpop.permute.xlu0 %8126
      %8128 = vrot.lane.b32.xlu0 %v4499, 8
      %v8129 = vpop.permute.xlu0 %8128
      %8130 = vrot.lane.b32.xlu0 %v4526, 8
      %v8131 = vpop.permute.xlu0 %8130
      %8132 = vrot.lane.b32.xlu0 %v4553, 8
      %v8133 = vpop.permute.xlu0 %8132
      %8134 = vrot.lane.b32.xlu0 %v4580, 8
      %v8135 = vpop.permute.xlu0 %8134
      %8136 = vrot.lane.b32.xlu0 %v4607, 8
      %v8137 = vpop.permute.xlu0 %8136
      %8138 = vrot.lane.b32.xlu0 %v4634, 8
      %v8139 = vpop.permute.xlu0 %8138
      %8140 = vrot.lane.b32.xlu0 %v4661, 8
      %v8141 = vpop.permute.xlu0 %8140
      %8142 = vrot.lane.b32.xlu0 %v4688, 8
      %v8143 = vpop.permute.xlu0 %8142
      %8144 = vrot.lane.b32.xlu0 %v4715, 8
      %v8145 = vpop.permute.xlu0 %8144
      %8146 = vrot.lane.b32.xlu0 %v4742, 8
      %v8147 = vpop.permute.xlu0 %8146
      %8148 = vrot.lane.b32.xlu0 %v4769, 8
      %v8149 = vpop.permute.xlu0 %8148
      %8150 = vrot.lane.b32.xlu0 %v4796, 8
      %v8151 = vpop.permute.xlu0 %8150
      %8152 = vrot.lane.b32.xlu0 %v4823, 8
      %v8153 = vpop.permute.xlu0 %8152
      %8154 = vrot.lane.b32.xlu0 %v4850, 8
      %v8155 = vpop.permute.xlu0 %8154
      %8156 = vrot.lane.b32.xlu0 %v4877, 8
      %v8157 = vpop.permute.xlu0 %8156
      %8158 = vrot.lane.b32.xlu0 %v4904, 8
      %v8159 = vpop.permute.xlu0 %8158
      %8160 = vrot.lane.b32.xlu0 %v4931, 8
      %v8161 = vpop.permute.xlu0 %8160
      %8162 = vrot.lane.b32.xlu0 %v4958, 8
      %v8163 = vpop.permute.xlu0 %8162
      %8164 = vrot.lane.b32.xlu0 %v4985, 8
      %v8165 = vpop.permute.xlu0 %8164
      %8166 = vrot.lane.b32.xlu0 %v5012, 8
      %v8167 = vpop.permute.xlu0 %8166
      %8168 = vrot.lane.b32.xlu0 %v5039, 8
      %v8169 = vpop.permute.xlu0 %8168
      %8170 = vrot.lane.b32.xlu0 %v5066, 8
      %v8171 = vpop.permute.xlu0 %8170
      %8236 = vrot.lane.b32.xlu0 %v5764, 16
      %v8237 = vpop.permute.xlu0 %8236
      %8238 = vrot.lane.b32.xlu0 %v5790, 16
      %v8239 = vpop.permute.xlu0 %8238
      %8240 = vrot.lane.b32.xlu0 %v5816, 16
      %v8241 = vpop.permute.xlu0 %8240
      %8242 = vrot.lane.b32.xlu0 %v5842, 16
      %v8243 = vpop.permute.xlu0 %8242
      %8244 = vrot.lane.b32.xlu0 %v5868, 16
      %v8245 = vpop.permute.xlu0 %8244
      %8246 = vrot.lane.b32.xlu0 %v5894, 16
      %v8247 = vpop.permute.xlu0 %8246
      %8248 = vrot.lane.b32.xlu0 %v5920, 16
      %v8249 = vpop.permute.xlu0 %8248
      %8250 = vrot.lane.b32.xlu0 %v5946, 16
      %v8251 = vpop.permute.xlu0 %8250
      %8252 = vrot.lane.b32.xlu0 %v5972, 16
      %v8253 = vpop.permute.xlu0 %8252
      %8254 = vrot.lane.b32.xlu0 %v5998, 16
      %v8255 = vpop.permute.xlu0 %8254
      %8256 = vrot.lane.b32.xlu0 %v6024, 16
      %v8257 = vpop.permute.xlu0 %8256
      %8258 = vrot.lane.b32.xlu0 %v6050, 16
      %v8259 = vpop.permute.xlu0 %8258
      %8260 = vrot.lane.b32.xlu0 %v6076, 16
      %v8261 = vpop.permute.xlu0 %8260
      %8262 = vrot.lane.b32.xlu0 %v6102, 16
      %v8263 = vpop.permute.xlu0 %8262
      %8264 = vrot.lane.b32.xlu0 %v6128, 16
      %v8265 = vpop.permute.xlu0 %8264
      %8266 = vrot.lane.b32.xlu0 %v6154, 16
      %v8267 = vpop.permute.xlu0 %8266
      %8268 = vrot.lane.b32.xlu0 %v6180, 16
      %v8269 = vpop.permute.xlu0 %8268
      %8270 = vrot.lane.b32.xlu0 %v6206, 16
      %v8271 = vpop.permute.xlu0 %8270
      %8272 = vrot.lane.b32.xlu0 %v6232, 16
      %v8273 = vpop.permute.xlu0 %8272
      %8274 = vrot.lane.b32.xlu0 %v6258, 16
      %v8275 = vpop.permute.xlu0 %8274
      %8276 = vrot.lane.b32.xlu0 %v6284, 16
      %v8277 = vpop.permute.xlu0 %8276
      %8278 = vrot.lane.b32.xlu0 %v6310, 16
      %v8279 = vpop.permute.xlu0 %8278
      %8280 = vrot.lane.b32.xlu0 %v6336, 16
      %v8281 = vpop.permute.xlu0 %8280
      %8282 = vrot.lane.b32.xlu0 %v6362, 16
      %v8283 = vpop.permute.xlu0 %8282
      %8284 = vrot.lane.b32.xlu0 %v6388, 16
      %v8285 = vpop.permute.xlu0 %8284
      %8286 = vrot.lane.b32.xlu0 %v6414, 16
      %v8287 = vpop.permute.xlu0 %8286
      %8288 = vrot.lane.b32.xlu0 %v6440, 16
      %v8289 = vpop.permute.xlu0 %8288
      %8290 = vrot.lane.b32.xlu0 %v6466, 16
      %v8291 = vpop.permute.xlu0 %8290
      %8292 = vrot.lane.b32.xlu0 %v6492, 16
      %v8293 = vpop.permute.xlu0 %8292
      %8294 = vrot.lane.b32.xlu0 %v6518, 16
      %v8295 = vpop.permute.xlu0 %8294
      %8296 = vrot.lane.b32.xlu0 %v6544, 16
      %v8297 = vpop.permute.xlu0 %8296
      %8298 = vrot.lane.b32.xlu0 %v6570, 16
      %v8299 = vpop.permute.xlu0 %8298
      %8364 = vrot.lane.b32.xlu0 %v7268, 24
      %v8365 = vpop.permute.xlu0 %8364
      %8366 = vrot.lane.b32.xlu0 %v7294, 24
      %v8367 = vpop.permute.xlu0 %8366
      %8368 = vrot.lane.b32.xlu0 %v7320, 24
      %v8369 = vpop.permute.xlu0 %8368
      %8370 = vrot.lane.b32.xlu0 %v7346, 24
      %v8371 = vpop.permute.xlu0 %8370
      %8372 = vrot.lane.b32.xlu0 %v7372, 24
      %v8373 = vpop.permute.xlu0 %8372
      %8374 = vrot.lane.b32.xlu0 %v7398, 24
      %v8375 = vpop.permute.xlu0 %8374
      %8376 = vrot.lane.b32.xlu0 %v7424, 24
      %v8377 = vpop.permute.xlu0 %8376
      %8378 = vrot.lane.b32.xlu0 %v7450, 24
      %v8379 = vpop.permute.xlu0 %8378
      %8380 = vrot.lane.b32.xlu0 %v7476, 24
      %v8381 = vpop.permute.xlu0 %8380
      %8382 = vrot.lane.b32.xlu0 %v7502, 24
      %v8383 = vpop.permute.xlu0 %8382
      %8384 = vrot.lane.b32.xlu0 %v7528, 24
      %v8385 = vpop.permute.xlu0 %8384
      %8386 = vrot.lane.b32.xlu0 %v7554, 24
      %v8387 = vpop.permute.xlu0 %8386
      %8388 = vrot.lane.b32.xlu0 %v7580, 24
      %v8389 = vpop.permute.xlu0 %8388
      %8390 = vrot.lane.b32.xlu0 %v7606, 24
      %v8391 = vpop.permute.xlu0 %8390
      %8392 = vrot.lane.b32.xlu0 %v7632, 24
      %v8393 = vpop.permute.xlu0 %8392
      %8394 = vrot.lane.b32.xlu0 %v7658, 24
      %v8395 = vpop.permute.xlu0 %8394
      %8396 = vrot.lane.b32.xlu0 %v7684, 24
      %v8397 = vpop.permute.xlu0 %8396
      %8398 = vrot.lane.b32.xlu0 %v7710, 24
      %v8399 = vpop.permute.xlu0 %8398
      %8400 = vrot.lane.b32.xlu0 %v7736, 24
      %v8401 = vpop.permute.xlu0 %8400
      %8402 = vrot.lane.b32.xlu0 %v7762, 24
      %v8403 = vpop.permute.xlu0 %8402
      %8404 = vrot.lane.b32.xlu0 %v7788, 24
      %v8405 = vpop.permute.xlu0 %8404
      %8406 = vrot.lane.b32.xlu0 %v7814, 24
      %v8407 = vpop.permute.xlu0 %8406
      %8408 = vrot.lane.b32.xlu0 %v7840, 24
      %v8409 = vpop.permute.xlu0 %8408
      %8410 = vrot.lane.b32.xlu0 %v7866, 24
      %v8411 = vpop.permute.xlu0 %8410
      %8412 = vrot.lane.b32.xlu0 %v7892, 24
      %v8413 = vpop.permute.xlu0 %8412
      %8414 = vrot.lane.b32.xlu0 %v7918, 24
      %v8415 = vpop.permute.xlu0 %8414
      %8416 = vrot.lane.b32.xlu0 %v7944, 24
      %v8417 = vpop.permute.xlu0 %8416
      %8418 = vrot.lane.b32.xlu0 %v7970, 24
      %v8419 = vpop.permute.xlu0 %8418
      %8420 = vrot.lane.b32.xlu0 %v7996, 24
      %v8421 = vpop.permute.xlu0 %8420
      %8422 = vrot.lane.b32.xlu0 %v8022, 24
      %v8423 = vpop.permute.xlu0 %8422
      %8424 = vrot.lane.b32.xlu0 %v8048, 24
      %v8425 = vpop.permute.xlu0 %8424
      %8426 = vrot.lane.b32.xlu0 %v8074, 24
      %v8427 = vpop.permute.xlu0 %8426
      %v8460 = vsel %vm2443, %v2817, %v8109
      %v8461 = vsel %vm2443, %v2840, %v8111
      %v8462 = vsel %vm2443, %v2863, %v8113
      %v8463 = vsel %vm2443, %v2886, %v8115
      %v8464 = vsel %vm2443, %v2909, %v8117
      %v8465 = vsel %vm2443, %v2932, %v8119
      %v8466 = vsel %vm2443, %v2955, %v8121
      %v8467 = vsel %vm2443, %v2978, %v8123
      %v8468 = vsel %vm2443, %v3001, %v8125
      %v8469 = vsel %vm2443, %v3024, %v8127
      %v8470 = vsel %vm2443, %v3047, %v8129
      %v8471 = vsel %vm2443, %v3070, %v8131
      %v8472 = vsel %vm2443, %v3093, %v8133
      %v8473 = vsel %vm2443, %v3116, %v8135
      %v8474 = vsel %vm2443, %v3139, %v8137
      %v8475 = vsel %vm2443, %v3162, %v8139
      %v8476 = vsel %vm2443, %v3185, %v8141
      %v8477 = vsel %vm2443, %v3208, %v8143
      %v8478 = vsel %vm2443, %v3231, %v8145
      %v8479 = vsel %vm2443, %v3254, %v8147
      %v8480 = vsel %vm2443, %v3277, %v8149
      %v8481 = vsel %vm2443, %v3300, %v8151
      %v8482 = vsel %vm2443, %v3323, %v8153
      %v8483 = vsel %vm2443, %v3346, %v8155
      %v8484 = vsel %vm2443, %v3369, %v8157
      %v8485 = vsel %vm2443, %v3392, %v8159
      %v8486 = vsel %vm2443, %v3415, %v8161
      %v8487 = vsel %vm2443, %v3438, %v8163
      %v8488 = vsel %vm2443, %v3461, %v8165
      %v8489 = vsel %vm2443, %v3484, %v8167
      %v8490 = vsel %vm2443, %v3507, %v8169
      %v8491 = vsel %vm2443, %v3530, %v8171
      %vm8492 = vcmask 130048
      %v8493 = vsel %vm8492, %v8460, %v8237
      %v8494 = vsel %vm8492, %v8461, %v8239
      %v8495 = vsel %vm8492, %v8462, %v8241
      %v8496 = vsel %vm8492, %v8463, %v8243
      %v8497 = vsel %vm8492, %v8464, %v8245
      %v8498 = vsel %vm8492, %v8465, %v8247
      %v8499 = vsel %vm8492, %v8466, %v8249
      %v8500 = vsel %vm8492, %v8467, %v8251
      %v8501 = vsel %vm8492, %v8468, %v8253
      %v8502 = vsel %vm8492, %v8469, %v8255
      %v8503 = vsel %vm8492, %v8470, %v8257
      %v8504 = vsel %vm8492, %v8471, %v8259
      %v8505 = vsel %vm8492, %v8472, %v8261
      %v8506 = vsel %vm8492, %v8473, %v8263
      %v8507 = vsel %vm8492, %v8474, %v8265
      %v8508 = vsel %vm8492, %v8475, %v8267
      %v8509 = vsel %vm8492, %v8476, %v8269
      %v8510 = vsel %vm8492, %v8477, %v8271
      %v8511 = vsel %vm8492, %v8478, %v8273
      %v8512 = vsel %vm8492, %v8479, %v8275
      %v8513 = vsel %vm8492, %v8480, %v8277
      %v8514 = vsel %vm8492, %v8481, %v8279
      %v8515 = vsel %vm8492, %v8482, %v8281
      %v8516 = vsel %vm8492, %v8483, %v8283
      %v8517 = vsel %vm8492, %v8484, %v8285
      %v8518 = vsel %vm8492, %v8485, %v8287
      %v8519 = vsel %vm8492, %v8486, %v8289
      %v8520 = vsel %vm8492, %v8487, %v8291
      %v8521 = vsel %vm8492, %v8488, %v8293
      %v8522 = vsel %vm8492, %v8489, %v8295
      %v8523 = vsel %vm8492, %v8490, %v8297
      %v8524 = vsel %vm8492, %v8491, %v8299
      %vm8525 = vcmask 195584
      %v8526 = vsel %vm8525, %v8493, %v8365
      %v8527 = vsel %vm8525, %v8494, %v8367
      %v8528 = vsel %vm8525, %v8495, %v8369
      %v8529 = vsel %vm8525, %v8496, %v8371
      %v8530 = vsel %vm8525, %v8497, %v8373
      %v8531 = vsel %vm8525, %v8498, %v8375
      %v8532 = vsel %vm8525, %v8499, %v8377
      %v8533 = vsel %vm8525, %v8500, %v8379
      %v8534 = vsel %vm8525, %v8501, %v8381
      %v8535 = vsel %vm8525, %v8502, %v8383
      %v8536 = vsel %vm8525, %v8503, %v8385
      %v8537 = vsel %vm8525, %v8504, %v8387
      %v8538 = vsel %vm8525, %v8505, %v8389
      %v8539 = vsel %vm8525, %v8506, %v8391
      %v8540 = vsel %vm8525, %v8507, %v8393
      %v8541 = vsel %vm8525, %v8508, %v8395
      %v8542 = vsel %vm8525, %v8509, %v8397
      %v8543 = vsel %vm8525, %v8510, %v8399
      %v8544 = vsel %vm8525, %v8511, %v8401
      %v8545 = vsel %vm8525, %v8512, %v8403
      %v8546 = vsel %vm8525, %v8513, %v8405
      %v8547 = vsel %vm8525, %v8514, %v8407
      %v8548 = vsel %vm8525, %v8515, %v8409
      %v8549 = vsel %vm8525, %v8516, %v8411
      %v8550 = vsel %vm8525, %v8517, %v8413
      %v8551 = vsel %vm8525, %v8518, %v8415
      %v8552 = vsel %vm8525, %v8519, %v8417
      %v8553 = vsel %vm8525, %v8520, %v8419
      %v8554 = vsel %vm8525, %v8521, %v8421
      %v8555 = vsel %vm8525, %v8522, %v8423
      %v8556 = vsel %vm8525, %v8523, %v8425
      %v8557 = vsel %vm8525, %v8524, %v8427
      %v8558 = vld [vmem:[%s5] sm:$0x1]
      %v8560 = vperm.slane %v8558, 0
      %v8562 = vadd.f32 %v8526, %v8560
      %v8563 = vadd.f32 %v8527, %v8560
      %v8564 = vadd.f32 %v8528, %v8560
      %v8565 = vadd.f32 %v8529, %v8560
      %v8566 = vadd.f32 %v8530, %v8560
      %v8567 = vadd.f32 %v8531, %v8560
      %v8568 = vadd.f32 %v8532, %v8560
      %v8569 = vadd.f32 %v8533, %v8560
      %v8570 = vadd.f32 %v8534, %v8560
      %v8571 = vadd.f32 %v8535, %v8560
      %v8572 = vadd.f32 %v8536, %v8560
      %v8573 = vadd.f32 %v8537, %v8560
      %v8574 = vadd.f32 %v8538, %v8560
      %v8575 = vadd.f32 %v8539, %v8560
      %v8576 = vadd.f32 %v8540, %v8560
      %v8577 = vadd.f32 %v8541, %v8560
      %v8578 = vadd.f32 %v8542, %v8560
      %v8579 = vadd.f32 %v8543, %v8560
      %v8580 = vadd.f32 %v8544, %v8560
      %v8581 = vadd.f32 %v8545, %v8560
      %v8582 = vadd.f32 %v8546, %v8560
      %v8583 = vadd.f32 %v8547, %v8560
      %v8584 = vadd.f32 %v8548, %v8560
      %v8585 = vadd.f32 %v8549, %v8560
      %v8586 = vadd.f32 %v8550, %v8560
      %v8587 = vadd.f32 %v8551, %v8560
      %v8588 = vadd.f32 %v8552, %v8560
      %v8589 = vadd.f32 %v8553, %v8560
      %v8590 = vadd.f32 %v8554, %v8560
      %v8591 = vadd.f32 %v8555, %v8560
      %v8592 = vadd.f32 %v8556, %v8560
      %v8593 = vadd.f32 %v8557, %v8560
      %vm8594 = vcmp.gt.f32.partialorder %v8562, 0.0
      %vm8595 = vcmp.gt.f32.partialorder %v8563, 0.0
      %vm8596 = vcmp.gt.f32.partialorder %v8564, 0.0
      %vm8597 = vcmp.gt.f32.partialorder %v8565, 0.0
      %vm8598 = vcmp.gt.f32.partialorder %v8566, 0.0
      %vm8599 = vcmp.gt.f32.partialorder %v8567, 0.0
      %vm8600 = vcmp.gt.f32.partialorder %v8568, 0.0
      %vm8601 = vcmp.gt.f32.partialorder %v8569, 0.0
      %vm8602 = vcmp.gt.f32.partialorder %v8570, 0.0
      %vm8603 = vcmp.gt.f32.partialorder %v8571, 0.0
      %vm8604 = vcmp.gt.f32.partialorder %v8572, 0.0
      %vm8605 = vcmp.gt.f32.partialorder %v8573, 0.0
      %vm8606 = vcmp.gt.f32.partialorder %v8574, 0.0
      %vm8607 = vcmp.gt.f32.partialorder %v8575, 0.0
      %vm8608 = vcmp.gt.f32.partialorder %v8576, 0.0
      %vm8609 = vcmp.gt.f32.partialorder %v8577, 0.0
      %vm8610 = vcmp.gt.f32.partialorder %v8578, 0.0
      %vm8611 = vcmp.gt.f32.partialorder %v8579, 0.0
      %vm8612 = vcmp.gt.f32.partialorder %v8580, 0.0
      %vm8613 = vcmp.gt.f32.partialorder %v8581, 0.0
      %vm8614 = vcmp.gt.f32.partialorder %v8582, 0.0
      %vm8615 = vcmp.gt.f32.partialorder %v8583, 0.0
      %vm8616 = vcmp.gt.f32.partialorder %v8584, 0.0
      %vm8617 = vcmp.gt.f32.partialorder %v8585, 0.0
      %vm8618 = vcmp.gt.f32.partialorder %v8586, 0.0
      %vm8619 = vcmp.gt.f32.partialorder %v8587, 0.0
      %vm8620 = vcmp.gt.f32.partialorder %v8588, 0.0
      %vm8621 = vcmp.gt.f32.partialorder %v8589, 0.0
      %vm8622 = vcmp.gt.f32.partialorder %v8590, 0.0
      %vm8623 = vcmp.gt.f32.partialorder %v8591, 0.0
      %vm8624 = vcmp.gt.f32.partialorder %v8592, 0.0
      %vm8625 = vcmp.gt.f32.partialorder %v8593, 0.0
      %v8626 = vmin.f32 %v8562, 0.0
      %v8627 = vmin.f32 %v8563, 0.0
      %v8628 = vmin.f32 %v8564, 0.0
      %v8629 = vmin.f32 %v8565, 0.0
      %v8630 = vmin.f32 %v8566, 0.0
      %v8631 = vmin.f32 %v8567, 0.0
      %v8632 = vmin.f32 %v8568, 0.0
      %v8633 = vmin.f32 %v8569, 0.0
      %v8634 = vmin.f32 %v8570, 0.0
      %v8635 = vmin.f32 %v8571, 0.0
      %v8636 = vmin.f32 %v8572, 0.0
      %v8637 = vmin.f32 %v8573, 0.0
      %v8638 = vmin.f32 %v8574, 0.0
      %v8639 = vmin.f32 %v8575, 0.0
      %v8640 = vmin.f32 %v8576, 0.0
      %v8641 = vmin.f32 %v8577, 0.0
      %v8642 = vmin.f32 %v8578, 0.0
      %v8643 = vmin.f32 %v8579, 0.0
      %v8644 = vmin.f32 %v8580, 0.0
      %v8645 = vmin.f32 %v8581, 0.0
      %v8646 = vmin.f32 %v8582, 0.0
      %v8647 = vmin.f32 %v8583, 0.0
      %v8648 = vmin.f32 %v8584, 0.0
      %v8649 = vmin.f32 %v8585, 0.0
      %v8650 = vmin.f32 %v8586, 0.0
      %v8651 = vmin.f32 %v8587, 0.0
      %v8652 = vmin.f32 %v8588, 0.0
      %v8653 = vmin.f32 %v8589, 0.0
      %v8654 = vmin.f32 %v8590, 0.0
      %v8655 = vmin.f32 %v8591, 0.0
      %v8656 = vmin.f32 %v8592, 0.0
      %v8657 = vmin.f32 %v8593, 0.0
      %v8658 = vmul.f32 %v8626, 1.442695
      %v8659 = vpow.pop %v8658
      %v8660 = vmul.f32 %v8627, 1.442695
      %v8661 = vpow.pop %v8660
      %v8662 = vmul.f32 %v8628, 1.442695
      %v8663 = vpow.pop %v8662
      %v8664 = vmul.f32 %v8629, 1.442695
      %v8665 = vpow.pop %v8664
      %v8666 = vmul.f32 %v8630, 1.442695
      %v8667 = vpow.pop %v8666
      %v8668 = vmul.f32 %v8631, 1.442695
      %v8669 = vpow.pop %v8668
      %v8670 = vmul.f32 %v8632, 1.442695
      %v8671 = vpow.pop %v8670
      %v8672 = vmul.f32 %v8633, 1.442695
      %v8673 = vpow.pop %v8672
      %v8674 = vmul.f32 %v8634, 1.442695
      %v8675 = vpow.pop %v8674
      %v8676 = vmul.f32 %v8635, 1.442695
      %v8677 = vpow.pop %v8676
      %v8678 = vmul.f32 %v8636, 1.442695
      %v8679 = vpow.pop %v8678
      %v8680 = vmul.f32 %v8637, 1.442695
      %v8681 = vpow.pop %v8680
      %v8682 = vmul.f32 %v8638, 1.442695
      %v8683 = vpow.pop %v8682
      %v8684 = vmul.f32 %v8639, 1.442695
      %v8685 = vpow.pop %v8684
      %v8686 = vmul.f32 %v8640, 1.442695
      %v8687 = vpow.pop %v8686
      %v8688 = vmul.f32 %v8641, 1.442695
      %v8689 = vpow.pop %v8688
      %v8690 = vmul.f32 %v8642, 1.442695
      %v8691 = vpow.pop %v8690
      %v8692 = vmul.f32 %v8643, 1.442695
      %v8693 = vpow.pop %v8692
      %v8694 = vmul.f32 %v8644, 1.442695
      %v8695 = vpow.pop %v8694
      %v8696 = vmul.f32 %v8645, 1.442695
      %v8697 = vpow.pop %v8696
      %v8698 = vmul.f32 %v8646, 1.442695
      %v8699 = vpow.pop %v8698
      %v8700 = vmul.f32 %v8647, 1.442695
      %v8701 = vpow.pop %v8700
      %v8702 = vmul.f32 %v8648, 1.442695
      %v8703 = vpow.pop %v8702
      %v8704 = vmul.f32 %v8649, 1.442695
      %v8705 = vpow.pop %v8704
      %v8706 = vmul.f32 %v8650, 1.442695
      %v8707 = vpow.pop %v8706
      %v8708 = vmul.f32 %v8651, 1.442695
      %v8709 = vpow.pop %v8708
      %v8710 = vmul.f32 %v8652, 1.442695
      %v8711 = vpow.pop %v8710
      %v8712 = vmul.f32 %v8653, 1.442695
      %v8713 = vpow.pop %v8712
      %v8714 = vmul.f32 %v8654, 1.442695
      %v8715 = vpow.pop %v8714
      %v8716 = vmul.f32 %v8655, 1.442695
      %v8717 = vpow.pop %v8716
      %v8718 = vmul.f32 %v8656, 1.442695
      %v8719 = vpow.pop %v8718
      %v8720 = vmul.f32 %v8657, 1.442695
      %v8721 = vpow.pop %v8720
      %v8722 = vsub.f32 %v8659, 1.0
      %v8723 = vsub.f32 %v8661, 1.0
      %v8724 = vsub.f32 %v8663, 1.0
      %v8725 = vsub.f32 %v8665, 1.0
      %v8726 = vsub.f32 %v8667, 1.0
      %v8727 = vsub.f32 %v8669, 1.0
      %v8728 = vsub.f32 %v8671, 1.0
      %v8729 = vsub.f32 %v8673, 1.0
      %v8730 = vsub.f32 %v8675, 1.0
      %v8731 = vsub.f32 %v8677, 1.0
      %v8732 = vsub.f32 %v8679, 1.0
      %v8733 = vsub.f32 %v8681, 1.0
      %v8734 = vsub.f32 %v8683, 1.0
      %v8735 = vsub.f32 %v8685, 1.0
      %v8736 = vsub.f32 %v8687, 1.0
      %v8737 = vsub.f32 %v8689, 1.0
      %v8738 = vsub.f32 %v8691, 1.0
      %v8739 = vsub.f32 %v8693, 1.0
      %v8740 = vsub.f32 %v8695, 1.0
      %v8741 = vsub.f32 %v8697, 1.0
      %v8742 = vsub.f32 %v8699, 1.0
      %v8743 = vsub.f32 %v8701, 1.0
      %v8744 = vsub.f32 %v8703, 1.0
      %v8745 = vsub.f32 %v8705, 1.0
      %v8746 = vsub.f32 %v8707, 1.0
      %v8747 = vsub.f32 %v8709, 1.0
      %v8748 = vsub.f32 %v8711, 1.0
      %v8749 = vsub.f32 %v8713, 1.0
      %v8750 = vsub.f32 %v8715, 1.0
      %v8751 = vsub.f32 %v8717, 1.0
      %v8752 = vsub.f32 %v8719, 1.0
      %v8753 = vsub.f32 %v8721, 1.0
      %v8754 = vsel %vm8594, %v8562, %v8722
      %v8755 = vsel %vm8595, %v8563, %v8723
      %v8756 = vsel %vm8596, %v8564, %v8724
      %v8757 = vsel %vm8597, %v8565, %v8725
      %v8758 = vsel %vm8598, %v8566, %v8726
      %v8759 = vsel %vm8599, %v8567, %v8727
      %v8760 = vsel %vm8600, %v8568, %v8728
      %v8761 = vsel %vm8601, %v8569, %v8729
      %v8762 = vsel %vm8602, %v8570, %v8730
      %v8763 = vsel %vm8603, %v8571, %v8731
      %v8764 = vsel %vm8604, %v8572, %v8732
      %v8765 = vsel %vm8605, %v8573, %v8733
      %v8766 = vsel %vm8606, %v8574, %v8734
      %v8767 = vsel %vm8607, %v8575, %v8735
      %v8768 = vsel %vm8608, %v8576, %v8736
      %v8769 = vsel %vm8609, %v8577, %v8737
      %v8770 = vsel %vm8610, %v8578, %v8738
      %v8771 = vsel %vm8611, %v8579, %v8739
      %v8772 = vsel %vm8612, %v8580, %v8740
      %v8773 = vsel %vm8613, %v8581, %v8741
      %v8774 = vsel %vm8614, %v8582, %v8742
      %v8775 = vsel %vm8615, %v8583, %v8743
      %v8776 = vsel %vm8616, %v8584, %v8744
      %v8777 = vsel %vm8617, %v8585, %v8745
      %v8778 = vsel %vm8618, %v8586, %v8746
      %v8779 = vsel %vm8619, %v8587, %v8747
      %v8780 = vsel %vm8620, %v8588, %v8748
      %v8781 = vsel %vm8621, %v8589, %v8749
      %v8782 = vsel %vm8622, %v8590, %v8750
      %v8783 = vsel %vm8623, %v8591, %v8751
      %v8784 = vsel %vm8624, %v8592, %v8752
      %v8785 = vsel %vm8625, %v8593, %v8753
      %v8786 = vld [vmem:[%s6] sm:$0xff]
      %v8787 = vld [vmem:[%s6 + $0x8] sm:$0xff]
      %v8788 = vld [vmem:[%s6 + $0x10] sm:$0xff]
      %v8789 = vld [vmem:[%s6 + $0x18] sm:$0xff]
      %v8790 = vld [vmem:[%s7] sm:$0x1]
      %v8792 = vperm.slane %v8790, 0
      %8794 = vmatpush.msra.mxu0 0.0
      %8795 = vmatpush.msra.mxu0 0.0
      %8796 = vmatpush.msra.mxu0 0.0
      %8797 = vmatpush.msra.mxu0 0.0
      %8798 = vmatpush.msra.mxu0 0.0
      %8799 = vmatpush.msra.mxu0 0.0
      %8800 = vmatpush.msra.mxu0 0.0
      %8801 = vmatpush.msra.mxu0 0.0
      %8802 = vmatpush.msra.mxu0 0.0
      %8803 = vmatpush.msra.mxu0 0.0
      %8804 = vmatpush.msra.mxu0 0.0
      %8805 = vmatpush.msra.mxu0 0.0
      %8806 = vmatpush.msra.mxu0 %v8789
      %8807 = vmatpush.msra.mxu0 %v8788
      %8808 = vmatpush.msra.mxu0 %v8787
      %8809 = vmatpush.msra.mxu0 %v8786
      %8810 = vmatmul.f32.gmra.mxu0 %v369
      %v8811 = vpop.f32.mrf.mxu0
      %v8812 = vadd.f32 %v8792, %v8811
      %8813 = vmatmul.f32.gmra.mxu0 %v372
      %v8814 = vpop.f32.mrf.mxu0
      %v8815 = vadd.f32 %v8792, %v8814
      %8816 = vmatmul.f32.gmra.mxu0 %v375
      %v8817 = vpop.f32.mrf.mxu0
      %v8818 = vadd.f32 %v8792, %v8817
      %8819 = vmatmul.f32.gmra.mxu0 %v378
      %v8820 = vpop.f32.mrf.mxu0
      %v8821 = vadd.f32 %v8792, %v8820
      %8822 = vmatmul.f32.gmra.mxu0 %v381
      %v8823 = vpop.f32.mrf.mxu0
      %v8824 = vadd.f32 %v8792, %v8823
      %8825 = vmatmul.f32.gmra.mxu0 %v384
      %v8826 = vpop.f32.mrf.mxu0
      %v8827 = vadd.f32 %v8792, %v8826
      %8828 = vmatmul.f32.gmra.mxu0 %v387
      %v8829 = vpop.f32.mrf.mxu0
      %v8830 = vadd.f32 %v8792, %v8829
      %8831 = vmatmul.f32.gmra.mxu0 %v390
      %v8832 = vpop.f32.mrf.mxu0
      %v8833 = vadd.f32 %v8792, %v8832
      %8834 = vmatmul.f32.gmra.mxu0 %v393
      %v8835 = vpop.f32.mrf.mxu0
      %v8836 = vadd.f32 %v8792, %v8835
      %8837 = vmatmul.f32.gmra.mxu0 %v396
      %v8838 = vpop.f32.mrf.mxu0
      %v8839 = vadd.f32 %v8792, %v8838
      %8840 = vmatmul.f32.gmra.mxu0 %v399
      %v8841 = vpop.f32.mrf.mxu0
      %v8842 = vadd.f32 %v8792, %v8841
      %8843 = vmatmul.f32.gmra.mxu0 %v402
      %v8844 = vpop.f32.mrf.mxu0
      %v8845 = vadd.f32 %v8792, %v8844
      %8846 = vmatmul.f32.gmra.mxu0 %v405
      %v8847 = vpop.f32.mrf.mxu0
      %v8848 = vadd.f32 %v8792, %v8847
      %8849 = vmatmul.f32.gmra.mxu0 %v408
      %v8850 = vpop.f32.mrf.mxu0
      %v8851 = vadd.f32 %v8792, %v8850
      %8852 = vmatmul.f32.gmra.mxu0 %v411
      %v8853 = vpop.f32.mrf.mxu0
      %v8854 = vadd.f32 %v8792, %v8853
      %8855 = vmatmul.f32.gmra.mxu0 %v414
      %v8856 = vpop.f32.mrf.mxu0
      %v8857 = vadd.f32 %v8792, %v8856
      %8858 = vmatmul.f32.gmra.mxu0 %v417
      %v8859 = vpop.f32.mrf.mxu0
      %v8860 = vadd.f32 %v8792, %v8859
      %8861 = vmatmul.f32.gmra.mxu0 %v420
      %v8862 = vpop.f32.mrf.mxu0
      %v8863 = vadd.f32 %v8792, %v8862
      %8864 = vmatmul.f32.gmra.mxu0 %v423
      %v8865 = vpop.f32.mrf.mxu0
      %v8866 = vadd.f32 %v8792, %v8865
      %8867 = vmatmul.f32.gmra.mxu0 %v426
      %v8868 = vpop.f32.mrf.mxu0
      %v8869 = vadd.f32 %v8792, %v8868
      %8870 = vmatmul.f32.gmra.mxu0 %v429
      %v8871 = vpop.f32.mrf.mxu0
      %v8872 = vadd.f32 %v8792, %v8871
      %8873 = vmatmul.f32.gmra.mxu0 %v432
      %v8874 = vpop.f32.mrf.mxu0
      %v8875 = vadd.f32 %v8792, %v8874
      %8876 = vmatmul.f32.gmra.mxu0 %v435
      %v8877 = vpop.f32.mrf.mxu0
      %v8878 = vadd.f32 %v8792, %v8877
      %8879 = vmatmul.f32.gmra.mxu0 %v438
      %v8880 = vpop.f32.mrf.mxu0
      %v8881 = vadd.f32 %v8792, %v8880
      %8882 = vmatmul.f32.gmra.mxu0 %v441
      %v8883 = vpop.f32.mrf.mxu0
      %v8884 = vadd.f32 %v8792, %v8883
      %8885 = vmatmul.f32.gmra.mxu0 %v444
      %v8886 = vpop.f32.mrf.mxu0
      %v8887 = vadd.f32 %v8792, %v8886
      %8888 = vmatmul.f32.gmra.mxu0 %v447
      %v8889 = vpop.f32.mrf.mxu0
      %v8890 = vadd.f32 %v8792, %v8889
      %8891 = vmatmul.f32.gmra.mxu0 %v450
      %v8892 = vpop.f32.mrf.mxu0
      %v8893 = vadd.f32 %v8792, %v8892
      %8894 = vmatmul.f32.gmra.mxu0 %v453
      %v8895 = vpop.f32.mrf.mxu0
      %v8896 = vadd.f32 %v8792, %v8895
      %8897 = vmatmul.f32.gmra.mxu0 %v456
      %v8898 = vpop.f32.mrf.mxu0
      %v8899 = vadd.f32 %v8792, %v8898
      %8900 = vmatmul.f32.gmra.mxu0 %v459
      %v8901 = vpop.f32.mrf.mxu0
      %v8902 = vadd.f32 %v8792, %v8901
      %8903 = vmatmul.f32.gmra.mxu0 %v462
      %v8904 = vpop.f32.mrf.mxu0
      %v8905 = vadd.f32 %v8792, %v8904
      %8906 = vdwg.mxu0
      %v8907 = vxor.u32 %v8812, 2147483648
      %v8908 = vxor.u32 %v8815, 2147483648
      %v8909 = vxor.u32 %v8818, 2147483648
      %v8910 = vxor.u32 %v8821, 2147483648
      %v8911 = vxor.u32 %v8824, 2147483648
      %v8912 = vxor.u32 %v8827, 2147483648
      %v8913 = vxor.u32 %v8830, 2147483648
      %v8914 = vxor.u32 %v8833, 2147483648
      %v8915 = vxor.u32 %v8836, 2147483648
      %v8916 = vxor.u32 %v8839, 2147483648
      %v8917 = vxor.u32 %v8842, 2147483648
      %v8918 = vxor.u32 %v8845, 2147483648
      %v8919 = vxor.u32 %v8848, 2147483648
      %v8920 = vxor.u32 %v8851, 2147483648
      %v8921 = vxor.u32 %v8854, 2147483648
      %v8922 = vxor.u32 %v8857, 2147483648
      %v8923 = vxor.u32 %v8860, 2147483648
      %v8924 = vxor.u32 %v8863, 2147483648
      %v8925 = vxor.u32 %v8866, 2147483648
      %v8926 = vxor.u32 %v8869, 2147483648
      %v8927 = vxor.u32 %v8872, 2147483648
      %v8928 = vxor.u32 %v8875, 2147483648
      %v8929 = vxor.u32 %v8878, 2147483648
      %v8930 = vxor.u32 %v8881, 2147483648
      %v8931 = vxor.u32 %v8884, 2147483648
      %v8932 = vxor.u32 %v8887, 2147483648
      %v8933 = vxor.u32 %v8890, 2147483648
      %v8934 = vxor.u32 %v8893, 2147483648
      %v8935 = vxor.u32 %v8896, 2147483648
      %v8936 = vxor.u32 %v8899, 2147483648
      %v8937 = vxor.u32 %v8902, 2147483648
      %v8938 = vxor.u32 %v8905, 2147483648
      %v8939 = vmul.f32 %v8907, 1.442695
      %v8940 = vpow.pop %v8939
      %v8941 = vmul.f32 %v8908, 1.442695
      %v8942 = vpow.pop %v8941
      %v8943 = vmul.f32 %v8909, 1.442695
      %v8944 = vpow.pop %v8943
      %v8945 = vmul.f32 %v8910, 1.442695
      %v8946 = vpow.pop %v8945
      %v8947 = vmul.f32 %v8911, 1.442695
      %v8948 = vpow.pop %v8947
      %v8949 = vmul.f32 %v8912, 1.442695
      %v8950 = vpow.pop %v8949
      %v8951 = vmul.f32 %v8913, 1.442695
      %v8952 = vpow.pop %v8951
      %v8953 = vmul.f32 %v8914, 1.442695
      %v8954 = vpow.pop %v8953
      %v8955 = vmul.f32 %v8915, 1.442695
      %v8956 = vpow.pop %v8955
      %v8957 = vmul.f32 %v8916, 1.442695
      %v8958 = vpow.pop %v8957
      %v8959 = vmul.f32 %v8917, 1.442695
      %v8960 = vpow.pop %v8959
      %v8961 = vmul.f32 %v8918, 1.442695
      %v8962 = vpow.pop %v8961
      %v8963 = vmul.f32 %v8919, 1.442695
      %v8964 = vpow.pop %v8963
      %v8965 = vmul.f32 %v8920, 1.442695
      %v8966 = vpow.pop %v8965
      %v8967 = vmul.f32 %v8921, 1.442695
      %v8968 = vpow.pop %v8967
      %v8969 = vmul.f32 %v8922, 1.442695
      %v8970 = vpow.pop %v8969
      %v8971 = vmul.f32 %v8923, 1.442695
      %v8972 = vpow.pop %v8971
      %v8973 = vmul.f32 %v8924, 1.442695
      %v8974 = vpow.pop %v8973
      %v8975 = vmul.f32 %v8925, 1.442695
      %v8976 = vpow.pop %v8975
      %v8977 = vmul.f32 %v8926, 1.442695
      %v8978 = vpow.pop %v8977
      %v8979 = vmul.f32 %v8927, 1.442695
      %v8980 = vpow.pop %v8979
      %v8981 = vmul.f32 %v8928, 1.442695
      %v8982 = vpow.pop %v8981
      %v8983 = vmul.f32 %v8929, 1.442695
      %v8984 = vpow.pop %v8983
      %v8985 = vmul.f32 %v8930, 1.442695
      %v8986 = vpow.pop %v8985
      %v8987 = vmul.f32 %v8931, 1.442695
      %v8988 = vpow.pop %v8987
      %v8989 = vmul.f32 %v8932, 1.442695
      %v8990 = vpow.pop %v8989
      %v8991 = vmul.f32 %v8933, 1.442695
      %v8992 = vpow.pop %v8991
      %v8993 = vmul.f32 %v8934, 1.442695
      %v8994 = vpow.pop %v8993
      %v8995 = vmul.f32 %v8935, 1.442695
      %v8996 = vpow.pop %v8995
      %v8997 = vmul.f32 %v8936, 1.442695
      %v8998 = vpow.pop %v8997
      %v8999 = vmul.f32 %v8937, 1.442695
      %v9000 = vpow.pop %v8999
      %v9001 = vmul.f32 %v8938, 1.442695
      %v9002 = vpow.pop %v9001
      %v9003 = vadd.f32 %v8940, 1.0
      %v9004 = vadd.f32 %v8942, 1.0
      %v9005 = vadd.f32 %v8944, 1.0
      %v9006 = vadd.f32 %v8946, 1.0
      %v9007 = vadd.f32 %v8948, 1.0
      %v9008 = vadd.f32 %v8950, 1.0
      %v9009 = vadd.f32 %v8952, 1.0
      %v9010 = vadd.f32 %v8954, 1.0
      %v9011 = vadd.f32 %v8956, 1.0
      %v9012 = vadd.f32 %v8958, 1.0
      %v9013 = vadd.f32 %v8960, 1.0
      %v9014 = vadd.f32 %v8962, 1.0
      %v9015 = vadd.f32 %v8964, 1.0
      %v9016 = vadd.f32 %v8966, 1.0
      %v9017 = vadd.f32 %v8968, 1.0
      %v9018 = vadd.f32 %v8970, 1.0
      %v9019 = vadd.f32 %v8972, 1.0
      %v9020 = vadd.f32 %v8974, 1.0
      %v9021 = vadd.f32 %v8976, 1.0
      %v9022 = vadd.f32 %v8978, 1.0
      %v9023 = vadd.f32 %v8980, 1.0
      %v9024 = vadd.f32 %v8982, 1.0
      %v9025 = vadd.f32 %v8984, 1.0
      %v9026 = vadd.f32 %v8986, 1.0
      %v9027 = vadd.f32 %v8988, 1.0
      %v9028 = vadd.f32 %v8990, 1.0
      %v9029 = vadd.f32 %v8992, 1.0
      %v9030 = vadd.f32 %v8994, 1.0
      %v9031 = vadd.f32 %v8996, 1.0
      %v9032 = vadd.f32 %v8998, 1.0
      %v9033 = vadd.f32 %v9000, 1.0
      %v9034 = vadd.f32 %v9002, 1.0
      %v9035 = vrcp.pop %v9003
      %v9036 = vmul.f32 %v9003, %v9035
      %v9037 = vsub.f32 1.0, %v9036
      %v9038 = vmul.f32 %v9035, %v9037
      %v9039 = vadd.f32 %v9035, %v9038
      %vm9040 = vweird.f32 %v9003
      %vm9041 = vweird.f32 %v9035
      %vm9042 = vmor %vm9040, %vm9041
      %v9043 = vsel %vm9042, %v9035, %v9039
      %v9044 = vand.u32 2147483647, %v9003
      %vm9045 = vcmp.eq.f32.partialorder %v9044, 8.507059e+37
      %v9046 = vand.u32 %v9003, 2147483648
      %v9047 = vor.u32 1.1754944e-38, %v9046
      %v9048 = vsel %vm9045, %v9047, %v9043
      %v9049 = vmul.f32 1.0, %v9048
      %v9050 = vrcp.pop %v9004
      %v9051 = vmul.f32 %v9004, %v9050
      %v9052 = vsub.f32 1.0, %v9051
      %v9053 = vmul.f32 %v9050, %v9052
      %v9054 = vadd.f32 %v9050, %v9053
      %vm9055 = vweird.f32 %v9004
      %vm9056 = vweird.f32 %v9050
      %vm9057 = vmor %vm9055, %vm9056
      %v9058 = vsel %vm9057, %v9050, %v9054
      %v9059 = vand.u32 2147483647, %v9004
      %vm9060 = vcmp.eq.f32.partialorder %v9059, 8.507059e+37
      %v9061 = vand.u32 %v9004, 2147483648
      %v9062 = vor.u32 1.1754944e-38, %v9061
      %v9063 = vsel %vm9060, %v9062, %v9058
      %v9064 = vmul.f32 1.0, %v9063
      %v9065 = vrcp.pop %v9005
      %v9066 = vmul.f32 %v9005, %v9065
      %v9067 = vsub.f32 1.0, %v9066
      %v9068 = vmul.f32 %v9065, %v9067
      %v9069 = vadd.f32 %v9065, %v9068
      %vm9070 = vweird.f32 %v9005
      %vm9071 = vweird.f32 %v9065
      %vm9072 = vmor %vm9070, %vm9071
      %v9073 = vsel %vm9072, %v9065, %v9069
      %v9074 = vand.u32 2147483647, %v9005
      %vm9075 = vcmp.eq.f32.partialorder %v9074, 8.507059e+37
      %v9076 = vand.u32 %v9005, 2147483648
      %v9077 = vor.u32 1.1754944e-38, %v9076
      %v9078 = vsel %vm9075, %v9077, %v9073
      %v9079 = vmul.f32 1.0, %v9078
      %v9080 = vrcp.pop %v9006
      %v9081 = vmul.f32 %v9006, %v9080
      %v9082 = vsub.f32 1.0, %v9081
      %v9083 = vmul.f32 %v9080, %v9082
      %v9084 = vadd.f32 %v9080, %v9083
      %vm9085 = vweird.f32 %v9006
      %vm9086 = vweird.f32 %v9080
      %vm9087 = vmor %vm9085, %vm9086
      %v9088 = vsel %vm9087, %v9080, %v9084
      %v9089 = vand.u32 2147483647, %v9006
      %vm9090 = vcmp.eq.f32.partialorder %v9089, 8.507059e+37
      %v9091 = vand.u32 %v9006, 2147483648
      %v9092 = vor.u32 1.1754944e-38, %v9091
      %v9093 = vsel %vm9090, %v9092, %v9088
      %v9094 = vmul.f32 1.0, %v9093
      %v9095 = vrcp.pop %v9007
      %v9096 = vmul.f32 %v9007, %v9095
      %v9097 = vsub.f32 1.0, %v9096
      %v9098 = vmul.f32 %v9095, %v9097
      %v9099 = vadd.f32 %v9095, %v9098
      %vm9100 = vweird.f32 %v9007
      %vm9101 = vweird.f32 %v9095
      %vm9102 = vmor %vm9100, %vm9101
      %v9103 = vsel %vm9102, %v9095, %v9099
      %v9104 = vand.u32 2147483647, %v9007
      %vm9105 = vcmp.eq.f32.partialorder %v9104, 8.507059e+37
      %v9106 = vand.u32 %v9007, 2147483648
      %v9107 = vor.u32 1.1754944e-38, %v9106
      %v9108 = vsel %vm9105, %v9107, %v9103
      %v9109 = vmul.f32 1.0, %v9108
      %v9110 = vrcp.pop %v9008
      %v9111 = vmul.f32 %v9008, %v9110
      %v9112 = vsub.f32 1.0, %v9111
      %v9113 = vmul.f32 %v9110, %v9112
      %v9114 = vadd.f32 %v9110, %v9113
      %vm9115 = vweird.f32 %v9008
      %vm9116 = vweird.f32 %v9110
      %vm9117 = vmor %vm9115, %vm9116
      %v9118 = vsel %vm9117, %v9110, %v9114
      %v9119 = vand.u32 2147483647, %v9008
      %vm9120 = vcmp.eq.f32.partialorder %v9119, 8.507059e+37
      %v9121 = vand.u32 %v9008, 2147483648
      %v9122 = vor.u32 1.1754944e-38, %v9121
      %v9123 = vsel %vm9120, %v9122, %v9118
      %v9124 = vmul.f32 1.0, %v9123
      %v9125 = vrcp.pop %v9009
      %v9126 = vmul.f32 %v9009, %v9125
      %v9127 = vsub.f32 1.0, %v9126
      %v9128 = vmul.f32 %v9125, %v9127
      %v9129 = vadd.f32 %v9125, %v9128
      %vm9130 = vweird.f32 %v9009
      %vm9131 = vweird.f32 %v9125
      %vm9132 = vmor %vm9130, %vm9131
      %v9133 = vsel %vm9132, %v9125, %v9129
      %v9134 = vand.u32 2147483647, %v9009
      %vm9135 = vcmp.eq.f32.partialorder %v9134, 8.507059e+37
      %v9136 = vand.u32 %v9009, 2147483648
      %v9137 = vor.u32 1.1754944e-38, %v9136
      %v9138 = vsel %vm9135, %v9137, %v9133
      %v9139 = vmul.f32 1.0, %v9138
      %v9140 = vrcp.pop %v9010
      %v9141 = vmul.f32 %v9010, %v9140
      %v9142 = vsub.f32 1.0, %v9141
      %v9143 = vmul.f32 %v9140, %v9142
      %v9144 = vadd.f32 %v9140, %v9143
      %vm9145 = vweird.f32 %v9010
      %vm9146 = vweird.f32 %v9140
      %vm9147 = vmor %vm9145, %vm9146
      %v9148 = vsel %vm9147, %v9140, %v9144
      %v9149 = vand.u32 2147483647, %v9010
      %vm9150 = vcmp.eq.f32.partialorder %v9149, 8.507059e+37
      %v9151 = vand.u32 %v9010, 2147483648
      %v9152 = vor.u32 1.1754944e-38, %v9151
      %v9153 = vsel %vm9150, %v9152, %v9148
      %v9154 = vmul.f32 1.0, %v9153
      %v9155 = vrcp.pop %v9011
      %v9156 = vmul.f32 %v9011, %v9155
      %v9157 = vsub.f32 1.0, %v9156
      %v9158 = vmul.f32 %v9155, %v9157
      %v9159 = vadd.f32 %v9155, %v9158
      %vm9160 = vweird.f32 %v9011
      %vm9161 = vweird.f32 %v9155
      %vm9162 = vmor %vm9160, %vm9161
      %v9163 = vsel %vm9162, %v9155, %v9159
      %v9164 = vand.u32 2147483647, %v9011
      %vm9165 = vcmp.eq.f32.partialorder %v9164, 8.507059e+37
      %v9166 = vand.u32 %v9011, 2147483648
      %v9167 = vor.u32 1.1754944e-38, %v9166
      %v9168 = vsel %vm9165, %v9167, %v9163
      %v9169 = vmul.f32 1.0, %v9168
      %v9170 = vrcp.pop %v9012
      %v9171 = vmul.f32 %v9012, %v9170
      %v9172 = vsub.f32 1.0, %v9171
      %v9173 = vmul.f32 %v9170, %v9172
      %v9174 = vadd.f32 %v9170, %v9173
      %vm9175 = vweird.f32 %v9012
      %vm9176 = vweird.f32 %v9170
      %vm9177 = vmor %vm9175, %vm9176
      %v9178 = vsel %vm9177, %v9170, %v9174
      %v9179 = vand.u32 2147483647, %v9012
      %vm9180 = vcmp.eq.f32.partialorder %v9179, 8.507059e+37
      %v9181 = vand.u32 %v9012, 2147483648
      %v9182 = vor.u32 1.1754944e-38, %v9181
      %v9183 = vsel %vm9180, %v9182, %v9178
      %v9184 = vmul.f32 1.0, %v9183
      %v9185 = vrcp.pop %v9013
      %v9186 = vmul.f32 %v9013, %v9185
      %v9187 = vsub.f32 1.0, %v9186
      %v9188 = vmul.f32 %v9185, %v9187
      %v9189 = vadd.f32 %v9185, %v9188
      %vm9190 = vweird.f32 %v9013
      %vm9191 = vweird.f32 %v9185
      %vm9192 = vmor %vm9190, %vm9191
      %v9193 = vsel %vm9192, %v9185, %v9189
      %v9194 = vand.u32 2147483647, %v9013
      %vm9195 = vcmp.eq.f32.partialorder %v9194, 8.507059e+37
      %v9196 = vand.u32 %v9013, 2147483648
      %v9197 = vor.u32 1.1754944e-38, %v9196
      %v9198 = vsel %vm9195, %v9197, %v9193
      %v9199 = vmul.f32 1.0, %v9198
      %v9200 = vrcp.pop %v9014
      %v9201 = vmul.f32 %v9014, %v9200
      %v9202 = vsub.f32 1.0, %v9201
      %v9203 = vmul.f32 %v9200, %v9202
      %v9204 = vadd.f32 %v9200, %v9203
      %vm9205 = vweird.f32 %v9014
      %vm9206 = vweird.f32 %v9200
      %vm9207 = vmor %vm9205, %vm9206
      %v9208 = vsel %vm9207, %v9200, %v9204
      %v9209 = vand.u32 2147483647, %v9014
      %vm9210 = vcmp.eq.f32.partialorder %v9209, 8.507059e+37
      %v9211 = vand.u32 %v9014, 2147483648
      %v9212 = vor.u32 1.1754944e-38, %v9211
      %v9213 = vsel %vm9210, %v9212, %v9208
      %v9214 = vmul.f32 1.0, %v9213
      %v9215 = vrcp.pop %v9015
      %v9216 = vmul.f32 %v9015, %v9215
      %v9217 = vsub.f32 1.0, %v9216
      %v9218 = vmul.f32 %v9215, %v9217
      %v9219 = vadd.f32 %v9215, %v9218
      %vm9220 = vweird.f32 %v9015
      %vm9221 = vweird.f32 %v9215
      %vm9222 = vmor %vm9220, %vm9221
      %v9223 = vsel %vm9222, %v9215, %v9219
      %v9224 = vand.u32 2147483647, %v9015
      %vm9225 = vcmp.eq.f32.partialorder %v9224, 8.507059e+37
      %v9226 = vand.u32 %v9015, 2147483648
      %v9227 = vor.u32 1.1754944e-38, %v9226
      %v9228 = vsel %vm9225, %v9227, %v9223
      %v9229 = vmul.f32 1.0, %v9228
      %v9230 = vrcp.pop %v9016
      %v9231 = vmul.f32 %v9016, %v9230
      %v9232 = vsub.f32 1.0, %v9231
      %v9233 = vmul.f32 %v9230, %v9232
      %v9234 = vadd.f32 %v9230, %v9233
      %vm9235 = vweird.f32 %v9016
      %vm9236 = vweird.f32 %v9230
      %vm9237 = vmor %vm9235, %vm9236
      %v9238 = vsel %vm9237, %v9230, %v9234
      %v9239 = vand.u32 2147483647, %v9016
      %vm9240 = vcmp.eq.f32.partialorder %v9239, 8.507059e+37
      %v9241 = vand.u32 %v9016, 2147483648
      %v9242 = vor.u32 1.1754944e-38, %v9241
      %v9243 = vsel %vm9240, %v9242, %v9238
      %v9244 = vmul.f32 1.0, %v9243
      %v9245 = vrcp.pop %v9017
      %v9246 = vmul.f32 %v9017, %v9245
      %v9247 = vsub.f32 1.0, %v9246
      %v9248 = vmul.f32 %v9245, %v9247
      %v9249 = vadd.f32 %v9245, %v9248
      %vm9250 = vweird.f32 %v9017
      %vm9251 = vweird.f32 %v9245
      %vm9252 = vmor %vm9250, %vm9251
      %v9253 = vsel %vm9252, %v9245, %v9249
      %v9254 = vand.u32 2147483647, %v9017
      %vm9255 = vcmp.eq.f32.partialorder %v9254, 8.507059e+37
      %v9256 = vand.u32 %v9017, 2147483648
      %v9257 = vor.u32 1.1754944e-38, %v9256
      %v9258 = vsel %vm9255, %v9257, %v9253
      %v9259 = vmul.f32 1.0, %v9258
      %v9260 = vrcp.pop %v9018
      %v9261 = vmul.f32 %v9018, %v9260
      %v9262 = vsub.f32 1.0, %v9261
      %v9263 = vmul.f32 %v9260, %v9262
      %v9264 = vadd.f32 %v9260, %v9263
      %vm9265 = vweird.f32 %v9018
      %vm9266 = vweird.f32 %v9260
      %vm9267 = vmor %vm9265, %vm9266
      %v9268 = vsel %vm9267, %v9260, %v9264
      %v9269 = vand.u32 2147483647, %v9018
      %vm9270 = vcmp.eq.f32.partialorder %v9269, 8.507059e+37
      %v9271 = vand.u32 %v9018, 2147483648
      %v9272 = vor.u32 1.1754944e-38, %v9271
      %v9273 = vsel %vm9270, %v9272, %v9268
      %v9274 = vmul.f32 1.0, %v9273
      %v9275 = vrcp.pop %v9019
      %v9276 = vmul.f32 %v9019, %v9275
      %v9277 = vsub.f32 1.0, %v9276
      %v9278 = vmul.f32 %v9275, %v9277
      %v9279 = vadd.f32 %v9275, %v9278
      %vm9280 = vweird.f32 %v9019
      %vm9281 = vweird.f32 %v9275
      %vm9282 = vmor %vm9280, %vm9281
      %v9283 = vsel %vm9282, %v9275, %v9279
      %v9284 = vand.u32 2147483647, %v9019
      %vm9285 = vcmp.eq.f32.partialorder %v9284, 8.507059e+37
      %v9286 = vand.u32 %v9019, 2147483648
      %v9287 = vor.u32 1.1754944e-38, %v9286
      %v9288 = vsel %vm9285, %v9287, %v9283
      %v9289 = vmul.f32 1.0, %v9288
      %v9290 = vrcp.pop %v9020
      %v9291 = vmul.f32 %v9020, %v9290
      %v9292 = vsub.f32 1.0, %v9291
      %v9293 = vmul.f32 %v9290, %v9292
      %v9294 = vadd.f32 %v9290, %v9293
      %vm9295 = vweird.f32 %v9020
      %vm9296 = vweird.f32 %v9290
      %vm9297 = vmor %vm9295, %vm9296
      %v9298 = vsel %vm9297, %v9290, %v9294
      %v9299 = vand.u32 2147483647, %v9020
      %vm9300 = vcmp.eq.f32.partialorder %v9299, 8.507059e+37
      %v9301 = vand.u32 %v9020, 2147483648
      %v9302 = vor.u32 1.1754944e-38, %v9301
      %v9303 = vsel %vm9300, %v9302, %v9298
      %v9304 = vmul.f32 1.0, %v9303
      %v9305 = vrcp.pop %v9021
      %v9306 = vmul.f32 %v9021, %v9305
      %v9307 = vsub.f32 1.0, %v9306
      %v9308 = vmul.f32 %v9305, %v9307
      %v9309 = vadd.f32 %v9305, %v9308
      %vm9310 = vweird.f32 %v9021
      %vm9311 = vweird.f32 %v9305
      %vm9312 = vmor %vm9310, %vm9311
      %v9313 = vsel %vm9312, %v9305, %v9309
      %v9314 = vand.u32 2147483647, %v9021
      %vm9315 = vcmp.eq.f32.partialorder %v9314, 8.507059e+37
      %v9316 = vand.u32 %v9021, 2147483648
      %v9317 = vor.u32 1.1754944e-38, %v9316
      %v9318 = vsel %vm9315, %v9317, %v9313
      %v9319 = vmul.f32 1.0, %v9318
      %v9320 = vrcp.pop %v9022
      %v9321 = vmul.f32 %v9022, %v9320
      %v9322 = vsub.f32 1.0, %v9321
      %v9323 = vmul.f32 %v9320, %v9322
      %v9324 = vadd.f32 %v9320, %v9323
      %vm9325 = vweird.f32 %v9022
      %vm9326 = vweird.f32 %v9320
      %vm9327 = vmor %vm9325, %vm9326
      %v9328 = vsel %vm9327, %v9320, %v9324
      %v9329 = vand.u32 2147483647, %v9022
      %vm9330 = vcmp.eq.f32.partialorder %v9329, 8.507059e+37
      %v9331 = vand.u32 %v9022, 2147483648
      %v9332 = vor.u32 1.1754944e-38, %v9331
      %v9333 = vsel %vm9330, %v9332, %v9328
      %v9334 = vmul.f32 1.0, %v9333
      %v9335 = vrcp.pop %v9023
      %v9336 = vmul.f32 %v9023, %v9335
      %v9337 = vsub.f32 1.0, %v9336
      %v9338 = vmul.f32 %v9335, %v9337
      %v9339 = vadd.f32 %v9335, %v9338
      %vm9340 = vweird.f32 %v9023
      %vm9341 = vweird.f32 %v9335
      %vm9342 = vmor %vm9340, %vm9341
      %v9343 = vsel %vm9342, %v9335, %v9339
      %v9344 = vand.u32 2147483647, %v9023
      %vm9345 = vcmp.eq.f32.partialorder %v9344, 8.507059e+37
      %v9346 = vand.u32 %v9023, 2147483648
      %v9347 = vor.u32 1.1754944e-38, %v9346
      %v9348 = vsel %vm9345, %v9347, %v9343
      %v9349 = vmul.f32 1.0, %v9348
      %v9350 = vrcp.pop %v9024
      %v9351 = vmul.f32 %v9024, %v9350
      %v9352 = vsub.f32 1.0, %v9351
      %v9353 = vmul.f32 %v9350, %v9352
      %v9354 = vadd.f32 %v9350, %v9353
      %vm9355 = vweird.f32 %v9024
      %vm9356 = vweird.f32 %v9350
      %vm9357 = vmor %vm9355, %vm9356
      %v9358 = vsel %vm9357, %v9350, %v9354
      %v9359 = vand.u32 2147483647, %v9024
      %vm9360 = vcmp.eq.f32.partialorder %v9359, 8.507059e+37
      %v9361 = vand.u32 %v9024, 2147483648
      %v9362 = vor.u32 1.1754944e-38, %v9361
      %v9363 = vsel %vm9360, %v9362, %v9358
      %v9364 = vmul.f32 1.0, %v9363
      %v9365 = vrcp.pop %v9025
      %v9366 = vmul.f32 %v9025, %v9365
      %v9367 = vsub.f32 1.0, %v9366
      %v9368 = vmul.f32 %v9365, %v9367
      %v9369 = vadd.f32 %v9365, %v9368
      %vm9370 = vweird.f32 %v9025
      %vm9371 = vweird.f32 %v9365
      %vm9372 = vmor %vm9370, %vm9371
      %v9373 = vsel %vm9372, %v9365, %v9369
      %v9374 = vand.u32 2147483647, %v9025
      %vm9375 = vcmp.eq.f32.partialorder %v9374, 8.507059e+37
      %v9376 = vand.u32 %v9025, 2147483648
      %v9377 = vor.u32 1.1754944e-38, %v9376
      %v9378 = vsel %vm9375, %v9377, %v9373
      %v9379 = vmul.f32 1.0, %v9378
      %v9380 = vrcp.pop %v9026
      %v9381 = vmul.f32 %v9026, %v9380
      %v9382 = vsub.f32 1.0, %v9381
      %v9383 = vmul.f32 %v9380, %v9382
      %v9384 = vadd.f32 %v9380, %v9383
      %vm9385 = vweird.f32 %v9026
      %vm9386 = vweird.f32 %v9380
      %vm9387 = vmor %vm9385, %vm9386
      %v9388 = vsel %vm9387, %v9380, %v9384
      %v9389 = vand.u32 2147483647, %v9026
      %vm9390 = vcmp.eq.f32.partialorder %v9389, 8.507059e+37
      %v9391 = vand.u32 %v9026, 2147483648
      %v9392 = vor.u32 1.1754944e-38, %v9391
      %v9393 = vsel %vm9390, %v9392, %v9388
      %v9394 = vmul.f32 1.0, %v9393
      %v9395 = vrcp.pop %v9027
      %v9396 = vmul.f32 %v9027, %v9395
      %v9397 = vsub.f32 1.0, %v9396
      %v9398 = vmul.f32 %v9395, %v9397
      %v9399 = vadd.f32 %v9395, %v9398
      %vm9400 = vweird.f32 %v9027
      %vm9401 = vweird.f32 %v9395
      %vm9402 = vmor %vm9400, %vm9401
      %v9403 = vsel %vm9402, %v9395, %v9399
      %v9404 = vand.u32 2147483647, %v9027
      %vm9405 = vcmp.eq.f32.partialorder %v9404, 8.507059e+37
      %v9406 = vand.u32 %v9027, 2147483648
      %v9407 = vor.u32 1.1754944e-38, %v9406
      %v9408 = vsel %vm9405, %v9407, %v9403
      %v9409 = vmul.f32 1.0, %v9408
      %v9410 = vrcp.pop %v9028
      %v9411 = vmul.f32 %v9028, %v9410
      %v9412 = vsub.f32 1.0, %v9411
      %v9413 = vmul.f32 %v9410, %v9412
      %v9414 = vadd.f32 %v9410, %v9413
      %vm9415 = vweird.f32 %v9028
      %vm9416 = vweird.f32 %v9410
      %vm9417 = vmor %vm9415, %vm9416
      %v9418 = vsel %vm9417, %v9410, %v9414
      %v9419 = vand.u32 2147483647, %v9028
      %vm9420 = vcmp.eq.f32.partialorder %v9419, 8.507059e+37
      %v9421 = vand.u32 %v9028, 2147483648
      %v9422 = vor.u32 1.1754944e-38, %v9421
      %v9423 = vsel %vm9420, %v9422, %v9418
      %v9424 = vmul.f32 1.0, %v9423
      %v9425 = vrcp.pop %v9029
      %v9426 = vmul.f32 %v9029, %v9425
      %v9427 = vsub.f32 1.0, %v9426
      %v9428 = vmul.f32 %v9425, %v9427
      %v9429 = vadd.f32 %v9425, %v9428
      %vm9430 = vweird.f32 %v9029
      %vm9431 = vweird.f32 %v9425
      %vm9432 = vmor %vm9430, %vm9431
      %v9433 = vsel %vm9432, %v9425, %v9429
      %v9434 = vand.u32 2147483647, %v9029
      %vm9435 = vcmp.eq.f32.partialorder %v9434, 8.507059e+37
      %v9436 = vand.u32 %v9029, 2147483648
      %v9437 = vor.u32 1.1754944e-38, %v9436
      %v9438 = vsel %vm9435, %v9437, %v9433
      %v9439 = vmul.f32 1.0, %v9438
      %v9440 = vrcp.pop %v9030
      %v9441 = vmul.f32 %v9030, %v9440
      %v9442 = vsub.f32 1.0, %v9441
      %v9443 = vmul.f32 %v9440, %v9442
      %v9444 = vadd.f32 %v9440, %v9443
      %vm9445 = vweird.f32 %v9030
      %vm9446 = vweird.f32 %v9440
      %vm9447 = vmor %vm9445, %vm9446
      %v9448 = vsel %vm9447, %v9440, %v9444
      %v9449 = vand.u32 2147483647, %v9030
      %vm9450 = vcmp.eq.f32.partialorder %v9449, 8.507059e+37
      %v9451 = vand.u32 %v9030, 2147483648
      %v9452 = vor.u32 1.1754944e-38, %v9451
      %v9453 = vsel %vm9450, %v9452, %v9448
      %v9454 = vmul.f32 1.0, %v9453
      %v9455 = vrcp.pop %v9031
      %v9456 = vmul.f32 %v9031, %v9455
      %v9457 = vsub.f32 1.0, %v9456
      %v9458 = vmul.f32 %v9455, %v9457
      %v9459 = vadd.f32 %v9455, %v9458
      %vm9460 = vweird.f32 %v9031
      %vm9461 = vweird.f32 %v9455
      %vm9462 = vmor %vm9460, %vm9461
      %v9463 = vsel %vm9462, %v9455, %v9459
      %v9464 = vand.u32 2147483647, %v9031
      %vm9465 = vcmp.eq.f32.partialorder %v9464, 8.507059e+37
      %v9466 = vand.u32 %v9031, 2147483648
      %v9467 = vor.u32 1.1754944e-38, %v9466
      %v9468 = vsel %vm9465, %v9467, %v9463
      %v9469 = vmul.f32 1.0, %v9468
      %v9470 = vrcp.pop %v9032
      %v9471 = vmul.f32 %v9032, %v9470
      %v9472 = vsub.f32 1.0, %v9471
      %v9473 = vmul.f32 %v9470, %v9472
      %v9474 = vadd.f32 %v9470, %v9473
      %vm9475 = vweird.f32 %v9032
      %vm9476 = vweird.f32 %v9470
      %vm9477 = vmor %vm9475, %vm9476
      %v9478 = vsel %vm9477, %v9470, %v9474
      %v9479 = vand.u32 2147483647, %v9032
      %vm9480 = vcmp.eq.f32.partialorder %v9479, 8.507059e+37
      %v9481 = vand.u32 %v9032, 2147483648
      %v9482 = vor.u32 1.1754944e-38, %v9481
      %v9483 = vsel %vm9480, %v9482, %v9478
      %v9484 = vmul.f32 1.0, %v9483
      %v9485 = vrcp.pop %v9033
      %v9486 = vmul.f32 %v9033, %v9485
      %v9487 = vsub.f32 1.0, %v9486
      %v9488 = vmul.f32 %v9485, %v9487
      %v9489 = vadd.f32 %v9485, %v9488
      %vm9490 = vweird.f32 %v9033
      %vm9491 = vweird.f32 %v9485
      %vm9492 = vmor %vm9490, %vm9491
      %v9493 = vsel %vm9492, %v9485, %v9489
      %v9494 = vand.u32 2147483647, %v9033
      %vm9495 = vcmp.eq.f32.partialorder %v9494, 8.507059e+37
      %v9496 = vand.u32 %v9033, 2147483648
      %v9497 = vor.u32 1.1754944e-38, %v9496
      %v9498 = vsel %vm9495, %v9497, %v9493
      %v9499 = vmul.f32 1.0, %v9498
      %v9500 = vrcp.pop %v9034
      %v9501 = vmul.f32 %v9034, %v9500
      %v9502 = vsub.f32 1.0, %v9501
      %v9503 = vmul.f32 %v9500, %v9502
      %v9504 = vadd.f32 %v9500, %v9503
      %vm9505 = vweird.f32 %v9034
      %vm9506 = vweird.f32 %v9500
      %vm9507 = vmor %vm9505, %vm9506
      %v9508 = vsel %vm9507, %v9500, %v9504
      %v9509 = vand.u32 2147483647, %v9034
      %vm9510 = vcmp.eq.f32.partialorder %v9509, 8.507059e+37
      %v9511 = vand.u32 %v9034, 2147483648
      %v9512 = vor.u32 1.1754944e-38, %v9511
      %v9513 = vsel %vm9510, %v9512, %v9508
      %v9514 = vmul.f32 1.0, %v9513
      %v9515 = vmul.f32 %v9049, %v8754
      %v9516 = vmul.f32 %v9064, %v8755
      %v9517 = vmul.f32 %v9079, %v8756
      %v9518 = vmul.f32 %v9094, %v8757
      %v9519 = vmul.f32 %v9109, %v8758
      %v9520 = vmul.f32 %v9124, %v8759
      %v9521 = vmul.f32 %v9139, %v8760
      %v9522 = vmul.f32 %v9154, %v8761
      %v9523 = vmul.f32 %v9169, %v8762
      %v9524 = vmul.f32 %v9184, %v8763
      %v9525 = vmul.f32 %v9199, %v8764
      %v9526 = vmul.f32 %v9214, %v8765
      %v9527 = vmul.f32 %v9229, %v8766
      %v9528 = vmul.f32 %v9244, %v8767
      %v9529 = vmul.f32 %v9259, %v8768
      %v9530 = vmul.f32 %v9274, %v8769
      %v9531 = vmul.f32 %v9289, %v8770
      %v9532 = vmul.f32 %v9304, %v8771
      %v9533 = vmul.f32 %v9319, %v8772
      %v9534 = vmul.f32 %v9334, %v8773
      %v9535 = vmul.f32 %v9349, %v8774
      %v9536 = vmul.f32 %v9364, %v8775
      %v9537 = vmul.f32 %v9379, %v8776
      %v9538 = vmul.f32 %v9394, %v8777
      %v9539 = vmul.f32 %v9409, %v8778
      %v9540 = vmul.f32 %v9424, %v8779
      %v9541 = vmul.f32 %v9439, %v8780
      %v9542 = vmul.f32 %v9454, %v8781
      %v9543 = vmul.f32 %v9469, %v8782
      %v9544 = vmul.f32 %v9484, %v8783
      %v9545 = vmul.f32 %v9499, %v8784
      %v9546 = vmul.f32 %v9514, %v8785
      %v9547 = vsub.f32 1.0, %v9049
      %v9548 = vsub.f32 1.0, %v9064
      %v9549 = vsub.f32 1.0, %v9079
      %v9550 = vsub.f32 1.0, %v9094
      %v9551 = vsub.f32 1.0, %v9109
      %v9552 = vsub.f32 1.0, %v9124
      %v9553 = vsub.f32 1.0, %v9139
      %v9554 = vsub.f32 1.0, %v9154
      %v9555 = vsub.f32 1.0, %v9169
      %v9556 = vsub.f32 1.0, %v9184
      %v9557 = vsub.f32 1.0, %v9199
      %v9558 = vsub.f32 1.0, %v9214
      %v9559 = vsub.f32 1.0, %v9229
      %v9560 = vsub.f32 1.0, %v9244
      %v9561 = vsub.f32 1.0, %v9259
      %v9562 = vsub.f32 1.0, %v9274
      %v9563 = vsub.f32 1.0, %v9289
      %v9564 = vsub.f32 1.0, %v9304
      %v9565 = vsub.f32 1.0, %v9319
      %v9566 = vsub.f32 1.0, %v9334
      %v9567 = vsub.f32 1.0, %v9349
      %v9568 = vsub.f32 1.0, %v9364
      %v9569 = vsub.f32 1.0, %v9379
      %v9570 = vsub.f32 1.0, %v9394
      %v9571 = vsub.f32 1.0, %v9409
      %v9572 = vsub.f32 1.0, %v9424
      %v9573 = vsub.f32 1.0, %v9439
      %v9574 = vsub.f32 1.0, %v9454
      %v9575 = vsub.f32 1.0, %v9469
      %v9576 = vsub.f32 1.0, %v9484
      %v9577 = vsub.f32 1.0, %v9499
      %v9578 = vsub.f32 1.0, %v9514
      %v9579 = vmul.f32 %v9547, %v331
      %v9580 = vmul.f32 %v9548, %v332
      %v9581 = vmul.f32 %v9549, %v333
      %v9582 = vmul.f32 %v9550, %v334
      %v9583 = vmul.f32 %v9551, %v335
      %v9584 = vmul.f32 %v9552, %v336
      %v9585 = vmul.f32 %v9553, %v337
      %v9586 = vmul.f32 %v9554, %v338
      %v9587 = vmul.f32 %v9555, %v339
      %v9588 = vmul.f32 %v9556, %v340
      %v9589 = vmul.f32 %v9557, %v341
      %v9590 = vmul.f32 %v9558, %v342
      %v9591 = vmul.f32 %v9559, %v343
      %v9592 = vmul.f32 %v9560, %v344
      %v9593 = vmul.f32 %v9561, %v345
      %v9594 = vmul.f32 %v9562, %v346
      %v9595 = vmul.f32 %v9563, %v347
      %v9596 = vmul.f32 %v9564, %v348
      %v9597 = vmul.f32 %v9565, %v349
      %v9598 = vmul.f32 %v9566, %v350
      %v9599 = vmul.f32 %v9567, %v351
      %v9600 = vmul.f32 %v9568, %v352
      %v9601 = vmul.f32 %v9569, %v353
      %v9602 = vmul.f32 %v9570, %v354
      %v9603 = vmul.f32 %v9571, %v355
      %v9604 = vmul.f32 %v9572, %v356
      %v9605 = vmul.f32 %v9573, %v357
      %v9606 = vmul.f32 %v9574, %v358
      %v9607 = vmul.f32 %v9575, %v359
      %v9608 = vmul.f32 %v9576, %v360
      %v9609 = vmul.f32 %v9577, %v361
      %v9610 = vmul.f32 %v9578, %v362
      %v9611 = vadd.f32 %v9515, %v9579
      %v9612 = vadd.f32 %v9516, %v9580
      %v9613 = vadd.f32 %v9517, %v9581
      %v9614 = vadd.f32 %v9518, %v9582
      %v9615 = vadd.f32 %v9519, %v9583
      %v9616 = vadd.f32 %v9520, %v9584
      %v9617 = vadd.f32 %v9521, %v9585
      %v9618 = vadd.f32 %v9522, %v9586
      %v9619 = vadd.f32 %v9523, %v9587
      %v9620 = vadd.f32 %v9524, %v9588
      %v9621 = vadd.f32 %v9525, %v9589
      %v9622 = vadd.f32 %v9526, %v9590
      %v9623 = vadd.f32 %v9527, %v9591
      %v9624 = vadd.f32 %v9528, %v9592
      %v9625 = vadd.f32 %v9529, %v9593
      %v9626 = vadd.f32 %v9530, %v9594
      %v9627 = vadd.f32 %v9531, %v9595
      %v9628 = vadd.f32 %v9532, %v9596
      %v9629 = vadd.f32 %v9533, %v9597
      %v9630 = vadd.f32 %v9534, %v9598
      %v9631 = vadd.f32 %v9535, %v9599
      %v9632 = vadd.f32 %v9536, %v9600
      %v9633 = vadd.f32 %v9537, %v9601
      %v9634 = vadd.f32 %v9538, %v9602
      %v9635 = vadd.f32 %v9539, %v9603
      %v9636 = vadd.f32 %v9540, %v9604
      %v9637 = vadd.f32 %v9541, %v9605
      %v9638 = vadd.f32 %v9542, %v9606
      %v9639 = vadd.f32 %v9543, %v9607
      %v9640 = vadd.f32 %v9544, %v9608
      %v9641 = vadd.f32 %v9545, %v9609
      %v9642 = vadd.f32 %v9546, %v9610
      %9643 = vst.msk [vmem:[%s329] sm:$0xff] %vm367, %v9611
      %9644 = vst.msk [vmem:[%s329 + $0x8] sm:$0xff] %vm367, %v9612
      %9645 = vst.msk [vmem:[%s329 + $0x10] sm:$0xff] %vm367, %v9613
      %9646 = vst.msk [vmem:[%s329 + $0x18] sm:$0xff] %vm367, %v9614
      %9647 = vst.msk [vmem:[%s329 + $0x20] sm:$0xff] %vm367, %v9615
      %9648 = vst.msk [vmem:[%s329 + $0x28] sm:$0xff] %vm367, %v9616
      %9649 = vst.msk [vmem:[%s329 + $0x30] sm:$0xff] %vm367, %v9617
      %9650 = vst.msk [vmem:[%s329 + $0x38] sm:$0xff] %vm367, %v9618
      %9651 = vst.msk [vmem:[%s329 + $0x40] sm:$0xff] %vm367, %v9619
      %9652 = vst.msk [vmem:[%s329 + $0x48] sm:$0xff] %vm367, %v9620
      %9653 = vst.msk [vmem:[%s329 + $0x50] sm:$0xff] %vm367, %v9621
      %9654 = vst.msk [vmem:[%s329 + $0x58] sm:$0xff] %vm367, %v9622
      %9655 = vst.msk [vmem:[%s329 + $0x60] sm:$0xff] %vm367, %v9623
      %9656 = vst.msk [vmem:[%s329 + $0x68] sm:$0xff] %vm367, %v9624
      %9657 = vst.msk [vmem:[%s329 + $0x70] sm:$0xff] %vm367, %v9625
      %9658 = vst.msk [vmem:[%s329 + $0x78] sm:$0xff] %vm367, %v9626
      %9659 = vst.msk [vmem:[%s329 + $0x80] sm:$0xff] %vm367, %v9627
      %9660 = vst.msk [vmem:[%s329 + $0x88] sm:$0xff] %vm367, %v9628
      %9661 = vst.msk [vmem:[%s329 + $0x90] sm:$0xff] %vm367, %v9629
      %9662 = vst.msk [vmem:[%s329 + $0x98] sm:$0xff] %vm367, %v9630
      %9663 = vst.msk [vmem:[%s329 + $0xa0] sm:$0xff] %vm367, %v9631
      %9664 = vst.msk [vmem:[%s329 + $0xa8] sm:$0xff] %vm367, %v9632
      %9665 = vst.msk [vmem:[%s329 + $0xb0] sm:$0xff] %vm367, %v9633
      %9666 = vst.msk [vmem:[%s329 + $0xb8] sm:$0xff] %vm367, %v9634
      %9667 = vst.msk [vmem:[%s329 + $0xc0] sm:$0xff] %vm367, %v9635
      %9668 = vst.msk [vmem:[%s329 + $0xc8] sm:$0xff] %vm367, %v9636
      %9669 = vst.msk [vmem:[%s329 + $0xd0] sm:$0xff] %vm367, %v9637
      %9670 = vst.msk [vmem:[%s329 + $0xd8] sm:$0xff] %vm367, %v9638
      %9671 = vst.msk [vmem:[%s329 + $0xe0] sm:$0xff] %vm367, %v9639
      %9672 = vst.msk [vmem:[%s329 + $0xe8] sm:$0xff] %vm367, %v9640
      %9673 = vst.msk [vmem:[%s329 + $0xf0] sm:$0xff] %vm367, %v9641
      %9674 = vst.msk [vmem:[%s329 + $0xf8] sm:$0xff] %vm367, %v9642
      %s9675 = smul.u32 32, %s19
      %p9676 = scmp.lt.s32.totalorder %s9675, 63
      %s9677 = scalar_select %p9676, %s9675, 63
      %s9678 = smul.addr %s9677, 8
      %s9679 = scalar_lea.vmem %s8, %s9678
      // Predicated region
      $region53: #{tpu_custom_call.1} parent=51 // pred_check
        %p9680 = pneg %p215
      $region54: #{tpu_custom_call.1} parent=51 // pred_check_branch
        %9682 = sbr.rel (%p9680) target = $region56
      $region55: #{tpu_custom_call.1} parent=51 // pred_region
        %s9683 = smul.u32 32, %s19
      $region56: #{tpu_custom_call.1} parent=51 // pred_fallthru
        _
    $region52: #{tpu_custom_call.1} parent=5 // pred_fallthru
      _
    %p9684 = scmp.le.s32.totalorder 2, %s14
    // Predicated region
    $region57: #{tpu_custom_call.1} parent=5 // pred_check
      %p9685 = pneg %p9684
    $region58: #{tpu_custom_call.1} parent=5 // pred_check_branch
      %9687 = sbr.rel (%p9685) target = $region60
    $region59: #{tpu_custom_call.1} parent=5 // pred_region
      %s9688 = ssub.s32 %s14, 2
      // Predicated region
      $region61: #{tpu_custom_call.1} parent=59 // pred_check
        %p9689 = pneg %p221
      $region62: #{tpu_custom_call.1} parent=59 // pred_check_branch
        %9691 = sbr.rel (%p9689) target = $region64
      $region63: #{tpu_custom_call.1} parent=59 // pred_region
        %s9692 = smul.u32 32, %s20
        %p9693 = scmp.lt.s32.totalorder %s9692, 63
        %s9694 = scalar_select %p9693, %s9692, 63
        %s9695 = smul.addr %s9694, 8
        %s9696 = scalar_lea.vmem %s8, %s9695
      $region64: #{tpu_custom_call.1} parent=59 // pred_fallthru
        _
    $region60: #{tpu_custom_call.1} parent=5 // pred_fallthru
      _
  $region6: #{tpu_custom_call.1} parent=0 // loop_footer
    %s18 = sadd.s32 1, %s14
  $region7: #{tpu_custom_call.1} parent=0 // loop_footer_branch
    %13 = sbr.rel target = $region3
  $region8: #{tpu_custom_call.1} parent=0 // loop_exit
    _

</llo_original>
